<compile_context>
chip_gen: v5e
topology: v5e:2x2
jax: 0.10.0
libtpu: 0.0.40
codegen_flags: <defaults>
</compile_context>

<pallas_src>
import jax
import jax.numpy as jnp
import numpy as np
from jax.experimental import pallas as pl
from jax.experimental.pallas import tpu as pltpu


# ------------------------------- geometry -----------------------------------
# conv1 reads a zero-padded 33x32 image flattened to 1056 lanes; its outputs
# live on a 28x32 grid flattened to 896 (cols 28..31 never used).
# conv2 reads a zero-padded 19x18 map flattened to 342; its outputs live on a
# 14x18 grid flattened to 252 (cols 14..17 never used).
_C1_IN = 33 * 32            # 1056
_C1_OUT_W = 32
_C1_OUT = 28 * _C1_OUT_W    # 896
_C2_IN = 19 * 18            # 342
_C2_OUT_W = 18
_C2_OUT = 14 * _C2_OUT_W    # 252

_OFFS1 = [kh * _C1_OUT_W + kw for kh in range(5) for kw in range(5)]
_OFFS2 = [kh * _C2_OUT_W + kw for kh in range(5) for kw in range(5)]

BT = 8                      # images per grid step (sublane batch tile)


# --------------------------- constant matrices -------------------------------


def _pool1_pad_select():
    """(863, 342) 0/1 matrix: hm @ S = 2x2-max-pooled 14x14 map, already placed
    at rows/cols [2,16) of the zero-padded 19x18 conv2-input layout."""
    s = np.zeros((_C1_OUT - _C1_OUT_W - 1, _C2_IN), np.float32)
    for pr in range(14):
        for pc in range(14):
            s[2 * pr * _C1_OUT_W + 2 * pc, (pr + 2) * _C2_OUT_W + (pc + 2)] = 1.0
    return s


def _pool2_select():
    """(233, 49) 0/1 matrix: hm2 @ S = 2x2-max-pooled 7x7 map (row-major)."""
    s = np.zeros((_C2_OUT - _C2_OUT_W - 1, 49), np.float32)
    for pr in range(7):
        for pc in range(7):
            s[2 * pr * _C2_OUT_W + 2 * pc, pr * 7 + pc] = 1.0
    return s


def _conv2_valid_lanes():
    valid = np.zeros((_C2_IN,), bool)
    for pr in range(14):
        for pc in range(14):
            valid[(pr + 2) * _C2_OUT_W + (pc + 2)] = True
    return valid


# ------------------------------ Pallas kernel --------------------------------


def _mnist_kernel(x_ref, w1k_ref, s1_ref, bpad1_ref, w2k_ref, b2_ref, s2_ref,
                  wl_ref, bl_ref, wdg_ref, bdg_ref, wdr_ref, bdr_ref,
                  wc_ref, bc_ref, out_ref, p1_ref):
    f32 = jnp.float32
    bt = x_ref.shape[0]           # batch tile (images live in sublanes)
    cb = 10 * bt                  # activation rows: channel*bt + image

    # ---- conv1: (25*bt, 896) patch matrix via 25 aligned slab stores --------
    for t, off in enumerate(_OFFS1):
        p1_ref[t * bt:(t + 1) * bt, :] = x_ref[:, off:off + _C1_OUT]
    # one MXU dot against kron(w1, I_bt): (10bt, 25bt) @ (25bt, 896)
    c1 = jnp.dot(w1k_ref[...], p1_ref[...],
                 preferred_element_type=f32)                        # (10bt, 896)

    # ---- 2x2 max-pool fused with re-pad into the 19x18 conv2-input layout ---
    vm = jnp.maximum(c1[:, :_C1_OUT - _C1_OUT_W], c1[:, _C1_OUT_W:])
    hm = jnp.maximum(vm[:, :-1], vm[:, 1:])                         # (10bt, 863)
    h1p = jnp.dot(hm, s1_ref[...], preferred_element_type=f32)      # (10bt, 342)
    # bias + ReLU; pad lanes carry -1e30 in the constant -> exact zeros.
    h1 = jnp.maximum(h1p + bpad1_ref[...], 0.0)

    # ---- conv2: 25 accumulating MXU dots, no patch scratch ------------------
    c2 = jnp.zeros((cb, _C2_OUT), f32)
    for t, off in enumerate(_OFFS2):
        c2 = c2 + jnp.dot(w2k_ref[t * cb:(t + 1) * cb, :],
                          h1[:, off:off + _C2_OUT],
                          preferred_element_type=f32)               # (10bt, 252)

    # ---- 2x2 max-pool + bias + ReLU ------------------------------------------
    vm2 = jnp.maximum(c2[:, :_C2_OUT - _C2_OUT_W], c2[:, _C2_OUT_W:])
    hm2 = jnp.maximum(vm2[:, :-1], vm2[:, 1:])                      # (10bt, 233)
    pool2 = jnp.dot(hm2, s2_ref[...], preferred_element_type=f32)   # (10bt, 49)
    act2 = jnp.maximum(pool2 + b2_ref[...], 0.0)

    # ---- lin1 with the NCHW flatten folded in: 10 accumulating dots ----------
    h = jnp.zeros((bt, 50), f32)
    for c in range(10):
        h = h + jnp.dot(act2[c * bt:(c + 1) * bt, :],
                        wl_ref[c * 56:c * 56 + 49, :],
                        preferred_element_type=f32)
    h = h + bl_ref[...]                                             # (bt, 50)

    # ---- heads ----------------------------------------------------------------
    def softmax(z):
        z = z - jnp.max(z, axis=-1, keepdims=True)
        e = jnp.exp(z)
        return e * pl.reciprocal(jnp.sum(e, axis=-1, keepdims=True), approx=True)

    pdig = softmax(jnp.dot(h, wdg_ref[...], preferred_element_type=f32)
                   + bdg_ref[...])                                  # (bt, 10)
    pdir = softmax(jnp.dot(h, wdr_ref[...], preferred_element_type=f32)
                   + bdr_ref[...])                                  # (bt, 4)
    critic = jnp.dot(h, wc_ref[...], preferred_element_type=f32) + bc_ref[...]

    # lane-dense packed output: y1[d*4+r] in lanes 0..39, critic in lane 40,
    # zeros elsewhere -> a single unmasked (bt, 128) store.
    y1 = jnp.concatenate([pdig[:, d:d + 1] * pdir for d in range(10)], axis=1)
    out_ref[...] = jnp.concatenate(
        [y1, critic, jnp.zeros((bt, 128 - 41), f32)], axis=1)


# --------------------------- pallas_call wrapper ------------------------------


def mnist_net_forward(x_nchw, params, bt=BT):
    B = x_nchw.shape[0]
    x = x_nchw.reshape(B, 28, 28).astype(jnp.float32)
    xp = jnp.pad(x, ((0, 0), (2, 3), (2, 2)))           # (B, 33, 32) zero pad
    xflat = xp.reshape(B, _C1_IN)                       # (B, 1056)

    bp = ((B + bt - 1) // bt) * bt                      # pad batch to the tile
    if bp != B:
        xflat = jnp.pad(xflat, ((0, bp - B), (0, 0)))

    consts = (params["w1k"], params["s1pad"], params["bpad1"],
              params["w2k"], params["b2r"], params["s2"],
              params["wl"], params["bl"],
              params["wdig"], params["bdig"], params["wdir"], params["bdir"],
              params["wc"], params["bc"])

    out = pl.pallas_call(
        _mnist_kernel,
        grid=(bp // bt,),
        in_specs=[pl.BlockSpec((bt, _C1_IN), lambda i: (i, 0))]
        + [pl.BlockSpec(c.shape, lambda i: (0, 0)) for c in consts],
        out_specs=pl.BlockSpec((bt, 128), lambda i: (i, 0)),
        out_shape=jax.ShapeDtypeStruct((bp, 128), jnp.float32),
        scratch_shapes=[pltpu.VMEM((25 * bt, _C1_OUT), jnp.float32)],
        compiler_params=pltpu.CompilerParams(
            # batch axis is independent across steps; megacore-capable gens can
            # shard it across TensorCores.
            dimension_semantics=("parallel",),
            vmem_limit_bytes=32 * 1024 * 1024),
    )(xflat, *consts)
    return out[:B, :40], out[:B, 40:41]


# -------------------------- parameters & reference ----------------------------


def init_raw_params(key):
    ks = jax.random.split(key, 12)

    def u(k, shape, fan_in):
        bound = 1.0 / jnp.sqrt(jnp.float32(fan_in))
        return jax.random.uniform(k, shape, jnp.float32, -bound, bound)

    return dict(
        w1=u(ks[0], (10, 1, 5, 5), 25),    b1=u(ks[1], (10,), 25),
        w2=u(ks[2], (10, 10, 5, 5), 250),  b2=u(ks[3], (10,), 250),
        wl=u(ks[4], (50, 490), 490),       bl=u(ks[5], (50,), 490),
        wdir=u(ks[6], (4, 50), 50),        bdir=u(ks[7], (4,), 50),
        wdig=u(ks[8], (10, 50), 50),       bdig=u(ks[9], (10,), 50),
        wc=u(ks[10], (1, 50), 50),         bc=u(ks[11], (1,), 50),
    )


def pack_params(raw, bt=BT):
    """Repack PyTorch-layout params into kernel layouts (batch tile baked in)."""
    eye = np.eye(bt, dtype=np.float32)
    w1 = np.asarray(raw["w1"], np.float32).reshape(10, 25)       # (Cout, kh*kw)
    w2 = np.asarray(raw["w2"], np.float32)                       # (Cout, Cin, 5, 5)
    b1 = np.asarray(raw["b1"], np.float32)
    b2 = np.asarray(raw["b2"], np.float32)

    # conv1: one dot against the (25*bt, 896) patch matrix (rows = tap*bt+img).
    w1k = np.kron(w1, eye)                                       # (10bt, 25bt)
    # conv2: 25 accumulating dots; tap-t weight = kron(w2[:, :, kh, kw], I_bt).
    w2k = np.concatenate(
        [np.kron(w2[:, :, kh, kw], eye) for kh in range(5) for kw in range(5)],
        axis=0)                                                  # (25*10bt, 10bt)

    # conv1 bias folded after the pool max; conv2-input pad lanes forced to
    # -1e30 so the in-kernel ReLU writes exact zeros there.
    valid = _conv2_valid_lanes()
    bpad1 = np.where(valid[None, :], np.repeat(b1, bt)[:, None],
                     np.float32(-1e30)).astype(np.float32)       # (10bt, 342)
    b2r = np.repeat(b2, bt).reshape(10 * bt, 1)                  # (10bt, 1)

    # lin1 with the NCHW flatten folded in: channel-c block of wl, padded to a
    # 56-row (8-aligned) stride so in-kernel slices start on a sublane tile.
    wl = np.asarray(raw["wl"], np.float32).T.reshape(10, 49, 50)  # [c, s, j]
    wl_pad = np.zeros((10, 56, 50), np.float32)
    wl_pad[:, :49, :] = wl
    wl_pad = wl_pad.reshape(560, 50)

    out = dict(
        w1k=w1k, s1pad=_pool1_pad_select(), bpad1=bpad1,
        w2k=w2k, b2r=b2r, s2=_pool2_select(),
        wl=wl_pad, bl=np.asarray(raw["bl"], np.float32).reshape(1, 50),
        wdig=np.asarray(raw["wdig"], np.float32).T,
        bdig=np.asarray(raw["bdig"], np.float32).reshape(1, 10),
        wdir=np.asarray(raw["wdir"], np.float32).T,
        bdir=np.asarray(raw["bdir"], np.float32).reshape(1, 4),
        wc=np.asarray(raw["wc"], np.float32).T,
        bc=np.asarray(raw["bc"], np.float32).reshape(1, 1),
    )
    return {k: jnp.asarray(v) for k, v in out.items()}


def reference_forward(x, raw):
    """Pure-JAX/XLA reference of the PyTorch module (f32, highest precision)."""
    hp = jax.lax.Precision.HIGHEST

    def conv(inp, w, b):
        o = jax.lax.conv_general_dilated(
            inp, w, window_strides=(1, 1), padding=((2, 2), (2, 2)),
            dimension_numbers=("NCHW", "OIHW", "NCHW"), precision=hp)
        return o + b[None, :, None, None]

    def pool(inp):
        return jax.lax.reduce_window(inp, -jnp.inf, jax.lax.max,
                                     (1, 1, 2, 2), (1, 1, 2, 2), "VALID")

    h = pool(jnp.maximum(conv(x, raw["w1"], raw["b1"]), 0.0))
    h = pool(jnp.maximum(conv(h, raw["w2"], raw["b2"]), 0.0))
    B = x.shape[0]
    f = h.reshape(B, 490)
    z = jnp.dot(f, raw["wl"].T, precision=hp) + raw["bl"]
    p1 = jax.nn.softmax(jnp.dot(z, raw["wdig"].T, precision=hp) + raw["bdig"], -1)
    p2 = jax.nn.softmax(jnp.dot(z, raw["wdir"].T, precision=hp) + raw["bdir"], -1)
    y1 = (p1[:, :, None] * p2[:, None, :]).reshape(B, 40)
    y2 = jnp.dot(z, raw["wc"].T, precision=hp) + raw["bc"]
    return y1, y2


if __name__ == "__main__":
    key = jax.random.PRNGKey(0)
    pkey, xkey = jax.random.split(key)
    raw = init_raw_params(pkey)
    params = pack_params(raw)

    # MNIST-style input: lin1 (10*7*7) hard-codes 28x28 spatial, 1 channel.
    x = jax.random.normal(xkey, (2, 1, 28, 28), jnp.float32)

    fwd = jax.jit(lambda inp: mnist_net_forward(inp, params))
    y1, y2 = fwd(x)
    jax.block_until_ready((y1, y2))

    assert y1.shape == (2, 40) and y1.dtype == jnp.float32
    assert y2.shape == (2, 1) and y2.dtype == jnp.float32
    # each row of y1 is an outer product of two softmaxes -> sums to ~1
    # (approx reciprocal in the softmax denominators -> loose-ish tolerance)
    assert jnp.allclose(jnp.sum(y1, axis=-1), 1.0, atol=5e-3)

    # compare against a pure-JAX reference of the PyTorch module
    y1_ref, y2_ref = reference_forward(x, raw)
    e1 = float(jnp.max(jnp.abs(y1 - y1_ref)))
    e2 = float(jnp.max(jnp.abs(y2 - y2_ref)))
    assert e1 < 5e-3 and e2 < 2e-3, (e1, e2)

    print("KERNEL_OK")
</pallas_src>

<mosaic_0001>
module attributes {stable_mosaic.version = 11 : i64} {
  func.func @_mnist_kernel(%arg0: i32, %arg1: memref<8x1056xf32, #tpu.memory_space<vmem>>, %arg2: memref<80x200xf32, #tpu.memory_space<vmem>>, %arg3: memref<863x342xf32, #tpu.memory_space<vmem>>, %arg4: memref<80x342xf32, #tpu.memory_space<vmem>>, %arg5: memref<2000x80xf32, #tpu.memory_space<vmem>>, %arg6: memref<80x1xf32, #tpu.memory_space<vmem>>, %arg7: memref<233x49xf32, #tpu.memory_space<vmem>>, %arg8: memref<560x50xf32, #tpu.memory_space<vmem>>, %arg9: memref<1x50xf32, #tpu.memory_space<vmem>>, %arg10: memref<50x10xf32, #tpu.memory_space<vmem>>, %arg11: memref<1x10xf32, #tpu.memory_space<vmem>>, %arg12: memref<50x4xf32, #tpu.memory_space<vmem>>, %arg13: memref<1x4xf32, #tpu.memory_space<vmem>>, %arg14: memref<50x1xf32, #tpu.memory_space<vmem>>, %arg15: memref<1x1xf32, #tpu.memory_space<vmem>>, %arg16: memref<8x128xf32, #tpu.memory_space<vmem>>, %arg17: memref<200x896xf32, #tpu.memory_space<vmem>>) attributes {dimension_semantics = [#tpu.dimension_semantics<parallel>], iteration_bounds = array<i64: 1>, scalar_prefetch = 0 : i64, scratch_operands = 1 : i64, tpu.core_type = #tpu.core_type<tc>, window_params = [{transform_indices = @transform_0, window_bounds = array<i64: 8, 1056>}, {pipeline_mode = #tpu.pipeline_mode<synchronous>, transform_indices = @transform_1, window_bounds = array<i64: 80, 200>}, {pipeline_mode = #tpu.pipeline_mode<synchronous>, transform_indices = @transform_2, window_bounds = array<i64: 863, 342>}, {pipeline_mode = #tpu.pipeline_mode<synchronous>, transform_indices = @transform_3, window_bounds = array<i64: 80, 342>}, {pipeline_mode = #tpu.pipeline_mode<synchronous>, transform_indices = @transform_4, window_bounds = array<i64: 2000, 80>}, {pipeline_mode = #tpu.pipeline_mode<synchronous>, transform_indices = @transform_5, window_bounds = array<i64: 80, 1>}, {pipeline_mode = #tpu.pipeline_mode<synchronous>, transform_indices = @transform_6, window_bounds = array<i64: 233, 49>}, {pipeline_mode = #tpu.pipeline_mode<synchronous>, transform_indices = @transform_7, window_bounds = array<i64: 560, 50>}, {pipeline_mode = #tpu.pipeline_mode<synchronous>, transform_indices = @transform_8, window_bounds = array<i64: 1, 50>}, {pipeline_mode = #tpu.pipeline_mode<synchronous>, transform_indices = @transform_9, window_bounds = array<i64: 50, 10>}, {pipeline_mode = #tpu.pipeline_mode<synchronous>, transform_indices = @transform_10, window_bounds = array<i64: 1, 10>}, {pipeline_mode = #tpu.pipeline_mode<synchronous>, transform_indices = @transform_11, window_bounds = array<i64: 50, 4>}, {pipeline_mode = #tpu.pipeline_mode<synchronous>, transform_indices = @transform_12, window_bounds = array<i64: 1, 4>}, {pipeline_mode = #tpu.pipeline_mode<synchronous>, transform_indices = @transform_13, window_bounds = array<i64: 50, 1>}, {pipeline_mode = #tpu.pipeline_mode<synchronous>, transform_indices = @transform_14, window_bounds = array<i64: 1, 1>}, {transform_indices = @transform_15, window_bounds = array<i64: 8, 128>}]} {
    %c0 = arith.constant 0 : index
    %c0_0 = arith.constant 0 : index
    %0 = vector.load %arg1[%c0, %c0_0] : memref<8x1056xf32, #tpu.memory_space<vmem>>, vector<8x896xf32>
    %c0_1 = arith.constant 0 : index
    %c0_2 = arith.constant 0 : index
    %1 = vector.load %arg17[%c0_1, %c0_2] : memref<200x896xf32, #tpu.memory_space<vmem>>, vector<8x896xf32>
    tpu.vector_store %arg17[%c0_1, %c0_2], %0 {strides = array<i32>} : memref<200x896xf32, #tpu.memory_space<vmem>>, vector<8x896xf32>,
    %c0_3 = arith.constant 0 : index
    %c1 = arith.constant 1 : index
    %2 = vector.load %arg1[%c0_3, %c1] : memref<8x1056xf32, #tpu.memory_space<vmem>>, vector<8x896xf32>
    %c8 = arith.constant 8 : index
    %c0_4 = arith.constant 0 : index
    %3 = vector.load %arg17[%c8, %c0_4] : memref<200x896xf32, #tpu.memory_space<vmem>>, vector<8x896xf32>
    tpu.vector_store %arg17[%c8, %c0_4], %2 {strides = array<i32>} : memref<200x896xf32, #tpu.memory_space<vmem>>, vector<8x896xf32>,
    %c0_5 = arith.constant 0 : index
    %c2 = arith.constant 2 : index
    %4 = vector.load %arg1[%c0_5, %c2] : memref<8x1056xf32, #tpu.memory_space<vmem>>, vector<8x896xf32>
    %c16 = arith.constant 16 : index
    %c0_6 = arith.constant 0 : index
    %5 = vector.load %arg17[%c16, %c0_6] : memref<200x896xf32, #tpu.memory_space<vmem>>, vector<8x896xf32>
    tpu.vector_store %arg17[%c16, %c0_6], %4 {strides = array<i32>} : memref<200x896xf32, #tpu.memory_space<vmem>>, vector<8x896xf32>,
    %c0_7 = arith.constant 0 : index
    %c3 = arith.constant 3 : index
    %6 = vector.load %arg1[%c0_7, %c3] : memref<8x1056xf32, #tpu.memory_space<vmem>>, vector<8x896xf32>
    %c24 = arith.constant 24 : index
    %c0_8 = arith.constant 0 : index
    %7 = vector.load %arg17[%c24, %c0_8] : memref<200x896xf32, #tpu.memory_space<vmem>>, vector<8x896xf32>
    tpu.vector_store %arg17[%c24, %c0_8], %6 {strides = array<i32>} : memref<200x896xf32, #tpu.memory_space<vmem>>, vector<8x896xf32>,
    %c0_9 = arith.constant 0 : index
    %c4 = arith.constant 4 : index
    %8 = vector.load %arg1[%c0_9, %c4] : memref<8x1056xf32, #tpu.memory_space<vmem>>, vector<8x896xf32>
    %c32 = arith.constant 32 : index
    %c0_10 = arith.constant 0 : index
    %9 = vector.load %arg17[%c32, %c0_10] : memref<200x896xf32, #tpu.memory_space<vmem>>, vector<8x896xf32>
    tpu.vector_store %arg17[%c32, %c0_10], %8 {strides = array<i32>} : memref<200x896xf32, #tpu.memory_space<vmem>>, vector<8x896xf32>,
    %c0_11 = arith.constant 0 : index
    %c32_12 = arith.constant 32 : index
    %10 = vector.load %arg1[%c0_11, %c32_12] : memref<8x1056xf32, #tpu.memory_space<vmem>>, vector<8x896xf32>
    %c40 = arith.constant 40 : index
    %c0_13 = arith.constant 0 : index
    %11 = vector.load %arg17[%c40, %c0_13] : memref<200x896xf32, #tpu.memory_space<vmem>>, vector<8x896xf32>
    tpu.vector_store %arg17[%c40, %c0_13], %10 {strides = array<i32>} : memref<200x896xf32, #tpu.memory_space<vmem>>, vector<8x896xf32>,
    %c0_14 = arith.constant 0 : index
    %c33 = arith.constant 33 : index
    %12 = vector.load %arg1[%c0_14, %c33] : memref<8x1056xf32, #tpu.memory_space<vmem>>, vector<8x896xf32>
    %c48 = arith.constant 48 : index
    %c0_15 = arith.constant 0 : index
    %13 = vector.load %arg17[%c48, %c0_15] : memref<200x896xf32, #tpu.memory_space<vmem>>, vector<8x896xf32>
    tpu.vector_store %arg17[%c48, %c0_15], %12 {strides = array<i32>} : memref<200x896xf32, #tpu.memory_space<vmem>>, vector<8x896xf32>,
    %c0_16 = arith.constant 0 : index
    %c34 = arith.constant 34 : index
    %14 = vector.load %arg1[%c0_16, %c34] : memref<8x1056xf32, #tpu.memory_space<vmem>>, vector<8x896xf32>
    %c56 = arith.constant 56 : index
    %c0_17 = arith.constant 0 : index
    %15 = vector.load %arg17[%c56, %c0_17] : memref<200x896xf32, #tpu.memory_space<vmem>>, vector<8x896xf32>
    tpu.vector_store %arg17[%c56, %c0_17], %14 {strides = array<i32>} : memref<200x896xf32, #tpu.memory_space<vmem>>, vector<8x896xf32>,
    %c0_18 = arith.constant 0 : index
    %c35 = arith.constant 35 : index
    %16 = vector.load %arg1[%c0_18, %c35] : memref<8x1056xf32, #tpu.memory_space<vmem>>, vector<8x896xf32>
    %c64 = arith.constant 64 : index
    %c0_19 = arith.constant 0 : index
    %17 = vector.load %arg17[%c64, %c0_19] : memref<200x896xf32, #tpu.memory_space<vmem>>, vector<8x896xf32>
    tpu.vector_store %arg17[%c64, %c0_19], %16 {strides = array<i32>} : memref<200x896xf32, #tpu.memory_space<vmem>>, vector<8x896xf32>,
    %c0_20 = arith.constant 0 : index
    %c36 = arith.constant 36 : index
    %18 = vector.load %arg1[%c0_20, %c36] : memref<8x1056xf32, #tpu.memory_space<vmem>>, vector<8x896xf32>
    %c72 = arith.constant 72 : index
    %c0_21 = arith.constant 0 : index
    %19 = vector.load %arg17[%c72, %c0_21] : memref<200x896xf32, #tpu.memory_space<vmem>>, vector<8x896xf32>
    tpu.vector_store %arg17[%c72, %c0_21], %18 {strides = array<i32>} : memref<200x896xf32, #tpu.memory_space<vmem>>, vector<8x896xf32>,
    %c0_22 = arith.constant 0 : index
    %c64_23 = arith.constant 64 : index
    %20 = vector.load %arg1[%c0_22, %c64_23] : memref<8x1056xf32, #tpu.memory_space<vmem>>, vector<8x896xf32>
    %c80 = arith.constant 80 : index
    %c0_24 = arith.constant 0 : index
    %21 = vector.load %arg17[%c80, %c0_24] : memref<200x896xf32, #tpu.memory_space<vmem>>, vector<8x896xf32>
    tpu.vector_store %arg17[%c80, %c0_24], %20 {strides = array<i32>} : memref<200x896xf32, #tpu.memory_space<vmem>>, vector<8x896xf32>,
    %c0_25 = arith.constant 0 : index
    %c65 = arith.constant 65 : index
    %22 = vector.load %arg1[%c0_25, %c65] : memref<8x1056xf32, #tpu.memory_space<vmem>>, vector<8x896xf32>
    %c88 = arith.constant 88 : index
    %c0_26 = arith.constant 0 : index
    %23 = vector.load %arg17[%c88, %c0_26] : memref<200x896xf32, #tpu.memory_space<vmem>>, vector<8x896xf32>
    tpu.vector_store %arg17[%c88, %c0_26], %22 {strides = array<i32>} : memref<200x896xf32, #tpu.memory_space<vmem>>, vector<8x896xf32>,
    %c0_27 = arith.constant 0 : index
    %c66 = arith.constant 66 : index
    %24 = vector.load %arg1[%c0_27, %c66] : memref<8x1056xf32, #tpu.memory_space<vmem>>, vector<8x896xf32>
    %c96 = arith.constant 96 : index
    %c0_28 = arith.constant 0 : index
    %25 = vector.load %arg17[%c96, %c0_28] : memref<200x896xf32, #tpu.memory_space<vmem>>, vector<8x896xf32>
    tpu.vector_store %arg17[%c96, %c0_28], %24 {strides = array<i32>} : memref<200x896xf32, #tpu.memory_space<vmem>>, vector<8x896xf32>,
    %c0_29 = arith.constant 0 : index
    %c67 = arith.constant 67 : index
    %26 = vector.load %arg1[%c0_29, %c67] : memref<8x1056xf32, #tpu.memory_space<vmem>>, vector<8x896xf32>
    %c104 = arith.constant 104 : index
    %c0_30 = arith.constant 0 : index
    %27 = vector.load %arg17[%c104, %c0_30] : memref<200x896xf32, #tpu.memory_space<vmem>>, vector<8x896xf32>
    tpu.vector_store %arg17[%c104, %c0_30], %26 {strides = array<i32>} : memref<200x896xf32, #tpu.memory_space<vmem>>, vector<8x896xf32>,
    %c0_31 = arith.constant 0 : index
    %c68 = arith.constant 68 : index
    %28 = vector.load %arg1[%c0_31, %c68] : memref<8x1056xf32, #tpu.memory_space<vmem>>, vector<8x896xf32>
    %c112 = arith.constant 112 : index
    %c0_32 = arith.constant 0 : index
    %29 = vector.load %arg17[%c112, %c0_32] : memref<200x896xf32, #tpu.memory_space<vmem>>, vector<8x896xf32>
    tpu.vector_store %arg17[%c112, %c0_32], %28 {strides = array<i32>} : memref<200x896xf32, #tpu.memory_space<vmem>>, vector<8x896xf32>,
    %c0_33 = arith.constant 0 : index
    %c96_34 = arith.constant 96 : index
    %30 = vector.load %arg1[%c0_33, %c96_34] : memref<8x1056xf32, #tpu.memory_space<vmem>>, vector<8x896xf32>
    %c120 = arith.constant 120 : index
    %c0_35 = arith.constant 0 : index
    %31 = vector.load %arg17[%c120, %c0_35] : memref<200x896xf32, #tpu.memory_space<vmem>>, vector<8x896xf32>
    tpu.vector_store %arg17[%c120, %c0_35], %30 {strides = array<i32>} : memref<200x896xf32, #tpu.memory_space<vmem>>, vector<8x896xf32>,
    %c0_36 = arith.constant 0 : index
    %c97 = arith.constant 97 : index
    %32 = vector.load %arg1[%c0_36, %c97] : memref<8x1056xf32, #tpu.memory_space<vmem>>, vector<8x896xf32>
    %c128 = arith.constant 128 : index
    %c0_37 = arith.constant 0 : index
    %33 = vector.load %arg17[%c128, %c0_37] : memref<200x896xf32, #tpu.memory_space<vmem>>, vector<8x896xf32>
    tpu.vector_store %arg17[%c128, %c0_37], %32 {strides = array<i32>} : memref<200x896xf32, #tpu.memory_space<vmem>>, vector<8x896xf32>,
    %c0_38 = arith.constant 0 : index
    %c98 = arith.constant 98 : index
    %34 = vector.load %arg1[%c0_38, %c98] : memref<8x1056xf32, #tpu.memory_space<vmem>>, vector<8x896xf32>
    %c136 = arith.constant 136 : index
    %c0_39 = arith.constant 0 : index
    %35 = vector.load %arg17[%c136, %c0_39] : memref<200x896xf32, #tpu.memory_space<vmem>>, vector<8x896xf32>
    tpu.vector_store %arg17[%c136, %c0_39], %34 {strides = array<i32>} : memref<200x896xf32, #tpu.memory_space<vmem>>, vector<8x896xf32>,
    %c0_40 = arith.constant 0 : index
    %c99 = arith.constant 99 : index
    %36 = vector.load %arg1[%c0_40, %c99] : memref<8x1056xf32, #tpu.memory_space<vmem>>, vector<8x896xf32>
    %c144 = arith.constant 144 : index
    %c0_41 = arith.constant 0 : index
    %37 = vector.load %arg17[%c144, %c0_41] : memref<200x896xf32, #tpu.memory_space<vmem>>, vector<8x896xf32>
    tpu.vector_store %arg17[%c144, %c0_41], %36 {strides = array<i32>} : memref<200x896xf32, #tpu.memory_space<vmem>>, vector<8x896xf32>,
    %c0_42 = arith.constant 0 : index
    %c100 = arith.constant 100 : index
    %38 = vector.load %arg1[%c0_42, %c100] : memref<8x1056xf32, #tpu.memory_space<vmem>>, vector<8x896xf32>
    %c152 = arith.constant 152 : index
    %c0_43 = arith.constant 0 : index
    %39 = vector.load %arg17[%c152, %c0_43] : memref<200x896xf32, #tpu.memory_space<vmem>>, vector<8x896xf32>
    tpu.vector_store %arg17[%c152, %c0_43], %38 {strides = array<i32>} : memref<200x896xf32, #tpu.memory_space<vmem>>, vector<8x896xf32>,
    %c0_44 = arith.constant 0 : index
    %c128_45 = arith.constant 128 : index
    %40 = vector.load %arg1[%c0_44, %c128_45] : memref<8x1056xf32, #tpu.memory_space<vmem>>, vector<8x896xf32>
    %c160 = arith.constant 160 : index
    %c0_46 = arith.constant 0 : index
    %41 = vector.load %arg17[%c160, %c0_46] : memref<200x896xf32, #tpu.memory_space<vmem>>, vector<8x896xf32>
    tpu.vector_store %arg17[%c160, %c0_46], %40 {strides = array<i32>} : memref<200x896xf32, #tpu.memory_space<vmem>>, vector<8x896xf32>,
    %c0_47 = arith.constant 0 : index
    %c129 = arith.constant 129 : index
    %42 = vector.load %arg1[%c0_47, %c129] : memref<8x1056xf32, #tpu.memory_space<vmem>>, vector<8x896xf32>
    %c168 = arith.constant 168 : index
    %c0_48 = arith.constant 0 : index
    %43 = vector.load %arg17[%c168, %c0_48] : memref<200x896xf32, #tpu.memory_space<vmem>>, vector<8x896xf32>
    tpu.vector_store %arg17[%c168, %c0_48], %42 {strides = array<i32>} : memref<200x896xf32, #tpu.memory_space<vmem>>, vector<8x896xf32>,
    %c0_49 = arith.constant 0 : index
    %c130 = arith.constant 130 : index
    %44 = vector.load %arg1[%c0_49, %c130] : memref<8x1056xf32, #tpu.memory_space<vmem>>, vector<8x896xf32>
    %c176 = arith.constant 176 : index
    %c0_50 = arith.constant 0 : index
    %45 = vector.load %arg17[%c176, %c0_50] : memref<200x896xf32, #tpu.memory_space<vmem>>, vector<8x896xf32>
    tpu.vector_store %arg17[%c176, %c0_50], %44 {strides = array<i32>} : memref<200x896xf32, #tpu.memory_space<vmem>>, vector<8x896xf32>,
    %c0_51 = arith.constant 0 : index
    %c131 = arith.constant 131 : index
    %46 = vector.load %arg1[%c0_51, %c131] : memref<8x1056xf32, #tpu.memory_space<vmem>>, vector<8x896xf32>
    %c184 = arith.constant 184 : index
    %c0_52 = arith.constant 0 : index
    %47 = vector.load %arg17[%c184, %c0_52] : memref<200x896xf32, #tpu.memory_space<vmem>>, vector<8x896xf32>
    tpu.vector_store %arg17[%c184, %c0_52], %46 {strides = array<i32>} : memref<200x896xf32, #tpu.memory_space<vmem>>, vector<8x896xf32>,
    %c0_53 = arith.constant 0 : index
    %c132 = arith.constant 132 : index
    %48 = vector.load %arg1[%c0_53, %c132] : memref<8x1056xf32, #tpu.memory_space<vmem>>, vector<8x896xf32>
    %c192 = arith.constant 192 : index
    %c0_54 = arith.constant 0 : index
    %49 = vector.load %arg17[%c192, %c0_54] : memref<200x896xf32, #tpu.memory_space<vmem>>, vector<8x896xf32>
    tpu.vector_store %arg17[%c192, %c0_54], %48 {strides = array<i32>} : memref<200x896xf32, #tpu.memory_space<vmem>>, vector<8x896xf32>,
    %c0_55 = arith.constant 0 : index
    %c0_56 = arith.constant 0 : index
    %50 = vector.load %arg2[%c0_55, %c0_56] : memref<80x200xf32, #tpu.memory_space<vmem>>, vector<80x200xf32>
    %c0_57 = arith.constant 0 : index
    %c0_58 = arith.constant 0 : index
    %51 = vector.load %arg17[%c0_57, %c0_58] : memref<200x896xf32, #tpu.memory_space<vmem>>, vector<200x896xf32>
    %cst = arith.constant dense<0.000000e+00> : vector<80x896xf32>
    %52 = tpu.matmul %50, %51, %cst {dimension_numbers = #tpu.dot_dimension_numbers<[1], [0], [0], [1], [0, 0, 1, 1], [], []>} : vector<80x200xf32>, vector<200x896xf32>, vector<80x896xf32> -> vector<80x896xf32>
    %53 = vector.extract_strided_slice %52 {offsets = [0, 0], sizes = [80, 864], strides = [1, 1]} : vector<80x896xf32> to vector<80x864xf32>
    %54 = vector.extract_strided_slice %52 {offsets = [0, 32], sizes = [80, 864], strides = [1, 1]} : vector<80x896xf32> to vector<80x864xf32>
    %55 = arith.maximumf %53, %54 : vector<80x864xf32>
    %56 = vector.extract_strided_slice %55 {offsets = [0, 0], sizes = [80, 863], strides = [1, 1]} : vector<80x864xf32> to vector<80x863xf32>
    %57 = vector.extract_strided_slice %55 {offsets = [0, 1], sizes = [80, 863], strides = [1, 1]} : vector<80x864xf32> to vector<80x863xf32>
    %58 = arith.maximumf %56, %57 : vector<80x863xf32>
    %c0_59 = arith.constant 0 : index
    %c0_60 = arith.constant 0 : index
    %59 = vector.load %arg3[%c0_59, %c0_60] : memref<863x342xf32, #tpu.memory_space<vmem>>, vector<863x342xf32>
    %cst_61 = arith.constant dense<0.000000e+00> : vector<80x342xf32>
    %60 = tpu.matmul %58, %59, %cst_61 {dimension_numbers = #tpu.dot_dimension_numbers<[1], [0], [0], [1], [0, 0, 1, 1], [], []>} : vector<80x863xf32>, vector<863x342xf32>, vector<80x342xf32> -> vector<80x342xf32>
    %c0_62 = arith.constant 0 : index
    %c0_63 = arith.constant 0 : index
    %61 = vector.load %arg4[%c0_62, %c0_63] : memref<80x342xf32, #tpu.memory_space<vmem>>, vector<80x342xf32>
    %62 = arith.addf %60, %61 : vector<80x342xf32>
    %cst_64 = arith.constant 0.000000e+00 : f32
    %63 = vector.broadcast %cst_64 : f32 to vector<80x342xf32>
    %64 = arith.maximumf %62, %63 : vector<80x342xf32>
    %cst_65 = arith.constant 0.000000e+00 : f32
    %65 = vector.broadcast %cst_65 : f32 to vector<80x252xf32>
    %c0_66 = arith.constant 0 : index
    %c0_67 = arith.constant 0 : index
    %66 = vector.load %arg5[%c0_66, %c0_67] : memref<2000x80xf32, #tpu.memory_space<vmem>>, vector<80x80xf32>
    %67 = vector.extract_strided_slice %64 {offsets = [0, 0], sizes = [80, 252], strides = [1, 1]} : vector<80x342xf32> to vector<80x252xf32>
    %cst_68 = arith.constant dense<0.000000e+00> : vector<80x252xf32>
    %68 = tpu.matmul %66, %67, %cst_68 {dimension_numbers = #tpu.dot_dimension_numbers<[1], [0], [0], [1], [0, 0, 1, 1], [], []>} : vector<80x80xf32>, vector<80x252xf32>, vector<80x252xf32> -> vector<80x252xf32>
    %69 = arith.addf %65, %68 : vector<80x252xf32>
    %c80_69 = arith.constant 80 : index
    %c0_70 = arith.constant 0 : index
    %70 = vector.load %arg5[%c80_69, %c0_70] : memref<2000x80xf32, #tpu.memory_space<vmem>>, vector<80x80xf32>
    %71 = vector.extract_strided_slice %64 {offsets = [0, 1], sizes = [80, 252], strides = [1, 1]} : vector<80x342xf32> to vector<80x252xf32>
    %cst_71 = arith.constant dense<0.000000e+00> : vector<80x252xf32>
    %72 = tpu.matmul %70, %71, %cst_71 {dimension_numbers = #tpu.dot_dimension_numbers<[1], [0], [0], [1], [0, 0, 1, 1], [], []>} : vector<80x80xf32>, vector<80x252xf32>, vector<80x252xf32> -> vector<80x252xf32>
    %73 = arith.addf %69, %72 : vector<80x252xf32>
    %c160_72 = arith.constant 160 : index
    %c0_73 = arith.constant 0 : index
    %74 = vector.load %arg5[%c160_72, %c0_73] : memref<2000x80xf32, #tpu.memory_space<vmem>>, vector<80x80xf32>
    %75 = vector.extract_strided_slice %64 {offsets = [0, 2], sizes = [80, 252], strides = [1, 1]} : vector<80x342xf32> to vector<80x252xf32>
    %cst_74 = arith.constant dense<0.000000e+00> : vector<80x252xf32>
    %76 = tpu.matmul %74, %75, %cst_74 {dimension_numbers = #tpu.dot_dimension_numbers<[1], [0], [0], [1], [0, 0, 1, 1], [], []>} : vector<80x80xf32>, vector<80x252xf32>, vector<80x252xf32> -> vector<80x252xf32>
    %77 = arith.addf %73, %76 : vector<80x252xf32>
    %c240 = arith.constant 240 : index
    %c0_75 = arith.constant 0 : index
    %78 = vector.load %arg5[%c240, %c0_75] : memref<2000x80xf32, #tpu.memory_space<vmem>>, vector<80x80xf32>
    %79 = vector.extract_strided_slice %64 {offsets = [0, 3], sizes = [80, 252], strides = [1, 1]} : vector<80x342xf32> to vector<80x252xf32>
    %cst_76 = arith.constant dense<0.000000e+00> : vector<80x252xf32>
    %80 = tpu.matmul %78, %79, %cst_76 {dimension_numbers = #tpu.dot_dimension_numbers<[1], [0], [0], [1], [0, 0, 1, 1], [], []>} : vector<80x80xf32>, vector<80x252xf32>, vector<80x252xf32> -> vector<80x252xf32>
    %81 = arith.addf %77, %80 : vector<80x252xf32>
    %c320 = arith.constant 320 : index
    %c0_77 = arith.constant 0 : index
    %82 = vector.load %arg5[%c320, %c0_77] : memref<2000x80xf32, #tpu.memory_space<vmem>>, vector<80x80xf32>
    %83 = vector.extract_strided_slice %64 {offsets = [0, 4], sizes = [80, 252], strides = [1, 1]} : vector<80x342xf32> to vector<80x252xf32>
    %cst_78 = arith.constant dense<0.000000e+00> : vector<80x252xf32>
    %84 = tpu.matmul %82, %83, %cst_78 {dimension_numbers = #tpu.dot_dimension_numbers<[1], [0], [0], [1], [0, 0, 1, 1], [], []>} : vector<80x80xf32>, vector<80x252xf32>, vector<80x252xf32> -> vector<80x252xf32>
    %85 = arith.addf %81, %84 : vector<80x252xf32>
    %c400 = arith.constant 400 : index
    %c0_79 = arith.constant 0 : index
    %86 = vector.load %arg5[%c400, %c0_79] : memref<2000x80xf32, #tpu.memory_space<vmem>>, vector<80x80xf32>
    %87 = vector.extract_strided_slice %64 {offsets = [0, 18], sizes = [80, 252], strides = [1, 1]} : vector<80x342xf32> to vector<80x252xf32>
    %cst_80 = arith.constant dense<0.000000e+00> : vector<80x252xf32>
    %88 = tpu.matmul %86, %87, %cst_80 {dimension_numbers = #tpu.dot_dimension_numbers<[1], [0], [0], [1], [0, 0, 1, 1], [], []>} : vector<80x80xf32>, vector<80x252xf32>, vector<80x252xf32> -> vector<80x252xf32>
    %89 = arith.addf %85, %88 : vector<80x252xf32>
    %c480 = arith.constant 480 : index
    %c0_81 = arith.constant 0 : index
    %90 = vector.load %arg5[%c480, %c0_81] : memref<2000x80xf32, #tpu.memory_space<vmem>>, vector<80x80xf32>
    %91 = vector.extract_strided_slice %64 {offsets = [0, 19], sizes = [80, 252], strides = [1, 1]} : vector<80x342xf32> to vector<80x252xf32>
    %cst_82 = arith.constant dense<0.000000e+00> : vector<80x252xf32>
    %92 = tpu.matmul %90, %91, %cst_82 {dimension_numbers = #tpu.dot_dimension_numbers<[1], [0], [0], [1], [0, 0, 1, 1], [], []>} : vector<80x80xf32>, vector<80x252xf32>, vector<80x252xf32> -> vector<80x252xf32>
    %93 = arith.addf %89, %92 : vector<80x252xf32>
    %c560 = arith.constant 560 : index
    %c0_83 = arith.constant 0 : index
    %94 = vector.load %arg5[%c560, %c0_83] : memref<2000x80xf32, #tpu.memory_space<vmem>>, vector<80x80xf32>
    %95 = vector.extract_strided_slice %64 {offsets = [0, 20], sizes = [80, 252], strides = [1, 1]} : vector<80x342xf32> to vector<80x252xf32>
    %cst_84 = arith.constant dense<0.000000e+00> : vector<80x252xf32>
    %96 = tpu.matmul %94, %95, %cst_84 {dimension_numbers = #tpu.dot_dimension_numbers<[1], [0], [0], [1], [0, 0, 1, 1], [], []>} : vector<80x80xf32>, vector<80x252xf32>, vector<80x252xf32> -> vector<80x252xf32>
    %97 = arith.addf %93, %96 : vector<80x252xf32>
    %c640 = arith.constant 640 : index
    %c0_85 = arith.constant 0 : index
    %98 = vector.load %arg5[%c640, %c0_85] : memref<2000x80xf32, #tpu.memory_space<vmem>>, vector<80x80xf32>
    %99 = vector.extract_strided_slice %64 {offsets = [0, 21], sizes = [80, 252], strides = [1, 1]} : vector<80x342xf32> to vector<80x252xf32>
    %cst_86 = arith.constant dense<0.000000e+00> : vector<80x252xf32>
    %100 = tpu.matmul %98, %99, %cst_86 {dimension_numbers = #tpu.dot_dimension_numbers<[1], [0], [0], [1], [0, 0, 1, 1], [], []>} : vector<80x80xf32>, vector<80x252xf32>, vector<80x252xf32> -> vector<80x252xf32>
    %101 = arith.addf %97, %100 : vector<80x252xf32>
    %c720 = arith.constant 720 : index
    %c0_87 = arith.constant 0 : index
    %102 = vector.load %arg5[%c720, %c0_87] : memref<2000x80xf32, #tpu.memory_space<vmem>>, vector<80x80xf32>
    %103 = vector.extract_strided_slice %64 {offsets = [0, 22], sizes = [80, 252], strides = [1, 1]} : vector<80x342xf32> to vector<80x252xf32>
    %cst_88 = arith.constant dense<0.000000e+00> : vector<80x252xf32>
    %104 = tpu.matmul %102, %103, %cst_88 {dimension_numbers = #tpu.dot_dimension_numbers<[1], [0], [0], [1], [0, 0, 1, 1], [], []>} : vector<80x80xf32>, vector<80x252xf32>, vector<80x252xf32> -> vector<80x252xf32>
    %105 = arith.addf %101, %104 : vector<80x252xf32>
    %c800 = arith.constant 800 : index
    %c0_89 = arith.constant 0 : index
    %106 = vector.load %arg5[%c800, %c0_89] : memref<2000x80xf32, #tpu.memory_space<vmem>>, vector<80x80xf32>
    %107 = vector.extract_strided_slice %64 {offsets = [0, 36], sizes = [80, 252], strides = [1, 1]} : vector<80x342xf32> to vector<80x252xf32>
    %cst_90 = arith.constant dense<0.000000e+00> : vector<80x252xf32>
    %108 = tpu.matmul %106, %107, %cst_90 {dimension_numbers = #tpu.dot_dimension_numbers<[1], [0], [0], [1], [0, 0, 1, 1], [], []>} : vector<80x80xf32>, vector<80x252xf32>, vector<80x252xf32> -> vector<80x252xf32>
    %109 = arith.addf %105, %108 : vector<80x252xf32>
    %c880 = arith.constant 880 : index
    %c0_91 = arith.constant 0 : index
    %110 = vector.load %arg5[%c880, %c0_91] : memref<2000x80xf32, #tpu.memory_space<vmem>>, vector<80x80xf32>
    %111 = vector.extract_strided_slice %64 {offsets = [0, 37], sizes = [80, 252], strides = [1, 1]} : vector<80x342xf32> to vector<80x252xf32>
    %cst_92 = arith.constant dense<0.000000e+00> : vector<80x252xf32>
    %112 = tpu.matmul %110, %111, %cst_92 {dimension_numbers = #tpu.dot_dimension_numbers<[1], [0], [0], [1], [0, 0, 1, 1], [], []>} : vector<80x80xf32>, vector<80x252xf32>, vector<80x252xf32> -> vector<80x252xf32>
    %113 = arith.addf %109, %112 : vector<80x252xf32>
    %c960 = arith.constant 960 : index
    %c0_93 = arith.constant 0 : index
    %114 = vector.load %arg5[%c960, %c0_93] : memref<2000x80xf32, #tpu.memory_space<vmem>>, vector<80x80xf32>
    %115 = vector.extract_strided_slice %64 {offsets = [0, 38], sizes = [80, 252], strides = [1, 1]} : vector<80x342xf32> to vector<80x252xf32>
    %cst_94 = arith.constant dense<0.000000e+00> : vector<80x252xf32>
    %116 = tpu.matmul %114, %115, %cst_94 {dimension_numbers = #tpu.dot_dimension_numbers<[1], [0], [0], [1], [0, 0, 1, 1], [], []>} : vector<80x80xf32>, vector<80x252xf32>, vector<80x252xf32> -> vector<80x252xf32>
    %117 = arith.addf %113, %116 : vector<80x252xf32>
    %c1040 = arith.constant 1040 : index
    %c0_95 = arith.constant 0 : index
    %118 = vector.load %arg5[%c1040, %c0_95] : memref<2000x80xf32, #tpu.memory_space<vmem>>, vector<80x80xf32>
    %119 = vector.extract_strided_slice %64 {offsets = [0, 39], sizes = [80, 252], strides = [1, 1]} : vector<80x342xf32> to vector<80x252xf32>
    %cst_96 = arith.constant dense<0.000000e+00> : vector<80x252xf32>
    %120 = tpu.matmul %118, %119, %cst_96 {dimension_numbers = #tpu.dot_dimension_numbers<[1], [0], [0], [1], [0, 0, 1, 1], [], []>} : vector<80x80xf32>, vector<80x252xf32>, vector<80x252xf32> -> vector<80x252xf32>
    %121 = arith.addf %117, %120 : vector<80x252xf32>
    %c1120 = arith.constant 1120 : index
    %c0_97 = arith.constant 0 : index
    %122 = vector.load %arg5[%c1120, %c0_97] : memref<2000x80xf32, #tpu.memory_space<vmem>>, vector<80x80xf32>
    %123 = vector.extract_strided_slice %64 {offsets = [0, 40], sizes = [80, 252], strides = [1, 1]} : vector<80x342xf32> to vector<80x252xf32>
    %cst_98 = arith.constant dense<0.000000e+00> : vector<80x252xf32>
    %124 = tpu.matmul %122, %123, %cst_98 {dimension_numbers = #tpu.dot_dimension_numbers<[1], [0], [0], [1], [0, 0, 1, 1], [], []>} : vector<80x80xf32>, vector<80x252xf32>, vector<80x252xf32> -> vector<80x252xf32>
    %125 = arith.addf %121, %124 : vector<80x252xf32>
    %c1200 = arith.constant 1200 : index
    %c0_99 = arith.constant 0 : index
    %126 = vector.load %arg5[%c1200, %c0_99] : memref<2000x80xf32, #tpu.memory_space<vmem>>, vector<80x80xf32>
    %127 = vector.extract_strided_slice %64 {offsets = [0, 54], sizes = [80, 252], strides = [1, 1]} : vector<80x342xf32> to vector<80x252xf32>
    %cst_100 = arith.constant dense<0.000000e+00> : vector<80x252xf32>
    %128 = tpu.matmul %126, %127, %cst_100 {dimension_numbers = #tpu.dot_dimension_numbers<[1], [0], [0], [1], [0, 0, 1, 1], [], []>} : vector<80x80xf32>, vector<80x252xf32>, vector<80x252xf32> -> vector<80x252xf32>
    %129 = arith.addf %125, %128 : vector<80x252xf32>
    %c1280 = arith.constant 1280 : index
    %c0_101 = arith.constant 0 : index
    %130 = vector.load %arg5[%c1280, %c0_101] : memref<2000x80xf32, #tpu.memory_space<vmem>>, vector<80x80xf32>
    %131 = vector.extract_strided_slice %64 {offsets = [0, 55], sizes = [80, 252], strides = [1, 1]} : vector<80x342xf32> to vector<80x252xf32>
    %cst_102 = arith.constant dense<0.000000e+00> : vector<80x252xf32>
    %132 = tpu.matmul %130, %131, %cst_102 {dimension_numbers = #tpu.dot_dimension_numbers<[1], [0], [0], [1], [0, 0, 1, 1], [], []>} : vector<80x80xf32>, vector<80x252xf32>, vector<80x252xf32> -> vector<80x252xf32>
    %133 = arith.addf %129, %132 : vector<80x252xf32>
    %c1360 = arith.constant 1360 : index
    %c0_103 = arith.constant 0 : index
    %134 = vector.load %arg5[%c1360, %c0_103] : memref<2000x80xf32, #tpu.memory_space<vmem>>, vector<80x80xf32>
    %135 = vector.extract_strided_slice %64 {offsets = [0, 56], sizes = [80, 252], strides = [1, 1]} : vector<80x342xf32> to vector<80x252xf32>
    %cst_104 = arith.constant dense<0.000000e+00> : vector<80x252xf32>
    %136 = tpu.matmul %134, %135, %cst_104 {dimension_numbers = #tpu.dot_dimension_numbers<[1], [0], [0], [1], [0, 0, 1, 1], [], []>} : vector<80x80xf32>, vector<80x252xf32>, vector<80x252xf32> -> vector<80x252xf32>
    %137 = arith.addf %133, %136 : vector<80x252xf32>
    %c1440 = arith.constant 1440 : index
    %c0_105 = arith.constant 0 : index
    %138 = vector.load %arg5[%c1440, %c0_105] : memref<2000x80xf32, #tpu.memory_space<vmem>>, vector<80x80xf32>
    %139 = vector.extract_strided_slice %64 {offsets = [0, 57], sizes = [80, 252], strides = [1, 1]} : vector<80x342xf32> to vector<80x252xf32>
    %cst_106 = arith.constant dense<0.000000e+00> : vector<80x252xf32>
    %140 = tpu.matmul %138, %139, %cst_106 {dimension_numbers = #tpu.dot_dimension_numbers<[1], [0], [0], [1], [0, 0, 1, 1], [], []>} : vector<80x80xf32>, vector<80x252xf32>, vector<80x252xf32> -> vector<80x252xf32>
    %141 = arith.addf %137, %140 : vector<80x252xf32>
    %c1520 = arith.constant 1520 : index
    %c0_107 = arith.constant 0 : index
    %142 = vector.load %arg5[%c1520, %c0_107] : memref<2000x80xf32, #tpu.memory_space<vmem>>, vector<80x80xf32>
    %143 = vector.extract_strided_slice %64 {offsets = [0, 58], sizes = [80, 252], strides = [1, 1]} : vector<80x342xf32> to vector<80x252xf32>
    %cst_108 = arith.constant dense<0.000000e+00> : vector<80x252xf32>
    %144 = tpu.matmul %142, %143, %cst_108 {dimension_numbers = #tpu.dot_dimension_numbers<[1], [0], [0], [1], [0, 0, 1, 1], [], []>} : vector<80x80xf32>, vector<80x252xf32>, vector<80x252xf32> -> vector<80x252xf32>
    %145 = arith.addf %141, %144 : vector<80x252xf32>
    %c1600 = arith.constant 1600 : index
    %c0_109 = arith.constant 0 : index
    %146 = vector.load %arg5[%c1600, %c0_109] : memref<2000x80xf32, #tpu.memory_space<vmem>>, vector<80x80xf32>
    %147 = vector.extract_strided_slice %64 {offsets = [0, 72], sizes = [80, 252], strides = [1, 1]} : vector<80x342xf32> to vector<80x252xf32>
    %cst_110 = arith.constant dense<0.000000e+00> : vector<80x252xf32>
    %148 = tpu.matmul %146, %147, %cst_110 {dimension_numbers = #tpu.dot_dimension_numbers<[1], [0], [0], [1], [0, 0, 1, 1], [], []>} : vector<80x80xf32>, vector<80x252xf32>, vector<80x252xf32> -> vector<80x252xf32>
    %149 = arith.addf %145, %148 : vector<80x252xf32>
    %c1680 = arith.constant 1680 : index
    %c0_111 = arith.constant 0 : index
    %150 = vector.load %arg5[%c1680, %c0_111] : memref<2000x80xf32, #tpu.memory_space<vmem>>, vector<80x80xf32>
    %151 = vector.extract_strided_slice %64 {offsets = [0, 73], sizes = [80, 252], strides = [1, 1]} : vector<80x342xf32> to vector<80x252xf32>
    %cst_112 = arith.constant dense<0.000000e+00> : vector<80x252xf32>
    %152 = tpu.matmul %150, %151, %cst_112 {dimension_numbers = #tpu.dot_dimension_numbers<[1], [0], [0], [1], [0, 0, 1, 1], [], []>} : vector<80x80xf32>, vector<80x252xf32>, vector<80x252xf32> -> vector<80x252xf32>
    %153 = arith.addf %149, %152 : vector<80x252xf32>
    %c1760 = arith.constant 1760 : index
    %c0_113 = arith.constant 0 : index
    %154 = vector.load %arg5[%c1760, %c0_113] : memref<2000x80xf32, #tpu.memory_space<vmem>>, vector<80x80xf32>
    %155 = vector.extract_strided_slice %64 {offsets = [0, 74], sizes = [80, 252], strides = [1, 1]} : vector<80x342xf32> to vector<80x252xf32>
    %cst_114 = arith.constant dense<0.000000e+00> : vector<80x252xf32>
    %156 = tpu.matmul %154, %155, %cst_114 {dimension_numbers = #tpu.dot_dimension_numbers<[1], [0], [0], [1], [0, 0, 1, 1], [], []>} : vector<80x80xf32>, vector<80x252xf32>, vector<80x252xf32> -> vector<80x252xf32>
    %157 = arith.addf %153, %156 : vector<80x252xf32>
    %c1840 = arith.constant 1840 : index
    %c0_115 = arith.constant 0 : index
    %158 = vector.load %arg5[%c1840, %c0_115] : memref<2000x80xf32, #tpu.memory_space<vmem>>, vector<80x80xf32>
    %159 = vector.extract_strided_slice %64 {offsets = [0, 75], sizes = [80, 252], strides = [1, 1]} : vector<80x342xf32> to vector<80x252xf32>
    %cst_116 = arith.constant dense<0.000000e+00> : vector<80x252xf32>
    %160 = tpu.matmul %158, %159, %cst_116 {dimension_numbers = #tpu.dot_dimension_numbers<[1], [0], [0], [1], [0, 0, 1, 1], [], []>} : vector<80x80xf32>, vector<80x252xf32>, vector<80x252xf32> -> vector<80x252xf32>
    %161 = arith.addf %157, %160 : vector<80x252xf32>
    %c1920 = arith.constant 1920 : index
    %c0_117 = arith.constant 0 : index
    %162 = vector.load %arg5[%c1920, %c0_117] : memref<2000x80xf32, #tpu.memory_space<vmem>>, vector<80x80xf32>
    %163 = vector.extract_strided_slice %64 {offsets = [0, 76], sizes = [80, 252], strides = [1, 1]} : vector<80x342xf32> to vector<80x252xf32>
    %cst_118 = arith.constant dense<0.000000e+00> : vector<80x252xf32>
    %164 = tpu.matmul %162, %163, %cst_118 {dimension_numbers = #tpu.dot_dimension_numbers<[1], [0], [0], [1], [0, 0, 1, 1], [], []>} : vector<80x80xf32>, vector<80x252xf32>, vector<80x252xf32> -> vector<80x252xf32>
    %165 = arith.addf %161, %164 : vector<80x252xf32>
    %166 = vector.extract_strided_slice %165 {offsets = [0, 0], sizes = [80, 234], strides = [1, 1]} : vector<80x252xf32> to vector<80x234xf32>
    %167 = vector.extract_strided_slice %165 {offsets = [0, 18], sizes = [80, 234], strides = [1, 1]} : vector<80x252xf32> to vector<80x234xf32>
    %168 = arith.maximumf %166, %167 : vector<80x234xf32>
    %169 = vector.extract_strided_slice %168 {offsets = [0, 0], sizes = [80, 233], strides = [1, 1]} : vector<80x234xf32> to vector<80x233xf32>
    %170 = vector.extract_strided_slice %168 {offsets = [0, 1], sizes = [80, 233], strides = [1, 1]} : vector<80x234xf32> to vector<80x233xf32>
    %171 = arith.maximumf %169, %170 : vector<80x233xf32>
    %c0_119 = arith.constant 0 : index
    %c0_120 = arith.constant 0 : index
    %172 = vector.load %arg7[%c0_119, %c0_120] : memref<233x49xf32, #tpu.memory_space<vmem>>, vector<233x49xf32>
    %cst_121 = arith.constant dense<0.000000e+00> : vector<80x49xf32>
    %173 = tpu.matmul %171, %172, %cst_121 {dimension_numbers = #tpu.dot_dimension_numbers<[1], [0], [0], [1], [0, 0, 1, 1], [], []>} : vector<80x233xf32>, vector<233x49xf32>, vector<80x49xf32> -> vector<80x49xf32>
    %c0_122 = arith.constant 0 : index
    %c0_123 = arith.constant 0 : index
    %174 = vector.load %arg6[%c0_122, %c0_123] : memref<80x1xf32, #tpu.memory_space<vmem>>, vector<80x1xf32>
    %175 = vector.broadcast %174 : vector<80x1xf32> to vector<80x49xf32>
    %176 = arith.addf %173, %175 : vector<80x49xf32>
    %cst_124 = arith.constant 0.000000e+00 : f32
    %177 = vector.broadcast %cst_124 : f32 to vector<80x49xf32>
    %178 = arith.maximumf %176, %177 : vector<80x49xf32>
    %cst_125 = arith.constant 0.000000e+00 : f32
    %179 = vector.broadcast %cst_125 : f32 to vector<8x50xf32>
    %180 = vector.extract_strided_slice %178 {offsets = [0, 0], sizes = [8, 49], strides = [1, 1]} : vector<80x49xf32> to vector<8x49xf32>
    %c0_126 = arith.constant 0 : index
    %c0_127 = arith.constant 0 : index
    %181 = vector.load %arg8[%c0_126, %c0_127] : memref<560x50xf32, #tpu.memory_space<vmem>>, vector<49x50xf32>
    %cst_128 = arith.constant dense<0.000000e+00> : vector<8x50xf32>
    %182 = tpu.matmul %180, %181, %cst_128 {dimension_numbers = #tpu.dot_dimension_numbers<[1], [0], [0], [1], [0, 0, 1, 1], [], []>} : vector<8x49xf32>, vector<49x50xf32>, vector<8x50xf32> -> vector<8x50xf32>
    %183 = arith.addf %179, %182 : vector<8x50xf32>
    %184 = vector.extract_strided_slice %178 {offsets = [8, 0], sizes = [8, 49], strides = [1, 1]} : vector<80x49xf32> to vector<8x49xf32>
    %c56_129 = arith.constant 56 : index
    %c0_130 = arith.constant 0 : index
    %185 = vector.load %arg8[%c56_129, %c0_130] : memref<560x50xf32, #tpu.memory_space<vmem>>, vector<49x50xf32>
    %cst_131 = arith.constant dense<0.000000e+00> : vector<8x50xf32>
    %186 = tpu.matmul %184, %185, %cst_131 {dimension_numbers = #tpu.dot_dimension_numbers<[1], [0], [0], [1], [0, 0, 1, 1], [], []>} : vector<8x49xf32>, vector<49x50xf32>, vector<8x50xf32> -> vector<8x50xf32>
    %187 = arith.addf %183, %186 : vector<8x50xf32>
    %188 = vector.extract_strided_slice %178 {offsets = [16, 0], sizes = [8, 49], strides = [1, 1]} : vector<80x49xf32> to vector<8x49xf32>
    %c112_132 = arith.constant 112 : index
    %c0_133 = arith.constant 0 : index
    %189 = vector.load %arg8[%c112_132, %c0_133] : memref<560x50xf32, #tpu.memory_space<vmem>>, vector<49x50xf32>
    %cst_134 = arith.constant dense<0.000000e+00> : vector<8x50xf32>
    %190 = tpu.matmul %188, %189, %cst_134 {dimension_numbers = #tpu.dot_dimension_numbers<[1], [0], [0], [1], [0, 0, 1, 1], [], []>} : vector<8x49xf32>, vector<49x50xf32>, vector<8x50xf32> -> vector<8x50xf32>
    %191 = arith.addf %187, %190 : vector<8x50xf32>
    %192 = vector.extract_strided_slice %178 {offsets = [24, 0], sizes = [8, 49], strides = [1, 1]} : vector<80x49xf32> to vector<8x49xf32>
    %c168_135 = arith.constant 168 : index
    %c0_136 = arith.constant 0 : index
    %193 = vector.load %arg8[%c168_135, %c0_136] : memref<560x50xf32, #tpu.memory_space<vmem>>, vector<49x50xf32>
    %cst_137 = arith.constant dense<0.000000e+00> : vector<8x50xf32>
    %194 = tpu.matmul %192, %193, %cst_137 {dimension_numbers = #tpu.dot_dimension_numbers<[1], [0], [0], [1], [0, 0, 1, 1], [], []>} : vector<8x49xf32>, vector<49x50xf32>, vector<8x50xf32> -> vector<8x50xf32>
    %195 = arith.addf %191, %194 : vector<8x50xf32>
    %196 = vector.extract_strided_slice %178 {offsets = [32, 0], sizes = [8, 49], strides = [1, 1]} : vector<80x49xf32> to vector<8x49xf32>
    %c224 = arith.constant 224 : index
    %c0_138 = arith.constant 0 : index
    %197 = vector.load %arg8[%c224, %c0_138] : memref<560x50xf32, #tpu.memory_space<vmem>>, vector<49x50xf32>
    %cst_139 = arith.constant dense<0.000000e+00> : vector<8x50xf32>
    %198 = tpu.matmul %196, %197, %cst_139 {dimension_numbers = #tpu.dot_dimension_numbers<[1], [0], [0], [1], [0, 0, 1, 1], [], []>} : vector<8x49xf32>, vector<49x50xf32>, vector<8x50xf32> -> vector<8x50xf32>
    %199 = arith.addf %195, %198 : vector<8x50xf32>
    %200 = vector.extract_strided_slice %178 {offsets = [40, 0], sizes = [8, 49], strides = [1, 1]} : vector<80x49xf32> to vector<8x49xf32>
    %c280 = arith.constant 280 : index
    %c0_140 = arith.constant 0 : index
    %201 = vector.load %arg8[%c280, %c0_140] : memref<560x50xf32, #tpu.memory_space<vmem>>, vector<49x50xf32>
    %cst_141 = arith.constant dense<0.000000e+00> : vector<8x50xf32>
    %202 = tpu.matmul %200, %201, %cst_141 {dimension_numbers = #tpu.dot_dimension_numbers<[1], [0], [0], [1], [0, 0, 1, 1], [], []>} : vector<8x49xf32>, vector<49x50xf32>, vector<8x50xf32> -> vector<8x50xf32>
    %203 = arith.addf %199, %202 : vector<8x50xf32>
    %204 = vector.extract_strided_slice %178 {offsets = [48, 0], sizes = [8, 49], strides = [1, 1]} : vector<80x49xf32> to vector<8x49xf32>
    %c336 = arith.constant 336 : index
    %c0_142 = arith.constant 0 : index
    %205 = vector.load %arg8[%c336, %c0_142] : memref<560x50xf32, #tpu.memory_space<vmem>>, vector<49x50xf32>
    %cst_143 = arith.constant dense<0.000000e+00> : vector<8x50xf32>
    %206 = tpu.matmul %204, %205, %cst_143 {dimension_numbers = #tpu.dot_dimension_numbers<[1], [0], [0], [1], [0, 0, 1, 1], [], []>} : vector<8x49xf32>, vector<49x50xf32>, vector<8x50xf32> -> vector<8x50xf32>
    %207 = arith.addf %203, %206 : vector<8x50xf32>
    %208 = vector.extract_strided_slice %178 {offsets = [56, 0], sizes = [8, 49], strides = [1, 1]} : vector<80x49xf32> to vector<8x49xf32>
    %c392 = arith.constant 392 : index
    %c0_144 = arith.constant 0 : index
    %209 = vector.load %arg8[%c392, %c0_144] : memref<560x50xf32, #tpu.memory_space<vmem>>, vector<49x50xf32>
    %cst_145 = arith.constant dense<0.000000e+00> : vector<8x50xf32>
    %210 = tpu.matmul %208, %209, %cst_145 {dimension_numbers = #tpu.dot_dimension_numbers<[1], [0], [0], [1], [0, 0, 1, 1], [], []>} : vector<8x49xf32>, vector<49x50xf32>, vector<8x50xf32> -> vector<8x50xf32>
    %211 = arith.addf %207, %210 : vector<8x50xf32>
    %212 = vector.extract_strided_slice %178 {offsets = [64, 0], sizes = [8, 49], strides = [1, 1]} : vector<80x49xf32> to vector<8x49xf32>
    %c448 = arith.constant 448 : index
    %c0_146 = arith.constant 0 : index
    %213 = vector.load %arg8[%c448, %c0_146] : memref<560x50xf32, #tpu.memory_space<vmem>>, vector<49x50xf32>
    %cst_147 = arith.constant dense<0.000000e+00> : vector<8x50xf32>
    %214 = tpu.matmul %212, %213, %cst_147 {dimension_numbers = #tpu.dot_dimension_numbers<[1], [0], [0], [1], [0, 0, 1, 1], [], []>} : vector<8x49xf32>, vector<49x50xf32>, vector<8x50xf32> -> vector<8x50xf32>
    %215 = arith.addf %211, %214 : vector<8x50xf32>
    %216 = vector.extract_strided_slice %178 {offsets = [72, 0], sizes = [8, 49], strides = [1, 1]} : vector<80x49xf32> to vector<8x49xf32>
    %c504 = arith.constant 504 : index
    %c0_148 = arith.constant 0 : index
    %217 = vector.load %arg8[%c504, %c0_148] : memref<560x50xf32, #tpu.memory_space<vmem>>, vector<49x50xf32>
    %cst_149 = arith.constant dense<0.000000e+00> : vector<8x50xf32>
    %218 = tpu.matmul %216, %217, %cst_149 {dimension_numbers = #tpu.dot_dimension_numbers<[1], [0], [0], [1], [0, 0, 1, 1], [], []>} : vector<8x49xf32>, vector<49x50xf32>, vector<8x50xf32> -> vector<8x50xf32>
    %219 = arith.addf %215, %218 : vector<8x50xf32>
    %c0_150 = arith.constant 0 : index
    %c0_151 = arith.constant 0 : index
    %220 = vector.load %arg9[%c0_150, %c0_151] : memref<1x50xf32, #tpu.memory_space<vmem>>, vector<1x50xf32>
    %221 = vector.broadcast %220 : vector<1x50xf32> to vector<8x50xf32>
    %222 = arith.addf %219, %221 : vector<8x50xf32>
    %c0_152 = arith.constant 0 : index
    %c0_153 = arith.constant 0 : index
    %223 = vector.load %arg10[%c0_152, %c0_153] : memref<50x10xf32, #tpu.memory_space<vmem>>, vector<50x10xf32>
    %cst_154 = arith.constant dense<0.000000e+00> : vector<8x10xf32>
    %224 = tpu.matmul %222, %223, %cst_154 {dimension_numbers = #tpu.dot_dimension_numbers<[1], [0], [0], [1], [0, 0, 1, 1], [], []>} : vector<8x50xf32>, vector<50x10xf32>, vector<8x10xf32> -> vector<8x10xf32>
    %c0_155 = arith.constant 0 : index
    %c0_156 = arith.constant 0 : index
    %225 = vector.load %arg11[%c0_155, %c0_156] : memref<1x10xf32, #tpu.memory_space<vmem>>, vector<1x10xf32>
    %226 = vector.broadcast %225 : vector<1x10xf32> to vector<8x10xf32>
    %227 = arith.addf %224, %226 : vector<8x10xf32>
    %cst_157 = arith.constant dense<0xFF800000> : vector<8xf32>
    %228 = vector.multi_reduction <maximumf>, %227, %cst_157 [1] : vector<8x10xf32> to vector<8xf32>
    %229 = vector.shape_cast %228 : vector<8xf32> to vector<8x1xf32>
    %230 = vector.broadcast %229 : vector<8x1xf32> to vector<8x10xf32>
    %231 = arith.subf %227, %230 : vector<8x10xf32>
    %232 = math.exp %231 : vector<8x10xf32>
    %cst_158 = arith.constant dense<0.000000e+00> : vector<8xf32>
    %233 = vector.multi_reduction <add>, %232, %cst_158 [1] : vector<8x10xf32> to vector<8xf32>
    %234 = vector.shape_cast %233 : vector<8xf32> to vector<8x1xf32>
    %235 = tpu.reciprocal %234 {approx = true} : vector<8x1xf32> -> vector<8x1xf32>
    %236 = vector.broadcast %235 : vector<8x1xf32> to vector<8x10xf32>
    %237 = arith.mulf %232, %236 : vector<8x10xf32>
    %c0_159 = arith.constant 0 : index
    %c0_160 = arith.constant 0 : index
    %238 = vector.load %arg12[%c0_159, %c0_160] : memref<50x4xf32, #tpu.memory_space<vmem>>, vector<50x4xf32>
    %cst_161 = arith.constant dense<0.000000e+00> : vector<8x4xf32>
    %239 = tpu.matmul %222, %238, %cst_161 {dimension_numbers = #tpu.dot_dimension_numbers<[1], [0], [0], [1], [0, 0, 1, 1], [], []>} : vector<8x50xf32>, vector<50x4xf32>, vector<8x4xf32> -> vector<8x4xf32>
    %c0_162 = arith.constant 0 : index
    %c0_163 = arith.constant 0 : index
    %240 = vector.load %arg13[%c0_162, %c0_163] : memref<1x4xf32, #tpu.memory_space<vmem>>, vector<1x4xf32>
    %241 = vector.broadcast %240 : vector<1x4xf32> to vector<8x4xf32>
    %242 = arith.addf %239, %241 : vector<8x4xf32>
    %cst_164 = arith.constant dense<0xFF800000> : vector<8xf32>
    %243 = vector.multi_reduction <maximumf>, %242, %cst_164 [1] : vector<8x4xf32> to vector<8xf32>
    %244 = vector.shape_cast %243 : vector<8xf32> to vector<8x1xf32>
    %245 = vector.broadcast %244 : vector<8x1xf32> to vector<8x4xf32>
    %246 = arith.subf %242, %245 : vector<8x4xf32>
    %247 = math.exp %246 : vector<8x4xf32>
    %cst_165 = arith.constant dense<0.000000e+00> : vector<8xf32>
    %248 = vector.multi_reduction <add>, %247, %cst_165 [1] : vector<8x4xf32> to vector<8xf32>
    %249 = vector.shape_cast %248 : vector<8xf32> to vector<8x1xf32>
    %250 = tpu.reciprocal %249 {approx = true} : vector<8x1xf32> -> vector<8x1xf32>
    %251 = vector.broadcast %250 : vector<8x1xf32> to vector<8x4xf32>
    %252 = arith.mulf %247, %251 : vector<8x4xf32>
    %c0_166 = arith.constant 0 : index
    %c0_167 = arith.constant 0 : index
    %253 = vector.load %arg14[%c0_166, %c0_167] : memref<50x1xf32, #tpu.memory_space<vmem>>, vector<50x1xf32>
    %cst_168 = arith.constant dense<0.000000e+00> : vector<8x1xf32>
    %254 = tpu.matmul %222, %253, %cst_168 {dimension_numbers = #tpu.dot_dimension_numbers<[1], [0], [0], [1], [0, 0, 1, 1], [], []>} : vector<8x50xf32>, vector<50x1xf32>, vector<8x1xf32> -> vector<8x1xf32>
    %c0_169 = arith.constant 0 : index
    %c0_170 = arith.constant 0 : index
    %255 = vector.load %arg15[%c0_169, %c0_170] : memref<1x1xf32, #tpu.memory_space<vmem>>, vector<1x1xf32>
    %256 = vector.broadcast %255 : vector<1x1xf32> to vector<8x1xf32>
    %257 = arith.addf %254, %256 : vector<8x1xf32>
    %258 = vector.extract_strided_slice %237 {offsets = [0, 0], sizes = [8, 1], strides = [1, 1]} : vector<8x10xf32> to vector<8x1xf32>
    %259 = vector.broadcast %258 : vector<8x1xf32> to vector<8x4xf32>
    %260 = arith.mulf %259, %252 : vector<8x4xf32>
    %261 = vector.extract_strided_slice %237 {offsets = [0, 1], sizes = [8, 1], strides = [1, 1]} : vector<8x10xf32> to vector<8x1xf32>
    %262 = vector.broadcast %261 : vector<8x1xf32> to vector<8x4xf32>
    %263 = arith.mulf %262, %252 : vector<8x4xf32>
    %264 = vector.extract_strided_slice %237 {offsets = [0, 2], sizes = [8, 1], strides = [1, 1]} : vector<8x10xf32> to vector<8x1xf32>
    %265 = vector.broadcast %264 : vector<8x1xf32> to vector<8x4xf32>
    %266 = arith.mulf %265, %252 : vector<8x4xf32>
    %267 = vector.extract_strided_slice %237 {offsets = [0, 3], sizes = [8, 1], strides = [1, 1]} : vector<8x10xf32> to vector<8x1xf32>
    %268 = vector.broadcast %267 : vector<8x1xf32> to vector<8x4xf32>
    %269 = arith.mulf %268, %252 : vector<8x4xf32>
    %270 = vector.extract_strided_slice %237 {offsets = [0, 4], sizes = [8, 1], strides = [1, 1]} : vector<8x10xf32> to vector<8x1xf32>
    %271 = vector.broadcast %270 : vector<8x1xf32> to vector<8x4xf32>
    %272 = arith.mulf %271, %252 : vector<8x4xf32>
    %273 = vector.extract_strided_slice %237 {offsets = [0, 5], sizes = [8, 1], strides = [1, 1]} : vector<8x10xf32> to vector<8x1xf32>
    %274 = vector.broadcast %273 : vector<8x1xf32> to vector<8x4xf32>
    %275 = arith.mulf %274, %252 : vector<8x4xf32>
    %276 = vector.extract_strided_slice %237 {offsets = [0, 6], sizes = [8, 1], strides = [1, 1]} : vector<8x10xf32> to vector<8x1xf32>
    %277 = vector.broadcast %276 : vector<8x1xf32> to vector<8x4xf32>
    %278 = arith.mulf %277, %252 : vector<8x4xf32>
    %279 = vector.extract_strided_slice %237 {offsets = [0, 7], sizes = [8, 1], strides = [1, 1]} : vector<8x10xf32> to vector<8x1xf32>
    %280 = vector.broadcast %279 : vector<8x1xf32> to vector<8x4xf32>
    %281 = arith.mulf %280, %252 : vector<8x4xf32>
    %282 = vector.extract_strided_slice %237 {offsets = [0, 8], sizes = [8, 1], strides = [1, 1]} : vector<8x10xf32> to vector<8x1xf32>
    %283 = vector.broadcast %282 : vector<8x1xf32> to vector<8x4xf32>
    %284 = arith.mulf %283, %252 : vector<8x4xf32>
    %285 = vector.extract_strided_slice %237 {offsets = [0, 9], sizes = [8, 1], strides = [1, 1]} : vector<8x10xf32> to vector<8x1xf32>
    %286 = vector.broadcast %285 : vector<8x1xf32> to vector<8x4xf32>
    %287 = arith.mulf %286, %252 : vector<8x4xf32>
    %288 = tpu.concatenate %260, %263, %266, %269, %272, %275, %278, %281, %284, %287 in 1 : vector<8x4xf32>, vector<8x4xf32>, vector<8x4xf32>, vector<8x4xf32>, vector<8x4xf32>, vector<8x4xf32>, vector<8x4xf32>, vector<8x4xf32>, vector<8x4xf32>, vector<8x4xf32> -> vector<8x40xf32>
    %cst_171 = arith.constant 0.000000e+00 : f32
    %289 = vector.broadcast %cst_171 : f32 to vector<8x87xf32>
    %290 = tpu.concatenate %288, %257, %289 in 1 : vector<8x40xf32>, vector<8x1xf32>, vector<8x87xf32> -> vector<8x128xf32>
    %c0_172 = arith.constant 0 : index
    %c0_173 = arith.constant 0 : index
    %291 = vector.load %arg16[%c0_172, %c0_173] : memref<8x128xf32, #tpu.memory_space<vmem>>, vector<8x128xf32>
    tpu.vector_store %arg16[%c0_172, %c0_173], %290 {strides = array<i32>} : memref<8x128xf32, #tpu.memory_space<vmem>>, vector<8x128xf32>,
    return
  }
  func.func @transform_0(%arg0: i32) -> (i32, i32) {
    %c0_i32 = arith.constant 0 : i32
    %c0_i32_0 = arith.constant 0 : i32
    return %arg0, %c0_i32 : i32, i32
  }
  func.func @transform_1(%arg0: i32) -> (i32, i32) {
    %c0_i32 = arith.constant 0 : i32
    %c0_i32_0 = arith.constant 0 : i32
    %c0_i32_1 = arith.constant 0 : i32
    return %c0_i32, %c0_i32_0 : i32, i32
  }
  func.func @transform_2(%arg0: i32) -> (i32, i32) {
    %c0_i32 = arith.constant 0 : i32
    %c0_i32_0 = arith.constant 0 : i32
    %c0_i32_1 = arith.constant 0 : i32
    return %c0_i32, %c0_i32_0 : i32, i32
  }
  func.func @transform_3(%arg0: i32) -> (i32, i32) {
    %c0_i32 = arith.constant 0 : i32
    %c0_i32_0 = arith.constant 0 : i32
    %c0_i32_1 = arith.constant 0 : i32
    return %c0_i32, %c0_i32_0 : i32, i32
  }
  func.func @transform_4(%arg0: i32) -> (i32, i32) {
    %c0_i32 = arith.constant 0 : i32
    %c0_i32_0 = arith.constant 0 : i32
    %c0_i32_1 = arith.constant 0 : i32
    return %c0_i32, %c0_i32_0 : i32, i32
  }
  func.func @transform_5(%arg0: i32) -> (i32, i32) {
    %c0_i32 = arith.constant 0 : i32
    %c0_i32_0 = arith.constant 0 : i32
    %c0_i32_1 = arith.constant 0 : i32
    return %c0_i32, %c0_i32_0 : i32, i32
  }
  func.func @transform_6(%arg0: i32) -> (i32, i32) {
    %c0_i32 = arith.constant 0 : i32
    %c0_i32_0 = arith.constant 0 : i32
    %c0_i32_1 = arith.constant 0 : i32
    return %c0_i32, %c0_i32_0 : i32, i32
  }
  func.func @transform_7(%arg0: i32) -> (i32, i32) {
    %c0_i32 = arith.constant 0 : i32
    %c0_i32_0 = arith.constant 0 : i32
    %c0_i32_1 = arith.constant 0 : i32
    return %c0_i32, %c0_i32_0 : i32, i32
  }
  func.func @transform_8(%arg0: i32) -> (i32, i32) {
    %c0_i32 = arith.constant 0 : i32
    %c0_i32_0 = arith.constant 0 : i32
    %c0_i32_1 = arith.constant 0 : i32
    return %c0_i32, %c0_i32_0 : i32, i32
  }
  func.func @transform_9(%arg0: i32) -> (i32, i32) {
    %c0_i32 = arith.constant 0 : i32
    %c0_i32_0 = arith.constant 0 : i32
    %c0_i32_1 = arith.constant 0 : i32
    return %c0_i32, %c0_i32_0 : i32, i32
  }
  func.func @transform_10(%arg0: i32) -> (i32, i32) {
    %c0_i32 = arith.constant 0 : i32
    %c0_i32_0 = arith.constant 0 : i32
    %c0_i32_1 = arith.constant 0 : i32
    return %c0_i32, %c0_i32_0 : i32, i32
  }
  func.func @transform_11(%arg0: i32) -> (i32, i32) {
    %c0_i32 = arith.constant 0 : i32
    %c0_i32_0 = arith.constant 0 : i32
    %c0_i32_1 = arith.constant 0 : i32
    return %c0_i32, %c0_i32_0 : i32, i32
  }
  func.func @transform_12(%arg0: i32) -> (i32, i32) {
    %c0_i32 = arith.constant 0 : i32
    %c0_i32_0 = arith.constant 0 : i32
    %c0_i32_1 = arith.constant 0 : i32
    return %c0_i32, %c0_i32_0 : i32, i32
  }
  func.func @transform_13(%arg0: i32) -> (i32, i32) {
    %c0_i32 = arith.constant 0 : i32
    %c0_i32_0 = arith.constant 0 : i32
    %c0_i32_1 = arith.constant 0 : i32
    return %c0_i32, %c0_i32_0 : i32, i32
  }
  func.func @transform_14(%arg0: i32) -> (i32, i32) {
    %c0_i32 = arith.constant 0 : i32
    %c0_i32_0 = arith.constant 0 : i32
    %c0_i32_1 = arith.constant 0 : i32
    return %c0_i32, %c0_i32_0 : i32, i32
  }
  func.func @transform_15(%arg0: i32) -> (i32, i32) {
    %c0_i32 = arith.constant 0 : i32
    %c0_i32_0 = arith.constant 0 : i32
    return %arg0, %c0_i32 : i32, i32
  }
}

</mosaic_0001>

<llo_original>
// kernel: _lambda_.1
$region0: #{_lambda_.1}
  #allocation0 [shape = 'u32[]', space=smem, size = 0x4, offset = 0x4, fixed_abs, tag = 'smem constant byte address 0x4 - core index']
  #allocation1 [shape = 'u32[72,128]{1,0:T(1,128)}', space=vmem, size = 0x9000, scoped, tag = 'internal scratch']
  #allocation2 [shape = 'f32[200,896]{1,0:T(8,128)}', space=vmem, size = 0xaf000, scoped, tag = 'scratch operand']
  #allocation3 [shape = 'f32[1,1]{1,0:T(1,128)S(1)}', space=vmem, size = 0x200, scoped, tag = 'scoped memory for _lambda_.1']
  %s0 = inlined_call_operand.vmem [shape: f32[8,1056], index: 0, kind: input, shape index: {}]
  %s1 = inlined_call_operand.hbm [shape: f32[80,200], index: 1, kind: input, shape index: {}]
  %s2 = inlined_call_operand.hbm [shape: f32[863,342], index: 2, kind: input, shape index: {}]
  %s3 = inlined_call_operand.hbm [shape: f32[80,342], index: 3, kind: input, shape index: {}]
  %s4 = inlined_call_operand.hbm [shape: f32[2000,80], index: 4, kind: input, shape index: {}]
  %s5 = inlined_call_operand.hbm [shape: f32[80,1], index: 5, kind: input, shape index: {}]
  %s6 = inlined_call_operand.hbm [shape: f32[233,49], index: 6, kind: input, shape index: {}]
  %s7 = inlined_call_operand.hbm [shape: f32[560,50], index: 7, kind: input, shape index: {}]
  %s8 = inlined_call_operand.hbm [shape: f32[1,50], index: 8, kind: input, shape index: {}]
  %s9 = inlined_call_operand.hbm [shape: f32[50,10], index: 9, kind: input, shape index: {}]
  %s10 = inlined_call_operand.hbm [shape: f32[1,10], index: 10, kind: input, shape index: {}]
  %s11 = inlined_call_operand.hbm [shape: f32[50,4], index: 11, kind: input, shape index: {}]
  %s12 = inlined_call_operand.hbm [shape: f32[1,4], index: 12, kind: input, shape index: {}]
  %s13 = inlined_call_operand.hbm [shape: f32[50,1], index: 13, kind: input, shape index: {}]
  %s14 = inlined_call_operand.<no memory space> [shape: f32[1,1], index: 14, kind: input, shape index: {}]
  %s15 = inlined_call_operand.vmem [shape: f32[8,128], index: 15, kind: output, shape index: {}]
  %s16 = sld [smem:[#allocation0]]
  $region122: #{_lambda_.1} parent=0
    _
  %s18 = ssub.s32 1, %s16
  %s19 = scalar_select 0, %s18, %s16
  %v20 = vstv %s14
  %21 = vst [vmem:[#allocation3] sm:$0x1] %v20
  $region1: #{_lambda_.1} parent=0
    #allocation4 [shape = 'u8[81920]{0}', space=vmem, size = 0x14000, scoped, tag = 'input window, operand 1, single buffered']
    #allocation5 [shape = 's32[1]{0}', space=sflag, size = 0x4, scoped, tag = 'scoped memory for _lambda_.1']
    #allocation6 [shape = 'u8[1327104]{0}', space=vmem, size = 0x144000, scoped, tag = 'input window, operand 2, single buffered']
    #allocation7 [shape = 's32[1]{0}', space=sflag, size = 0x4, scoped, tag = 'scoped memory for _lambda_.1']
    #allocation8 [shape = 'u8[122880]{0}', space=vmem, size = 0x1e000, scoped, tag = 'input window, operand 3, single buffered']
    #allocation9 [shape = 'u8[1024000]{0}', space=vmem, size = 0xfa000, scoped, tag = 'input window, operand 4, single buffered']
    #allocation10 [shape = 's32[1]{0}', space=sflag, size = 0x4, scoped, tag = 'scoped memory for _lambda_.1']
    #allocation11 [shape = 'u8[40960]{0}', space=vmem, size = 0xa000, scoped, tag = 'input window, operand 5, single buffered']
    #allocation12 [shape = 'u8[122880]{0}', space=vmem, size = 0x1e000, scoped, tag = 'input window, operand 6, single buffered']
    #allocation13 [shape = 's32[1]{0}', space=sflag, size = 0x4, scoped, tag = 'scoped memory for _lambda_.1']
    #allocation14 [shape = 'u8[286720]{0}', space=vmem, size = 0x46000, scoped, tag = 'input window, operand 7, single buffered']
    #allocation15 [shape = 'u8[512]{0}', space=vmem, size = 0x400, scoped, tag = 'input window, operand 8, single buffered']
    #allocation16 [shape = 's32[1]{0}', space=sflag, size = 0x4, scoped, tag = 'scoped memory for _lambda_.1']
    #allocation17 [shape = 'u8[28672]{0}', space=vmem, size = 0x7000, scoped, tag = 'input window, operand 9, single buffered']
    #allocation18 [shape = 'u8[512]{0}', space=vmem, size = 0x400, scoped, tag = 'input window, operand 10, single buffered']
    #allocation19 [shape = 's32[1]{0}', space=sflag, size = 0x4, scoped, tag = 'scoped memory for _lambda_.1']
    #allocation20 [shape = 'u8[28672]{0}', space=vmem, size = 0x7000, scoped, tag = 'input window, operand 11, single buffered']
    #allocation21 [shape = 'u8[512]{0}', space=vmem, size = 0x400, scoped, tag = 'input window, operand 12, single buffered']
    #allocation22 [shape = 's32[1]{0}', space=sflag, size = 0x4, scoped, tag = 'scoped memory for _lambda_.1']
    #allocation23 [shape = 'u8[28672]{0}', space=vmem, size = 0x7000, scoped, tag = 'input window, operand 13, single buffered']
    %22 = vsyncpa [#allocation5], 0
    %23 = vsyncpa [#allocation7], 0
    %24 = vsyncpa [#allocation10], 0
    %25 = vsyncpa [#allocation13], 0
    %26 = vsyncpa [#allocation16], 0
    %27 = vsyncpa [#allocation19], 0
    %28 = vsyncpa [#allocation22], 0
    // Predicated region
    $region2: #{_lambda_.1} parent=1 // pred_check
      _
    $region3: #{_lambda_.1} parent=1 // pred_check_branch
      %30 = sbr.rel (0) target = $region5
    $region4: #{_lambda_.1} parent=1 // pred_region
      _
    $region5: #{_lambda_.1} parent=1 // pred_fallthru
      _
    // Predicated region
    $region6: #{_lambda_.1} parent=1 // pred_check
      _
    $region7: #{_lambda_.1} parent=1 // pred_check_branch
      %32 = sbr.rel (0) target = $region9
    $region8: #{_lambda_.1} parent=1 // pred_region
      %34 = vsyncadd [#allocation5], 0
      %s35 = sshll.u32 %s1, 4
      %s36 = int_to_ptr.hbm [resolvable:$true] %s35
      %s37 = sshll.u32 [#allocation4], 4
      %s38 = int_to_ptr.vmem [resolvable:$true] %s37
      %43 = dma.hbm_to_vmem [thread:$0]  %s36, 2560, %s38, [#allocation5], 256, 256, 16
    $region9: #{_lambda_.1} parent=1 // pred_fallthru
      _
    // Predicated region
    $region10: #{_lambda_.1} parent=1 // pred_check
      _
    $region11: #{_lambda_.1} parent=1 // pred_check_branch
      %45 = sbr.rel (0) target = $region13
    $region12: #{_lambda_.1} parent=1 // pred_region
      %47 = vsyncadd [#allocation7], 0
      %s48 = sshll.u32 %s2, 4
      %s49 = int_to_ptr.hbm [resolvable:$true] %s48
      %s50 = sshll.u32 [#allocation6], 4
      %s51 = int_to_ptr.vmem [resolvable:$true] %s50
      %56 = dma.hbm_to_vmem [thread:$0]  %s49, 41472, %s51, [#allocation7], 384, 384, 24
    $region13: #{_lambda_.1} parent=1 // pred_fallthru
      _
    // Predicated region
    $region14: #{_lambda_.1} parent=1 // pred_check
      _
    $region15: #{_lambda_.1} parent=1 // pred_check_branch
      %58 = sbr.rel (0) target = $region17
    $region16: #{_lambda_.1} parent=1 // pred_region
      %60 = vsyncadd [#allocation7], 0
      %s61 = sshll.u32 %s3, 4
      %s62 = int_to_ptr.hbm [resolvable:$true] %s61
      %s63 = sshll.u32 [#allocation8], 4
      %s64 = int_to_ptr.vmem [resolvable:$true] %s63
      %69 = dma.hbm_to_vmem [thread:$0]  %s62, 3840, %s64, [#allocation7], 384, 384, 24
    $region17: #{_lambda_.1} parent=1 // pred_fallthru
      _
    // Predicated region
    $region18: #{_lambda_.1} parent=1 // pred_check
      _
    $region19: #{_lambda_.1} parent=1 // pred_check_branch
      %71 = sbr.rel (0) target = $region21
    $region20: #{_lambda_.1} parent=1 // pred_region
      %73 = vsyncadd [#allocation10], 0
      %s74 = sshll.u32 %s4, 4
      %s75 = int_to_ptr.hbm [resolvable:$true] %s74
      %s76 = sshll.u32 [#allocation9], 4
      %s77 = int_to_ptr.vmem [resolvable:$true] %s76
      %82 = dma.hbm_to_vmem [thread:$0]  %s75, 32000, %s77, [#allocation10], 128, 128, 8
    $region21: #{_lambda_.1} parent=1 // pred_fallthru
      _
    // Predicated region
    $region22: #{_lambda_.1} parent=1 // pred_check
      _
    $region23: #{_lambda_.1} parent=1 // pred_check_branch
      %84 = sbr.rel (0) target = $region25
    $region24: #{_lambda_.1} parent=1 // pred_region
      %86 = vsyncadd [#allocation10], 0
      %s87 = sshll.u32 %s5, 4
      %s88 = int_to_ptr.hbm [resolvable:$true] %s87
      %s89 = sshll.u32 [#allocation11], 4
      %s90 = int_to_ptr.vmem [resolvable:$true] %s89
      %95 = dma.hbm_to_vmem [thread:$0]  %s88, 1280, %s90, [#allocation10], 128, 128, 8
    $region25: #{_lambda_.1} parent=1 // pred_fallthru
      _
    // Predicated region
    $region26: #{_lambda_.1} parent=1 // pred_check
      _
    $region27: #{_lambda_.1} parent=1 // pred_check_branch
      %97 = sbr.rel (0) target = $region29
    $region28: #{_lambda_.1} parent=1 // pred_region
      %99 = vsyncadd [#allocation13], 0
      %s100 = sshll.u32 %s6, 4
      %s101 = int_to_ptr.hbm [resolvable:$true] %s100
      %s102 = sshll.u32 [#allocation12], 4
      %s103 = int_to_ptr.vmem [resolvable:$true] %s102
      %108 = dma.hbm_to_vmem [thread:$0]  %s101, 3840, %s103, [#allocation13], 128, 128, 8
    $region29: #{_lambda_.1} parent=1 // pred_fallthru
      _
    // Predicated region
    $region30: #{_lambda_.1} parent=1 // pred_check
      _
    $region31: #{_lambda_.1} parent=1 // pred_check_branch
      %110 = sbr.rel (0) target = $region33
    $region32: #{_lambda_.1} parent=1 // pred_region
      %112 = vsyncadd [#allocation13], 0
      %s113 = sshll.u32 %s7, 4
      %s114 = int_to_ptr.hbm [resolvable:$true] %s113
      %s115 = sshll.u32 [#allocation14], 4
      %s116 = int_to_ptr.vmem [resolvable:$true] %s115
      %121 = dma.hbm_to_vmem [thread:$0]  %s114, 8960, %s116, [#allocation13], 128, 128, 8
    $region33: #{_lambda_.1} parent=1 // pred_fallthru
      _
    // Predicated region
    $region34: #{_lambda_.1} parent=1 // pred_check
      _
    $region35: #{_lambda_.1} parent=1 // pred_check_branch
      %123 = sbr.rel (0) target = $region37
    $region36: #{_lambda_.1} parent=1 // pred_region
      %125 = vsyncadd [#allocation16], 0
      %s127 = sshll.u32 %s8, 4
      %s128 = int_to_ptr.hbm [resolvable:$true] %s127
      %s129 = sshll.u32 [#allocation15], 4
      %s130 = int_to_ptr.vmem [resolvable:$true] %s129
      %132 = dma.hbm_to_vmem [thread:$0]  %s128, 16, %s130, [#allocation16]
    $region37: #{_lambda_.1} parent=1 // pred_fallthru
      _
    // Predicated region
    $region38: #{_lambda_.1} parent=1 // pred_check
      _
    $region39: #{_lambda_.1} parent=1 // pred_check_branch
      %134 = sbr.rel (0) target = $region41
    $region40: #{_lambda_.1} parent=1 // pred_region
      %136 = vsyncadd [#allocation16], 0
      %s137 = sshll.u32 %s9, 4
      %s138 = int_to_ptr.hbm [resolvable:$true] %s137
      %s139 = sshll.u32 [#allocation17], 4
      %s140 = int_to_ptr.vmem [resolvable:$true] %s139
      %145 = dma.hbm_to_vmem [thread:$0]  %s138, 896, %s140, [#allocation16], 128, 128, 8
    $region41: #{_lambda_.1} parent=1 // pred_fallthru
      _
    // Predicated region
    $region42: #{_lambda_.1} parent=1 // pred_check
      _
    $region43: #{_lambda_.1} parent=1 // pred_check_branch
      %147 = sbr.rel (0) target = $region45
    $region44: #{_lambda_.1} parent=1 // pred_region
      %149 = vsyncadd [#allocation19], 0
      %s151 = sshll.u32 %s10, 4
      %s152 = int_to_ptr.hbm [resolvable:$true] %s151
      %s153 = sshll.u32 [#allocation18], 4
      %s154 = int_to_ptr.vmem [resolvable:$true] %s153
      %156 = dma.hbm_to_vmem [thread:$0]  %s152, 16, %s154, [#allocation19]
    $region45: #{_lambda_.1} parent=1 // pred_fallthru
      _
    // Predicated region
    $region46: #{_lambda_.1} parent=1 // pred_check
      _
    $region47: #{_lambda_.1} parent=1 // pred_check_branch
      %158 = sbr.rel (0) target = $region49
    $region48: #{_lambda_.1} parent=1 // pred_region
      %160 = vsyncadd [#allocation19], 0
      %s161 = sshll.u32 %s11, 4
      %s162 = int_to_ptr.hbm [resolvable:$true] %s161
      %s163 = sshll.u32 [#allocation20], 4
      %s164 = int_to_ptr.vmem [resolvable:$true] %s163
      %169 = dma.hbm_to_vmem [thread:$0]  %s162, 896, %s164, [#allocation19], 128, 128, 8
    $region49: #{_lambda_.1} parent=1 // pred_fallthru
      _
    // Predicated region
    $region50: #{_lambda_.1} parent=1 // pred_check
      _
    $region51: #{_lambda_.1} parent=1 // pred_check_branch
      %171 = sbr.rel (0) target = $region53
    $region52: #{_lambda_.1} parent=1 // pred_region
      %173 = vsyncadd [#allocation22], 0
      %s175 = sshll.u32 %s12, 4
      %s176 = int_to_ptr.hbm [resolvable:$true] %s175
      %s177 = sshll.u32 [#allocation21], 4
      %s178 = int_to_ptr.vmem [resolvable:$true] %s177
      %180 = dma.hbm_to_vmem [thread:$0]  %s176, 16, %s178, [#allocation22]
    $region53: #{_lambda_.1} parent=1 // pred_fallthru
      _
    // Predicated region
    $region54: #{_lambda_.1} parent=1 // pred_check
      _
    $region55: #{_lambda_.1} parent=1 // pred_check_branch
      %182 = sbr.rel (0) target = $region57
    $region56: #{_lambda_.1} parent=1 // pred_region
      %184 = vsyncadd [#allocation22], 0
      %s185 = sshll.u32 %s13, 4
      %s186 = int_to_ptr.hbm [resolvable:$true] %s185
      %s187 = sshll.u32 [#allocation23], 4
      %s188 = int_to_ptr.vmem [resolvable:$true] %s187
      %193 = dma.hbm_to_vmem [thread:$0]  %s186, 896, %s188, [#allocation22], 128, 128, 8
    $region57: #{_lambda_.1} parent=1 // pred_fallthru
      _
    // Predicated region
    $region58: #{_lambda_.1} parent=1 // pred_check
      _
    $region59: #{_lambda_.1} parent=1 // pred_check_branch
      %195 = sbr.rel (0) target = $region61
    $region60: #{_lambda_.1} parent=1 // pred_region
      _
    $region61: #{_lambda_.1} parent=1 // pred_fallthru
      _
    // Predicated region
    $region62: #{_lambda_.1} parent=1 // pred_check
      _
    $region63: #{_lambda_.1} parent=1 // pred_check_branch
      %197 = sbr.rel (0) target = $region65
    $region64: #{_lambda_.1} parent=1 // pred_region
      %199 = dma.done [#allocation5], 2560
    $region65: #{_lambda_.1} parent=1 // pred_fallthru
      _
    // Predicated region
    $region66: #{_lambda_.1} parent=1 // pred_check
      _
    $region67: #{_lambda_.1} parent=1 // pred_check_branch
      %201 = sbr.rel (0) target = $region69
    $region68: #{_lambda_.1} parent=1 // pred_region
      %203 = dma.done [#allocation7], 41472
    $region69: #{_lambda_.1} parent=1 // pred_fallthru
      _
    // Predicated region
    $region70: #{_lambda_.1} parent=1 // pred_check
      _
    $region71: #{_lambda_.1} parent=1 // pred_check_branch
      %205 = sbr.rel (0) target = $region73
    $region72: #{_lambda_.1} parent=1 // pred_region
      %207 = dma.done [#allocation7], 3840
    $region73: #{_lambda_.1} parent=1 // pred_fallthru
      _
    // Predicated region
    $region74: #{_lambda_.1} parent=1 // pred_check
      _
    $region75: #{_lambda_.1} parent=1 // pred_check_branch
      %209 = sbr.rel (0) target = $region77
    $region76: #{_lambda_.1} parent=1 // pred_region
      %211 = dma.done [#allocation10], 32000
    $region77: #{_lambda_.1} parent=1 // pred_fallthru
      _
    // Predicated region
    $region78: #{_lambda_.1} parent=1 // pred_check
      _
    $region79: #{_lambda_.1} parent=1 // pred_check_branch
      %213 = sbr.rel (0) target = $region81
    $region80: #{_lambda_.1} parent=1 // pred_region
      %215 = dma.done [#allocation10], 1280
    $region81: #{_lambda_.1} parent=1 // pred_fallthru
      _
    // Predicated region
    $region82: #{_lambda_.1} parent=1 // pred_check
      _
    $region83: #{_lambda_.1} parent=1 // pred_check_branch
      %217 = sbr.rel (0) target = $region85
    $region84: #{_lambda_.1} parent=1 // pred_region
      %219 = dma.done [#allocation13], 3840
    $region85: #{_lambda_.1} parent=1 // pred_fallthru
      _
    // Predicated region
    $region86: #{_lambda_.1} parent=1 // pred_check
      _
    $region87: #{_lambda_.1} parent=1 // pred_check_branch
      %221 = sbr.rel (0) target = $region89
    $region88: #{_lambda_.1} parent=1 // pred_region
      %223 = dma.done [#allocation13], 8960
    $region89: #{_lambda_.1} parent=1 // pred_fallthru
      _
    // Predicated region
    $region90: #{_lambda_.1} parent=1 // pred_check
      _
    $region91: #{_lambda_.1} parent=1 // pred_check_branch
      %225 = sbr.rel (0) target = $region93
    $region92: #{_lambda_.1} parent=1 // pred_region
      %227 = dma.done [#allocation16], 16
    $region93: #{_lambda_.1} parent=1 // pred_fallthru
      _
    // Predicated region
    $region94: #{_lambda_.1} parent=1 // pred_check
      _
    $region95: #{_lambda_.1} parent=1 // pred_check_branch
      %229 = sbr.rel (0) target = $region97
    $region96: #{_lambda_.1} parent=1 // pred_region
      %231 = dma.done [#allocation16], 896
    $region97: #{_lambda_.1} parent=1 // pred_fallthru
      _
    // Predicated region
    $region98: #{_lambda_.1} parent=1 // pred_check
      _
    $region99: #{_lambda_.1} parent=1 // pred_check_branch
      %233 = sbr.rel (0) target = $region101
    $region100: #{_lambda_.1} parent=1 // pred_region
      %235 = dma.done [#allocation19], 16
    $region101: #{_lambda_.1} parent=1 // pred_fallthru
      _
    // Predicated region
    $region102: #{_lambda_.1} parent=1 // pred_check
      _
    $region103: #{_lambda_.1} parent=1 // pred_check_branch
      %237 = sbr.rel (0) target = $region105
    $region104: #{_lambda_.1} parent=1 // pred_region
      %239 = dma.done [#allocation19], 896
    $region105: #{_lambda_.1} parent=1 // pred_fallthru
      _
    // Predicated region
    $region106: #{_lambda_.1} parent=1 // pred_check
      _
    $region107: #{_lambda_.1} parent=1 // pred_check_branch
      %241 = sbr.rel (0) target = $region109
    $region108: #{_lambda_.1} parent=1 // pred_region
      %243 = dma.done [#allocation22], 16
    $region109: #{_lambda_.1} parent=1 // pred_fallthru
      _
    // Predicated region
    $region110: #{_lambda_.1} parent=1 // pred_check
      _
    $region111: #{_lambda_.1} parent=1 // pred_check_branch
      %245 = sbr.rel (0) target = $region113
    $region112: #{_lambda_.1} parent=1 // pred_region
      %247 = dma.done [#allocation22], 896
    $region113: #{_lambda_.1} parent=1 // pred_fallthru
      _
    %v248 = vld [vmem:[%s0] sm:$0xff]
    %v249 = vld [vmem:[%s0 + $0x8] sm:$0xff]
    %v250 = vld [vmem:[%s0 + $0x10] sm:$0xff]
    %v251 = vld [vmem:[%s0 + $0x18] sm:$0xff]
    %v252 = vld [vmem:[%s0 + $0x20] sm:$0xff]
    %v253 = vld [vmem:[%s0 + $0x28] sm:$0xff]
    %v254 = vld [vmem:[%s0 + $0x30] sm:$0xff]
    %255 = vst [vmem:[#allocation2] sm:$0xff] %v248
    %256 = vst [vmem:[#allocation2 + $0x8] sm:$0xff] %v249
    %257 = vst [vmem:[#allocation2 + $0x10] sm:$0xff] %v250
    %258 = vst [vmem:[#allocation2 + $0x18] sm:$0xff] %v251
    %259 = vst [vmem:[#allocation2 + $0x20] sm:$0xff] %v252
    %260 = vst [vmem:[#allocation2 + $0x28] sm:$0xff] %v253
    %261 = vst [vmem:[#allocation2 + $0x30] sm:$0xff] %v254
    %v262 = vld [vmem:[%s0] sm:$0xff]
    %v263 = vld [vmem:[%s0 + $0x8] sm:$0xff]
    %v264 = vld [vmem:[%s0 + $0x10] sm:$0xff]
    %v265 = vld [vmem:[%s0 + $0x18] sm:$0xff]
    %v266 = vld [vmem:[%s0 + $0x20] sm:$0xff]
    %v267 = vld [vmem:[%s0 + $0x28] sm:$0xff]
    %v268 = vld [vmem:[%s0 + $0x30] sm:$0xff]
    %v269 = vld [vmem:[%s0 + $0x38] sm:$0xff]
    %278 = vrot.lane.b32.xlu0 %v262, 127
    %v279 = vpop.permute.xlu0 %278
    %280 = vrot.lane.b32.xlu0 %v263, 127
    %v281 = vpop.permute.xlu0 %280
    %282 = vrot.lane.b32.xlu0 %v264, 127
    %v283 = vpop.permute.xlu0 %282
    %284 = vrot.lane.b32.xlu0 %v265, 127
    %v285 = vpop.permute.xlu0 %284
    %286 = vrot.lane.b32.xlu0 %v266, 127
    %v287 = vpop.permute.xlu0 %286
    %288 = vrot.lane.b32.xlu0 %v267, 127
    %v289 = vpop.permute.xlu0 %288
    %290 = vrot.lane.b32.xlu0 %v268, 127
    %v291 = vpop.permute.xlu0 %290
    %292 = vrot.lane.b32.xlu0 %v269, 127
    %v293 = vpop.permute.xlu0 %292
    %vm294 = vcmask 1039360
    %v295 = vsel %vm294, %v279, %v281
    %v296 = vsel %vm294, %v281, %v283
    %v297 = vsel %vm294, %v283, %v285
    %v298 = vsel %vm294, %v285, %v287
    %v299 = vsel %vm294, %v287, %v289
    %v300 = vsel %vm294, %v289, %v291
    %v301 = vsel %vm294, %v291, %v293
    %309 = vst [vmem:[#allocation2 + $0x38] sm:$0xff] %v295
    %310 = vst [vmem:[#allocation2 + $0x40] sm:$0xff] %v296
    %311 = vst [vmem:[#allocation2 + $0x48] sm:$0xff] %v297
    %312 = vst [vmem:[#allocation2 + $0x50] sm:$0xff] %v298
    %313 = vst [vmem:[#allocation2 + $0x58] sm:$0xff] %v299
    %314 = vst [vmem:[#allocation2 + $0x60] sm:$0xff] %v300
    %315 = vst [vmem:[#allocation2 + $0x68] sm:$0xff] %v301
    %v316 = vld [vmem:[%s0] sm:$0xff]
    %v317 = vld [vmem:[%s0 + $0x8] sm:$0xff]
    %v318 = vld [vmem:[%s0 + $0x10] sm:$0xff]
    %v319 = vld [vmem:[%s0 + $0x18] sm:$0xff]
    %v320 = vld [vmem:[%s0 + $0x20] sm:$0xff]
    %v321 = vld [vmem:[%s0 + $0x28] sm:$0xff]
    %v322 = vld [vmem:[%s0 + $0x30] sm:$0xff]
    %v323 = vld [vmem:[%s0 + $0x38] sm:$0xff]
    %332 = vrot.lane.b32.xlu0 %v316, 126
    %v333 = vpop.permute.xlu0 %332
    %334 = vrot.lane.b32.xlu0 %v317, 126
    %v335 = vpop.permute.xlu0 %334
    %336 = vrot.lane.b32.xlu0 %v318, 126
    %v337 = vpop.permute.xlu0 %336
    %338 = vrot.lane.b32.xlu0 %v319, 126
    %v339 = vpop.permute.xlu0 %338
    %340 = vrot.lane.b32.xlu0 %v320, 126
    %v341 = vpop.permute.xlu0 %340
    %342 = vrot.lane.b32.xlu0 %v321, 126
    %v343 = vpop.permute.xlu0 %342
    %344 = vrot.lane.b32.xlu0 %v322, 126
    %v345 = vpop.permute.xlu0 %344
    %346 = vrot.lane.b32.xlu0 %v323, 126
    %v347 = vpop.permute.xlu0 %346
    %vm348 = vcmask 1031168
    %v349 = vsel %vm348, %v333, %v335
    %v350 = vsel %vm348, %v335, %v337
    %v351 = vsel %vm348, %v337, %v339
    %v352 = vsel %vm348, %v339, %v341
    %v353 = vsel %vm348, %v341, %v343
    %v354 = vsel %vm348, %v343, %v345
    %v355 = vsel %vm348, %v345, %v347
    %363 = vst [vmem:[#allocation2 + $0x70] sm:$0xff] %v349
    %364 = vst [vmem:[#allocation2 + $0x78] sm:$0xff] %v350
    %365 = vst [vmem:[#allocation2 + $0x80] sm:$0xff] %v351
    %366 = vst [vmem:[#allocation2 + $0x88] sm:$0xff] %v352
    %367 = vst [vmem:[#allocation2 + $0x90] sm:$0xff] %v353
    %368 = vst [vmem:[#allocation2 + $0x98] sm:$0xff] %v354
    %369 = vst [vmem:[#allocation2 + $0xa0] sm:$0xff] %v355
    %v370 = vld [vmem:[%s0] sm:$0xff]
    %v371 = vld [vmem:[%s0 + $0x8] sm:$0xff]
    %v372 = vld [vmem:[%s0 + $0x10] sm:$0xff]
    %v373 = vld [vmem:[%s0 + $0x18] sm:$0xff]
    %v374 = vld [vmem:[%s0 + $0x20] sm:$0xff]
    %v375 = vld [vmem:[%s0 + $0x28] sm:$0xff]
    %v376 = vld [vmem:[%s0 + $0x30] sm:$0xff]
    %v377 = vld [vmem:[%s0 + $0x38] sm:$0xff]
    %386 = vrot.lane.b32.xlu0 %v370, 125
    %v387 = vpop.permute.xlu0 %386
    %388 = vrot.lane.b32.xlu0 %v371, 125
    %v389 = vpop.permute.xlu0 %388
    %390 = vrot.lane.b32.xlu0 %v372, 125
    %v391 = vpop.permute.xlu0 %390
    %392 = vrot.lane.b32.xlu0 %v373, 125
    %v393 = vpop.permute.xlu0 %392
    %394 = vrot.lane.b32.xlu0 %v374, 125
    %v395 = vpop.permute.xlu0 %394
    %396 = vrot.lane.b32.xlu0 %v375, 125
    %v397 = vpop.permute.xlu0 %396
    %398 = vrot.lane.b32.xlu0 %v376, 125
    %v399 = vpop.permute.xlu0 %398
    %400 = vrot.lane.b32.xlu0 %v377, 125
    %v401 = vpop.permute.xlu0 %400
    %vm402 = vcmask 1022976
    %v403 = vsel %vm402, %v387, %v389
    %v404 = vsel %vm402, %v389, %v391
    %v405 = vsel %vm402, %v391, %v393
    %v406 = vsel %vm402, %v393, %v395
    %v407 = vsel %vm402, %v395, %v397
    %v408 = vsel %vm402, %v397, %v399
    %v409 = vsel %vm402, %v399, %v401
    %417 = vst [vmem:[#allocation2 + $0xa8] sm:$0xff] %v403
    %418 = vst [vmem:[#allocation2 + $0xb0] sm:$0xff] %v404
    %419 = vst [vmem:[#allocation2 + $0xb8] sm:$0xff] %v405
    %420 = vst [vmem:[#allocation2 + $0xc0] sm:$0xff] %v406
    %421 = vst [vmem:[#allocation2 + $0xc8] sm:$0xff] %v407
    %422 = vst [vmem:[#allocation2 + $0xd0] sm:$0xff] %v408
    %423 = vst [vmem:[#allocation2 + $0xd8] sm:$0xff] %v409
    %v424 = vld [vmem:[%s0] sm:$0xff]
    %v425 = vld [vmem:[%s0 + $0x8] sm:$0xff]
    %v426 = vld [vmem:[%s0 + $0x10] sm:$0xff]
    %v427 = vld [vmem:[%s0 + $0x18] sm:$0xff]
    %v428 = vld [vmem:[%s0 + $0x20] sm:$0xff]
    %v429 = vld [vmem:[%s0 + $0x28] sm:$0xff]
    %v430 = vld [vmem:[%s0 + $0x30] sm:$0xff]
    %v431 = vld [vmem:[%s0 + $0x38] sm:$0xff]
    %440 = vrot.lane.b32.xlu0 %v424, 124
    %v441 = vpop.permute.xlu0 %440
    %442 = vrot.lane.b32.xlu0 %v425, 124
    %v443 = vpop.permute.xlu0 %442
    %444 = vrot.lane.b32.xlu0 %v426, 124
    %v445 = vpop.permute.xlu0 %444
    %446 = vrot.lane.b32.xlu0 %v427, 124
    %v447 = vpop.permute.xlu0 %446
    %448 = vrot.lane.b32.xlu0 %v428, 124
    %v449 = vpop.permute.xlu0 %448
    %450 = vrot.lane.b32.xlu0 %v429, 124
    %v451 = vpop.permute.xlu0 %450
    %452 = vrot.lane.b32.xlu0 %v430, 124
    %v453 = vpop.permute.xlu0 %452
    %454 = vrot.lane.b32.xlu0 %v431, 124
    %v455 = vpop.permute.xlu0 %454
    %vm456 = vcmask 1014784
    %v457 = vsel %vm456, %v441, %v443
    %v458 = vsel %vm456, %v443, %v445
    %v459 = vsel %vm456, %v445, %v447
    %v460 = vsel %vm456, %v447, %v449
    %v461 = vsel %vm456, %v449, %v451
    %v462 = vsel %vm456, %v451, %v453
    %v463 = vsel %vm456, %v453, %v455
    %471 = vst [vmem:[#allocation2 + $0xe0] sm:$0xff] %v457
    %472 = vst [vmem:[#allocation2 + $0xe8] sm:$0xff] %v458
    %473 = vst [vmem:[#allocation2 + $0xf0] sm:$0xff] %v459
    %474 = vst [vmem:[#allocation2 + $0xf8] sm:$0xff] %v460
    %475 = vst [vmem:[#allocation2 + $0x100] sm:$0xff] %v461
    %476 = vst [vmem:[#allocation2 + $0x108] sm:$0xff] %v462
    %477 = vst [vmem:[#allocation2 + $0x110] sm:$0xff] %v463
    %v478 = vld [vmem:[%s0] sm:$0xff]
    %v479 = vld [vmem:[%s0 + $0x8] sm:$0xff]
    %v480 = vld [vmem:[%s0 + $0x10] sm:$0xff]
    %v481 = vld [vmem:[%s0 + $0x18] sm:$0xff]
    %v482 = vld [vmem:[%s0 + $0x20] sm:$0xff]
    %v483 = vld [vmem:[%s0 + $0x28] sm:$0xff]
    %v484 = vld [vmem:[%s0 + $0x30] sm:$0xff]
    %v485 = vld [vmem:[%s0 + $0x38] sm:$0xff]
    %494 = vrot.lane.b32.xlu0 %v478, 96
    %v495 = vpop.permute.xlu0 %494
    %496 = vrot.lane.b32.xlu0 %v479, 96
    %v497 = vpop.permute.xlu0 %496
    %498 = vrot.lane.b32.xlu0 %v480, 96
    %v499 = vpop.permute.xlu0 %498
    %500 = vrot.lane.b32.xlu0 %v481, 96
    %v501 = vpop.permute.xlu0 %500
    %502 = vrot.lane.b32.xlu0 %v482, 96
    %v503 = vpop.permute.xlu0 %502
    %504 = vrot.lane.b32.xlu0 %v483, 96
    %v505 = vpop.permute.xlu0 %504
    %506 = vrot.lane.b32.xlu0 %v484, 96
    %v507 = vpop.permute.xlu0 %506
    %508 = vrot.lane.b32.xlu0 %v485, 96
    %v509 = vpop.permute.xlu0 %508
    %vm510 = vcmask 785408
    %v511 = vsel %vm510, %v495, %v497
    %v512 = vsel %vm510, %v497, %v499
    %v513 = vsel %vm510, %v499, %v501
    %v514 = vsel %vm510, %v501, %v503
    %v515 = vsel %vm510, %v503, %v505
    %v516 = vsel %vm510, %v505, %v507
    %v517 = vsel %vm510, %v507, %v509
    %525 = vst [vmem:[#allocation2 + $0x118] sm:$0xff] %v511
    %526 = vst [vmem:[#allocation2 + $0x120] sm:$0xff] %v512
    %527 = vst [vmem:[#allocation2 + $0x128] sm:$0xff] %v513
    %528 = vst [vmem:[#allocation2 + $0x130] sm:$0xff] %v514
    %529 = vst [vmem:[#allocation2 + $0x138] sm:$0xff] %v515
    %530 = vst [vmem:[#allocation2 + $0x140] sm:$0xff] %v516
    %531 = vst [vmem:[#allocation2 + $0x148] sm:$0xff] %v517
    %v532 = vld [vmem:[%s0] sm:$0xff]
    %v533 = vld [vmem:[%s0 + $0x8] sm:$0xff]
    %v534 = vld [vmem:[%s0 + $0x10] sm:$0xff]
    %v535 = vld [vmem:[%s0 + $0x18] sm:$0xff]
    %v536 = vld [vmem:[%s0 + $0x20] sm:$0xff]
    %v537 = vld [vmem:[%s0 + $0x28] sm:$0xff]
    %v538 = vld [vmem:[%s0 + $0x30] sm:$0xff]
    %v539 = vld [vmem:[%s0 + $0x38] sm:$0xff]
    %548 = vrot.lane.b32.xlu0 %v532, 95
    %v549 = vpop.permute.xlu0 %548
    %550 = vrot.lane.b32.xlu0 %v533, 95
    %v551 = vpop.permute.xlu0 %550
    %552 = vrot.lane.b32.xlu0 %v534, 95
    %v553 = vpop.permute.xlu0 %552
    %554 = vrot.lane.b32.xlu0 %v535, 95
    %v555 = vpop.permute.xlu0 %554
    %556 = vrot.lane.b32.xlu0 %v536, 95
    %v557 = vpop.permute.xlu0 %556
    %558 = vrot.lane.b32.xlu0 %v537, 95
    %v559 = vpop.permute.xlu0 %558
    %560 = vrot.lane.b32.xlu0 %v538, 95
    %v561 = vpop.permute.xlu0 %560
    %562 = vrot.lane.b32.xlu0 %v539, 95
    %v563 = vpop.permute.xlu0 %562
    %vm564 = vcmask 777216
    %v565 = vsel %vm564, %v549, %v551
    %v566 = vsel %vm564, %v551, %v553
    %v567 = vsel %vm564, %v553, %v555
    %v568 = vsel %vm564, %v555, %v557
    %v569 = vsel %vm564, %v557, %v559
    %v570 = vsel %vm564, %v559, %v561
    %v571 = vsel %vm564, %v561, %v563
    %579 = vst [vmem:[#allocation2 + $0x150] sm:$0xff] %v565
    %580 = vst [vmem:[#allocation2 + $0x158] sm:$0xff] %v566
    %581 = vst [vmem:[#allocation2 + $0x160] sm:$0xff] %v567
    %582 = vst [vmem:[#allocation2 + $0x168] sm:$0xff] %v568
    %583 = vst [vmem:[#allocation2 + $0x170] sm:$0xff] %v569
    %584 = vst [vmem:[#allocation2 + $0x178] sm:$0xff] %v570
    %585 = vst [vmem:[#allocation2 + $0x180] sm:$0xff] %v571
    %v586 = vld [vmem:[%s0] sm:$0xff]
    %v587 = vld [vmem:[%s0 + $0x8] sm:$0xff]
    %v588 = vld [vmem:[%s0 + $0x10] sm:$0xff]
    %v589 = vld [vmem:[%s0 + $0x18] sm:$0xff]
    %v590 = vld [vmem:[%s0 + $0x20] sm:$0xff]
    %v591 = vld [vmem:[%s0 + $0x28] sm:$0xff]
    %v592 = vld [vmem:[%s0 + $0x30] sm:$0xff]
    %v593 = vld [vmem:[%s0 + $0x38] sm:$0xff]
    %602 = vrot.lane.b32.xlu0 %v586, 94
    %v603 = vpop.permute.xlu0 %602
    %604 = vrot.lane.b32.xlu0 %v587, 94
    %v605 = vpop.permute.xlu0 %604
    %606 = vrot.lane.b32.xlu0 %v588, 94
    %v607 = vpop.permute.xlu0 %606
    %608 = vrot.lane.b32.xlu0 %v589, 94
    %v609 = vpop.permute.xlu0 %608
    %610 = vrot.lane.b32.xlu0 %v590, 94
    %v611 = vpop.permute.xlu0 %610
    %612 = vrot.lane.b32.xlu0 %v591, 94
    %v613 = vpop.permute.xlu0 %612
    %614 = vrot.lane.b32.xlu0 %v592, 94
    %v615 = vpop.permute.xlu0 %614
    %616 = vrot.lane.b32.xlu0 %v593, 94
    %v617 = vpop.permute.xlu0 %616
    %vm618 = vcmask 769024
    %v619 = vsel %vm618, %v603, %v605
    %v620 = vsel %vm618, %v605, %v607
    %v621 = vsel %vm618, %v607, %v609
    %v622 = vsel %vm618, %v609, %v611
    %v623 = vsel %vm618, %v611, %v613
    %v624 = vsel %vm618, %v613, %v615
    %v625 = vsel %vm618, %v615, %v617
    %633 = vst [vmem:[#allocation2 + $0x188] sm:$0xff] %v619
    %634 = vst [vmem:[#allocation2 + $0x190] sm:$0xff] %v620
    %635 = vst [vmem:[#allocation2 + $0x198] sm:$0xff] %v621
    %636 = vst [vmem:[#allocation2 + $0x1a0] sm:$0xff] %v622
    %637 = vst [vmem:[#allocation2 + $0x1a8] sm:$0xff] %v623
    %638 = vst [vmem:[#allocation2 + $0x1b0] sm:$0xff] %v624
    %639 = vst [vmem:[#allocation2 + $0x1b8] sm:$0xff] %v625
    %v640 = vld [vmem:[%s0] sm:$0xff]
    %v641 = vld [vmem:[%s0 + $0x8] sm:$0xff]
    %v642 = vld [vmem:[%s0 + $0x10] sm:$0xff]
    %v643 = vld [vmem:[%s0 + $0x18] sm:$0xff]
    %v644 = vld [vmem:[%s0 + $0x20] sm:$0xff]
    %v645 = vld [vmem:[%s0 + $0x28] sm:$0xff]
    %v646 = vld [vmem:[%s0 + $0x30] sm:$0xff]
    %v647 = vld [vmem:[%s0 + $0x38] sm:$0xff]
    %656 = vrot.lane.b32.xlu0 %v640, 93
    %v657 = vpop.permute.xlu0 %656
    %658 = vrot.lane.b32.xlu0 %v641, 93
    %v659 = vpop.permute.xlu0 %658
    %660 = vrot.lane.b32.xlu0 %v642, 93
    %v661 = vpop.permute.xlu0 %660
    %662 = vrot.lane.b32.xlu0 %v643, 93
    %v663 = vpop.permute.xlu0 %662
    %664 = vrot.lane.b32.xlu0 %v644, 93
    %v665 = vpop.permute.xlu0 %664
    %666 = vrot.lane.b32.xlu0 %v645, 93
    %v667 = vpop.permute.xlu0 %666
    %668 = vrot.lane.b32.xlu0 %v646, 93
    %v669 = vpop.permute.xlu0 %668
    %670 = vrot.lane.b32.xlu0 %v647, 93
    %v671 = vpop.permute.xlu0 %670
    %vm672 = vcmask 760832
    %v673 = vsel %vm672, %v657, %v659
    %v674 = vsel %vm672, %v659, %v661
    %v675 = vsel %vm672, %v661, %v663
    %v676 = vsel %vm672, %v663, %v665
    %v677 = vsel %vm672, %v665, %v667
    %v678 = vsel %vm672, %v667, %v669
    %v679 = vsel %vm672, %v669, %v671
    %687 = vst [vmem:[#allocation2 + $0x1c0] sm:$0xff] %v673
    %688 = vst [vmem:[#allocation2 + $0x1c8] sm:$0xff] %v674
    %689 = vst [vmem:[#allocation2 + $0x1d0] sm:$0xff] %v675
    %690 = vst [vmem:[#allocation2 + $0x1d8] sm:$0xff] %v676
    %691 = vst [vmem:[#allocation2 + $0x1e0] sm:$0xff] %v677
    %692 = vst [vmem:[#allocation2 + $0x1e8] sm:$0xff] %v678
    %693 = vst [vmem:[#allocation2 + $0x1f0] sm:$0xff] %v679
    %v694 = vld [vmem:[%s0] sm:$0xff]
    %v695 = vld [vmem:[%s0 + $0x8] sm:$0xff]
    %v696 = vld [vmem:[%s0 + $0x10] sm:$0xff]
    %v697 = vld [vmem:[%s0 + $0x18] sm:$0xff]
    %v698 = vld [vmem:[%s0 + $0x20] sm:$0xff]
    %v699 = vld [vmem:[%s0 + $0x28] sm:$0xff]
    %v700 = vld [vmem:[%s0 + $0x30] sm:$0xff]
    %v701 = vld [vmem:[%s0 + $0x38] sm:$0xff]
    %710 = vrot.lane.b32.xlu0 %v694, 92
    %v711 = vpop.permute.xlu0 %710
    %712 = vrot.lane.b32.xlu0 %v695, 92
    %v713 = vpop.permute.xlu0 %712
    %714 = vrot.lane.b32.xlu0 %v696, 92
    %v715 = vpop.permute.xlu0 %714
    %716 = vrot.lane.b32.xlu0 %v697, 92
    %v717 = vpop.permute.xlu0 %716
    %718 = vrot.lane.b32.xlu0 %v698, 92
    %v719 = vpop.permute.xlu0 %718
    %720 = vrot.lane.b32.xlu0 %v699, 92
    %v721 = vpop.permute.xlu0 %720
    %722 = vrot.lane.b32.xlu0 %v700, 92
    %v723 = vpop.permute.xlu0 %722
    %724 = vrot.lane.b32.xlu0 %v701, 92
    %v725 = vpop.permute.xlu0 %724
    %vm726 = vcmask 752640
    %v727 = vsel %vm726, %v711, %v713
    %v728 = vsel %vm726, %v713, %v715
    %v729 = vsel %vm726, %v715, %v717
    %v730 = vsel %vm726, %v717, %v719
    %v731 = vsel %vm726, %v719, %v721
    %v732 = vsel %vm726, %v721, %v723
    %v733 = vsel %vm726, %v723, %v725
    %741 = vst [vmem:[#allocation2 + $0x1f8] sm:$0xff] %v727
    %742 = vst [vmem:[#allocation2 + $0x200] sm:$0xff] %v728
    %743 = vst [vmem:[#allocation2 + $0x208] sm:$0xff] %v729
    %744 = vst [vmem:[#allocation2 + $0x210] sm:$0xff] %v730
    %745 = vst [vmem:[#allocation2 + $0x218] sm:$0xff] %v731
    %746 = vst [vmem:[#allocation2 + $0x220] sm:$0xff] %v732
    %747 = vst [vmem:[#allocation2 + $0x228] sm:$0xff] %v733
    %v748 = vld [vmem:[%s0] sm:$0xff]
    %v749 = vld [vmem:[%s0 + $0x8] sm:$0xff]
    %v750 = vld [vmem:[%s0 + $0x10] sm:$0xff]
    %v751 = vld [vmem:[%s0 + $0x18] sm:$0xff]
    %v752 = vld [vmem:[%s0 + $0x20] sm:$0xff]
    %v753 = vld [vmem:[%s0 + $0x28] sm:$0xff]
    %v754 = vld [vmem:[%s0 + $0x30] sm:$0xff]
    %v755 = vld [vmem:[%s0 + $0x38] sm:$0xff]
    %764 = vrot.lane.b32.xlu0 %v748, 64
    %v765 = vpop.permute.xlu0 %764
    %766 = vrot.lane.b32.xlu0 %v749, 64
    %v767 = vpop.permute.xlu0 %766
    %768 = vrot.lane.b32.xlu0 %v750, 64
    %v769 = vpop.permute.xlu0 %768
    %770 = vrot.lane.b32.xlu0 %v751, 64
    %v771 = vpop.permute.xlu0 %770
    %772 = vrot.lane.b32.xlu0 %v752, 64
    %v773 = vpop.permute.xlu0 %772
    %774 = vrot.lane.b32.xlu0 %v753, 64
    %v775 = vpop.permute.xlu0 %774
    %776 = vrot.lane.b32.xlu0 %v754, 64
    %v777 = vpop.permute.xlu0 %776
    %778 = vrot.lane.b32.xlu0 %v755, 64
    %v779 = vpop.permute.xlu0 %778
    %vm780 = vcmask 523264
    %v781 = vsel %vm780, %v765, %v767
    %v782 = vsel %vm780, %v767, %v769
    %v783 = vsel %vm780, %v769, %v771
    %v784 = vsel %vm780, %v771, %v773
    %v785 = vsel %vm780, %v773, %v775
    %v786 = vsel %vm780, %v775, %v777
    %v787 = vsel %vm780, %v777, %v779
    %795 = vst [vmem:[#allocation2 + $0x230] sm:$0xff] %v781
    %796 = vst [vmem:[#allocation2 + $0x238] sm:$0xff] %v782
    %797 = vst [vmem:[#allocation2 + $0x240] sm:$0xff] %v783
    %798 = vst [vmem:[#allocation2 + $0x248] sm:$0xff] %v784
    %799 = vst [vmem:[#allocation2 + $0x250] sm:$0xff] %v785
    %800 = vst [vmem:[#allocation2 + $0x258] sm:$0xff] %v786
    %801 = vst [vmem:[#allocation2 + $0x260] sm:$0xff] %v787
    %v802 = vld [vmem:[%s0] sm:$0xff]
    %v803 = vld [vmem:[%s0 + $0x8] sm:$0xff]
    %v804 = vld [vmem:[%s0 + $0x10] sm:$0xff]
    %v805 = vld [vmem:[%s0 + $0x18] sm:$0xff]
    %v806 = vld [vmem:[%s0 + $0x20] sm:$0xff]
    %v807 = vld [vmem:[%s0 + $0x28] sm:$0xff]
    %v808 = vld [vmem:[%s0 + $0x30] sm:$0xff]
    %v809 = vld [vmem:[%s0 + $0x38] sm:$0xff]
    %818 = vrot.lane.b32.xlu0 %v802, 63
    %v819 = vpop.permute.xlu0 %818
    %820 = vrot.lane.b32.xlu0 %v803, 63
    %v821 = vpop.permute.xlu0 %820
    %822 = vrot.lane.b32.xlu0 %v804, 63
    %v823 = vpop.permute.xlu0 %822
    %824 = vrot.lane.b32.xlu0 %v805, 63
    %v825 = vpop.permute.xlu0 %824
    %826 = vrot.lane.b32.xlu0 %v806, 63
    %v827 = vpop.permute.xlu0 %826
    %828 = vrot.lane.b32.xlu0 %v807, 63
    %v829 = vpop.permute.xlu0 %828
    %830 = vrot.lane.b32.xlu0 %v808, 63
    %v831 = vpop.permute.xlu0 %830
    %832 = vrot.lane.b32.xlu0 %v809, 63
    %v833 = vpop.permute.xlu0 %832
    %vm834 = vcmask 515072
    %v835 = vsel %vm834, %v819, %v821
    %v836 = vsel %vm834, %v821, %v823
    %v837 = vsel %vm834, %v823, %v825
    %v838 = vsel %vm834, %v825, %v827
    %v839 = vsel %vm834, %v827, %v829
    %v840 = vsel %vm834, %v829, %v831
    %v841 = vsel %vm834, %v831, %v833
    %849 = vst [vmem:[#allocation2 + $0x268] sm:$0xff] %v835
    %850 = vst [vmem:[#allocation2 + $0x270] sm:$0xff] %v836
    %851 = vst [vmem:[#allocation2 + $0x278] sm:$0xff] %v837
    %852 = vst [vmem:[#allocation2 + $0x280] sm:$0xff] %v838
    %853 = vst [vmem:[#allocation2 + $0x288] sm:$0xff] %v839
    %854 = vst [vmem:[#allocation2 + $0x290] sm:$0xff] %v840
    %855 = vst [vmem:[#allocation2 + $0x298] sm:$0xff] %v841
    %v856 = vld [vmem:[%s0] sm:$0xff]
    %v857 = vld [vmem:[%s0 + $0x8] sm:$0xff]
    %v858 = vld [vmem:[%s0 + $0x10] sm:$0xff]
    %v859 = vld [vmem:[%s0 + $0x18] sm:$0xff]
    %v860 = vld [vmem:[%s0 + $0x20] sm:$0xff]
    %v861 = vld [vmem:[%s0 + $0x28] sm:$0xff]
    %v862 = vld [vmem:[%s0 + $0x30] sm:$0xff]
    %v863 = vld [vmem:[%s0 + $0x38] sm:$0xff]
    %872 = vrot.lane.b32.xlu0 %v856, 62
    %v873 = vpop.permute.xlu0 %872
    %874 = vrot.lane.b32.xlu0 %v857, 62
    %v875 = vpop.permute.xlu0 %874
    %876 = vrot.lane.b32.xlu0 %v858, 62
    %v877 = vpop.permute.xlu0 %876
    %878 = vrot.lane.b32.xlu0 %v859, 62
    %v879 = vpop.permute.xlu0 %878
    %880 = vrot.lane.b32.xlu0 %v860, 62
    %v881 = vpop.permute.xlu0 %880
    %882 = vrot.lane.b32.xlu0 %v861, 62
    %v883 = vpop.permute.xlu0 %882
    %884 = vrot.lane.b32.xlu0 %v862, 62
    %v885 = vpop.permute.xlu0 %884
    %886 = vrot.lane.b32.xlu0 %v863, 62
    %v887 = vpop.permute.xlu0 %886
    %vm888 = vcmask 506880
    %v889 = vsel %vm888, %v873, %v875
    %v890 = vsel %vm888, %v875, %v877
    %v891 = vsel %vm888, %v877, %v879
    %v892 = vsel %vm888, %v879, %v881
    %v893 = vsel %vm888, %v881, %v883
    %v894 = vsel %vm888, %v883, %v885
    %v895 = vsel %vm888, %v885, %v887
    %903 = vst [vmem:[#allocation2 + $0x2a0] sm:$0xff] %v889
    %904 = vst [vmem:[#allocation2 + $0x2a8] sm:$0xff] %v890
    %905 = vst [vmem:[#allocation2 + $0x2b0] sm:$0xff] %v891
    %906 = vst [vmem:[#allocation2 + $0x2b8] sm:$0xff] %v892
    %907 = vst [vmem:[#allocation2 + $0x2c0] sm:$0xff] %v893
    %908 = vst [vmem:[#allocation2 + $0x2c8] sm:$0xff] %v894
    %909 = vst [vmem:[#allocation2 + $0x2d0] sm:$0xff] %v895
    %v910 = vld [vmem:[%s0] sm:$0xff]
    %v911 = vld [vmem:[%s0 + $0x8] sm:$0xff]
    %v912 = vld [vmem:[%s0 + $0x10] sm:$0xff]
    %v913 = vld [vmem:[%s0 + $0x18] sm:$0xff]
    %v914 = vld [vmem:[%s0 + $0x20] sm:$0xff]
    %v915 = vld [vmem:[%s0 + $0x28] sm:$0xff]
    %v916 = vld [vmem:[%s0 + $0x30] sm:$0xff]
    %v917 = vld [vmem:[%s0 + $0x38] sm:$0xff]
    %926 = vrot.lane.b32.xlu0 %v910, 61
    %v927 = vpop.permute.xlu0 %926
    %928 = vrot.lane.b32.xlu0 %v911, 61
    %v929 = vpop.permute.xlu0 %928
    %930 = vrot.lane.b32.xlu0 %v912, 61
    %v931 = vpop.permute.xlu0 %930
    %932 = vrot.lane.b32.xlu0 %v913, 61
    %v933 = vpop.permute.xlu0 %932
    %934 = vrot.lane.b32.xlu0 %v914, 61
    %v935 = vpop.permute.xlu0 %934
    %936 = vrot.lane.b32.xlu0 %v915, 61
    %v937 = vpop.permute.xlu0 %936
    %938 = vrot.lane.b32.xlu0 %v916, 61
    %v939 = vpop.permute.xlu0 %938
    %940 = vrot.lane.b32.xlu0 %v917, 61
    %v941 = vpop.permute.xlu0 %940
    %vm942 = vcmask 498688
    %v943 = vsel %vm942, %v927, %v929
    %v944 = vsel %vm942, %v929, %v931
    %v945 = vsel %vm942, %v931, %v933
    %v946 = vsel %vm942, %v933, %v935
    %v947 = vsel %vm942, %v935, %v937
    %v948 = vsel %vm942, %v937, %v939
    %v949 = vsel %vm942, %v939, %v941
    %957 = vst [vmem:[#allocation2 + $0x2d8] sm:$0xff] %v943
    %958 = vst [vmem:[#allocation2 + $0x2e0] sm:$0xff] %v944
    %959 = vst [vmem:[#allocation2 + $0x2e8] sm:$0xff] %v945
    %960 = vst [vmem:[#allocation2 + $0x2f0] sm:$0xff] %v946
    %961 = vst [vmem:[#allocation2 + $0x2f8] sm:$0xff] %v947
    %962 = vst [vmem:[#allocation2 + $0x300] sm:$0xff] %v948
    %963 = vst [vmem:[#allocation2 + $0x308] sm:$0xff] %v949
    %v964 = vld [vmem:[%s0] sm:$0xff]
    %v965 = vld [vmem:[%s0 + $0x8] sm:$0xff]
    %v966 = vld [vmem:[%s0 + $0x10] sm:$0xff]
    %v967 = vld [vmem:[%s0 + $0x18] sm:$0xff]
    %v968 = vld [vmem:[%s0 + $0x20] sm:$0xff]
    %v969 = vld [vmem:[%s0 + $0x28] sm:$0xff]
    %v970 = vld [vmem:[%s0 + $0x30] sm:$0xff]
    %v971 = vld [vmem:[%s0 + $0x38] sm:$0xff]
    %980 = vrot.lane.b32.xlu0 %v964, 60
    %v981 = vpop.permute.xlu0 %980
    %982 = vrot.lane.b32.xlu0 %v965, 60
    %v983 = vpop.permute.xlu0 %982
    %984 = vrot.lane.b32.xlu0 %v966, 60
    %v985 = vpop.permute.xlu0 %984
    %986 = vrot.lane.b32.xlu0 %v967, 60
    %v987 = vpop.permute.xlu0 %986
    %988 = vrot.lane.b32.xlu0 %v968, 60
    %v989 = vpop.permute.xlu0 %988
    %990 = vrot.lane.b32.xlu0 %v969, 60
    %v991 = vpop.permute.xlu0 %990
    %992 = vrot.lane.b32.xlu0 %v970, 60
    %v993 = vpop.permute.xlu0 %992
    %994 = vrot.lane.b32.xlu0 %v971, 60
    %v995 = vpop.permute.xlu0 %994
    %vm996 = vcmask 490496
    %v997 = vsel %vm996, %v981, %v983
    %v998 = vsel %vm996, %v983, %v985
    %v999 = vsel %vm996, %v985, %v987
    %v1000 = vsel %vm996, %v987, %v989
    %v1001 = vsel %vm996, %v989, %v991
    %v1002 = vsel %vm996, %v991, %v993
    %v1003 = vsel %vm996, %v993, %v995
    %1011 = vst [vmem:[#allocation2 + $0x310] sm:$0xff] %v997
    %1012 = vst [vmem:[#allocation2 + $0x318] sm:$0xff] %v998
    %1013 = vst [vmem:[#allocation2 + $0x320] sm:$0xff] %v999
    %1014 = vst [vmem:[#allocation2 + $0x328] sm:$0xff] %v1000
    %1015 = vst [vmem:[#allocation2 + $0x330] sm:$0xff] %v1001
    %1016 = vst [vmem:[#allocation2 + $0x338] sm:$0xff] %v1002
    %1017 = vst [vmem:[#allocation2 + $0x340] sm:$0xff] %v1003
    %v1018 = vld [vmem:[%s0] sm:$0xff]
    %v1019 = vld [vmem:[%s0 + $0x8] sm:$0xff]
    %v1020 = vld [vmem:[%s0 + $0x10] sm:$0xff]
    %v1021 = vld [vmem:[%s0 + $0x18] sm:$0xff]
    %v1022 = vld [vmem:[%s0 + $0x20] sm:$0xff]
    %v1023 = vld [vmem:[%s0 + $0x28] sm:$0xff]
    %v1024 = vld [vmem:[%s0 + $0x30] sm:$0xff]
    %v1025 = vld [vmem:[%s0 + $0x38] sm:$0xff]
    %1034 = vrot.lane.b32.xlu0 %v1018, 32
    %v1035 = vpop.permute.xlu0 %1034
    %1036 = vrot.lane.b32.xlu0 %v1019, 32
    %v1037 = vpop.permute.xlu0 %1036
    %1038 = vrot.lane.b32.xlu0 %v1020, 32
    %v1039 = vpop.permute.xlu0 %1038
    %1040 = vrot.lane.b32.xlu0 %v1021, 32
    %v1041 = vpop.permute.xlu0 %1040
    %1042 = vrot.lane.b32.xlu0 %v1022, 32
    %v1043 = vpop.permute.xlu0 %1042
    %1044 = vrot.lane.b32.xlu0 %v1023, 32
    %v1045 = vpop.permute.xlu0 %1044
    %1046 = vrot.lane.b32.xlu0 %v1024, 32
    %v1047 = vpop.permute.xlu0 %1046
    %1048 = vrot.lane.b32.xlu0 %v1025, 32
    %v1049 = vpop.permute.xlu0 %1048
    %vm1050 = vcmask 261120
    %v1051 = vsel %vm1050, %v1035, %v1037
    %v1052 = vsel %vm1050, %v1037, %v1039
    %v1053 = vsel %vm1050, %v1039, %v1041
    %v1054 = vsel %vm1050, %v1041, %v1043
    %v1055 = vsel %vm1050, %v1043, %v1045
    %v1056 = vsel %vm1050, %v1045, %v1047
    %v1057 = vsel %vm1050, %v1047, %v1049
    %1065 = vst [vmem:[#allocation2 + $0x348] sm:$0xff] %v1051
    %1066 = vst [vmem:[#allocation2 + $0x350] sm:$0xff] %v1052
    %1067 = vst [vmem:[#allocation2 + $0x358] sm:$0xff] %v1053
    %1068 = vst [vmem:[#allocation2 + $0x360] sm:$0xff] %v1054
    %1069 = vst [vmem:[#allocation2 + $0x368] sm:$0xff] %v1055
    %1070 = vst [vmem:[#allocation2 + $0x370] sm:$0xff] %v1056
    %1071 = vst [vmem:[#allocation2 + $0x378] sm:$0xff] %v1057
    %v1072 = vld [vmem:[%s0] sm:$0xff]
    %v1073 = vld [vmem:[%s0 + $0x8] sm:$0xff]
    %v1074 = vld [vmem:[%s0 + $0x10] sm:$0xff]
    %v1075 = vld [vmem:[%s0 + $0x18] sm:$0xff]
    %v1076 = vld [vmem:[%s0 + $0x20] sm:$0xff]
    %v1077 = vld [vmem:[%s0 + $0x28] sm:$0xff]
    %v1078 = vld [vmem:[%s0 + $0x30] sm:$0xff]
    %v1079 = vld [vmem:[%s0 + $0x38] sm:$0xff]
    %1088 = vrot.lane.b32.xlu0 %v1072, 31
    %v1089 = vpop.permute.xlu0 %1088
    %1090 = vrot.lane.b32.xlu0 %v1073, 31
    %v1091 = vpop.permute.xlu0 %1090
    %1092 = vrot.lane.b32.xlu0 %v1074, 31
    %v1093 = vpop.permute.xlu0 %1092
    %1094 = vrot.lane.b32.xlu0 %v1075, 31
    %v1095 = vpop.permute.xlu0 %1094
    %1096 = vrot.lane.b32.xlu0 %v1076, 31
    %v1097 = vpop.permute.xlu0 %1096
    %1098 = vrot.lane.b32.xlu0 %v1077, 31
    %v1099 = vpop.permute.xlu0 %1098
    %1100 = vrot.lane.b32.xlu0 %v1078, 31
    %v1101 = vpop.permute.xlu0 %1100
    %1102 = vrot.lane.b32.xlu0 %v1079, 31
    %v1103 = vpop.permute.xlu0 %1102
    %vm1104 = vcmask 252928
    %v1105 = vsel %vm1104, %v1089, %v1091
    %v1106 = vsel %vm1104, %v1091, %v1093
    %v1107 = vsel %vm1104, %v1093, %v1095
    %v1108 = vsel %vm1104, %v1095, %v1097
    %v1109 = vsel %vm1104, %v1097, %v1099
    %v1110 = vsel %vm1104, %v1099, %v1101
    %v1111 = vsel %vm1104, %v1101, %v1103
    %1119 = vst [vmem:[#allocation2 + $0x380] sm:$0xff] %v1105
    %1120 = vst [vmem:[#allocation2 + $0x388] sm:$0xff] %v1106
    %1121 = vst [vmem:[#allocation2 + $0x390] sm:$0xff] %v1107
    %1122 = vst [vmem:[#allocation2 + $0x398] sm:$0xff] %v1108
    %1123 = vst [vmem:[#allocation2 + $0x3a0] sm:$0xff] %v1109
    %1124 = vst [vmem:[#allocation2 + $0x3a8] sm:$0xff] %v1110
    %1125 = vst [vmem:[#allocation2 + $0x3b0] sm:$0xff] %v1111
    %v1126 = vld [vmem:[%s0] sm:$0xff]
    %v1127 = vld [vmem:[%s0 + $0x8] sm:$0xff]
    %v1128 = vld [vmem:[%s0 + $0x10] sm:$0xff]
    %v1129 = vld [vmem:[%s0 + $0x18] sm:$0xff]
    %v1130 = vld [vmem:[%s0 + $0x20] sm:$0xff]
    %v1131 = vld [vmem:[%s0 + $0x28] sm:$0xff]
    %v1132 = vld [vmem:[%s0 + $0x30] sm:$0xff]
    %v1133 = vld [vmem:[%s0 + $0x38] sm:$0xff]
    %1142 = vrot.lane.b32.xlu0 %v1126, 30
    %v1143 = vpop.permute.xlu0 %1142
    %1144 = vrot.lane.b32.xlu0 %v1127, 30
    %v1145 = vpop.permute.xlu0 %1144
    %1146 = vrot.lane.b32.xlu0 %v1128, 30
    %v1147 = vpop.permute.xlu0 %1146
    %1148 = vrot.lane.b32.xlu0 %v1129, 30
    %v1149 = vpop.permute.xlu0 %1148
    %1150 = vrot.lane.b32.xlu0 %v1130, 30
    %v1151 = vpop.permute.xlu0 %1150
    %1152 = vrot.lane.b32.xlu0 %v1131, 30
    %v1153 = vpop.permute.xlu0 %1152
    %1154 = vrot.lane.b32.xlu0 %v1132, 30
    %v1155 = vpop.permute.xlu0 %1154
    %1156 = vrot.lane.b32.xlu0 %v1133, 30
    %v1157 = vpop.permute.xlu0 %1156
    %vm1158 = vcmask 244736
    %v1159 = vsel %vm1158, %v1143, %v1145
    %v1160 = vsel %vm1158, %v1145, %v1147
    %v1161 = vsel %vm1158, %v1147, %v1149
    %v1162 = vsel %vm1158, %v1149, %v1151
    %v1163 = vsel %vm1158, %v1151, %v1153
    %v1164 = vsel %vm1158, %v1153, %v1155
    %v1165 = vsel %vm1158, %v1155, %v1157
    %1173 = vst [vmem:[#allocation2 + $0x3b8] sm:$0xff] %v1159
    %1174 = vst [vmem:[#allocation2 + $0x3c0] sm:$0xff] %v1160
    %1175 = vst [vmem:[#allocation2 + $0x3c8] sm:$0xff] %v1161
    %1176 = vst [vmem:[#allocation2 + $0x3d0] sm:$0xff] %v1162
    %1177 = vst [vmem:[#allocation2 + $0x3d8] sm:$0xff] %v1163
    %1178 = vst [vmem:[#allocation2 + $0x3e0] sm:$0xff] %v1164
    %1179 = vst [vmem:[#allocation2 + $0x3e8] sm:$0xff] %v1165
    %v1180 = vld [vmem:[%s0] sm:$0xff]
    %v1181 = vld [vmem:[%s0 + $0x8] sm:$0xff]
    %v1182 = vld [vmem:[%s0 + $0x10] sm:$0xff]
    %v1183 = vld [vmem:[%s0 + $0x18] sm:$0xff]
    %v1184 = vld [vmem:[%s0 + $0x20] sm:$0xff]
    %v1185 = vld [vmem:[%s0 + $0x28] sm:$0xff]
    %v1186 = vld [vmem:[%s0 + $0x30] sm:$0xff]
    %v1187 = vld [vmem:[%s0 + $0x38] sm:$0xff]
    %1196 = vrot.lane.b32.xlu0 %v1180, 29
    %v1197 = vpop.permute.xlu0 %1196
    %1198 = vrot.lane.b32.xlu0 %v1181, 29
    %v1199 = vpop.permute.xlu0 %1198
    %1200 = vrot.lane.b32.xlu0 %v1182, 29
    %v1201 = vpop.permute.xlu0 %1200
    %1202 = vrot.lane.b32.xlu0 %v1183, 29
    %v1203 = vpop.permute.xlu0 %1202
    %1204 = vrot.lane.b32.xlu0 %v1184, 29
    %v1205 = vpop.permute.xlu0 %1204
    %1206 = vrot.lane.b32.xlu0 %v1185, 29
    %v1207 = vpop.permute.xlu0 %1206
    %1208 = vrot.lane.b32.xlu0 %v1186, 29
    %v1209 = vpop.permute.xlu0 %1208
    %1210 = vrot.lane.b32.xlu0 %v1187, 29
    %v1211 = vpop.permute.xlu0 %1210
    %vm1212 = vcmask 236544
    %v1213 = vsel %vm1212, %v1197, %v1199
    %v1214 = vsel %vm1212, %v1199, %v1201
    %v1215 = vsel %vm1212, %v1201, %v1203
    %v1216 = vsel %vm1212, %v1203, %v1205
    %v1217 = vsel %vm1212, %v1205, %v1207
    %v1218 = vsel %vm1212, %v1207, %v1209
    %v1219 = vsel %vm1212, %v1209, %v1211
    %1227 = vst [vmem:[#allocation2 + $0x3f0] sm:$0xff] %v1213
    %1228 = vst [vmem:[#allocation2 + $0x3f8] sm:$0xff] %v1214
    %1229 = vst [vmem:[#allocation2 + $0x400] sm:$0xff] %v1215
    %1230 = vst [vmem:[#allocation2 + $0x408] sm:$0xff] %v1216
    %1231 = vst [vmem:[#allocation2 + $0x410] sm:$0xff] %v1217
    %1232 = vst [vmem:[#allocation2 + $0x418] sm:$0xff] %v1218
    %1233 = vst [vmem:[#allocation2 + $0x420] sm:$0xff] %v1219
    %v1234 = vld [vmem:[%s0] sm:$0xff]
    %v1235 = vld [vmem:[%s0 + $0x8] sm:$0xff]
    %v1236 = vld [vmem:[%s0 + $0x10] sm:$0xff]
    %v1237 = vld [vmem:[%s0 + $0x18] sm:$0xff]
    %v1238 = vld [vmem:[%s0 + $0x20] sm:$0xff]
    %v1239 = vld [vmem:[%s0 + $0x28] sm:$0xff]
    %v1240 = vld [vmem:[%s0 + $0x30] sm:$0xff]
    %v1241 = vld [vmem:[%s0 + $0x38] sm:$0xff]
    %1250 = vrot.lane.b32.xlu0 %v1234, 28
    %v1251 = vpop.permute.xlu0 %1250
    %1252 = vrot.lane.b32.xlu0 %v1235, 28
    %v1253 = vpop.permute.xlu0 %1252
    %1254 = vrot.lane.b32.xlu0 %v1236, 28
    %v1255 = vpop.permute.xlu0 %1254
    %1256 = vrot.lane.b32.xlu0 %v1237, 28
    %v1257 = vpop.permute.xlu0 %1256
    %1258 = vrot.lane.b32.xlu0 %v1238, 28
    %v1259 = vpop.permute.xlu0 %1258
    %1260 = vrot.lane.b32.xlu0 %v1239, 28
    %v1261 = vpop.permute.xlu0 %1260
    %1262 = vrot.lane.b32.xlu0 %v1240, 28
    %v1263 = vpop.permute.xlu0 %1262
    %1264 = vrot.lane.b32.xlu0 %v1241, 28
    %v1265 = vpop.permute.xlu0 %1264
    %vm1266 = vcmask 228352
    %v1267 = vsel %vm1266, %v1251, %v1253
    %v1268 = vsel %vm1266, %v1253, %v1255
    %v1269 = vsel %vm1266, %v1255, %v1257
    %v1270 = vsel %vm1266, %v1257, %v1259
    %v1271 = vsel %vm1266, %v1259, %v1261
    %v1272 = vsel %vm1266, %v1261, %v1263
    %v1273 = vsel %vm1266, %v1263, %v1265
    %1281 = vst [vmem:[#allocation2 + $0x428] sm:$0xff] %v1267
    %1282 = vst [vmem:[#allocation2 + $0x430] sm:$0xff] %v1268
    %1283 = vst [vmem:[#allocation2 + $0x438] sm:$0xff] %v1269
    %1284 = vst [vmem:[#allocation2 + $0x440] sm:$0xff] %v1270
    %1285 = vst [vmem:[#allocation2 + $0x448] sm:$0xff] %v1271
    %1286 = vst [vmem:[#allocation2 + $0x450] sm:$0xff] %v1272
    %1287 = vst [vmem:[#allocation2 + $0x458] sm:$0xff] %v1273
    %v1288 = vld [vmem:[%s0 + $0x8] sm:$0xff]
    %v1289 = vld [vmem:[%s0 + $0x10] sm:$0xff]
    %v1290 = vld [vmem:[%s0 + $0x18] sm:$0xff]
    %v1291 = vld [vmem:[%s0 + $0x20] sm:$0xff]
    %v1292 = vld [vmem:[%s0 + $0x28] sm:$0xff]
    %v1293 = vld [vmem:[%s0 + $0x30] sm:$0xff]
    %v1294 = vld [vmem:[%s0 + $0x38] sm:$0xff]
    %1295 = vst [vmem:[#allocation2 + $0x460] sm:$0xff] %v1288
    %1296 = vst [vmem:[#allocation2 + $0x468] sm:$0xff] %v1289
    %1297 = vst [vmem:[#allocation2 + $0x470] sm:$0xff] %v1290
    %1298 = vst [vmem:[#allocation2 + $0x478] sm:$0xff] %v1291
    %1299 = vst [vmem:[#allocation2 + $0x480] sm:$0xff] %v1292
    %1300 = vst [vmem:[#allocation2 + $0x488] sm:$0xff] %v1293
    %1301 = vst [vmem:[#allocation2 + $0x490] sm:$0xff] %v1294
    %v1302 = vld [vmem:[%s0 + $0x8] sm:$0xff]
    %v1303 = vld [vmem:[%s0 + $0x10] sm:$0xff]
    %v1304 = vld [vmem:[%s0 + $0x18] sm:$0xff]
    %v1305 = vld [vmem:[%s0 + $0x20] sm:$0xff]
    %v1306 = vld [vmem:[%s0 + $0x28] sm:$0xff]
    %v1307 = vld [vmem:[%s0 + $0x30] sm:$0xff]
    %v1308 = vld [vmem:[%s0 + $0x38] sm:$0xff]
    %v1309 = vld [vmem:[%s0 + $0x40] sm:$0xff]
    %1318 = vrot.lane.b32.xlu0 %v1302, 127
    %v1319 = vpop.permute.xlu0 %1318
    %1320 = vrot.lane.b32.xlu0 %v1303, 127
    %v1321 = vpop.permute.xlu0 %1320
    %1322 = vrot.lane.b32.xlu0 %v1304, 127
    %v1323 = vpop.permute.xlu0 %1322
    %1324 = vrot.lane.b32.xlu0 %v1305, 127
    %v1325 = vpop.permute.xlu0 %1324
    %1326 = vrot.lane.b32.xlu0 %v1306, 127
    %v1327 = vpop.permute.xlu0 %1326
    %1328 = vrot.lane.b32.xlu0 %v1307, 127
    %v1329 = vpop.permute.xlu0 %1328
    %1330 = vrot.lane.b32.xlu0 %v1308, 127
    %v1331 = vpop.permute.xlu0 %1330
    %1332 = vrot.lane.b32.xlu0 %v1309, 127
    %v1333 = vpop.permute.xlu0 %1332
    %v1334 = vsel %vm294, %v1319, %v1321
    %v1335 = vsel %vm294, %v1321, %v1323
    %v1336 = vsel %vm294, %v1323, %v1325
    %v1337 = vsel %vm294, %v1325, %v1327
    %v1338 = vsel %vm294, %v1327, %v1329
    %v1339 = vsel %vm294, %v1329, %v1331
    %v1340 = vsel %vm294, %v1331, %v1333
    %1348 = vst [vmem:[#allocation2 + $0x498] sm:$0xff] %v1334
    %1349 = vst [vmem:[#allocation2 + $0x4a0] sm:$0xff] %v1335
    %1350 = vst [vmem:[#allocation2 + $0x4a8] sm:$0xff] %v1336
    %1351 = vst [vmem:[#allocation2 + $0x4b0] sm:$0xff] %v1337
    %1352 = vst [vmem:[#allocation2 + $0x4b8] sm:$0xff] %v1338
    %1353 = vst [vmem:[#allocation2 + $0x4c0] sm:$0xff] %v1339
    %1354 = vst [vmem:[#allocation2 + $0x4c8] sm:$0xff] %v1340
    %v1355 = vld [vmem:[%s0 + $0x8] sm:$0xff]
    %v1356 = vld [vmem:[%s0 + $0x10] sm:$0xff]
    %v1357 = vld [vmem:[%s0 + $0x18] sm:$0xff]
    %v1358 = vld [vmem:[%s0 + $0x20] sm:$0xff]
    %v1359 = vld [vmem:[%s0 + $0x28] sm:$0xff]
    %v1360 = vld [vmem:[%s0 + $0x30] sm:$0xff]
    %v1361 = vld [vmem:[%s0 + $0x38] sm:$0xff]
    %v1362 = vld [vmem:[%s0 + $0x40] sm:$0xff]
    %1371 = vrot.lane.b32.xlu0 %v1355, 126
    %v1372 = vpop.permute.xlu0 %1371
    %1373 = vrot.lane.b32.xlu0 %v1356, 126
    %v1374 = vpop.permute.xlu0 %1373
    %1375 = vrot.lane.b32.xlu0 %v1357, 126
    %v1376 = vpop.permute.xlu0 %1375
    %1377 = vrot.lane.b32.xlu0 %v1358, 126
    %v1378 = vpop.permute.xlu0 %1377
    %1379 = vrot.lane.b32.xlu0 %v1359, 126
    %v1380 = vpop.permute.xlu0 %1379
    %1381 = vrot.lane.b32.xlu0 %v1360, 126
    %v1382 = vpop.permute.xlu0 %1381
    %1383 = vrot.lane.b32.xlu0 %v1361, 126
    %v1384 = vpop.permute.xlu0 %1383
    %1385 = vrot.lane.b32.xlu0 %v1362, 126
    %v1386 = vpop.permute.xlu0 %1385
    %v1387 = vsel %vm348, %v1372, %v1374
    %v1388 = vsel %vm348, %v1374, %v1376
    %v1389 = vsel %vm348, %v1376, %v1378
    %v1390 = vsel %vm348, %v1378, %v1380
    %v1391 = vsel %vm348, %v1380, %v1382
    %v1392 = vsel %vm348, %v1382, %v1384
    %v1393 = vsel %vm348, %v1384, %v1386
    %1401 = vst [vmem:[#allocation2 + $0x4d0] sm:$0xff] %v1387
    %1402 = vst [vmem:[#allocation2 + $0x4d8] sm:$0xff] %v1388
    %1403 = vst [vmem:[#allocation2 + $0x4e0] sm:$0xff] %v1389
    %1404 = vst [vmem:[#allocation2 + $0x4e8] sm:$0xff] %v1390
    %1405 = vst [vmem:[#allocation2 + $0x4f0] sm:$0xff] %v1391
    %1406 = vst [vmem:[#allocation2 + $0x4f8] sm:$0xff] %v1392
    %1407 = vst [vmem:[#allocation2 + $0x500] sm:$0xff] %v1393
    %v1408 = vld [vmem:[%s0 + $0x8] sm:$0xff]
    %v1409 = vld [vmem:[%s0 + $0x10] sm:$0xff]
    %v1410 = vld [vmem:[%s0 + $0x18] sm:$0xff]
    %v1411 = vld [vmem:[%s0 + $0x20] sm:$0xff]
    %v1412 = vld [vmem:[%s0 + $0x28] sm:$0xff]
    %v1413 = vld [vmem:[%s0 + $0x30] sm:$0xff]
    %v1414 = vld [vmem:[%s0 + $0x38] sm:$0xff]
    %v1415 = vld [vmem:[%s0 + $0x40] sm:$0xff]
    %1424 = vrot.lane.b32.xlu0 %v1408, 125
    %v1425 = vpop.permute.xlu0 %1424
    %1426 = vrot.lane.b32.xlu0 %v1409, 125
    %v1427 = vpop.permute.xlu0 %1426
    %1428 = vrot.lane.b32.xlu0 %v1410, 125
    %v1429 = vpop.permute.xlu0 %1428
    %1430 = vrot.lane.b32.xlu0 %v1411, 125
    %v1431 = vpop.permute.xlu0 %1430
    %1432 = vrot.lane.b32.xlu0 %v1412, 125
    %v1433 = vpop.permute.xlu0 %1432
    %1434 = vrot.lane.b32.xlu0 %v1413, 125
    %v1435 = vpop.permute.xlu0 %1434
    %1436 = vrot.lane.b32.xlu0 %v1414, 125
    %v1437 = vpop.permute.xlu0 %1436
    %1438 = vrot.lane.b32.xlu0 %v1415, 125
    %v1439 = vpop.permute.xlu0 %1438
    %v1440 = vsel %vm402, %v1425, %v1427
    %v1441 = vsel %vm402, %v1427, %v1429
    %v1442 = vsel %vm402, %v1429, %v1431
    %v1443 = vsel %vm402, %v1431, %v1433
    %v1444 = vsel %vm402, %v1433, %v1435
    %v1445 = vsel %vm402, %v1435, %v1437
    %v1446 = vsel %vm402, %v1437, %v1439
    %1454 = vst [vmem:[#allocation2 + $0x508] sm:$0xff] %v1440
    %1455 = vst [vmem:[#allocation2 + $0x510] sm:$0xff] %v1441
    %1456 = vst [vmem:[#allocation2 + $0x518] sm:$0xff] %v1442
    %1457 = vst [vmem:[#allocation2 + $0x520] sm:$0xff] %v1443
    %1458 = vst [vmem:[#allocation2 + $0x528] sm:$0xff] %v1444
    %1459 = vst [vmem:[#allocation2 + $0x530] sm:$0xff] %v1445
    %1460 = vst [vmem:[#allocation2 + $0x538] sm:$0xff] %v1446
    %v1461 = vld [vmem:[%s0 + $0x8] sm:$0xff]
    %v1462 = vld [vmem:[%s0 + $0x10] sm:$0xff]
    %v1463 = vld [vmem:[%s0 + $0x18] sm:$0xff]
    %v1464 = vld [vmem:[%s0 + $0x20] sm:$0xff]
    %v1465 = vld [vmem:[%s0 + $0x28] sm:$0xff]
    %v1466 = vld [vmem:[%s0 + $0x30] sm:$0xff]
    %v1467 = vld [vmem:[%s0 + $0x38] sm:$0xff]
    %v1468 = vld [vmem:[%s0 + $0x40] sm:$0xff]
    %1477 = vrot.lane.b32.xlu0 %v1461, 124
    %v1478 = vpop.permute.xlu0 %1477
    %1479 = vrot.lane.b32.xlu0 %v1462, 124
    %v1480 = vpop.permute.xlu0 %1479
    %1481 = vrot.lane.b32.xlu0 %v1463, 124
    %v1482 = vpop.permute.xlu0 %1481
    %1483 = vrot.lane.b32.xlu0 %v1464, 124
    %v1484 = vpop.permute.xlu0 %1483
    %1485 = vrot.lane.b32.xlu0 %v1465, 124
    %v1486 = vpop.permute.xlu0 %1485
    %1487 = vrot.lane.b32.xlu0 %v1466, 124
    %v1488 = vpop.permute.xlu0 %1487
    %1489 = vrot.lane.b32.xlu0 %v1467, 124
    %v1490 = vpop.permute.xlu0 %1489
    %1491 = vrot.lane.b32.xlu0 %v1468, 124
    %v1492 = vpop.permute.xlu0 %1491
    %v1493 = vsel %vm456, %v1478, %v1480
    %v1494 = vsel %vm456, %v1480, %v1482
    %v1495 = vsel %vm456, %v1482, %v1484
    %v1496 = vsel %vm456, %v1484, %v1486
    %v1497 = vsel %vm456, %v1486, %v1488
    %v1498 = vsel %vm456, %v1488, %v1490
    %v1499 = vsel %vm456, %v1490, %v1492
    %1507 = vst [vmem:[#allocation2 + $0x540] sm:$0xff] %v1493
    %1508 = vst [vmem:[#allocation2 + $0x548] sm:$0xff] %v1494
    %1509 = vst [vmem:[#allocation2 + $0x550] sm:$0xff] %v1495
    %1510 = vst [vmem:[#allocation2 + $0x558] sm:$0xff] %v1496
    %1511 = vst [vmem:[#allocation2 + $0x560] sm:$0xff] %v1497
    %1512 = vst [vmem:[#allocation2 + $0x568] sm:$0xff] %v1498
    %1513 = vst [vmem:[#allocation2 + $0x570] sm:$0xff] %v1499
    %v1514 = vld [vmem:[#allocation4] sm:$0xff]
    %v1515 = vld [vmem:[#allocation4 + $0x8] sm:$0xff]
    %v1516 = vld [vmem:[#allocation4 + $0x10] sm:$0xff]
    %v1517 = vld [vmem:[#allocation4 + $0x18] sm:$0xff]
    %v1518 = vld [vmem:[#allocation4 + $0x20] sm:$0xff]
    %v1519 = vld [vmem:[#allocation4 + $0x28] sm:$0xff]
    %v1520 = vld [vmem:[#allocation4 + $0x30] sm:$0xff]
    %v1521 = vld [vmem:[#allocation4 + $0x38] sm:$0xff]
    %v1522 = vld [vmem:[#allocation4 + $0x40] sm:$0xff]
    %v1523 = vld [vmem:[#allocation4 + $0x48] sm:$0xff]
    %v1524 = vld [vmem:[#allocation4 + $0x50] sm:$0xff]
    %v1525 = vld [vmem:[#allocation4 + $0x58] sm:$0xff]
    %v1526 = vld [vmem:[#allocation4 + $0x60] sm:$0xff]
    %v1527 = vld [vmem:[#allocation4 + $0x68] sm:$0xff]
    %v1528 = vld [vmem:[#allocation4 + $0x70] sm:$0xff]
    %v1529 = vld [vmem:[#allocation4 + $0x78] sm:$0xff]
    %v1530 = vld [vmem:[#allocation4 + $0x80] sm:$0xff]
    %v1531 = vld [vmem:[#allocation4 + $0x88] sm:$0xff]
    %v1532 = vld [vmem:[#allocation4 + $0x90] sm:$0xff]
    %v1533 = vld [vmem:[#allocation4 + $0x98] sm:$0xff]
    %v1534 = vld [vmem:[#allocation2] sm:$0xff]
    %v1535 = vld [vmem:[#allocation2 + $0x8] sm:$0xff]
    %v1536 = vld [vmem:[#allocation2 + $0x10] sm:$0xff]
    %v1537 = vld [vmem:[#allocation2 + $0x18] sm:$0xff]
    %v1538 = vld [vmem:[#allocation2 + $0x20] sm:$0xff]
    %v1539 = vld [vmem:[#allocation2 + $0x28] sm:$0xff]
    %v1540 = vld [vmem:[#allocation2 + $0x30] sm:$0xff]
    %v1541 = vld [vmem:[#allocation2 + $0x38] sm:$0xff]
    %v1542 = vld [vmem:[#allocation2 + $0x40] sm:$0xff]
    %v1543 = vld [vmem:[#allocation2 + $0x48] sm:$0xff]
    %v1544 = vld [vmem:[#allocation2 + $0x50] sm:$0xff]
    %v1545 = vld [vmem:[#allocation2 + $0x58] sm:$0xff]
    %v1546 = vld [vmem:[#allocation2 + $0x60] sm:$0xff]
    %v1547 = vld [vmem:[#allocation2 + $0x68] sm:$0xff]
    %v1548 = vld [vmem:[#allocation2 + $0x70] sm:$0xff]
    %v1549 = vld [vmem:[#allocation2 + $0x78] sm:$0xff]
    %v1550 = vld [vmem:[#allocation2 + $0x80] sm:$0xff]
    %v1551 = vld [vmem:[#allocation2 + $0x88] sm:$0xff]
    %v1552 = vld [vmem:[#allocation2 + $0x90] sm:$0xff]
    %v1553 = vld [vmem:[#allocation2 + $0x98] sm:$0xff]
    %v1554 = vld [vmem:[#allocation2 + $0xa0] sm:$0xff]
    %v1555 = vld [vmem:[#allocation2 + $0xa8] sm:$0xff]
    %v1556 = vld [vmem:[#allocation2 + $0xb0] sm:$0xff]
    %v1557 = vld [vmem:[#allocation2 + $0xb8] sm:$0xff]
    %v1558 = vld [vmem:[#allocation2 + $0xc0] sm:$0xff]
    %v1559 = vld [vmem:[#allocation2 + $0xc8] sm:$0xff]
    %v1560 = vld [vmem:[#allocation2 + $0xd0] sm:$0xff]
    %v1561 = vld [vmem:[#allocation2 + $0xd8] sm:$0xff]
    %v1562 = vld [vmem:[#allocation2 + $0xe0] sm:$0xff]
    %v1563 = vld [vmem:[#allocation2 + $0xe8] sm:$0xff]
    %v1564 = vld [vmem:[#allocation2 + $0xf0] sm:$0xff]
    %v1565 = vld [vmem:[#allocation2 + $0xf8] sm:$0xff]
    %v1566 = vld [vmem:[#allocation2 + $0x100] sm:$0xff]
    %v1567 = vld [vmem:[#allocation2 + $0x108] sm:$0xff]
    %v1568 = vld [vmem:[#allocation2 + $0x110] sm:$0xff]
    %v1569 = vld [vmem:[#allocation2 + $0x118] sm:$0xff]
    %v1570 = vld [vmem:[#allocation2 + $0x120] sm:$0xff]
    %v1571 = vld [vmem:[#allocation2 + $0x128] sm:$0xff]
    %v1572 = vld [vmem:[#allocation2 + $0x130] sm:$0xff]
    %v1573 = vld [vmem:[#allocation2 + $0x138] sm:$0xff]
    %v1574 = vld [vmem:[#allocation2 + $0x140] sm:$0xff]
    %v1575 = vld [vmem:[#allocation2 + $0x148] sm:$0xff]
    %v1576 = vld [vmem:[#allocation2 + $0x150] sm:$0xff]
    %v1577 = vld [vmem:[#allocation2 + $0x158] sm:$0xff]
    %v1578 = vld [vmem:[#allocation2 + $0x160] sm:$0xff]
    %v1579 = vld [vmem:[#allocation2 + $0x168] sm:$0xff]
    %v1580 = vld [vmem:[#allocation2 + $0x170] sm:$0xff]
    %v1581 = vld [vmem:[#allocation2 + $0x178] sm:$0xff]
    %v1582 = vld [vmem:[#allocation2 + $0x180] sm:$0xff]
    %v1583 = vld [vmem:[#allocation2 + $0x188] sm:$0xff]
    %v1584 = vld [vmem:[#allocation2 + $0x190] sm:$0xff]
    %v1585 = vld [vmem:[#allocation2 + $0x198] sm:$0xff]
    %v1586 = vld [vmem:[#allocation2 + $0x1a0] sm:$0xff]
    %v1587 = vld [vmem:[#allocation2 + $0x1a8] sm:$0xff]
    %v1588 = vld [vmem:[#allocation2 + $0x1b0] sm:$0xff]
    %v1589 = vld [vmem:[#allocation2 + $0x1b8] sm:$0xff]
    %v1590 = vld [vmem:[#allocation2 + $0x1c0] sm:$0xff]
    %v1591 = vld [vmem:[#allocation2 + $0x1c8] sm:$0xff]
    %v1592 = vld [vmem:[#allocation2 + $0x1d0] sm:$0xff]
    %v1593 = vld [vmem:[#allocation2 + $0x1d8] sm:$0xff]
    %v1594 = vld [vmem:[#allocation2 + $0x1e0] sm:$0xff]
    %v1595 = vld [vmem:[#allocation2 + $0x1e8] sm:$0xff]
    %v1596 = vld [vmem:[#allocation2 + $0x1f0] sm:$0xff]
    %v1597 = vld [vmem:[#allocation2 + $0x1f8] sm:$0xff]
    %v1598 = vld [vmem:[#allocation2 + $0x200] sm:$0xff]
    %v1599 = vld [vmem:[#allocation2 + $0x208] sm:$0xff]
    %v1600 = vld [vmem:[#allocation2 + $0x210] sm:$0xff]
    %v1601 = vld [vmem:[#allocation2 + $0x218] sm:$0xff]
    %v1602 = vld [vmem:[#allocation2 + $0x220] sm:$0xff]
    %v1603 = vld [vmem:[#allocation2 + $0x228] sm:$0xff]
    %v1604 = vld [vmem:[#allocation2 + $0x230] sm:$0xff]
    %v1605 = vld [vmem:[#allocation2 + $0x238] sm:$0xff]
    %v1606 = vld [vmem:[#allocation2 + $0x240] sm:$0xff]
    %v1607 = vld [vmem:[#allocation2 + $0x248] sm:$0xff]
    %v1608 = vld [vmem:[#allocation2 + $0x250] sm:$0xff]
    %v1609 = vld [vmem:[#allocation2 + $0x258] sm:$0xff]
    %v1610 = vld [vmem:[#allocation2 + $0x260] sm:$0xff]
    %v1611 = vld [vmem:[#allocation2 + $0x268] sm:$0xff]
    %v1612 = vld [vmem:[#allocation2 + $0x270] sm:$0xff]
    %v1613 = vld [vmem:[#allocation2 + $0x278] sm:$0xff]
    %v1614 = vld [vmem:[#allocation2 + $0x280] sm:$0xff]
    %v1615 = vld [vmem:[#allocation2 + $0x288] sm:$0xff]
    %v1616 = vld [vmem:[#allocation2 + $0x290] sm:$0xff]
    %v1617 = vld [vmem:[#allocation2 + $0x298] sm:$0xff]
    %v1618 = vld [vmem:[#allocation2 + $0x2a0] sm:$0xff]
    %v1619 = vld [vmem:[#allocation2 + $0x2a8] sm:$0xff]
    %v1620 = vld [vmem:[#allocation2 + $0x2b0] sm:$0xff]
    %v1621 = vld [vmem:[#allocation2 + $0x2b8] sm:$0xff]
    %v1622 = vld [vmem:[#allocation2 + $0x2c0] sm:$0xff]
    %v1623 = vld [vmem:[#allocation2 + $0x2c8] sm:$0xff]
    %v1624 = vld [vmem:[#allocation2 + $0x2d0] sm:$0xff]
    %v1625 = vld [vmem:[#allocation2 + $0x2d8] sm:$0xff]
    %v1626 = vld [vmem:[#allocation2 + $0x2e0] sm:$0xff]
    %v1627 = vld [vmem:[#allocation2 + $0x2e8] sm:$0xff]
    %v1628 = vld [vmem:[#allocation2 + $0x2f0] sm:$0xff]
    %v1629 = vld [vmem:[#allocation2 + $0x2f8] sm:$0xff]
    %v1630 = vld [vmem:[#allocation2 + $0x300] sm:$0xff]
    %v1631 = vld [vmem:[#allocation2 + $0x308] sm:$0xff]
    %v1632 = vld [vmem:[#allocation2 + $0x310] sm:$0xff]
    %v1633 = vld [vmem:[#allocation2 + $0x318] sm:$0xff]
    %v1634 = vld [vmem:[#allocation2 + $0x320] sm:$0xff]
    %v1635 = vld [vmem:[#allocation2 + $0x328] sm:$0xff]
    %v1636 = vld [vmem:[#allocation2 + $0x330] sm:$0xff]
    %v1637 = vld [vmem:[#allocation2 + $0x338] sm:$0xff]
    %v1638 = vld [vmem:[#allocation2 + $0x340] sm:$0xff]
    %v1639 = vld [vmem:[#allocation2 + $0x348] sm:$0xff]
    %v1640 = vld [vmem:[#allocation2 + $0x350] sm:$0xff]
    %v1641 = vld [vmem:[#allocation2 + $0x358] sm:$0xff]
    %v1642 = vld [vmem:[#allocation2 + $0x360] sm:$0xff]
    %v1643 = vld [vmem:[#allocation2 + $0x368] sm:$0xff]
    %v1644 = vld [vmem:[#allocation2 + $0x370] sm:$0xff]
    %v1645 = vld [vmem:[#allocation2 + $0x378] sm:$0xff]
    %v1646 = vld [vmem:[#allocation2 + $0x380] sm:$0xff]
    %v1647 = vld [vmem:[#allocation2 + $0x388] sm:$0xff]
    %v1648 = vld [vmem:[#allocation2 + $0x390] sm:$0xff]
    %v1649 = vld [vmem:[#allocation2 + $0x398] sm:$0xff]
    %v1650 = vld [vmem:[#allocation2 + $0x3a0] sm:$0xff]
    %v1651 = vld [vmem:[#allocation2 + $0x3a8] sm:$0xff]
    %v1652 = vld [vmem:[#allocation2 + $0x3b0] sm:$0xff]
    %v1653 = vld [vmem:[#allocation2 + $0x3b8] sm:$0xff]
    %v1654 = vld [vmem:[#allocation2 + $0x3c0] sm:$0xff]
    %v1655 = vld [vmem:[#allocation2 + $0x3c8] sm:$0xff]
    %v1656 = vld [vmem:[#allocation2 + $0x3d0] sm:$0xff]
    %v1657 = vld [vmem:[#allocation2 + $0x3d8] sm:$0xff]
    %v1658 = vld [vmem:[#allocation2 + $0x3e0] sm:$0xff]
    %v1659 = vld [vmem:[#allocation2 + $0x3e8] sm:$0xff]
    %v1660 = vld [vmem:[#allocation2 + $0x3f0] sm:$0xff]
    %v1661 = vld [vmem:[#allocation2 + $0x3f8] sm:$0xff]
    %v1662 = vld [vmem:[#allocation2 + $0x400] sm:$0xff]
    %v1663 = vld [vmem:[#allocation2 + $0x408] sm:$0xff]
    %v1664 = vld [vmem:[#allocation2 + $0x410] sm:$0xff]
    %v1665 = vld [vmem:[#allocation2 + $0x418] sm:$0xff]
    %v1666 = vld [vmem:[#allocation2 + $0x420] sm:$0xff]
    %v1667 = vld [vmem:[#allocation2 + $0x428] sm:$0xff]
    %v1668 = vld [vmem:[#allocation2 + $0x430] sm:$0xff]
    %v1669 = vld [vmem:[#allocation2 + $0x438] sm:$0xff]
    %v1670 = vld [vmem:[#allocation2 + $0x440] sm:$0xff]
    %v1671 = vld [vmem:[#allocation2 + $0x448] sm:$0xff]
    %v1672 = vld [vmem:[#allocation2 + $0x450] sm:$0xff]
    %v1673 = vld [vmem:[#allocation2 + $0x458] sm:$0xff]
    %v1674 = vld [vmem:[#allocation2 + $0x460] sm:$0xff]
    %v1675 = vld [vmem:[#allocation2 + $0x468] sm:$0xff]
    %v1676 = vld [vmem:[#allocation2 + $0x470] sm:$0xff]
    %v1677 = vld [vmem:[#allocation2 + $0x478] sm:$0xff]
    %v1678 = vld [vmem:[#allocation2 + $0x480] sm:$0xff]
    %v1679 = vld [vmem:[#allocation2 + $0x488] sm:$0xff]
    %v1680 = vld [vmem:[#allocation2 + $0x490] sm:$0xff]
    %v1681 = vld [vmem:[#allocation2 + $0x498] sm:$0xff]
    %v1682 = vld [vmem:[#allocation2 + $0x4a0] sm:$0xff]
    %v1683 = vld [vmem:[#allocation2 + $0x4a8] sm:$0xff]
    %v1684 = vld [vmem:[#allocation2 + $0x4b0] sm:$0xff]
    %v1685 = vld [vmem:[#allocation2 + $0x4b8] sm:$0xff]
    %v1686 = vld [vmem:[#allocation2 + $0x4c0] sm:$0xff]
    %v1687 = vld [vmem:[#allocation2 + $0x4c8] sm:$0xff]
    %v1688 = vld [vmem:[#allocation2 + $0x4d0] sm:$0xff]
    %v1689 = vld [vmem:[#allocation2 + $0x4d8] sm:$0xff]
    %v1690 = vld [vmem:[#allocation2 + $0x4e0] sm:$0xff]
    %v1691 = vld [vmem:[#allocation2 + $0x4e8] sm:$0xff]
    %v1692 = vld [vmem:[#allocation2 + $0x4f0] sm:$0xff]
    %v1693 = vld [vmem:[#allocation2 + $0x4f8] sm:$0xff]
    %v1694 = vld [vmem:[#allocation2 + $0x500] sm:$0xff]
    %v1695 = vld [vmem:[#allocation2 + $0x508] sm:$0xff]
    %v1696 = vld [vmem:[#allocation2 + $0x510] sm:$0xff]
    %v1697 = vld [vmem:[#allocation2 + $0x518] sm:$0xff]
    %v1698 = vld [vmem:[#allocation2 + $0x520] sm:$0xff]
    %v1699 = vld [vmem:[#allocation2 + $0x528] sm:$0xff]
    %v1700 = vld [vmem:[#allocation2 + $0x530] sm:$0xff]
    %v1701 = vld [vmem:[#allocation2 + $0x538] sm:$0xff]
    %v1702 = vld [vmem:[#allocation2 + $0x540] sm:$0xff]
    %v1703 = vld [vmem:[#allocation2 + $0x548] sm:$0xff]
    %v1704 = vld [vmem:[#allocation2 + $0x550] sm:$0xff]
    %v1705 = vld [vmem:[#allocation2 + $0x558] sm:$0xff]
    %v1706 = vld [vmem:[#allocation2 + $0x560] sm:$0xff]
    %v1707 = vld [vmem:[#allocation2 + $0x568] sm:$0xff]
    %v1708 = vld [vmem:[#allocation2 + $0x570] sm:$0xff]
    %vm1709 = vcmask 588800
    %v1711 = vsel %vm1709, %v1515, 0
    %v1714 = vsel %vm1709, %v1517, 0
    %v1717 = vsel %vm1709, %v1519, 0
    %v1720 = vsel %vm1709, %v1521, 0
    %v1723 = vsel %vm1709, %v1523, 0
    %v1726 = vsel %vm1709, %v1525, 0
    %v1729 = vsel %vm1709, %v1527, 0
    %v1732 = vsel %vm1709, %v1529, 0
    %v1735 = vsel %vm1709, %v1531, 0
    %v1738 = vsel %vm1709, %v1533, 0
    %1740 = vmatpush.msra.mxu0 %v1639
    %1741 = vmatpush.msra.mxu0 %v1632
    %1742 = vmatpush.msra.mxu0 %v1625
    %1743 = vmatpush.msra.mxu0 %v1618
    %1744 = vmatpush.msra.mxu0 %v1611
    %1745 = vmatpush.msra.mxu0 %v1604
    %1746 = vmatpush.msra.mxu0 %v1597
    %1747 = vmatpush.msra.mxu0 %v1590
    %1748 = vmatpush.msra.mxu0 %v1583
    %1749 = vmatpush.msra.mxu0 %v1576
    %1750 = vmatpush.msra.mxu0 %v1569
    %1751 = vmatpush.msra.mxu0 %v1562
    %1752 = vmatpush.msra.mxu0 %v1555
    %1753 = vmatpush.msra.mxu0 %v1548
    %1754 = vmatpush.msra.mxu0 %v1541
    %1755 = vmatpush.msra.mxu0 %v1534
    %1756 = vmatmul.f32.gmra.mxu0 %v1514
    %v1757 = vpop.f32.mrf.mxu0
    %v1758 = vadd.f32 0.0, %v1757
    %1759 = vmatmul.f32.gmra.mxu0 %v1516
    %v1760 = vpop.f32.mrf.mxu0
    %v1761 = vadd.f32 0.0, %v1760
    %1762 = vmatmul.f32.gmra.mxu0 %v1518
    %v1763 = vpop.f32.mrf.mxu0
    %v1764 = vadd.f32 0.0, %v1763
    %1765 = vmatmul.f32.gmra.mxu0 %v1520
    %v1766 = vpop.f32.mrf.mxu0
    %v1767 = vadd.f32 0.0, %v1766
    %1768 = vmatmul.f32.gmra.mxu0 %v1522
    %v1769 = vpop.f32.mrf.mxu0
    %v1770 = vadd.f32 0.0, %v1769
    %1771 = vmatmul.f32.gmra.mxu0 %v1524
    %v1772 = vpop.f32.mrf.mxu0
    %v1773 = vadd.f32 0.0, %v1772
    %1774 = vmatmul.f32.gmra.mxu0 %v1526
    %v1775 = vpop.f32.mrf.mxu0
    %v1776 = vadd.f32 0.0, %v1775
    %1777 = vmatmul.f32.gmra.mxu0 %v1528
    %v1778 = vpop.f32.mrf.mxu0
    %v1779 = vadd.f32 0.0, %v1778
    %1780 = vmatmul.f32.gmra.mxu0 %v1530
    %v1781 = vpop.f32.mrf.mxu0
    %v1782 = vadd.f32 0.0, %v1781
    %1783 = vmatmul.f32.gmra.mxu0 %v1532
    %v1784 = vpop.f32.mrf.mxu0
    %v1785 = vadd.f32 0.0, %v1784
    %1786 = vdwg.mxu0
    %1787 = vmatpush.msra.mxu0 0.0
    %1788 = vmatpush.msra.mxu0 0.0
    %1789 = vmatpush.msra.mxu0 0.0
    %1790 = vmatpush.msra.mxu0 0.0
    %1791 = vmatpush.msra.mxu0 0.0
    %1792 = vmatpush.msra.mxu0 0.0
    %1793 = vmatpush.msra.mxu0 0.0
    %1794 = vmatpush.msra.mxu0 %v1702
    %1795 = vmatpush.msra.mxu0 %v1695
    %1796 = vmatpush.msra.mxu0 %v1688
    %1797 = vmatpush.msra.mxu0 %v1681
    %1798 = vmatpush.msra.mxu0 %v1674
    %1799 = vmatpush.msra.mxu0 %v1667
    %1800 = vmatpush.msra.mxu0 %v1660
    %1801 = vmatpush.msra.mxu0 %v1653
    %1802 = vmatpush.msra.mxu0 %v1646
    %1803 = vmatmul.f32.gmra.mxu0 %v1711
    %v1804 = vpop.f32.mrf.mxu0
    %v1805 = vadd.f32 %v1758, %v1804
    %1806 = vmatmul.f32.gmra.mxu0 %v1714
    %v1807 = vpop.f32.mrf.mxu0
    %v1808 = vadd.f32 %v1761, %v1807
    %1809 = vmatmul.f32.gmra.mxu0 %v1717
    %v1810 = vpop.f32.mrf.mxu0
    %v1811 = vadd.f32 %v1764, %v1810
    %1812 = vmatmul.f32.gmra.mxu0 %v1720
    %v1813 = vpop.f32.mrf.mxu0
    %v1814 = vadd.f32 %v1767, %v1813
    %1815 = vmatmul.f32.gmra.mxu0 %v1723
    %v1816 = vpop.f32.mrf.mxu0
    %v1817 = vadd.f32 %v1770, %v1816
    %1818 = vmatmul.f32.gmra.mxu0 %v1726
    %v1819 = vpop.f32.mrf.mxu0
    %v1820 = vadd.f32 %v1773, %v1819
    %1821 = vmatmul.f32.gmra.mxu0 %v1729
    %v1822 = vpop.f32.mrf.mxu0
    %v1823 = vadd.f32 %v1776, %v1822
    %1824 = vmatmul.f32.gmra.mxu0 %v1732
    %v1825 = vpop.f32.mrf.mxu0
    %v1826 = vadd.f32 %v1779, %v1825
    %1827 = vmatmul.f32.gmra.mxu0 %v1735
    %v1828 = vpop.f32.mrf.mxu0
    %v1829 = vadd.f32 %v1782, %v1828
    %1830 = vmatmul.f32.gmra.mxu0 %v1738
    %v1831 = vpop.f32.mrf.mxu0
    %v1832 = vadd.f32 %v1785, %v1831
    %1833 = vdwg.mxu0
    %1834 = vmatpush.msra.mxu0 %v1640
    %1835 = vmatpush.msra.mxu0 %v1633
    %1836 = vmatpush.msra.mxu0 %v1626
    %1837 = vmatpush.msra.mxu0 %v1619
    %1838 = vmatpush.msra.mxu0 %v1612
    %1839 = vmatpush.msra.mxu0 %v1605
    %1840 = vmatpush.msra.mxu0 %v1598
    %1841 = vmatpush.msra.mxu0 %v1591
    %1842 = vmatpush.msra.mxu0 %v1584
    %1843 = vmatpush.msra.mxu0 %v1577
    %1844 = vmatpush.msra.mxu0 %v1570
    %1845 = vmatpush.msra.mxu0 %v1563
    %1846 = vmatpush.msra.mxu0 %v1556
    %1847 = vmatpush.msra.mxu0 %v1549
    %1848 = vmatpush.msra.mxu0 %v1542
    %1849 = vmatpush.msra.mxu0 %v1535
    %1850 = vmatmul.f32.gmra.mxu0 %v1514
    %v1851 = vpop.f32.mrf.mxu0
    %v1852 = vadd.f32 0.0, %v1851
    %1853 = vmatmul.f32.gmra.mxu0 %v1516
    %v1854 = vpop.f32.mrf.mxu0
    %v1855 = vadd.f32 0.0, %v1854
    %1856 = vmatmul.f32.gmra.mxu0 %v1518
    %v1857 = vpop.f32.mrf.mxu0
    %v1858 = vadd.f32 0.0, %v1857
    %1859 = vmatmul.f32.gmra.mxu0 %v1520
    %v1860 = vpop.f32.mrf.mxu0
    %v1861 = vadd.f32 0.0, %v1860
    %1862 = vmatmul.f32.gmra.mxu0 %v1522
    %v1863 = vpop.f32.mrf.mxu0
    %v1864 = vadd.f32 0.0, %v1863
    %1865 = vmatmul.f32.gmra.mxu0 %v1524
    %v1866 = vpop.f32.mrf.mxu0
    %v1867 = vadd.f32 0.0, %v1866
    %1868 = vmatmul.f32.gmra.mxu0 %v1526
    %v1869 = vpop.f32.mrf.mxu0
    %v1870 = vadd.f32 0.0, %v1869
    %1871 = vmatmul.f32.gmra.mxu0 %v1528
    %v1872 = vpop.f32.mrf.mxu0
    %v1873 = vadd.f32 0.0, %v1872
    %1874 = vmatmul.f32.gmra.mxu0 %v1530
    %v1875 = vpop.f32.mrf.mxu0
    %v1876 = vadd.f32 0.0, %v1875
    %1877 = vmatmul.f32.gmra.mxu0 %v1532
    %v1878 = vpop.f32.mrf.mxu0
    %v1879 = vadd.f32 0.0, %v1878
    %1880 = vdwg.mxu0
    %1881 = vmatpush.msra.mxu0 0.0
    %1882 = vmatpush.msra.mxu0 0.0
    %1883 = vmatpush.msra.mxu0 0.0
    %1884 = vmatpush.msra.mxu0 0.0
    %1885 = vmatpush.msra.mxu0 0.0
    %1886 = vmatpush.msra.mxu0 0.0
    %1887 = vmatpush.msra.mxu0 0.0
    %1888 = vmatpush.msra.mxu0 %v1703
    %1889 = vmatpush.msra.mxu0 %v1696
    %1890 = vmatpush.msra.mxu0 %v1689
    %1891 = vmatpush.msra.mxu0 %v1682
    %1892 = vmatpush.msra.mxu0 %v1675
    %1893 = vmatpush.msra.mxu0 %v1668
    %1894 = vmatpush.msra.mxu0 %v1661
    %1895 = vmatpush.msra.mxu0 %v1654
    %1896 = vmatpush.msra.mxu0 %v1647
    %1897 = vmatmul.f32.gmra.mxu0 %v1711
    %v1898 = vpop.f32.mrf.mxu0
    %v1899 = vadd.f32 %v1852, %v1898
    %1900 = vmatmul.f32.gmra.mxu0 %v1714
    %v1901 = vpop.f32.mrf.mxu0
    %v1902 = vadd.f32 %v1855, %v1901
    %1903 = vmatmul.f32.gmra.mxu0 %v1717
    %v1904 = vpop.f32.mrf.mxu0
    %v1905 = vadd.f32 %v1858, %v1904
    %1906 = vmatmul.f32.gmra.mxu0 %v1720
    %v1907 = vpop.f32.mrf.mxu0
    %v1908 = vadd.f32 %v1861, %v1907
    %1909 = vmatmul.f32.gmra.mxu0 %v1723
    %v1910 = vpop.f32.mrf.mxu0
    %v1911 = vadd.f32 %v1864, %v1910
    %1912 = vmatmul.f32.gmra.mxu0 %v1726
    %v1913 = vpop.f32.mrf.mxu0
    %v1914 = vadd.f32 %v1867, %v1913
    %1915 = vmatmul.f32.gmra.mxu0 %v1729
    %v1916 = vpop.f32.mrf.mxu0
    %v1917 = vadd.f32 %v1870, %v1916
    %1918 = vmatmul.f32.gmra.mxu0 %v1732
    %v1919 = vpop.f32.mrf.mxu0
    %v1920 = vadd.f32 %v1873, %v1919
    %1921 = vmatmul.f32.gmra.mxu0 %v1735
    %v1922 = vpop.f32.mrf.mxu0
    %v1923 = vadd.f32 %v1876, %v1922
    %1924 = vmatmul.f32.gmra.mxu0 %v1738
    %v1925 = vpop.f32.mrf.mxu0
    %v1926 = vadd.f32 %v1879, %v1925
    %1927 = vdwg.mxu0
    %1928 = vmatpush.msra.mxu0 %v1641
    %1929 = vmatpush.msra.mxu0 %v1634
    %1930 = vmatpush.msra.mxu0 %v1627
    %1931 = vmatpush.msra.mxu0 %v1620
    %1932 = vmatpush.msra.mxu0 %v1613
    %1933 = vmatpush.msra.mxu0 %v1606
    %1934 = vmatpush.msra.mxu0 %v1599
    %1935 = vmatpush.msra.mxu0 %v1592
    %1936 = vmatpush.msra.mxu0 %v1585
    %1937 = vmatpush.msra.mxu0 %v1578
    %1938 = vmatpush.msra.mxu0 %v1571
    %1939 = vmatpush.msra.mxu0 %v1564
    %1940 = vmatpush.msra.mxu0 %v1557
    %1941 = vmatpush.msra.mxu0 %v1550
    %1942 = vmatpush.msra.mxu0 %v1543
    %1943 = vmatpush.msra.mxu0 %v1536
    %1944 = vmatmul.f32.gmra.mxu0 %v1514
    %v1945 = vpop.f32.mrf.mxu0
    %v1946 = vadd.f32 0.0, %v1945
    %1947 = vmatmul.f32.gmra.mxu0 %v1516
    %v1948 = vpop.f32.mrf.mxu0
    %v1949 = vadd.f32 0.0, %v1948
    %1950 = vmatmul.f32.gmra.mxu0 %v1518
    %v1951 = vpop.f32.mrf.mxu0
    %v1952 = vadd.f32 0.0, %v1951
    %1953 = vmatmul.f32.gmra.mxu0 %v1520
    %v1954 = vpop.f32.mrf.mxu0
    %v1955 = vadd.f32 0.0, %v1954
    %1956 = vmatmul.f32.gmra.mxu0 %v1522
    %v1957 = vpop.f32.mrf.mxu0
    %v1958 = vadd.f32 0.0, %v1957
    %1959 = vmatmul.f32.gmra.mxu0 %v1524
    %v1960 = vpop.f32.mrf.mxu0
    %v1961 = vadd.f32 0.0, %v1960
    %1962 = vmatmul.f32.gmra.mxu0 %v1526
    %v1963 = vpop.f32.mrf.mxu0
    %v1964 = vadd.f32 0.0, %v1963
    %1965 = vmatmul.f32.gmra.mxu0 %v1528
    %v1966 = vpop.f32.mrf.mxu0
    %v1967 = vadd.f32 0.0, %v1966
    %1968 = vmatmul.f32.gmra.mxu0 %v1530
    %v1969 = vpop.f32.mrf.mxu0
    %v1970 = vadd.f32 0.0, %v1969
    %1971 = vmatmul.f32.gmra.mxu0 %v1532
    %v1972 = vpop.f32.mrf.mxu0
    %v1973 = vadd.f32 0.0, %v1972
    %1974 = vdwg.mxu0
    %1975 = vmatpush.msra.mxu0 0.0
    %1976 = vmatpush.msra.mxu0 0.0
    %1977 = vmatpush.msra.mxu0 0.0
    %1978 = vmatpush.msra.mxu0 0.0
    %1979 = vmatpush.msra.mxu0 0.0
    %1980 = vmatpush.msra.mxu0 0.0
    %1981 = vmatpush.msra.mxu0 0.0
    %1982 = vmatpush.msra.mxu0 %v1704
    %1983 = vmatpush.msra.mxu0 %v1697
    %1984 = vmatpush.msra.mxu0 %v1690
    %1985 = vmatpush.msra.mxu0 %v1683
    %1986 = vmatpush.msra.mxu0 %v1676
    %1987 = vmatpush.msra.mxu0 %v1669
    %1988 = vmatpush.msra.mxu0 %v1662
    %1989 = vmatpush.msra.mxu0 %v1655
    %1990 = vmatpush.msra.mxu0 %v1648
    %1991 = vmatmul.f32.gmra.mxu0 %v1711
    %v1992 = vpop.f32.mrf.mxu0
    %v1993 = vadd.f32 %v1946, %v1992
    %1994 = vmatmul.f32.gmra.mxu0 %v1714
    %v1995 = vpop.f32.mrf.mxu0
    %v1996 = vadd.f32 %v1949, %v1995
    %1997 = vmatmul.f32.gmra.mxu0 %v1717
    %v1998 = vpop.f32.mrf.mxu0
    %v1999 = vadd.f32 %v1952, %v1998
    %2000 = vmatmul.f32.gmra.mxu0 %v1720
    %v2001 = vpop.f32.mrf.mxu0
    %v2002 = vadd.f32 %v1955, %v2001
    %2003 = vmatmul.f32.gmra.mxu0 %v1723
    %v2004 = vpop.f32.mrf.mxu0
    %v2005 = vadd.f32 %v1958, %v2004
    %2006 = vmatmul.f32.gmra.mxu0 %v1726
    %v2007 = vpop.f32.mrf.mxu0
    %v2008 = vadd.f32 %v1961, %v2007
    %2009 = vmatmul.f32.gmra.mxu0 %v1729
    %v2010 = vpop.f32.mrf.mxu0
    %v2011 = vadd.f32 %v1964, %v2010
    %2012 = vmatmul.f32.gmra.mxu0 %v1732
    %v2013 = vpop.f32.mrf.mxu0
    %v2014 = vadd.f32 %v1967, %v2013
    %2015 = vmatmul.f32.gmra.mxu0 %v1735
    %v2016 = vpop.f32.mrf.mxu0
    %v2017 = vadd.f32 %v1970, %v2016
    %2018 = vmatmul.f32.gmra.mxu0 %v1738
    %v2019 = vpop.f32.mrf.mxu0
    %v2020 = vadd.f32 %v1973, %v2019
    %2021 = vdwg.mxu0
    %2022 = vmatpush.msra.mxu0 %v1642
    %2023 = vmatpush.msra.mxu0 %v1635
    %2024 = vmatpush.msra.mxu0 %v1628
    %2025 = vmatpush.msra.mxu0 %v1621
    %2026 = vmatpush.msra.mxu0 %v1614
    %2027 = vmatpush.msra.mxu0 %v1607
    %2028 = vmatpush.msra.mxu0 %v1600
    %2029 = vmatpush.msra.mxu0 %v1593
    %2030 = vmatpush.msra.mxu0 %v1586
    %2031 = vmatpush.msra.mxu0 %v1579
    %2032 = vmatpush.msra.mxu0 %v1572
    %2033 = vmatpush.msra.mxu0 %v1565
    %2034 = vmatpush.msra.mxu0 %v1558
    %2035 = vmatpush.msra.mxu0 %v1551
    %2036 = vmatpush.msra.mxu0 %v1544
    %2037 = vmatpush.msra.mxu0 %v1537
    %2038 = vmatmul.f32.gmra.mxu0 %v1514
    %v2039 = vpop.f32.mrf.mxu0
    %v2040 = vadd.f32 0.0, %v2039
    %2041 = vmatmul.f32.gmra.mxu0 %v1516
    %v2042 = vpop.f32.mrf.mxu0
    %v2043 = vadd.f32 0.0, %v2042
    %2044 = vmatmul.f32.gmra.mxu0 %v1518
    %v2045 = vpop.f32.mrf.mxu0
    %v2046 = vadd.f32 0.0, %v2045
    %2047 = vmatmul.f32.gmra.mxu0 %v1520
    %v2048 = vpop.f32.mrf.mxu0
    %v2049 = vadd.f32 0.0, %v2048
    %2050 = vmatmul.f32.gmra.mxu0 %v1522
    %v2051 = vpop.f32.mrf.mxu0
    %v2052 = vadd.f32 0.0, %v2051
    %2053 = vmatmul.f32.gmra.mxu0 %v1524
    %v2054 = vpop.f32.mrf.mxu0
    %v2055 = vadd.f32 0.0, %v2054
    %2056 = vmatmul.f32.gmra.mxu0 %v1526
    %v2057 = vpop.f32.mrf.mxu0
    %v2058 = vadd.f32 0.0, %v2057
    %2059 = vmatmul.f32.gmra.mxu0 %v1528
    %v2060 = vpop.f32.mrf.mxu0
    %v2061 = vadd.f32 0.0, %v2060
    %2062 = vmatmul.f32.gmra.mxu0 %v1530
    %v2063 = vpop.f32.mrf.mxu0
    %v2064 = vadd.f32 0.0, %v2063
    %2065 = vmatmul.f32.gmra.mxu0 %v1532
    %v2066 = vpop.f32.mrf.mxu0
    %v2067 = vadd.f32 0.0, %v2066
    %2068 = vdwg.mxu0
    %2069 = vmatpush.msra.mxu0 0.0
    %2070 = vmatpush.msra.mxu0 0.0
    %2071 = vmatpush.msra.mxu0 0.0
    %2072 = vmatpush.msra.mxu0 0.0
    %2073 = vmatpush.msra.mxu0 0.0
    %2074 = vmatpush.msra.mxu0 0.0
    %2075 = vmatpush.msra.mxu0 0.0
    %2076 = vmatpush.msra.mxu0 %v1705
    %2077 = vmatpush.msra.mxu0 %v1698
    %2078 = vmatpush.msra.mxu0 %v1691
    %2079 = vmatpush.msra.mxu0 %v1684
    %2080 = vmatpush.msra.mxu0 %v1677
    %2081 = vmatpush.msra.mxu0 %v1670
    %2082 = vmatpush.msra.mxu0 %v1663
    %2083 = vmatpush.msra.mxu0 %v1656
    %2084 = vmatpush.msra.mxu0 %v1649
    %2085 = vmatmul.f32.gmra.mxu0 %v1711
    %v2086 = vpop.f32.mrf.mxu0
    %v2087 = vadd.f32 %v2040, %v2086
    %2088 = vmatmul.f32.gmra.mxu0 %v1714
    %v2089 = vpop.f32.mrf.mxu0
    %v2090 = vadd.f32 %v2043, %v2089
    %2091 = vmatmul.f32.gmra.mxu0 %v1717
    %v2092 = vpop.f32.mrf.mxu0
    %v2093 = vadd.f32 %v2046, %v2092
    %2094 = vmatmul.f32.gmra.mxu0 %v1720
    %v2095 = vpop.f32.mrf.mxu0
    %v2096 = vadd.f32 %v2049, %v2095
    %2097 = vmatmul.f32.gmra.mxu0 %v1723
    %v2098 = vpop.f32.mrf.mxu0
    %v2099 = vadd.f32 %v2052, %v2098
    %2100 = vmatmul.f32.gmra.mxu0 %v1726
    %v2101 = vpop.f32.mrf.mxu0
    %v2102 = vadd.f32 %v2055, %v2101
    %2103 = vmatmul.f32.gmra.mxu0 %v1729
    %v2104 = vpop.f32.mrf.mxu0
    %v2105 = vadd.f32 %v2058, %v2104
    %2106 = vmatmul.f32.gmra.mxu0 %v1732
    %v2107 = vpop.f32.mrf.mxu0
    %v2108 = vadd.f32 %v2061, %v2107
    %2109 = vmatmul.f32.gmra.mxu0 %v1735
    %v2110 = vpop.f32.mrf.mxu0
    %v2111 = vadd.f32 %v2064, %v2110
    %2112 = vmatmul.f32.gmra.mxu0 %v1738
    %v2113 = vpop.f32.mrf.mxu0
    %v2114 = vadd.f32 %v2067, %v2113
    %2115 = vdwg.mxu0
    %2116 = vmatpush.msra.mxu0 %v1643
    %2117 = vmatpush.msra.mxu0 %v1636
    %2118 = vmatpush.msra.mxu0 %v1629
    %2119 = vmatpush.msra.mxu0 %v1622
    %2120 = vmatpush.msra.mxu0 %v1615
    %2121 = vmatpush.msra.mxu0 %v1608
    %2122 = vmatpush.msra.mxu0 %v1601
    %2123 = vmatpush.msra.mxu0 %v1594
    %2124 = vmatpush.msra.mxu0 %v1587
    %2125 = vmatpush.msra.mxu0 %v1580
    %2126 = vmatpush.msra.mxu0 %v1573
    %2127 = vmatpush.msra.mxu0 %v1566
    %2128 = vmatpush.msra.mxu0 %v1559
    %2129 = vmatpush.msra.mxu0 %v1552
    %2130 = vmatpush.msra.mxu0 %v1545
    %2131 = vmatpush.msra.mxu0 %v1538
    %2132 = vmatmul.f32.gmra.mxu0 %v1514
    %v2133 = vpop.f32.mrf.mxu0
    %v2134 = vadd.f32 0.0, %v2133
    %2135 = vmatmul.f32.gmra.mxu0 %v1516
    %v2136 = vpop.f32.mrf.mxu0
    %v2137 = vadd.f32 0.0, %v2136
    %2138 = vmatmul.f32.gmra.mxu0 %v1518
    %v2139 = vpop.f32.mrf.mxu0
    %v2140 = vadd.f32 0.0, %v2139
    %2141 = vmatmul.f32.gmra.mxu0 %v1520
    %v2142 = vpop.f32.mrf.mxu0
    %v2143 = vadd.f32 0.0, %v2142
    %2144 = vmatmul.f32.gmra.mxu0 %v1522
    %v2145 = vpop.f32.mrf.mxu0
    %v2146 = vadd.f32 0.0, %v2145
    %2147 = vmatmul.f32.gmra.mxu0 %v1524
    %v2148 = vpop.f32.mrf.mxu0
    %v2149 = vadd.f32 0.0, %v2148
    %2150 = vmatmul.f32.gmra.mxu0 %v1526
    %v2151 = vpop.f32.mrf.mxu0
    %v2152 = vadd.f32 0.0, %v2151
    %2153 = vmatmul.f32.gmra.mxu0 %v1528
    %v2154 = vpop.f32.mrf.mxu0
    %v2155 = vadd.f32 0.0, %v2154
    %2156 = vmatmul.f32.gmra.mxu0 %v1530
    %v2157 = vpop.f32.mrf.mxu0
    %v2158 = vadd.f32 0.0, %v2157
    %2159 = vmatmul.f32.gmra.mxu0 %v1532
    %v2160 = vpop.f32.mrf.mxu0
    %v2161 = vadd.f32 0.0, %v2160
    %2162 = vdwg.mxu0
    %2163 = vmatpush.msra.mxu0 0.0
    %2164 = vmatpush.msra.mxu0 0.0
    %2165 = vmatpush.msra.mxu0 0.0
    %2166 = vmatpush.msra.mxu0 0.0
    %2167 = vmatpush.msra.mxu0 0.0
    %2168 = vmatpush.msra.mxu0 0.0
    %2169 = vmatpush.msra.mxu0 0.0
    %2170 = vmatpush.msra.mxu0 %v1706
    %2171 = vmatpush.msra.mxu0 %v1699
    %2172 = vmatpush.msra.mxu0 %v1692
    %2173 = vmatpush.msra.mxu0 %v1685
    %2174 = vmatpush.msra.mxu0 %v1678
    %2175 = vmatpush.msra.mxu0 %v1671
    %2176 = vmatpush.msra.mxu0 %v1664
    %2177 = vmatpush.msra.mxu0 %v1657
    %2178 = vmatpush.msra.mxu0 %v1650
    %2179 = vmatmul.f32.gmra.mxu0 %v1711
    %v2180 = vpop.f32.mrf.mxu0
    %v2181 = vadd.f32 %v2134, %v2180
    %2182 = vmatmul.f32.gmra.mxu0 %v1714
    %v2183 = vpop.f32.mrf.mxu0
    %v2184 = vadd.f32 %v2137, %v2183
    %2185 = vmatmul.f32.gmra.mxu0 %v1717
    %v2186 = vpop.f32.mrf.mxu0
    %v2187 = vadd.f32 %v2140, %v2186
    %2188 = vmatmul.f32.gmra.mxu0 %v1720
    %v2189 = vpop.f32.mrf.mxu0
    %v2190 = vadd.f32 %v2143, %v2189
    %2191 = vmatmul.f32.gmra.mxu0 %v1723
    %v2192 = vpop.f32.mrf.mxu0
    %v2193 = vadd.f32 %v2146, %v2192
    %2194 = vmatmul.f32.gmra.mxu0 %v1726
    %v2195 = vpop.f32.mrf.mxu0
    %v2196 = vadd.f32 %v2149, %v2195
    %2197 = vmatmul.f32.gmra.mxu0 %v1729
    %v2198 = vpop.f32.mrf.mxu0
    %v2199 = vadd.f32 %v2152, %v2198
    %2200 = vmatmul.f32.gmra.mxu0 %v1732
    %v2201 = vpop.f32.mrf.mxu0
    %v2202 = vadd.f32 %v2155, %v2201
    %2203 = vmatmul.f32.gmra.mxu0 %v1735
    %v2204 = vpop.f32.mrf.mxu0
    %v2205 = vadd.f32 %v2158, %v2204
    %2206 = vmatmul.f32.gmra.mxu0 %v1738
    %v2207 = vpop.f32.mrf.mxu0
    %v2208 = vadd.f32 %v2161, %v2207
    %2209 = vdwg.mxu0
    %2210 = vmatpush.msra.mxu0 %v1644
    %2211 = vmatpush.msra.mxu0 %v1637
    %2212 = vmatpush.msra.mxu0 %v1630
    %2213 = vmatpush.msra.mxu0 %v1623
    %2214 = vmatpush.msra.mxu0 %v1616
    %2215 = vmatpush.msra.mxu0 %v1609
    %2216 = vmatpush.msra.mxu0 %v1602
    %2217 = vmatpush.msra.mxu0 %v1595
    %2218 = vmatpush.msra.mxu0 %v1588
    %2219 = vmatpush.msra.mxu0 %v1581
    %2220 = vmatpush.msra.mxu0 %v1574
    %2221 = vmatpush.msra.mxu0 %v1567
    %2222 = vmatpush.msra.mxu0 %v1560
    %2223 = vmatpush.msra.mxu0 %v1553
    %2224 = vmatpush.msra.mxu0 %v1546
    %2225 = vmatpush.msra.mxu0 %v1539
    %2226 = vmatmul.f32.gmra.mxu0 %v1514
    %v2227 = vpop.f32.mrf.mxu0
    %v2228 = vadd.f32 0.0, %v2227
    %2229 = vmatmul.f32.gmra.mxu0 %v1516
    %v2230 = vpop.f32.mrf.mxu0
    %v2231 = vadd.f32 0.0, %v2230
    %2232 = vmatmul.f32.gmra.mxu0 %v1518
    %v2233 = vpop.f32.mrf.mxu0
    %v2234 = vadd.f32 0.0, %v2233
    %2235 = vmatmul.f32.gmra.mxu0 %v1520
    %v2236 = vpop.f32.mrf.mxu0
    %v2237 = vadd.f32 0.0, %v2236
    %2238 = vmatmul.f32.gmra.mxu0 %v1522
    %v2239 = vpop.f32.mrf.mxu0
    %v2240 = vadd.f32 0.0, %v2239
    %2241 = vmatmul.f32.gmra.mxu0 %v1524
    %v2242 = vpop.f32.mrf.mxu0
    %v2243 = vadd.f32 0.0, %v2242
    %2244 = vmatmul.f32.gmra.mxu0 %v1526
    %v2245 = vpop.f32.mrf.mxu0
    %v2246 = vadd.f32 0.0, %v2245
    %2247 = vmatmul.f32.gmra.mxu0 %v1528
    %v2248 = vpop.f32.mrf.mxu0
    %v2249 = vadd.f32 0.0, %v2248
    %2250 = vmatmul.f32.gmra.mxu0 %v1530
    %v2251 = vpop.f32.mrf.mxu0
    %v2252 = vadd.f32 0.0, %v2251
    %2253 = vmatmul.f32.gmra.mxu0 %v1532
    %v2254 = vpop.f32.mrf.mxu0
    %v2255 = vadd.f32 0.0, %v2254
    %2256 = vdwg.mxu0
    %2257 = vmatpush.msra.mxu0 0.0
    %2258 = vmatpush.msra.mxu0 0.0
    %2259 = vmatpush.msra.mxu0 0.0
    %2260 = vmatpush.msra.mxu0 0.0
    %2261 = vmatpush.msra.mxu0 0.0
    %2262 = vmatpush.msra.mxu0 0.0
    %2263 = vmatpush.msra.mxu0 0.0
    %2264 = vmatpush.msra.mxu0 %v1707
    %2265 = vmatpush.msra.mxu0 %v1700
    %2266 = vmatpush.msra.mxu0 %v1693
    %2267 = vmatpush.msra.mxu0 %v1686
    %2268 = vmatpush.msra.mxu0 %v1679
    %2269 = vmatpush.msra.mxu0 %v1672
    %2270 = vmatpush.msra.mxu0 %v1665
    %2271 = vmatpush.msra.mxu0 %v1658
    %2272 = vmatpush.msra.mxu0 %v1651
    %2273 = vmatmul.f32.gmra.mxu0 %v1711
    %v2274 = vpop.f32.mrf.mxu0
    %v2275 = vadd.f32 %v2228, %v2274
    %2276 = vmatmul.f32.gmra.mxu0 %v1714
    %v2277 = vpop.f32.mrf.mxu0
    %v2278 = vadd.f32 %v2231, %v2277
    %2279 = vmatmul.f32.gmra.mxu0 %v1717
    %v2280 = vpop.f32.mrf.mxu0
    %v2281 = vadd.f32 %v2234, %v2280
    %2282 = vmatmul.f32.gmra.mxu0 %v1720
    %v2283 = vpop.f32.mrf.mxu0
    %v2284 = vadd.f32 %v2237, %v2283
    %2285 = vmatmul.f32.gmra.mxu0 %v1723
    %v2286 = vpop.f32.mrf.mxu0
    %v2287 = vadd.f32 %v2240, %v2286
    %2288 = vmatmul.f32.gmra.mxu0 %v1726
    %v2289 = vpop.f32.mrf.mxu0
    %v2290 = vadd.f32 %v2243, %v2289
    %2291 = vmatmul.f32.gmra.mxu0 %v1729
    %v2292 = vpop.f32.mrf.mxu0
    %v2293 = vadd.f32 %v2246, %v2292
    %2294 = vmatmul.f32.gmra.mxu0 %v1732
    %v2295 = vpop.f32.mrf.mxu0
    %v2296 = vadd.f32 %v2249, %v2295
    %2297 = vmatmul.f32.gmra.mxu0 %v1735
    %v2298 = vpop.f32.mrf.mxu0
    %v2299 = vadd.f32 %v2252, %v2298
    %2300 = vmatmul.f32.gmra.mxu0 %v1738
    %v2301 = vpop.f32.mrf.mxu0
    %v2302 = vadd.f32 %v2255, %v2301
    %2303 = vdwg.mxu0
    %2304 = vmatpush.msra.mxu0 %v1645
    %2305 = vmatpush.msra.mxu0 %v1638
    %2306 = vmatpush.msra.mxu0 %v1631
    %2307 = vmatpush.msra.mxu0 %v1624
    %2308 = vmatpush.msra.mxu0 %v1617
    %2309 = vmatpush.msra.mxu0 %v1610
    %2310 = vmatpush.msra.mxu0 %v1603
    %2311 = vmatpush.msra.mxu0 %v1596
    %2312 = vmatpush.msra.mxu0 %v1589
    %2313 = vmatpush.msra.mxu0 %v1582
    %2314 = vmatpush.msra.mxu0 %v1575
    %2315 = vmatpush.msra.mxu0 %v1568
    %2316 = vmatpush.msra.mxu0 %v1561
    %2317 = vmatpush.msra.mxu0 %v1554
    %2318 = vmatpush.msra.mxu0 %v1547
    %2319 = vmatpush.msra.mxu0 %v1540
    %2320 = vmatmul.f32.gmra.mxu0 %v1514
    %v2321 = vpop.f32.mrf.mxu0
    %v2322 = vadd.f32 0.0, %v2321
    %2323 = vmatmul.f32.gmra.mxu0 %v1516
    %v2324 = vpop.f32.mrf.mxu0
    %v2325 = vadd.f32 0.0, %v2324
    %2326 = vmatmul.f32.gmra.mxu0 %v1518
    %v2327 = vpop.f32.mrf.mxu0
    %v2328 = vadd.f32 0.0, %v2327
    %2329 = vmatmul.f32.gmra.mxu0 %v1520
    %v2330 = vpop.f32.mrf.mxu0
    %v2331 = vadd.f32 0.0, %v2330
    %2332 = vmatmul.f32.gmra.mxu0 %v1522
    %v2333 = vpop.f32.mrf.mxu0
    %v2334 = vadd.f32 0.0, %v2333
    %2335 = vmatmul.f32.gmra.mxu0 %v1524
    %v2336 = vpop.f32.mrf.mxu0
    %v2337 = vadd.f32 0.0, %v2336
    %2338 = vmatmul.f32.gmra.mxu0 %v1526
    %v2339 = vpop.f32.mrf.mxu0
    %v2340 = vadd.f32 0.0, %v2339
    %2341 = vmatmul.f32.gmra.mxu0 %v1528
    %v2342 = vpop.f32.mrf.mxu0
    %v2343 = vadd.f32 0.0, %v2342
    %2344 = vmatmul.f32.gmra.mxu0 %v1530
    %v2345 = vpop.f32.mrf.mxu0
    %v2346 = vadd.f32 0.0, %v2345
    %2347 = vmatmul.f32.gmra.mxu0 %v1532
    %v2348 = vpop.f32.mrf.mxu0
    %v2349 = vadd.f32 0.0, %v2348
    %2350 = vdwg.mxu0
    %2351 = vmatpush.msra.mxu0 0.0
    %2352 = vmatpush.msra.mxu0 0.0
    %2353 = vmatpush.msra.mxu0 0.0
    %2354 = vmatpush.msra.mxu0 0.0
    %2355 = vmatpush.msra.mxu0 0.0
    %2356 = vmatpush.msra.mxu0 0.0
    %2357 = vmatpush.msra.mxu0 0.0
    %2358 = vmatpush.msra.mxu0 %v1708
    %2359 = vmatpush.msra.mxu0 %v1701
    %2360 = vmatpush.msra.mxu0 %v1694
    %2361 = vmatpush.msra.mxu0 %v1687
    %2362 = vmatpush.msra.mxu0 %v1680
    %2363 = vmatpush.msra.mxu0 %v1673
    %2364 = vmatpush.msra.mxu0 %v1666
    %2365 = vmatpush.msra.mxu0 %v1659
    %2366 = vmatpush.msra.mxu0 %v1652
    %2367 = vmatmul.f32.gmra.mxu0 %v1711
    %v2368 = vpop.f32.mrf.mxu0
    %v2369 = vadd.f32 %v2322, %v2368
    %2370 = vmatmul.f32.gmra.mxu0 %v1714
    %v2371 = vpop.f32.mrf.mxu0
    %v2372 = vadd.f32 %v2325, %v2371
    %2373 = vmatmul.f32.gmra.mxu0 %v1717
    %v2374 = vpop.f32.mrf.mxu0
    %v2375 = vadd.f32 %v2328, %v2374
    %2376 = vmatmul.f32.gmra.mxu0 %v1720
    %v2377 = vpop.f32.mrf.mxu0
    %v2378 = vadd.f32 %v2331, %v2377
    %2379 = vmatmul.f32.gmra.mxu0 %v1723
    %v2380 = vpop.f32.mrf.mxu0
    %v2381 = vadd.f32 %v2334, %v2380
    %2382 = vmatmul.f32.gmra.mxu0 %v1726
    %v2383 = vpop.f32.mrf.mxu0
    %v2384 = vadd.f32 %v2337, %v2383
    %2385 = vmatmul.f32.gmra.mxu0 %v1729
    %v2386 = vpop.f32.mrf.mxu0
    %v2387 = vadd.f32 %v2340, %v2386
    %2388 = vmatmul.f32.gmra.mxu0 %v1732
    %v2389 = vpop.f32.mrf.mxu0
    %v2390 = vadd.f32 %v2343, %v2389
    %2391 = vmatmul.f32.gmra.mxu0 %v1735
    %v2392 = vpop.f32.mrf.mxu0
    %v2393 = vadd.f32 %v2346, %v2392
    %2394 = vmatmul.f32.gmra.mxu0 %v1738
    %v2395 = vpop.f32.mrf.mxu0
    %v2396 = vadd.f32 %v2349, %v2395
    %2397 = vdwg.mxu0
    %2468 = vrot.lane.b32.xlu0 %v1805, 96
    %v2469 = vpop.permute.xlu0 %2468
    %2470 = vrot.lane.b32.xlu0 %v1899, 96
    %v2471 = vpop.permute.xlu0 %2470
    %2472 = vrot.lane.b32.xlu0 %v1993, 96
    %v2473 = vpop.permute.xlu0 %2472
    %2474 = vrot.lane.b32.xlu0 %v2087, 96
    %v2475 = vpop.permute.xlu0 %2474
    %2476 = vrot.lane.b32.xlu0 %v2181, 96
    %v2477 = vpop.permute.xlu0 %2476
    %2478 = vrot.lane.b32.xlu0 %v2275, 96
    %v2479 = vpop.permute.xlu0 %2478
    %2480 = vrot.lane.b32.xlu0 %v2369, 96
    %v2481 = vpop.permute.xlu0 %2480
    %2482 = vrot.lane.b32.xlu0 %v1808, 96
    %v2483 = vpop.permute.xlu0 %2482
    %2484 = vrot.lane.b32.xlu0 %v1902, 96
    %v2485 = vpop.permute.xlu0 %2484
    %2486 = vrot.lane.b32.xlu0 %v1996, 96
    %v2487 = vpop.permute.xlu0 %2486
    %2488 = vrot.lane.b32.xlu0 %v2090, 96
    %v2489 = vpop.permute.xlu0 %2488
    %2490 = vrot.lane.b32.xlu0 %v2184, 96
    %v2491 = vpop.permute.xlu0 %2490
    %2492 = vrot.lane.b32.xlu0 %v2278, 96
    %v2493 = vpop.permute.xlu0 %2492
    %2494 = vrot.lane.b32.xlu0 %v2372, 96
    %v2495 = vpop.permute.xlu0 %2494
    %2496 = vrot.lane.b32.xlu0 %v1811, 96
    %v2497 = vpop.permute.xlu0 %2496
    %2498 = vrot.lane.b32.xlu0 %v1905, 96
    %v2499 = vpop.permute.xlu0 %2498
    %2500 = vrot.lane.b32.xlu0 %v1999, 96
    %v2501 = vpop.permute.xlu0 %2500
    %2502 = vrot.lane.b32.xlu0 %v2093, 96
    %v2503 = vpop.permute.xlu0 %2502
    %2504 = vrot.lane.b32.xlu0 %v2187, 96
    %v2505 = vpop.permute.xlu0 %2504
    %2506 = vrot.lane.b32.xlu0 %v2281, 96
    %v2507 = vpop.permute.xlu0 %2506
    %2508 = vrot.lane.b32.xlu0 %v2375, 96
    %v2509 = vpop.permute.xlu0 %2508
    %2510 = vrot.lane.b32.xlu0 %v1814, 96
    %v2511 = vpop.permute.xlu0 %2510
    %2512 = vrot.lane.b32.xlu0 %v1908, 96
    %v2513 = vpop.permute.xlu0 %2512
    %2514 = vrot.lane.b32.xlu0 %v2002, 96
    %v2515 = vpop.permute.xlu0 %2514
    %2516 = vrot.lane.b32.xlu0 %v2096, 96
    %v2517 = vpop.permute.xlu0 %2516
    %2518 = vrot.lane.b32.xlu0 %v2190, 96
    %v2519 = vpop.permute.xlu0 %2518
    %2520 = vrot.lane.b32.xlu0 %v2284, 96
    %v2521 = vpop.permute.xlu0 %2520
    %2522 = vrot.lane.b32.xlu0 %v2378, 96
    %v2523 = vpop.permute.xlu0 %2522
    %2524 = vrot.lane.b32.xlu0 %v1817, 96
    %v2525 = vpop.permute.xlu0 %2524
    %2526 = vrot.lane.b32.xlu0 %v1911, 96
    %v2527 = vpop.permute.xlu0 %2526
    %2528 = vrot.lane.b32.xlu0 %v2005, 96
    %v2529 = vpop.permute.xlu0 %2528
    %2530 = vrot.lane.b32.xlu0 %v2099, 96
    %v2531 = vpop.permute.xlu0 %2530
    %2532 = vrot.lane.b32.xlu0 %v2193, 96
    %v2533 = vpop.permute.xlu0 %2532
    %2534 = vrot.lane.b32.xlu0 %v2287, 96
    %v2535 = vpop.permute.xlu0 %2534
    %2536 = vrot.lane.b32.xlu0 %v2381, 96
    %v2537 = vpop.permute.xlu0 %2536
    %2538 = vrot.lane.b32.xlu0 %v1820, 96
    %v2539 = vpop.permute.xlu0 %2538
    %2540 = vrot.lane.b32.xlu0 %v1914, 96
    %v2541 = vpop.permute.xlu0 %2540
    %2542 = vrot.lane.b32.xlu0 %v2008, 96
    %v2543 = vpop.permute.xlu0 %2542
    %2544 = vrot.lane.b32.xlu0 %v2102, 96
    %v2545 = vpop.permute.xlu0 %2544
    %2546 = vrot.lane.b32.xlu0 %v2196, 96
    %v2547 = vpop.permute.xlu0 %2546
    %2548 = vrot.lane.b32.xlu0 %v2290, 96
    %v2549 = vpop.permute.xlu0 %2548
    %2550 = vrot.lane.b32.xlu0 %v2384, 96
    %v2551 = vpop.permute.xlu0 %2550
    %2552 = vrot.lane.b32.xlu0 %v1823, 96
    %v2553 = vpop.permute.xlu0 %2552
    %2554 = vrot.lane.b32.xlu0 %v1917, 96
    %v2555 = vpop.permute.xlu0 %2554
    %2556 = vrot.lane.b32.xlu0 %v2011, 96
    %v2557 = vpop.permute.xlu0 %2556
    %2558 = vrot.lane.b32.xlu0 %v2105, 96
    %v2559 = vpop.permute.xlu0 %2558
    %2560 = vrot.lane.b32.xlu0 %v2199, 96
    %v2561 = vpop.permute.xlu0 %2560
    %2562 = vrot.lane.b32.xlu0 %v2293, 96
    %v2563 = vpop.permute.xlu0 %2562
    %2564 = vrot.lane.b32.xlu0 %v2387, 96
    %v2565 = vpop.permute.xlu0 %2564
    %2566 = vrot.lane.b32.xlu0 %v1826, 96
    %v2567 = vpop.permute.xlu0 %2566
    %2568 = vrot.lane.b32.xlu0 %v1920, 96
    %v2569 = vpop.permute.xlu0 %2568
    %2570 = vrot.lane.b32.xlu0 %v2014, 96
    %v2571 = vpop.permute.xlu0 %2570
    %2572 = vrot.lane.b32.xlu0 %v2108, 96
    %v2573 = vpop.permute.xlu0 %2572
    %2574 = vrot.lane.b32.xlu0 %v2202, 96
    %v2575 = vpop.permute.xlu0 %2574
    %2576 = vrot.lane.b32.xlu0 %v2296, 96
    %v2577 = vpop.permute.xlu0 %2576
    %2578 = vrot.lane.b32.xlu0 %v2390, 96
    %v2579 = vpop.permute.xlu0 %2578
    %2580 = vrot.lane.b32.xlu0 %v1829, 96
    %v2581 = vpop.permute.xlu0 %2580
    %2582 = vrot.lane.b32.xlu0 %v1923, 96
    %v2583 = vpop.permute.xlu0 %2582
    %2584 = vrot.lane.b32.xlu0 %v2017, 96
    %v2585 = vpop.permute.xlu0 %2584
    %2586 = vrot.lane.b32.xlu0 %v2111, 96
    %v2587 = vpop.permute.xlu0 %2586
    %2588 = vrot.lane.b32.xlu0 %v2205, 96
    %v2589 = vpop.permute.xlu0 %2588
    %2590 = vrot.lane.b32.xlu0 %v2299, 96
    %v2591 = vpop.permute.xlu0 %2590
    %2592 = vrot.lane.b32.xlu0 %v2393, 96
    %v2593 = vpop.permute.xlu0 %2592
    %2594 = vrot.lane.b32.xlu0 %v1832, 96
    %v2595 = vpop.permute.xlu0 %2594
    %2596 = vrot.lane.b32.xlu0 %v1926, 96
    %v2597 = vpop.permute.xlu0 %2596
    %2598 = vrot.lane.b32.xlu0 %v2020, 96
    %v2599 = vpop.permute.xlu0 %2598
    %2600 = vrot.lane.b32.xlu0 %v2114, 96
    %v2601 = vpop.permute.xlu0 %2600
    %2602 = vrot.lane.b32.xlu0 %v2208, 96
    %v2603 = vpop.permute.xlu0 %2602
    %2604 = vrot.lane.b32.xlu0 %v2302, 96
    %v2605 = vpop.permute.xlu0 %2604
    %2606 = vrot.lane.b32.xlu0 %v2396, 96
    %v2607 = vpop.permute.xlu0 %2606
    %v2608 = vsel %vm510, %v2469, %v2471
    %v2609 = vsel %vm510, %v2471, %v2473
    %v2610 = vsel %vm510, %v2473, %v2475
    %v2611 = vsel %vm510, %v2475, %v2477
    %v2612 = vsel %vm510, %v2477, %v2479
    %v2613 = vsel %vm510, %v2479, %v2481
    %v2614 = vsel %vm510, %v2483, %v2485
    %v2615 = vsel %vm510, %v2485, %v2487
    %v2616 = vsel %vm510, %v2487, %v2489
    %v2617 = vsel %vm510, %v2489, %v2491
    %v2618 = vsel %vm510, %v2491, %v2493
    %v2619 = vsel %vm510, %v2493, %v2495
    %v2620 = vsel %vm510, %v2497, %v2499
    %v2621 = vsel %vm510, %v2499, %v2501
    %v2622 = vsel %vm510, %v2501, %v2503
    %v2623 = vsel %vm510, %v2503, %v2505
    %v2624 = vsel %vm510, %v2505, %v2507
    %v2625 = vsel %vm510, %v2507, %v2509
    %v2626 = vsel %vm510, %v2511, %v2513
    %v2627 = vsel %vm510, %v2513, %v2515
    %v2628 = vsel %vm510, %v2515, %v2517
    %v2629 = vsel %vm510, %v2517, %v2519
    %v2630 = vsel %vm510, %v2519, %v2521
    %v2631 = vsel %vm510, %v2521, %v2523
    %v2632 = vsel %vm510, %v2525, %v2527
    %v2633 = vsel %vm510, %v2527, %v2529
    %v2634 = vsel %vm510, %v2529, %v2531
    %v2635 = vsel %vm510, %v2531, %v2533
    %v2636 = vsel %vm510, %v2533, %v2535
    %v2637 = vsel %vm510, %v2535, %v2537
    %v2638 = vsel %vm510, %v2539, %v2541
    %v2639 = vsel %vm510, %v2541, %v2543
    %v2640 = vsel %vm510, %v2543, %v2545
    %v2641 = vsel %vm510, %v2545, %v2547
    %v2642 = vsel %vm510, %v2547, %v2549
    %v2643 = vsel %vm510, %v2549, %v2551
    %v2644 = vsel %vm510, %v2553, %v2555
    %v2645 = vsel %vm510, %v2555, %v2557
    %v2646 = vsel %vm510, %v2557, %v2559
    %v2647 = vsel %vm510, %v2559, %v2561
    %v2648 = vsel %vm510, %v2561, %v2563
    %v2649 = vsel %vm510, %v2563, %v2565
    %v2650 = vsel %vm510, %v2567, %v2569
    %v2651 = vsel %vm510, %v2569, %v2571
    %v2652 = vsel %vm510, %v2571, %v2573
    %v2653 = vsel %vm510, %v2573, %v2575
    %v2654 = vsel %vm510, %v2575, %v2577
    %v2655 = vsel %vm510, %v2577, %v2579
    %v2656 = vsel %vm510, %v2581, %v2583
    %v2657 = vsel %vm510, %v2583, %v2585
    %v2658 = vsel %vm510, %v2585, %v2587
    %v2659 = vsel %vm510, %v2587, %v2589
    %v2660 = vsel %vm510, %v2589, %v2591
    %v2661 = vsel %vm510, %v2591, %v2593
    %v2662 = vsel %vm510, %v2595, %v2597
    %v2663 = vsel %vm510, %v2597, %v2599
    %v2664 = vsel %vm510, %v2599, %v2601
    %v2665 = vsel %vm510, %v2601, %v2603
    %v2666 = vsel %vm510, %v2603, %v2605
    %v2667 = vsel %vm510, %v2605, %v2607
    %v2738 = vmax.f32 %v1805, %v2608
    %v2739 = vmax.f32 %v1899, %v2609
    %v2740 = vmax.f32 %v1993, %v2610
    %v2741 = vmax.f32 %v2087, %v2611
    %v2742 = vmax.f32 %v2181, %v2612
    %v2743 = vmax.f32 %v2275, %v2613
    %v2744 = vmax.f32 %v2369, %v2481
    %v2745 = vmax.f32 %v1808, %v2614
    %v2746 = vmax.f32 %v1902, %v2615
    %v2747 = vmax.f32 %v1996, %v2616
    %v2748 = vmax.f32 %v2090, %v2617
    %v2749 = vmax.f32 %v2184, %v2618
    %v2750 = vmax.f32 %v2278, %v2619
    %v2751 = vmax.f32 %v2372, %v2495
    %v2752 = vmax.f32 %v1811, %v2620
    %v2753 = vmax.f32 %v1905, %v2621
    %v2754 = vmax.f32 %v1999, %v2622
    %v2755 = vmax.f32 %v2093, %v2623
    %v2756 = vmax.f32 %v2187, %v2624
    %v2757 = vmax.f32 %v2281, %v2625
    %v2758 = vmax.f32 %v2375, %v2509
    %v2759 = vmax.f32 %v1814, %v2626
    %v2760 = vmax.f32 %v1908, %v2627
    %v2761 = vmax.f32 %v2002, %v2628
    %v2762 = vmax.f32 %v2096, %v2629
    %v2763 = vmax.f32 %v2190, %v2630
    %v2764 = vmax.f32 %v2284, %v2631
    %v2765 = vmax.f32 %v2378, %v2523
    %v2766 = vmax.f32 %v1817, %v2632
    %v2767 = vmax.f32 %v1911, %v2633
    %v2768 = vmax.f32 %v2005, %v2634
    %v2769 = vmax.f32 %v2099, %v2635
    %v2770 = vmax.f32 %v2193, %v2636
    %v2771 = vmax.f32 %v2287, %v2637
    %v2772 = vmax.f32 %v2381, %v2537
    %v2773 = vmax.f32 %v1820, %v2638
    %v2774 = vmax.f32 %v1914, %v2639
    %v2775 = vmax.f32 %v2008, %v2640
    %v2776 = vmax.f32 %v2102, %v2641
    %v2777 = vmax.f32 %v2196, %v2642
    %v2778 = vmax.f32 %v2290, %v2643
    %v2779 = vmax.f32 %v2384, %v2551
    %v2780 = vmax.f32 %v1823, %v2644
    %v2781 = vmax.f32 %v1917, %v2645
    %v2782 = vmax.f32 %v2011, %v2646
    %v2783 = vmax.f32 %v2105, %v2647
    %v2784 = vmax.f32 %v2199, %v2648
    %v2785 = vmax.f32 %v2293, %v2649
    %v2786 = vmax.f32 %v2387, %v2565
    %v2787 = vmax.f32 %v1826, %v2650
    %v2788 = vmax.f32 %v1920, %v2651
    %v2789 = vmax.f32 %v2014, %v2652
    %v2790 = vmax.f32 %v2108, %v2653
    %v2791 = vmax.f32 %v2202, %v2654
    %v2792 = vmax.f32 %v2296, %v2655
    %v2793 = vmax.f32 %v2390, %v2579
    %v2794 = vmax.f32 %v1829, %v2656
    %v2795 = vmax.f32 %v1923, %v2657
    %v2796 = vmax.f32 %v2017, %v2658
    %v2797 = vmax.f32 %v2111, %v2659
    %v2798 = vmax.f32 %v2205, %v2660
    %v2799 = vmax.f32 %v2299, %v2661
    %v2800 = vmax.f32 %v2393, %v2593
    %v2801 = vmax.f32 %v1832, %v2662
    %v2802 = vmax.f32 %v1926, %v2663
    %v2803 = vmax.f32 %v2020, %v2664
    %v2804 = vmax.f32 %v2114, %v2665
    %v2805 = vmax.f32 %v2208, %v2666
    %v2806 = vmax.f32 %v2302, %v2667
    %v2807 = vmax.f32 %v2396, %v2607
    %2878 = vrot.lane.b32.xlu0 %v2738, 127
    %v2879 = vpop.permute.xlu0 %2878
    %2880 = vrot.lane.b32.xlu0 %v2739, 127
    %v2881 = vpop.permute.xlu0 %2880
    %2882 = vrot.lane.b32.xlu0 %v2740, 127
    %v2883 = vpop.permute.xlu0 %2882
    %2884 = vrot.lane.b32.xlu0 %v2741, 127
    %v2885 = vpop.permute.xlu0 %2884
    %2886 = vrot.lane.b32.xlu0 %v2742, 127
    %v2887 = vpop.permute.xlu0 %2886
    %2888 = vrot.lane.b32.xlu0 %v2743, 127
    %v2889 = vpop.permute.xlu0 %2888
    %2890 = vrot.lane.b32.xlu0 %v2744, 127
    %v2891 = vpop.permute.xlu0 %2890
    %2892 = vrot.lane.b32.xlu0 %v2745, 127
    %v2893 = vpop.permute.xlu0 %2892
    %2894 = vrot.lane.b32.xlu0 %v2746, 127
    %v2895 = vpop.permute.xlu0 %2894
    %2896 = vrot.lane.b32.xlu0 %v2747, 127
    %v2897 = vpop.permute.xlu0 %2896
    %2898 = vrot.lane.b32.xlu0 %v2748, 127
    %v2899 = vpop.permute.xlu0 %2898
    %2900 = vrot.lane.b32.xlu0 %v2749, 127
    %v2901 = vpop.permute.xlu0 %2900
    %2902 = vrot.lane.b32.xlu0 %v2750, 127
    %v2903 = vpop.permute.xlu0 %2902
    %2904 = vrot.lane.b32.xlu0 %v2751, 127
    %v2905 = vpop.permute.xlu0 %2904
    %2906 = vrot.lane.b32.xlu0 %v2752, 127
    %v2907 = vpop.permute.xlu0 %2906
    %2908 = vrot.lane.b32.xlu0 %v2753, 127
    %v2909 = vpop.permute.xlu0 %2908
    %2910 = vrot.lane.b32.xlu0 %v2754, 127
    %v2911 = vpop.permute.xlu0 %2910
    %2912 = vrot.lane.b32.xlu0 %v2755, 127
    %v2913 = vpop.permute.xlu0 %2912
    %2914 = vrot.lane.b32.xlu0 %v2756, 127
    %v2915 = vpop.permute.xlu0 %2914
    %2916 = vrot.lane.b32.xlu0 %v2757, 127
    %v2917 = vpop.permute.xlu0 %2916
    %2918 = vrot.lane.b32.xlu0 %v2758, 127
    %v2919 = vpop.permute.xlu0 %2918
    %2920 = vrot.lane.b32.xlu0 %v2759, 127
    %v2921 = vpop.permute.xlu0 %2920
    %2922 = vrot.lane.b32.xlu0 %v2760, 127
    %v2923 = vpop.permute.xlu0 %2922
    %2924 = vrot.lane.b32.xlu0 %v2761, 127
    %v2925 = vpop.permute.xlu0 %2924
    %2926 = vrot.lane.b32.xlu0 %v2762, 127
    %v2927 = vpop.permute.xlu0 %2926
    %2928 = vrot.lane.b32.xlu0 %v2763, 127
    %v2929 = vpop.permute.xlu0 %2928
    %2930 = vrot.lane.b32.xlu0 %v2764, 127
    %v2931 = vpop.permute.xlu0 %2930
    %2932 = vrot.lane.b32.xlu0 %v2765, 127
    %v2933 = vpop.permute.xlu0 %2932
    %2934 = vrot.lane.b32.xlu0 %v2766, 127
    %v2935 = vpop.permute.xlu0 %2934
    %2936 = vrot.lane.b32.xlu0 %v2767, 127
    %v2937 = vpop.permute.xlu0 %2936
    %2938 = vrot.lane.b32.xlu0 %v2768, 127
    %v2939 = vpop.permute.xlu0 %2938
    %2940 = vrot.lane.b32.xlu0 %v2769, 127
    %v2941 = vpop.permute.xlu0 %2940
    %2942 = vrot.lane.b32.xlu0 %v2770, 127
    %v2943 = vpop.permute.xlu0 %2942
    %2944 = vrot.lane.b32.xlu0 %v2771, 127
    %v2945 = vpop.permute.xlu0 %2944
    %2946 = vrot.lane.b32.xlu0 %v2772, 127
    %v2947 = vpop.permute.xlu0 %2946
    %2948 = vrot.lane.b32.xlu0 %v2773, 127
    %v2949 = vpop.permute.xlu0 %2948
    %2950 = vrot.lane.b32.xlu0 %v2774, 127
    %v2951 = vpop.permute.xlu0 %2950
    %2952 = vrot.lane.b32.xlu0 %v2775, 127
    %v2953 = vpop.permute.xlu0 %2952
    %2954 = vrot.lane.b32.xlu0 %v2776, 127
    %v2955 = vpop.permute.xlu0 %2954
    %2956 = vrot.lane.b32.xlu0 %v2777, 127
    %v2957 = vpop.permute.xlu0 %2956
    %2958 = vrot.lane.b32.xlu0 %v2778, 127
    %v2959 = vpop.permute.xlu0 %2958
    %2960 = vrot.lane.b32.xlu0 %v2779, 127
    %v2961 = vpop.permute.xlu0 %2960
    %2962 = vrot.lane.b32.xlu0 %v2780, 127
    %v2963 = vpop.permute.xlu0 %2962
    %2964 = vrot.lane.b32.xlu0 %v2781, 127
    %v2965 = vpop.permute.xlu0 %2964
    %2966 = vrot.lane.b32.xlu0 %v2782, 127
    %v2967 = vpop.permute.xlu0 %2966
    %2968 = vrot.lane.b32.xlu0 %v2783, 127
    %v2969 = vpop.permute.xlu0 %2968
    %2970 = vrot.lane.b32.xlu0 %v2784, 127
    %v2971 = vpop.permute.xlu0 %2970
    %2972 = vrot.lane.b32.xlu0 %v2785, 127
    %v2973 = vpop.permute.xlu0 %2972
    %2974 = vrot.lane.b32.xlu0 %v2786, 127
    %v2975 = vpop.permute.xlu0 %2974
    %2976 = vrot.lane.b32.xlu0 %v2787, 127
    %v2977 = vpop.permute.xlu0 %2976
    %2978 = vrot.lane.b32.xlu0 %v2788, 127
    %v2979 = vpop.permute.xlu0 %2978
    %2980 = vrot.lane.b32.xlu0 %v2789, 127
    %v2981 = vpop.permute.xlu0 %2980
    %2982 = vrot.lane.b32.xlu0 %v2790, 127
    %v2983 = vpop.permute.xlu0 %2982
    %2984 = vrot.lane.b32.xlu0 %v2791, 127
    %v2985 = vpop.permute.xlu0 %2984
    %2986 = vrot.lane.b32.xlu0 %v2792, 127
    %v2987 = vpop.permute.xlu0 %2986
    %2988 = vrot.lane.b32.xlu0 %v2793, 127
    %v2989 = vpop.permute.xlu0 %2988
    %2990 = vrot.lane.b32.xlu0 %v2794, 127
    %v2991 = vpop.permute.xlu0 %2990
    %2992 = vrot.lane.b32.xlu0 %v2795, 127
    %v2993 = vpop.permute.xlu0 %2992
    %2994 = vrot.lane.b32.xlu0 %v2796, 127
    %v2995 = vpop.permute.xlu0 %2994
    %2996 = vrot.lane.b32.xlu0 %v2797, 127
    %v2997 = vpop.permute.xlu0 %2996
    %2998 = vrot.lane.b32.xlu0 %v2798, 127
    %v2999 = vpop.permute.xlu0 %2998
    %3000 = vrot.lane.b32.xlu0 %v2799, 127
    %v3001 = vpop.permute.xlu0 %3000
    %3002 = vrot.lane.b32.xlu0 %v2800, 127
    %v3003 = vpop.permute.xlu0 %3002
    %3004 = vrot.lane.b32.xlu0 %v2801, 127
    %v3005 = vpop.permute.xlu0 %3004
    %3006 = vrot.lane.b32.xlu0 %v2802, 127
    %v3007 = vpop.permute.xlu0 %3006
    %3008 = vrot.lane.b32.xlu0 %v2803, 127
    %v3009 = vpop.permute.xlu0 %3008
    %3010 = vrot.lane.b32.xlu0 %v2804, 127
    %v3011 = vpop.permute.xlu0 %3010
    %3012 = vrot.lane.b32.xlu0 %v2805, 127
    %v3013 = vpop.permute.xlu0 %3012
    %3014 = vrot.lane.b32.xlu0 %v2806, 127
    %v3015 = vpop.permute.xlu0 %3014
    %3016 = vrot.lane.b32.xlu0 %v2807, 127
    %v3017 = vpop.permute.xlu0 %3016
    %v3018 = vsel %vm294, %v2879, %v2881
    %v3019 = vsel %vm294, %v2881, %v2883
    %v3020 = vsel %vm294, %v2883, %v2885
    %v3021 = vsel %vm294, %v2885, %v2887
    %v3022 = vsel %vm294, %v2887, %v2889
    %v3023 = vsel %vm294, %v2889, %v2891
    %v3024 = vsel %vm294, %v2893, %v2895
    %v3025 = vsel %vm294, %v2895, %v2897
    %v3026 = vsel %vm294, %v2897, %v2899
    %v3027 = vsel %vm294, %v2899, %v2901
    %v3028 = vsel %vm294, %v2901, %v2903
    %v3029 = vsel %vm294, %v2903, %v2905
    %v3030 = vsel %vm294, %v2907, %v2909
    %v3031 = vsel %vm294, %v2909, %v2911
    %v3032 = vsel %vm294, %v2911, %v2913
    %v3033 = vsel %vm294, %v2913, %v2915
    %v3034 = vsel %vm294, %v2915, %v2917
    %v3035 = vsel %vm294, %v2917, %v2919
    %v3036 = vsel %vm294, %v2921, %v2923
    %v3037 = vsel %vm294, %v2923, %v2925
    %v3038 = vsel %vm294, %v2925, %v2927
    %v3039 = vsel %vm294, %v2927, %v2929
    %v3040 = vsel %vm294, %v2929, %v2931
    %v3041 = vsel %vm294, %v2931, %v2933
    %v3042 = vsel %vm294, %v2935, %v2937
    %v3043 = vsel %vm294, %v2937, %v2939
    %v3044 = vsel %vm294, %v2939, %v2941
    %v3045 = vsel %vm294, %v2941, %v2943
    %v3046 = vsel %vm294, %v2943, %v2945
    %v3047 = vsel %vm294, %v2945, %v2947
    %v3048 = vsel %vm294, %v2949, %v2951
    %v3049 = vsel %vm294, %v2951, %v2953
    %v3050 = vsel %vm294, %v2953, %v2955
    %v3051 = vsel %vm294, %v2955, %v2957
    %v3052 = vsel %vm294, %v2957, %v2959
    %v3053 = vsel %vm294, %v2959, %v2961
    %v3054 = vsel %vm294, %v2963, %v2965
    %v3055 = vsel %vm294, %v2965, %v2967
    %v3056 = vsel %vm294, %v2967, %v2969
    %v3057 = vsel %vm294, %v2969, %v2971
    %v3058 = vsel %vm294, %v2971, %v2973
    %v3059 = vsel %vm294, %v2973, %v2975
    %v3060 = vsel %vm294, %v2977, %v2979
    %v3061 = vsel %vm294, %v2979, %v2981
    %v3062 = vsel %vm294, %v2981, %v2983
    %v3063 = vsel %vm294, %v2983, %v2985
    %v3064 = vsel %vm294, %v2985, %v2987
    %v3065 = vsel %vm294, %v2987, %v2989
    %v3066 = vsel %vm294, %v2991, %v2993
    %v3067 = vsel %vm294, %v2993, %v2995
    %v3068 = vsel %vm294, %v2995, %v2997
    %v3069 = vsel %vm294, %v2997, %v2999
    %v3070 = vsel %vm294, %v2999, %v3001
    %v3071 = vsel %vm294, %v3001, %v3003
    %v3072 = vsel %vm294, %v3005, %v3007
    %v3073 = vsel %vm294, %v3007, %v3009
    %v3074 = vsel %vm294, %v3009, %v3011
    %v3075 = vsel %vm294, %v3011, %v3013
    %v3076 = vsel %vm294, %v3013, %v3015
    %v3077 = vsel %vm294, %v3015, %v3017
    %v3148 = vmax.f32 %v2738, %v3018
    %v3149 = vmax.f32 %v2739, %v3019
    %v3150 = vmax.f32 %v2740, %v3020
    %v3151 = vmax.f32 %v2741, %v3021
    %v3152 = vmax.f32 %v2742, %v3022
    %v3153 = vmax.f32 %v2743, %v3023
    %v3154 = vmax.f32 %v2744, %v2891
    %v3155 = vmax.f32 %v2745, %v3024
    %v3156 = vmax.f32 %v2746, %v3025
    %v3157 = vmax.f32 %v2747, %v3026
    %v3158 = vmax.f32 %v2748, %v3027
    %v3159 = vmax.f32 %v2749, %v3028
    %v3160 = vmax.f32 %v2750, %v3029
    %v3161 = vmax.f32 %v2751, %v2905
    %v3162 = vmax.f32 %v2752, %v3030
    %v3163 = vmax.f32 %v2753, %v3031
    %v3164 = vmax.f32 %v2754, %v3032
    %v3165 = vmax.f32 %v2755, %v3033
    %v3166 = vmax.f32 %v2756, %v3034
    %v3167 = vmax.f32 %v2757, %v3035
    %v3168 = vmax.f32 %v2758, %v2919
    %v3169 = vmax.f32 %v2759, %v3036
    %v3170 = vmax.f32 %v2760, %v3037
    %v3171 = vmax.f32 %v2761, %v3038
    %v3172 = vmax.f32 %v2762, %v3039
    %v3173 = vmax.f32 %v2763, %v3040
    %v3174 = vmax.f32 %v2764, %v3041
    %v3175 = vmax.f32 %v2765, %v2933
    %v3176 = vmax.f32 %v2766, %v3042
    %v3177 = vmax.f32 %v2767, %v3043
    %v3178 = vmax.f32 %v2768, %v3044
    %v3179 = vmax.f32 %v2769, %v3045
    %v3180 = vmax.f32 %v2770, %v3046
    %v3181 = vmax.f32 %v2771, %v3047
    %v3182 = vmax.f32 %v2772, %v2947
    %v3183 = vmax.f32 %v2773, %v3048
    %v3184 = vmax.f32 %v2774, %v3049
    %v3185 = vmax.f32 %v2775, %v3050
    %v3186 = vmax.f32 %v2776, %v3051
    %v3187 = vmax.f32 %v2777, %v3052
    %v3188 = vmax.f32 %v2778, %v3053
    %v3189 = vmax.f32 %v2779, %v2961
    %v3190 = vmax.f32 %v2780, %v3054
    %v3191 = vmax.f32 %v2781, %v3055
    %v3192 = vmax.f32 %v2782, %v3056
    %v3193 = vmax.f32 %v2783, %v3057
    %v3194 = vmax.f32 %v2784, %v3058
    %v3195 = vmax.f32 %v2785, %v3059
    %v3196 = vmax.f32 %v2786, %v2975
    %v3197 = vmax.f32 %v2787, %v3060
    %v3198 = vmax.f32 %v2788, %v3061
    %v3199 = vmax.f32 %v2789, %v3062
    %v3200 = vmax.f32 %v2790, %v3063
    %v3201 = vmax.f32 %v2791, %v3064
    %v3202 = vmax.f32 %v2792, %v3065
    %v3203 = vmax.f32 %v2793, %v2989
    %v3204 = vmax.f32 %v2794, %v3066
    %v3205 = vmax.f32 %v2795, %v3067
    %v3206 = vmax.f32 %v2796, %v3068
    %v3207 = vmax.f32 %v2797, %v3069
    %v3208 = vmax.f32 %v2798, %v3070
    %v3209 = vmax.f32 %v2799, %v3071
    %v3210 = vmax.f32 %v2800, %v3003
    %v3211 = vmax.f32 %v2801, %v3072
    %v3212 = vmax.f32 %v2802, %v3073
    %v3213 = vmax.f32 %v2803, %v3074
    %v3214 = vmax.f32 %v2804, %v3075
    %v3215 = vmax.f32 %v2805, %v3076
    %v3216 = vmax.f32 %v2806, %v3077
    %v3217 = vmax.f32 %v2807, %v3017
    %v3218 = vld [vmem:[#allocation6] sm:$0xff]
    %v3219 = vld [vmem:[#allocation6 + $0x8] sm:$0xff]
    %v3220 = vld [vmem:[#allocation6 + $0x10] sm:$0xff]
    %v3221 = vld [vmem:[#allocation6 + $0x18] sm:$0xff]
    %v3222 = vld [vmem:[#allocation6 + $0x20] sm:$0xff]
    %v3223 = vld [vmem:[#allocation6 + $0x28] sm:$0xff]
    %v3224 = vld [vmem:[#allocation6 + $0x30] sm:$0xff]
    %v3225 = vld [vmem:[#allocation6 + $0x38] sm:$0xff]
    %v3226 = vld [vmem:[#allocation6 + $0x40] sm:$0xff]
    %v3227 = vld [vmem:[#allocation6 + $0x48] sm:$0xff]
    %v3228 = vld [vmem:[#allocation6 + $0x50] sm:$0xff]
    %v3229 = vld [vmem:[#allocation6 + $0x58] sm:$0xff]
    %v3230 = vld [vmem:[#allocation6 + $0x60] sm:$0xff]
    %v3231 = vld [vmem:[#allocation6 + $0x68] sm:$0xff]
    %v3232 = vld [vmem:[#allocation6 + $0x70] sm:$0xff]
    %v3233 = vld [vmem:[#allocation6 + $0x78] sm:$0xff]
    %v3234 = vld [vmem:[#allocation6 + $0x80] sm:$0xff]
    %v3235 = vld [vmem:[#allocation6 + $0x88] sm:$0xff]
    %v3236 = vld [vmem:[#allocation6 + $0x90] sm:$0xff]
    %v3237 = vld [vmem:[#allocation6 + $0x98] sm:$0xff]
    %v3238 = vld [vmem:[#allocation6 + $0xa0] sm:$0xff]
    %v3239 = vld [vmem:[#allocation6 + $0xa8] sm:$0xff]
    %v3240 = vld [vmem:[#allocation6 + $0xb0] sm:$0xff]
    %v3241 = vld [vmem:[#allocation6 + $0xb8] sm:$0xff]
    %v3242 = vld [vmem:[#allocation6 + $0xc0] sm:$0xff]
    %v3243 = vld [vmem:[#allocation6 + $0xc8] sm:$0xff]
    %v3244 = vld [vmem:[#allocation6 + $0xd0] sm:$0xff]
    %v3245 = vld [vmem:[#allocation6 + $0xd8] sm:$0xff]
    %v3246 = vld [vmem:[#allocation6 + $0xe0] sm:$0xff]
    %v3247 = vld [vmem:[#allocation6 + $0xe8] sm:$0xff]
    %v3248 = vld [vmem:[#allocation6 + $0xf0] sm:$0xff]
    %v3249 = vld [vmem:[#allocation6 + $0xf8] sm:$0xff]
    %v3250 = vld [vmem:[#allocation6 + $0x100] sm:$0xff]
    %v3251 = vld [vmem:[#allocation6 + $0x108] sm:$0xff]
    %v3252 = vld [vmem:[#allocation6 + $0x110] sm:$0xff]
    %v3253 = vld [vmem:[#allocation6 + $0x118] sm:$0xff]
    %v3254 = vld [vmem:[#allocation6 + $0x120] sm:$0xff]
    %v3255 = vld [vmem:[#allocation6 + $0x128] sm:$0xff]
    %v3256 = vld [vmem:[#allocation6 + $0x130] sm:$0xff]
    %v3257 = vld [vmem:[#allocation6 + $0x138] sm:$0xff]
    %v3258 = vld [vmem:[#allocation6 + $0x140] sm:$0xff]
    %v3259 = vld [vmem:[#allocation6 + $0x148] sm:$0xff]
    %v3260 = vld [vmem:[#allocation6 + $0x150] sm:$0xff]
    %v3261 = vld [vmem:[#allocation6 + $0x158] sm:$0xff]
    %v3262 = vld [vmem:[#allocation6 + $0x160] sm:$0xff]
    %v3263 = vld [vmem:[#allocation6 + $0x168] sm:$0xff]
    %v3264 = vld [vmem:[#allocation6 + $0x170] sm:$0xff]
    %v3265 = vld [vmem:[#allocation6 + $0x178] sm:$0xff]
    %v3266 = vld [vmem:[#allocation6 + $0x180] sm:$0xff]
    %v3267 = vld [vmem:[#allocation6 + $0x188] sm:$0xff]
    %v3268 = vld [vmem:[#allocation6 + $0x190] sm:$0xff]
    %v3269 = vld [vmem:[#allocation6 + $0x198] sm:$0xff]
    %v3270 = vld [vmem:[#allocation6 + $0x1a0] sm:$0xff]
    %v3271 = vld [vmem:[#allocation6 + $0x1a8] sm:$0xff]
    %v3272 = vld [vmem:[#allocation6 + $0x1b0] sm:$0xff]
    %v3273 = vld [vmem:[#allocation6 + $0x1b8] sm:$0xff]
    %v3274 = vld [vmem:[#allocation6 + $0x1c0] sm:$0xff]
    %v3275 = vld [vmem:[#allocation6 + $0x1c8] sm:$0xff]
    %v3276 = vld [vmem:[#allocation6 + $0x1d0] sm:$0xff]
    %v3277 = vld [vmem:[#allocation6 + $0x1d8] sm:$0xff]
    %v3278 = vld [vmem:[#allocation6 + $0x1e0] sm:$0xff]
    %v3279 = vld [vmem:[#allocation6 + $0x1e8] sm:$0xff]
    %v3280 = vld [vmem:[#allocation6 + $0x1f0] sm:$0xff]
    %v3281 = vld [vmem:[#allocation6 + $0x1f8] sm:$0xff]
    %v3282 = vld [vmem:[#allocation6 + $0x200] sm:$0xff]
    %v3283 = vld [vmem:[#allocation6 + $0x208] sm:$0xff]
    %v3284 = vld [vmem:[#allocation6 + $0x210] sm:$0xff]
    %v3285 = vld [vmem:[#allocation6 + $0x218] sm:$0xff]
    %v3286 = vld [vmem:[#allocation6 + $0x220] sm:$0xff]
    %v3287 = vld [vmem:[#allocation6 + $0x228] sm:$0xff]
    %v3288 = vld [vmem:[#allocation6 + $0x230] sm:$0xff]
    %v3289 = vld [vmem:[#allocation6 + $0x238] sm:$0xff]
    %v3290 = vld [vmem:[#allocation6 + $0x240] sm:$0xff]
    %v3291 = vld [vmem:[#allocation6 + $0x248] sm:$0xff]
    %v3292 = vld [vmem:[#allocation6 + $0x250] sm:$0xff]
    %v3293 = vld [vmem:[#allocation6 + $0x258] sm:$0xff]
    %v3294 = vld [vmem:[#allocation6 + $0x260] sm:$0xff]
    %v3295 = vld [vmem:[#allocation6 + $0x268] sm:$0xff]
    %v3296 = vld [vmem:[#allocation6 + $0x270] sm:$0xff]
    %v3297 = vld [vmem:[#allocation6 + $0x278] sm:$0xff]
    %v3298 = vld [vmem:[#allocation6 + $0x280] sm:$0xff]
    %v3299 = vld [vmem:[#allocation6 + $0x288] sm:$0xff]
    %v3300 = vld [vmem:[#allocation6 + $0x290] sm:$0xff]
    %v3301 = vld [vmem:[#allocation6 + $0x298] sm:$0xff]
    %v3302 = vld [vmem:[#allocation6 + $0x2a0] sm:$0xff]
    %v3303 = vld [vmem:[#allocation6 + $0x2a8] sm:$0xff]
    %v3304 = vld [vmem:[#allocation6 + $0x2b0] sm:$0xff]
    %v3305 = vld [vmem:[#allocation6 + $0x2b8] sm:$0xff]
    %v3306 = vld [vmem:[#allocation6 + $0x2c0] sm:$0xff]
    %v3307 = vld [vmem:[#allocation6 + $0x2c8] sm:$0xff]
    %v3308 = vld [vmem:[#allocation6 + $0x2d0] sm:$0xff]
    %v3309 = vld [vmem:[#allocation6 + $0x2d8] sm:$0xff]
    %v3310 = vld [vmem:[#allocation6 + $0x2e0] sm:$0xff]
    %v3311 = vld [vmem:[#allocation6 + $0x2e8] sm:$0xff]
    %v3312 = vld [vmem:[#allocation6 + $0x2f0] sm:$0xff]
    %v3313 = vld [vmem:[#allocation6 + $0x2f8] sm:$0xff]
    %v3314 = vld [vmem:[#allocation6 + $0x300] sm:$0xff]
    %v3315 = vld [vmem:[#allocation6 + $0x308] sm:$0xff]
    %v3316 = vld [vmem:[#allocation6 + $0x310] sm:$0xff]
    %v3317 = vld [vmem:[#allocation6 + $0x318] sm:$0xff]
    %v3318 = vld [vmem:[#allocation6 + $0x320] sm:$0xff]
    %v3319 = vld [vmem:[#allocation6 + $0x328] sm:$0xff]
    %v3320 = vld [vmem:[#allocation6 + $0x330] sm:$0xff]
    %v3321 = vld [vmem:[#allocation6 + $0x338] sm:$0xff]
    %v3322 = vld [vmem:[#allocation6 + $0x340] sm:$0xff]
    %v3323 = vld [vmem:[#allocation6 + $0x348] sm:$0xff]
    %v3324 = vld [vmem:[#allocation6 + $0x350] sm:$0xff]
    %v3325 = vld [vmem:[#allocation6 + $0x358] sm:$0xff]
    %v3326 = vld [vmem:[#allocation6 + $0x360] sm:$0xff]
    %v3327 = vld [vmem:[#allocation6 + $0x368] sm:$0xff]
    %v3328 = vld [vmem:[#allocation6 + $0x370] sm:$0xff]
    %v3329 = vld [vmem:[#allocation6 + $0x378] sm:$0xff]
    %v3330 = vld [vmem:[#allocation6 + $0x380] sm:$0xff]
    %v3331 = vld [vmem:[#allocation6 + $0x388] sm:$0xff]
    %v3332 = vld [vmem:[#allocation6 + $0x390] sm:$0xff]
    %v3333 = vld [vmem:[#allocation6 + $0x398] sm:$0xff]
    %v3334 = vld [vmem:[#allocation6 + $0x3a0] sm:$0xff]
    %v3335 = vld [vmem:[#allocation6 + $0x3a8] sm:$0xff]
    %v3336 = vld [vmem:[#allocation6 + $0x3b0] sm:$0xff]
    %v3337 = vld [vmem:[#allocation6 + $0x3b8] sm:$0xff]
    %v3338 = vld [vmem:[#allocation6 + $0x3c0] sm:$0xff]
    %v3339 = vld [vmem:[#allocation6 + $0x3c8] sm:$0xff]
    %v3340 = vld [vmem:[#allocation6 + $0x3d0] sm:$0xff]
    %v3341 = vld [vmem:[#allocation6 + $0x3d8] sm:$0xff]
    %v3342 = vld [vmem:[#allocation6 + $0x3e0] sm:$0xff]
    %v3343 = vld [vmem:[#allocation6 + $0x3e8] sm:$0xff]
    %v3344 = vld [vmem:[#allocation6 + $0x3f0] sm:$0xff]
    %v3345 = vld [vmem:[#allocation6 + $0x3f8] sm:$0xff]
    %v3346 = vld [vmem:[#allocation6 + $0x400] sm:$0xff]
    %v3347 = vld [vmem:[#allocation6 + $0x408] sm:$0xff]
    %v3348 = vld [vmem:[#allocation6 + $0x410] sm:$0xff]
    %v3349 = vld [vmem:[#allocation6 + $0x418] sm:$0xff]
    %v3350 = vld [vmem:[#allocation6 + $0x420] sm:$0xff]
    %v3351 = vld [vmem:[#allocation6 + $0x428] sm:$0xff]
    %v3352 = vld [vmem:[#allocation6 + $0x430] sm:$0xff]
    %v3353 = vld [vmem:[#allocation6 + $0x438] sm:$0xff]
    %v3354 = vld [vmem:[#allocation6 + $0x440] sm:$0xff]
    %v3355 = vld [vmem:[#allocation6 + $0x448] sm:$0xff]
    %v3356 = vld [vmem:[#allocation6 + $0x450] sm:$0xff]
    %v3357 = vld [vmem:[#allocation6 + $0x458] sm:$0xff]
    %v3358 = vld [vmem:[#allocation6 + $0x460] sm:$0xff]
    %v3359 = vld [vmem:[#allocation6 + $0x468] sm:$0xff]
    %v3360 = vld [vmem:[#allocation6 + $0x470] sm:$0xff]
    %v3361 = vld [vmem:[#allocation6 + $0x478] sm:$0xff]
    %v3362 = vld [vmem:[#allocation6 + $0x480] sm:$0xff]
    %v3363 = vld [vmem:[#allocation6 + $0x488] sm:$0xff]
    %v3364 = vld [vmem:[#allocation6 + $0x490] sm:$0xff]
    %v3365 = vld [vmem:[#allocation6 + $0x498] sm:$0xff]
    %v3366 = vld [vmem:[#allocation6 + $0x4a0] sm:$0xff]
    %v3367 = vld [vmem:[#allocation6 + $0x4a8] sm:$0xff]
    %v3368 = vld [vmem:[#allocation6 + $0x4b0] sm:$0xff]
    %v3369 = vld [vmem:[#allocation6 + $0x4b8] sm:$0xff]
    %v3370 = vld [vmem:[#allocation6 + $0x4c0] sm:$0xff]
    %v3371 = vld [vmem:[#allocation6 + $0x4c8] sm:$0xff]
    %v3372 = vld [vmem:[#allocation6 + $0x4d0] sm:$0xff]
    %v3373 = vld [vmem:[#allocation6 + $0x4d8] sm:$0xff]
    %v3374 = vld [vmem:[#allocation6 + $0x4e0] sm:$0xff]
    %v3375 = vld [vmem:[#allocation6 + $0x4e8] sm:$0xff]
    %v3376 = vld [vmem:[#allocation6 + $0x4f0] sm:$0xff]
    %v3377 = vld [vmem:[#allocation6 + $0x4f8] sm:$0xff]
    %v3378 = vld [vmem:[#allocation6 + $0x500] sm:$0xff]
    %v3379 = vld [vmem:[#allocation6 + $0x508] sm:$0xff]
    %v3380 = vld [vmem:[#allocation6 + $0x510] sm:$0xff]
    %v3381 = vld [vmem:[#allocation6 + $0x518] sm:$0xff]
    %v3382 = vld [vmem:[#allocation6 + $0x520] sm:$0xff]
    %v3383 = vld [vmem:[#allocation6 + $0x528] sm:$0xff]
    %v3384 = vld [vmem:[#allocation6 + $0x530] sm:$0xff]
    %v3385 = vld [vmem:[#allocation6 + $0x538] sm:$0xff]
    %v3386 = vld [vmem:[#allocation6 + $0x540] sm:$0xff]
    %v3387 = vld [vmem:[#allocation6 + $0x548] sm:$0xff]
    %v3388 = vld [vmem:[#allocation6 + $0x550] sm:$0xff]
    %v3389 = vld [vmem:[#allocation6 + $0x558] sm:$0xff]
    %v3390 = vld [vmem:[#allocation6 + $0x560] sm:$0xff]
    %v3391 = vld [vmem:[#allocation6 + $0x568] sm:$0xff]
    %v3392 = vld [vmem:[#allocation6 + $0x570] sm:$0xff]
    %v3393 = vld [vmem:[#allocation6 + $0x578] sm:$0xff]
    %v3394 = vld [vmem:[#allocation6 + $0x580] sm:$0xff]
    %v3395 = vld [vmem:[#allocation6 + $0x588] sm:$0xff]
    %v3396 = vld [vmem:[#allocation6 + $0x590] sm:$0xff]
    %v3397 = vld [vmem:[#allocation6 + $0x598] sm:$0xff]
    %v3398 = vld [vmem:[#allocation6 + $0x5a0] sm:$0xff]
    %v3399 = vld [vmem:[#allocation6 + $0x5a8] sm:$0xff]
    %v3400 = vld [vmem:[#allocation6 + $0x5b0] sm:$0xff]
    %v3401 = vld [vmem:[#allocation6 + $0x5b8] sm:$0xff]
    %v3402 = vld [vmem:[#allocation6 + $0x5c0] sm:$0xff]
    %v3403 = vld [vmem:[#allocation6 + $0x5c8] sm:$0xff]
    %v3404 = vld [vmem:[#allocation6 + $0x5d0] sm:$0xff]
    %v3405 = vld [vmem:[#allocation6 + $0x5d8] sm:$0xff]
    %v3406 = vld [vmem:[#allocation6 + $0x5e0] sm:$0xff]
    %v3407 = vld [vmem:[#allocation6 + $0x5e8] sm:$0xff]
    %v3408 = vld [vmem:[#allocation6 + $0x5f0] sm:$0xff]
    %v3409 = vld [vmem:[#allocation6 + $0x5f8] sm:$0xff]
    %v3410 = vld [vmem:[#allocation6 + $0x600] sm:$0xff]
    %v3411 = vld [vmem:[#allocation6 + $0x608] sm:$0xff]
    %v3412 = vld [vmem:[#allocation6 + $0x610] sm:$0xff]
    %v3413 = vld [vmem:[#allocation6 + $0x618] sm:$0xff]
    %v3414 = vld [vmem:[#allocation6 + $0x620] sm:$0xff]
    %v3415 = vld [vmem:[#allocation6 + $0x628] sm:$0xff]
    %v3416 = vld [vmem:[#allocation6 + $0x630] sm:$0xff]
    %v3417 = vld [vmem:[#allocation6 + $0x638] sm:$0xff]
    %v3418 = vld [vmem:[#allocation6 + $0x640] sm:$0xff]
    %v3419 = vld [vmem:[#allocation6 + $0x648] sm:$0xff]
    %v3420 = vld [vmem:[#allocation6 + $0x650] sm:$0xff]
    %v3421 = vld [vmem:[#allocation6 + $0x658] sm:$0xff]
    %v3422 = vld [vmem:[#allocation6 + $0x660] sm:$0xff]
    %v3423 = vld [vmem:[#allocation6 + $0x668] sm:$0xff]
    %v3424 = vld [vmem:[#allocation6 + $0x670] sm:$0xff]
    %v3425 = vld [vmem:[#allocation6 + $0x678] sm:$0xff]
    %v3426 = vld [vmem:[#allocation6 + $0x680] sm:$0xff]
    %v3427 = vld [vmem:[#allocation6 + $0x688] sm:$0xff]
    %v3428 = vld [vmem:[#allocation6 + $0x690] sm:$0xff]
    %v3429 = vld [vmem:[#allocation6 + $0x698] sm:$0xff]
    %v3430 = vld [vmem:[#allocation6 + $0x6a0] sm:$0xff]
    %v3431 = vld [vmem:[#allocation6 + $0x6a8] sm:$0xff]
    %v3432 = vld [vmem:[#allocation6 + $0x6b0] sm:$0xff]
    %v3433 = vld [vmem:[#allocation6 + $0x6b8] sm:$0xff]
    %v3434 = vld [vmem:[#allocation6 + $0x6c0] sm:$0xff]
    %v3435 = vld [vmem:[#allocation6 + $0x6c8] sm:$0xff]
    %v3436 = vld [vmem:[#allocation6 + $0x6d0] sm:$0xff]
    %v3437 = vld [vmem:[#allocation6 + $0x6d8] sm:$0xff]
    %v3438 = vld [vmem:[#allocation6 + $0x6e0] sm:$0xff]
    %v3439 = vld [vmem:[#allocation6 + $0x6e8] sm:$0xff]
    %v3440 = vld [vmem:[#allocation6 + $0x6f0] sm:$0xff]
    %v3441 = vld [vmem:[#allocation6 + $0x6f8] sm:$0xff]
    %v3442 = vld [vmem:[#allocation6 + $0x700] sm:$0xff]
    %v3443 = vld [vmem:[#allocation6 + $0x708] sm:$0xff]
    %v3444 = vld [vmem:[#allocation6 + $0x710] sm:$0xff]
    %v3445 = vld [vmem:[#allocation6 + $0x718] sm:$0xff]
    %v3446 = vld [vmem:[#allocation6 + $0x720] sm:$0xff]
    %v3447 = vld [vmem:[#allocation6 + $0x728] sm:$0xff]
    %v3448 = vld [vmem:[#allocation6 + $0x730] sm:$0xff]
    %v3449 = vld [vmem:[#allocation6 + $0x738] sm:$0xff]
    %v3450 = vld [vmem:[#allocation6 + $0x740] sm:$0xff]
    %v3451 = vld [vmem:[#allocation6 + $0x748] sm:$0xff]
    %v3452 = vld [vmem:[#allocation6 + $0x750] sm:$0xff]
    %v3453 = vld [vmem:[#allocation6 + $0x758] sm:$0xff]
    %v3454 = vld [vmem:[#allocation6 + $0x760] sm:$0xff]
    %v3455 = vld [vmem:[#allocation6 + $0x768] sm:$0xff]
    %v3456 = vld [vmem:[#allocation6 + $0x770] sm:$0xff]
    %v3457 = vld [vmem:[#allocation6 + $0x778] sm:$0xff]
    %v3458 = vld [vmem:[#allocation6 + $0x780] sm:$0xff]
    %v3459 = vld [vmem:[#allocation6 + $0x788] sm:$0xff]
    %v3460 = vld [vmem:[#allocation6 + $0x790] sm:$0xff]
    %v3461 = vld [vmem:[#allocation6 + $0x798] sm:$0xff]
    %v3462 = vld [vmem:[#allocation6 + $0x7a0] sm:$0xff]
    %v3463 = vld [vmem:[#allocation6 + $0x7a8] sm:$0xff]
    %v3464 = vld [vmem:[#allocation6 + $0x7b0] sm:$0xff]
    %v3465 = vld [vmem:[#allocation6 + $0x7b8] sm:$0xff]
    %v3466 = vld [vmem:[#allocation6 + $0x7c0] sm:$0xff]
    %v3467 = vld [vmem:[#allocation6 + $0x7c8] sm:$0xff]
    %v3468 = vld [vmem:[#allocation6 + $0x7d0] sm:$0xff]
    %v3469 = vld [vmem:[#allocation6 + $0x7d8] sm:$0xff]
    %v3470 = vld [vmem:[#allocation6 + $0x7e0] sm:$0xff]
    %v3471 = vld [vmem:[#allocation6 + $0x7e8] sm:$0xff]
    %v3472 = vld [vmem:[#allocation6 + $0x7f0] sm:$0xff]
    %v3473 = vld [vmem:[#allocation6 + $0x7f8] sm:$0xff]
    %v3474 = vld [vmem:[#allocation6 + $0x800] sm:$0xff]
    %v3475 = vld [vmem:[#allocation6 + $0x808] sm:$0xff]
    %v3476 = vld [vmem:[#allocation6 + $0x810] sm:$0xff]
    %v3477 = vld [vmem:[#allocation6 + $0x818] sm:$0xff]
    %v3478 = vld [vmem:[#allocation6 + $0x820] sm:$0xff]
    %v3479 = vld [vmem:[#allocation6 + $0x828] sm:$0xff]
    %v3480 = vld [vmem:[#allocation6 + $0x830] sm:$0xff]
    %v3481 = vld [vmem:[#allocation6 + $0x838] sm:$0xff]
    %v3482 = vld [vmem:[#allocation6 + $0x840] sm:$0xff]
    %v3483 = vld [vmem:[#allocation6 + $0x848] sm:$0xff]
    %v3484 = vld [vmem:[#allocation6 + $0x850] sm:$0xff]
    %v3485 = vld [vmem:[#allocation6 + $0x858] sm:$0xff]
    %v3486 = vld [vmem:[#allocation6 + $0x860] sm:$0xff]
    %v3487 = vld [vmem:[#allocation6 + $0x868] sm:$0xff]
    %v3488 = vld [vmem:[#allocation6 + $0x870] sm:$0xff]
    %v3489 = vld [vmem:[#allocation6 + $0x878] sm:$0xff]
    %v3490 = vld [vmem:[#allocation6 + $0x880] sm:$0xff]
    %v3491 = vld [vmem:[#allocation6 + $0x888] sm:$0xff]
    %v3492 = vld [vmem:[#allocation6 + $0x890] sm:$0xff]
    %v3493 = vld [vmem:[#allocation6 + $0x898] sm:$0xff]
    %v3494 = vld [vmem:[#allocation6 + $0x8a0] sm:$0xff]
    %v3495 = vld [vmem:[#allocation6 + $0x8a8] sm:$0xff]
    %v3496 = vld [vmem:[#allocation6 + $0x8b0] sm:$0xff]
    %v3497 = vld [vmem:[#allocation6 + $0x8b8] sm:$0xff]
    %v3498 = vld [vmem:[#allocation6 + $0x8c0] sm:$0xff]
    %v3499 = vld [vmem:[#allocation6 + $0x8c8] sm:$0xff]
    %v3500 = vld [vmem:[#allocation6 + $0x8d0] sm:$0xff]
    %v3501 = vld [vmem:[#allocation6 + $0x8d8] sm:$0xff]
    %v3502 = vld [vmem:[#allocation6 + $0x8e0] sm:$0xff]
    %v3503 = vld [vmem:[#allocation6 + $0x8e8] sm:$0xff]
    %v3504 = vld [vmem:[#allocation6 + $0x8f0] sm:$0xff]
    %v3505 = vld [vmem:[#allocation6 + $0x8f8] sm:$0xff]
    %v3506 = vld [vmem:[#allocation6 + $0x900] sm:$0xff]
    %v3507 = vld [vmem:[#allocation6 + $0x908] sm:$0xff]
    %v3508 = vld [vmem:[#allocation6 + $0x910] sm:$0xff]
    %v3509 = vld [vmem:[#allocation6 + $0x918] sm:$0xff]
    %v3510 = vld [vmem:[#allocation6 + $0x920] sm:$0xff]
    %v3511 = vld [vmem:[#allocation6 + $0x928] sm:$0xff]
    %v3512 = vld [vmem:[#allocation6 + $0x930] sm:$0xff]
    %v3513 = vld [vmem:[#allocation6 + $0x938] sm:$0xff]
    %v3514 = vld [vmem:[#allocation6 + $0x940] sm:$0xff]
    %v3515 = vld [vmem:[#allocation6 + $0x948] sm:$0xff]
    %v3516 = vld [vmem:[#allocation6 + $0x950] sm:$0xff]
    %v3517 = vld [vmem:[#allocation6 + $0x958] sm:$0xff]
    %v3518 = vld [vmem:[#allocation6 + $0x960] sm:$0xff]
    %v3519 = vld [vmem:[#allocation6 + $0x968] sm:$0xff]
    %v3520 = vld [vmem:[#allocation6 + $0x970] sm:$0xff]
    %v3521 = vld [vmem:[#allocation6 + $0x978] sm:$0xff]
    %v3522 = vld [vmem:[#allocation6 + $0x980] sm:$0xff]
    %v3523 = vld [vmem:[#allocation6 + $0x988] sm:$0xff]
    %v3524 = vld [vmem:[#allocation6 + $0x990] sm:$0xff]
    %v3525 = vld [vmem:[#allocation6 + $0x998] sm:$0xff]
    %v3526 = vld [vmem:[#allocation6 + $0x9a0] sm:$0xff]
    %v3527 = vld [vmem:[#allocation6 + $0x9a8] sm:$0xff]
    %v3528 = vld [vmem:[#allocation6 + $0x9b0] sm:$0xff]
    %v3529 = vld [vmem:[#allocation6 + $0x9b8] sm:$0xff]
    %v3530 = vld [vmem:[#allocation6 + $0x9c0] sm:$0xff]
    %v3531 = vld [vmem:[#allocation6 + $0x9c8] sm:$0xff]
    %v3532 = vld [vmem:[#allocation6 + $0x9d0] sm:$0xff]
    %v3533 = vld [vmem:[#allocation6 + $0x9d8] sm:$0xff]
    %v3534 = vld [vmem:[#allocation6 + $0x9e0] sm:$0xff]
    %v3535 = vld [vmem:[#allocation6 + $0x9e8] sm:$0xff]
    %v3536 = vld [vmem:[#allocation6 + $0x9f0] sm:$0xff]
    %v3537 = vld [vmem:[#allocation6 + $0x9f8] sm:$0xff]
    %v3538 = vld [vmem:[#allocation6 + $0xa00] sm:$0xff]
    %v3539 = vld [vmem:[#allocation6 + $0xa08] sm:$0x7f]
    %v3540 = vld [vmem:[#allocation6 + $0xa10] sm:$0x7f]
    %v3541 = vld [vmem:[#allocation6 + $0xa18] sm:$0x7f]
    %v3542 = vld [vmem:[#allocation8] sm:$0xff]
    %v3543 = vld [vmem:[#allocation8 + $0x8] sm:$0xff]
    %v3544 = vld [vmem:[#allocation8 + $0x10] sm:$0xff]
    %v3545 = vld [vmem:[#allocation8 + $0x18] sm:$0xff]
    %v3546 = vld [vmem:[#allocation8 + $0x20] sm:$0xff]
    %v3547 = vld [vmem:[#allocation8 + $0x28] sm:$0xff]
    %v3548 = vld [vmem:[#allocation8 + $0x30] sm:$0xff]
    %v3549 = vld [vmem:[#allocation8 + $0x38] sm:$0xff]
    %v3550 = vld [vmem:[#allocation8 + $0x40] sm:$0xff]
    %v3551 = vld [vmem:[#allocation8 + $0x48] sm:$0xff]
    %v3552 = vld [vmem:[#allocation8 + $0x50] sm:$0xff]
    %v3553 = vld [vmem:[#allocation8 + $0x58] sm:$0xff]
    %v3554 = vld [vmem:[#allocation8 + $0x60] sm:$0xff]
    %v3555 = vld [vmem:[#allocation8 + $0x68] sm:$0xff]
    %v3556 = vld [vmem:[#allocation8 + $0x70] sm:$0xff]
    %v3557 = vld [vmem:[#allocation8 + $0x78] sm:$0xff]
    %v3558 = vld [vmem:[#allocation8 + $0x80] sm:$0xff]
    %v3559 = vld [vmem:[#allocation8 + $0x88] sm:$0xff]
    %v3560 = vld [vmem:[#allocation8 + $0x90] sm:$0xff]
    %v3561 = vld [vmem:[#allocation8 + $0x98] sm:$0xff]
    %v3562 = vld [vmem:[#allocation8 + $0xa0] sm:$0xff]
    %v3563 = vld [vmem:[#allocation8 + $0xa8] sm:$0xff]
    %v3564 = vld [vmem:[#allocation8 + $0xb0] sm:$0xff]
    %v3565 = vld [vmem:[#allocation8 + $0xb8] sm:$0xff]
    %v3566 = vld [vmem:[#allocation8 + $0xc0] sm:$0xff]
    %v3567 = vld [vmem:[#allocation8 + $0xc8] sm:$0xff]
    %v3568 = vld [vmem:[#allocation8 + $0xd0] sm:$0xff]
    %v3569 = vld [vmem:[#allocation8 + $0xd8] sm:$0xff]
    %v3570 = vld [vmem:[#allocation8 + $0xe0] sm:$0xff]
    %v3571 = vld [vmem:[#allocation8 + $0xe8] sm:$0xff]
    %v3573 = vsel %vm564, %v3154, 0
    %v3576 = vsel %vm564, %v3161, 0
    %v3579 = vsel %vm564, %v3168, 0
    %v3582 = vsel %vm564, %v3175, 0
    %v3585 = vsel %vm564, %v3182, 0
    %v3588 = vsel %vm564, %v3189, 0
    %v3591 = vsel %vm564, %v3196, 0
    %v3594 = vsel %vm564, %v3203, 0
    %v3597 = vsel %vm564, %v3210, 0
    %v3600 = vsel %vm564, %v3217, 0
    %vm3602 = vcmask 1046528
    %v3604 = vsel %vm3602, %v3539, 0
    %v3607 = vsel %vm3602, %v3540, 0
    %v3610 = vsel %vm3602, %v3541, 0
    %3612 = vmatpush.msra.mxu0 %v3263
    %3613 = vmatpush.msra.mxu0 %v3260
    %3614 = vmatpush.msra.mxu0 %v3257
    %3615 = vmatpush.msra.mxu0 %v3254
    %3616 = vmatpush.msra.mxu0 %v3251
    %3617 = vmatpush.msra.mxu0 %v3248
    %3618 = vmatpush.msra.mxu0 %v3245
    %3619 = vmatpush.msra.mxu0 %v3242
    %3620 = vmatpush.msra.mxu0 %v3239
    %3621 = vmatpush.msra.mxu0 %v3236
    %3622 = vmatpush.msra.mxu0 %v3233
    %3623 = vmatpush.msra.mxu0 %v3230
    %3624 = vmatpush.msra.mxu0 %v3227
    %3625 = vmatpush.msra.mxu0 %v3224
    %3626 = vmatpush.msra.mxu0 %v3221
    %3627 = vmatpush.msra.mxu0 %v3218
    %3628 = vmatmul.f32.gmra.mxu0 %v3148
    %v3629 = vpop.f32.mrf.mxu0
    %v3630 = vadd.f32 %v3542, %v3629
    %3631 = vmatmul.f32.gmra.mxu0 %v3155
    %v3632 = vpop.f32.mrf.mxu0
    %v3633 = vadd.f32 %v3545, %v3632
    %3634 = vmatmul.f32.gmra.mxu0 %v3162
    %v3635 = vpop.f32.mrf.mxu0
    %v3636 = vadd.f32 %v3548, %v3635
    %3637 = vmatmul.f32.gmra.mxu0 %v3169
    %v3638 = vpop.f32.mrf.mxu0
    %v3639 = vadd.f32 %v3551, %v3638
    %3640 = vmatmul.f32.gmra.mxu0 %v3176
    %v3641 = vpop.f32.mrf.mxu0
    %v3642 = vadd.f32 %v3554, %v3641
    %3643 = vmatmul.f32.gmra.mxu0 %v3183
    %v3644 = vpop.f32.mrf.mxu0
    %v3645 = vadd.f32 %v3557, %v3644
    %3646 = vmatmul.f32.gmra.mxu0 %v3190
    %v3647 = vpop.f32.mrf.mxu0
    %v3648 = vadd.f32 %v3560, %v3647
    %3649 = vmatmul.f32.gmra.mxu0 %v3197
    %v3650 = vpop.f32.mrf.mxu0
    %v3651 = vadd.f32 %v3563, %v3650
    %3652 = vmatmul.f32.gmra.mxu0 %v3204
    %v3653 = vpop.f32.mrf.mxu0
    %v3654 = vadd.f32 %v3566, %v3653
    %3655 = vmatmul.f32.gmra.mxu0 %v3211
    %v3656 = vpop.f32.mrf.mxu0
    %v3657 = vadd.f32 %v3569, %v3656
    %3658 = vdwg.mxu0
    %3659 = vmatpush.msra.mxu0 %v3311
    %3660 = vmatpush.msra.mxu0 %v3308
    %3661 = vmatpush.msra.mxu0 %v3305
    %3662 = vmatpush.msra.mxu0 %v3302
    %3663 = vmatpush.msra.mxu0 %v3299
    %3664 = vmatpush.msra.mxu0 %v3296
    %3665 = vmatpush.msra.mxu0 %v3293
    %3666 = vmatpush.msra.mxu0 %v3290
    %3667 = vmatpush.msra.mxu0 %v3287
    %3668 = vmatpush.msra.mxu0 %v3284
    %3669 = vmatpush.msra.mxu0 %v3281
    %3670 = vmatpush.msra.mxu0 %v3278
    %3671 = vmatpush.msra.mxu0 %v3275
    %3672 = vmatpush.msra.mxu0 %v3272
    %3673 = vmatpush.msra.mxu0 %v3269
    %3674 = vmatpush.msra.mxu0 %v3266
    %3675 = vmatmul.f32.gmra.mxu0 %v3149
    %v3676 = vpop.f32.mrf.mxu0
    %v3677 = vadd.f32 %v3630, %v3676
    %3678 = vmatmul.f32.gmra.mxu0 %v3156
    %v3679 = vpop.f32.mrf.mxu0
    %v3680 = vadd.f32 %v3633, %v3679
    %3681 = vmatmul.f32.gmra.mxu0 %v3163
    %v3682 = vpop.f32.mrf.mxu0
    %v3683 = vadd.f32 %v3636, %v3682
    %3684 = vmatmul.f32.gmra.mxu0 %v3170
    %v3685 = vpop.f32.mrf.mxu0
    %v3686 = vadd.f32 %v3639, %v3685
    %3687 = vmatmul.f32.gmra.mxu0 %v3177
    %v3688 = vpop.f32.mrf.mxu0
    %v3689 = vadd.f32 %v3642, %v3688
    %3690 = vmatmul.f32.gmra.mxu0 %v3184
    %v3691 = vpop.f32.mrf.mxu0
    %v3692 = vadd.f32 %v3645, %v3691
    %3693 = vmatmul.f32.gmra.mxu0 %v3191
    %v3694 = vpop.f32.mrf.mxu0
    %v3695 = vadd.f32 %v3648, %v3694
    %3696 = vmatmul.f32.gmra.mxu0 %v3198
    %v3697 = vpop.f32.mrf.mxu0
    %v3698 = vadd.f32 %v3651, %v3697
    %3699 = vmatmul.f32.gmra.mxu0 %v3205
    %v3700 = vpop.f32.mrf.mxu0
    %v3701 = vadd.f32 %v3654, %v3700
    %3702 = vmatmul.f32.gmra.mxu0 %v3212
    %v3703 = vpop.f32.mrf.mxu0
    %v3704 = vadd.f32 %v3657, %v3703
    %3705 = vdwg.mxu0
    %3706 = vmatpush.msra.mxu0 %v3359
    %3707 = vmatpush.msra.mxu0 %v3356
    %3708 = vmatpush.msra.mxu0 %v3353
    %3709 = vmatpush.msra.mxu0 %v3350
    %3710 = vmatpush.msra.mxu0 %v3347
    %3711 = vmatpush.msra.mxu0 %v3344
    %3712 = vmatpush.msra.mxu0 %v3341
    %3713 = vmatpush.msra.mxu0 %v3338
    %3714 = vmatpush.msra.mxu0 %v3335
    %3715 = vmatpush.msra.mxu0 %v3332
    %3716 = vmatpush.msra.mxu0 %v3329
    %3717 = vmatpush.msra.mxu0 %v3326
    %3718 = vmatpush.msra.mxu0 %v3323
    %3719 = vmatpush.msra.mxu0 %v3320
    %3720 = vmatpush.msra.mxu0 %v3317
    %3721 = vmatpush.msra.mxu0 %v3314
    %3722 = vmatmul.f32.gmra.mxu0 %v3150
    %v3723 = vpop.f32.mrf.mxu0
    %v3724 = vadd.f32 %v3677, %v3723
    %3725 = vmatmul.f32.gmra.mxu0 %v3157
    %v3726 = vpop.f32.mrf.mxu0
    %v3727 = vadd.f32 %v3680, %v3726
    %3728 = vmatmul.f32.gmra.mxu0 %v3164
    %v3729 = vpop.f32.mrf.mxu0
    %v3730 = vadd.f32 %v3683, %v3729
    %3731 = vmatmul.f32.gmra.mxu0 %v3171
    %v3732 = vpop.f32.mrf.mxu0
    %v3733 = vadd.f32 %v3686, %v3732
    %3734 = vmatmul.f32.gmra.mxu0 %v3178
    %v3735 = vpop.f32.mrf.mxu0
    %v3736 = vadd.f32 %v3689, %v3735
    %3737 = vmatmul.f32.gmra.mxu0 %v3185
    %v3738 = vpop.f32.mrf.mxu0
    %v3739 = vadd.f32 %v3692, %v3738
    %3740 = vmatmul.f32.gmra.mxu0 %v3192
    %v3741 = vpop.f32.mrf.mxu0
    %v3742 = vadd.f32 %v3695, %v3741
    %3743 = vmatmul.f32.gmra.mxu0 %v3199
    %v3744 = vpop.f32.mrf.mxu0
    %v3745 = vadd.f32 %v3698, %v3744
    %3746 = vmatmul.f32.gmra.mxu0 %v3206
    %v3747 = vpop.f32.mrf.mxu0
    %v3748 = vadd.f32 %v3701, %v3747
    %3749 = vmatmul.f32.gmra.mxu0 %v3213
    %v3750 = vpop.f32.mrf.mxu0
    %v3751 = vadd.f32 %v3704, %v3750
    %3752 = vdwg.mxu0
    %3753 = vmatpush.msra.mxu0 %v3407
    %3754 = vmatpush.msra.mxu0 %v3404
    %3755 = vmatpush.msra.mxu0 %v3401
    %3756 = vmatpush.msra.mxu0 %v3398
    %3757 = vmatpush.msra.mxu0 %v3395
    %3758 = vmatpush.msra.mxu0 %v3392
    %3759 = vmatpush.msra.mxu0 %v3389
    %3760 = vmatpush.msra.mxu0 %v3386
    %3761 = vmatpush.msra.mxu0 %v3383
    %3762 = vmatpush.msra.mxu0 %v3380
    %3763 = vmatpush.msra.mxu0 %v3377
    %3764 = vmatpush.msra.mxu0 %v3374
    %3765 = vmatpush.msra.mxu0 %v3371
    %3766 = vmatpush.msra.mxu0 %v3368
    %3767 = vmatpush.msra.mxu0 %v3365
    %3768 = vmatpush.msra.mxu0 %v3362
    %3769 = vmatmul.f32.gmra.mxu0 %v3151
    %v3770 = vpop.f32.mrf.mxu0
    %v3771 = vadd.f32 %v3724, %v3770
    %3772 = vmatmul.f32.gmra.mxu0 %v3158
    %v3773 = vpop.f32.mrf.mxu0
    %v3774 = vadd.f32 %v3727, %v3773
    %3775 = vmatmul.f32.gmra.mxu0 %v3165
    %v3776 = vpop.f32.mrf.mxu0
    %v3777 = vadd.f32 %v3730, %v3776
    %3778 = vmatmul.f32.gmra.mxu0 %v3172
    %v3779 = vpop.f32.mrf.mxu0
    %v3780 = vadd.f32 %v3733, %v3779
    %3781 = vmatmul.f32.gmra.mxu0 %v3179
    %v3782 = vpop.f32.mrf.mxu0
    %v3783 = vadd.f32 %v3736, %v3782
    %3784 = vmatmul.f32.gmra.mxu0 %v3186
    %v3785 = vpop.f32.mrf.mxu0
    %v3786 = vadd.f32 %v3739, %v3785
    %3787 = vmatmul.f32.gmra.mxu0 %v3193
    %v3788 = vpop.f32.mrf.mxu0
    %v3789 = vadd.f32 %v3742, %v3788
    %3790 = vmatmul.f32.gmra.mxu0 %v3200
    %v3791 = vpop.f32.mrf.mxu0
    %v3792 = vadd.f32 %v3745, %v3791
    %3793 = vmatmul.f32.gmra.mxu0 %v3207
    %v3794 = vpop.f32.mrf.mxu0
    %v3795 = vadd.f32 %v3748, %v3794
    %3796 = vmatmul.f32.gmra.mxu0 %v3214
    %v3797 = vpop.f32.mrf.mxu0
    %v3798 = vadd.f32 %v3751, %v3797
    %3799 = vdwg.mxu0
    %3800 = vmatpush.msra.mxu0 %v3455
    %3801 = vmatpush.msra.mxu0 %v3452
    %3802 = vmatpush.msra.mxu0 %v3449
    %3803 = vmatpush.msra.mxu0 %v3446
    %3804 = vmatpush.msra.mxu0 %v3443
    %3805 = vmatpush.msra.mxu0 %v3440
    %3806 = vmatpush.msra.mxu0 %v3437
    %3807 = vmatpush.msra.mxu0 %v3434
    %3808 = vmatpush.msra.mxu0 %v3431
    %3809 = vmatpush.msra.mxu0 %v3428
    %3810 = vmatpush.msra.mxu0 %v3425
    %3811 = vmatpush.msra.mxu0 %v3422
    %3812 = vmatpush.msra.mxu0 %v3419
    %3813 = vmatpush.msra.mxu0 %v3416
    %3814 = vmatpush.msra.mxu0 %v3413
    %3815 = vmatpush.msra.mxu0 %v3410
    %3816 = vmatmul.f32.gmra.mxu0 %v3152
    %v3817 = vpop.f32.mrf.mxu0
    %v3818 = vadd.f32 %v3771, %v3817
    %3819 = vmatmul.f32.gmra.mxu0 %v3159
    %v3820 = vpop.f32.mrf.mxu0
    %v3821 = vadd.f32 %v3774, %v3820
    %3822 = vmatmul.f32.gmra.mxu0 %v3166
    %v3823 = vpop.f32.mrf.mxu0
    %v3824 = vadd.f32 %v3777, %v3823
    %3825 = vmatmul.f32.gmra.mxu0 %v3173
    %v3826 = vpop.f32.mrf.mxu0
    %v3827 = vadd.f32 %v3780, %v3826
    %3828 = vmatmul.f32.gmra.mxu0 %v3180
    %v3829 = vpop.f32.mrf.mxu0
    %v3830 = vadd.f32 %v3783, %v3829
    %3831 = vmatmul.f32.gmra.mxu0 %v3187
    %v3832 = vpop.f32.mrf.mxu0
    %v3833 = vadd.f32 %v3786, %v3832
    %3834 = vmatmul.f32.gmra.mxu0 %v3194
    %v3835 = vpop.f32.mrf.mxu0
    %v3836 = vadd.f32 %v3789, %v3835
    %3837 = vmatmul.f32.gmra.mxu0 %v3201
    %v3838 = vpop.f32.mrf.mxu0
    %v3839 = vadd.f32 %v3792, %v3838
    %3840 = vmatmul.f32.gmra.mxu0 %v3208
    %v3841 = vpop.f32.mrf.mxu0
    %v3842 = vadd.f32 %v3795, %v3841
    %3843 = vmatmul.f32.gmra.mxu0 %v3215
    %v3844 = vpop.f32.mrf.mxu0
    %v3845 = vadd.f32 %v3798, %v3844
    %3846 = vdwg.mxu0
    %3847 = vmatpush.msra.mxu0 %v3503
    %3848 = vmatpush.msra.mxu0 %v3500
    %3849 = vmatpush.msra.mxu0 %v3497
    %3850 = vmatpush.msra.mxu0 %v3494
    %3851 = vmatpush.msra.mxu0 %v3491
    %3852 = vmatpush.msra.mxu0 %v3488
    %3853 = vmatpush.msra.mxu0 %v3485
    %3854 = vmatpush.msra.mxu0 %v3482
    %3855 = vmatpush.msra.mxu0 %v3479
    %3856 = vmatpush.msra.mxu0 %v3476
    %3857 = vmatpush.msra.mxu0 %v3473
    %3858 = vmatpush.msra.mxu0 %v3470
    %3859 = vmatpush.msra.mxu0 %v3467
    %3860 = vmatpush.msra.mxu0 %v3464
    %3861 = vmatpush.msra.mxu0 %v3461
    %3862 = vmatpush.msra.mxu0 %v3458
    %3863 = vmatmul.f32.gmra.mxu0 %v3153
    %v3864 = vpop.f32.mrf.mxu0
    %v3865 = vadd.f32 %v3818, %v3864
    %3866 = vmatmul.f32.gmra.mxu0 %v3160
    %v3867 = vpop.f32.mrf.mxu0
    %v3868 = vadd.f32 %v3821, %v3867
    %3869 = vmatmul.f32.gmra.mxu0 %v3167
    %v3870 = vpop.f32.mrf.mxu0
    %v3871 = vadd.f32 %v3824, %v3870
    %3872 = vmatmul.f32.gmra.mxu0 %v3174
    %v3873 = vpop.f32.mrf.mxu0
    %v3874 = vadd.f32 %v3827, %v3873
    %3875 = vmatmul.f32.gmra.mxu0 %v3181
    %v3876 = vpop.f32.mrf.mxu0
    %v3877 = vadd.f32 %v3830, %v3876
    %3878 = vmatmul.f32.gmra.mxu0 %v3188
    %v3879 = vpop.f32.mrf.mxu0
    %v3880 = vadd.f32 %v3833, %v3879
    %3881 = vmatmul.f32.gmra.mxu0 %v3195
    %v3882 = vpop.f32.mrf.mxu0
    %v3883 = vadd.f32 %v3836, %v3882
    %3884 = vmatmul.f32.gmra.mxu0 %v3202
    %v3885 = vpop.f32.mrf.mxu0
    %v3886 = vadd.f32 %v3839, %v3885
    %3887 = vmatmul.f32.gmra.mxu0 %v3209
    %v3888 = vpop.f32.mrf.mxu0
    %v3889 = vadd.f32 %v3842, %v3888
    %3890 = vmatmul.f32.gmra.mxu0 %v3216
    %v3891 = vpop.f32.mrf.mxu0
    %v3892 = vadd.f32 %v3845, %v3891
    %3893 = vdwg.mxu0
    %3894 = vmatpush.msra.mxu0 0.0
    %3895 = vmatpush.msra.mxu0 0.0
    %3896 = vmatpush.msra.mxu0 0.0
    %3897 = vmatpush.msra.mxu0 0.0
    %3898 = vmatpush.msra.mxu0 %v3604
    %3899 = vmatpush.msra.mxu0 %v3536
    %3900 = vmatpush.msra.mxu0 %v3533
    %3901 = vmatpush.msra.mxu0 %v3530
    %3902 = vmatpush.msra.mxu0 %v3527
    %3903 = vmatpush.msra.mxu0 %v3524
    %3904 = vmatpush.msra.mxu0 %v3521
    %3905 = vmatpush.msra.mxu0 %v3518
    %3906 = vmatpush.msra.mxu0 %v3515
    %3907 = vmatpush.msra.mxu0 %v3512
    %3908 = vmatpush.msra.mxu0 %v3509
    %3909 = vmatpush.msra.mxu0 %v3506
    %3910 = vmatmul.f32.gmra.mxu0 %v3573
    %v3911 = vpop.f32.mrf.mxu0
    %v3912 = vadd.f32 %v3865, %v3911
    %3913 = vmatmul.f32.gmra.mxu0 %v3576
    %v3914 = vpop.f32.mrf.mxu0
    %v3915 = vadd.f32 %v3868, %v3914
    %3916 = vmatmul.f32.gmra.mxu0 %v3579
    %v3917 = vpop.f32.mrf.mxu0
    %v3918 = vadd.f32 %v3871, %v3917
    %3919 = vmatmul.f32.gmra.mxu0 %v3582
    %v3920 = vpop.f32.mrf.mxu0
    %v3921 = vadd.f32 %v3874, %v3920
    %3922 = vmatmul.f32.gmra.mxu0 %v3585
    %v3923 = vpop.f32.mrf.mxu0
    %v3924 = vadd.f32 %v3877, %v3923
    %3925 = vmatmul.f32.gmra.mxu0 %v3588
    %v3926 = vpop.f32.mrf.mxu0
    %v3927 = vadd.f32 %v3880, %v3926
    %3928 = vmatmul.f32.gmra.mxu0 %v3591
    %v3929 = vpop.f32.mrf.mxu0
    %v3930 = vadd.f32 %v3883, %v3929
    %3931 = vmatmul.f32.gmra.mxu0 %v3594
    %v3932 = vpop.f32.mrf.mxu0
    %v3933 = vadd.f32 %v3886, %v3932
    %3934 = vmatmul.f32.gmra.mxu0 %v3597
    %v3935 = vpop.f32.mrf.mxu0
    %v3936 = vadd.f32 %v3889, %v3935
    %3937 = vmatmul.f32.gmra.mxu0 %v3600
    %v3938 = vpop.f32.mrf.mxu0
    %v3939 = vadd.f32 %v3892, %v3938
    %3940 = vdwg.mxu0
    %3941 = vmatpush.msra.mxu0 %v3264
    %3942 = vmatpush.msra.mxu0 %v3261
    %3943 = vmatpush.msra.mxu0 %v3258
    %3944 = vmatpush.msra.mxu0 %v3255
    %3945 = vmatpush.msra.mxu0 %v3252
    %3946 = vmatpush.msra.mxu0 %v3249
    %3947 = vmatpush.msra.mxu0 %v3246
    %3948 = vmatpush.msra.mxu0 %v3243
    %3949 = vmatpush.msra.mxu0 %v3240
    %3950 = vmatpush.msra.mxu0 %v3237
    %3951 = vmatpush.msra.mxu0 %v3234
    %3952 = vmatpush.msra.mxu0 %v3231
    %3953 = vmatpush.msra.mxu0 %v3228
    %3954 = vmatpush.msra.mxu0 %v3225
    %3955 = vmatpush.msra.mxu0 %v3222
    %3956 = vmatpush.msra.mxu0 %v3219
    %3957 = vmatmul.f32.gmra.mxu0 %v3148
    %v3958 = vpop.f32.mrf.mxu0
    %v3959 = vadd.f32 %v3543, %v3958
    %3960 = vmatmul.f32.gmra.mxu0 %v3155
    %v3961 = vpop.f32.mrf.mxu0
    %v3962 = vadd.f32 %v3546, %v3961
    %3963 = vmatmul.f32.gmra.mxu0 %v3162
    %v3964 = vpop.f32.mrf.mxu0
    %v3965 = vadd.f32 %v3549, %v3964
    %3966 = vmatmul.f32.gmra.mxu0 %v3169
    %v3967 = vpop.f32.mrf.mxu0
    %v3968 = vadd.f32 %v3552, %v3967
    %3969 = vmatmul.f32.gmra.mxu0 %v3176
    %v3970 = vpop.f32.mrf.mxu0
    %v3971 = vadd.f32 %v3555, %v3970
    %3972 = vmatmul.f32.gmra.mxu0 %v3183
    %v3973 = vpop.f32.mrf.mxu0
    %v3974 = vadd.f32 %v3558, %v3973
    %3975 = vmatmul.f32.gmra.mxu0 %v3190
    %v3976 = vpop.f32.mrf.mxu0
    %v3977 = vadd.f32 %v3561, %v3976
    %3978 = vmatmul.f32.gmra.mxu0 %v3197
    %v3979 = vpop.f32.mrf.mxu0
    %v3980 = vadd.f32 %v3564, %v3979
    %3981 = vmatmul.f32.gmra.mxu0 %v3204
    %v3982 = vpop.f32.mrf.mxu0
    %v3983 = vadd.f32 %v3567, %v3982
    %3984 = vmatmul.f32.gmra.mxu0 %v3211
    %v3985 = vpop.f32.mrf.mxu0
    %v3986 = vadd.f32 %v3570, %v3985
    %3987 = vdwg.mxu0
    %3988 = vmatpush.msra.mxu0 %v3312
    %3989 = vmatpush.msra.mxu0 %v3309
    %3990 = vmatpush.msra.mxu0 %v3306
    %3991 = vmatpush.msra.mxu0 %v3303
    %3992 = vmatpush.msra.mxu0 %v3300
    %3993 = vmatpush.msra.mxu0 %v3297
    %3994 = vmatpush.msra.mxu0 %v3294
    %3995 = vmatpush.msra.mxu0 %v3291
    %3996 = vmatpush.msra.mxu0 %v3288
    %3997 = vmatpush.msra.mxu0 %v3285
    %3998 = vmatpush.msra.mxu0 %v3282
    %3999 = vmatpush.msra.mxu0 %v3279
    %4000 = vmatpush.msra.mxu0 %v3276
    %4001 = vmatpush.msra.mxu0 %v3273
    %4002 = vmatpush.msra.mxu0 %v3270
    %4003 = vmatpush.msra.mxu0 %v3267
    %4004 = vmatmul.f32.gmra.mxu0 %v3149
    %v4005 = vpop.f32.mrf.mxu0
    %v4006 = vadd.f32 %v3959, %v4005
    %4007 = vmatmul.f32.gmra.mxu0 %v3156
    %v4008 = vpop.f32.mrf.mxu0
    %v4009 = vadd.f32 %v3962, %v4008
    %4010 = vmatmul.f32.gmra.mxu0 %v3163
    %v4011 = vpop.f32.mrf.mxu0
    %v4012 = vadd.f32 %v3965, %v4011
    %4013 = vmatmul.f32.gmra.mxu0 %v3170
    %v4014 = vpop.f32.mrf.mxu0
    %v4015 = vadd.f32 %v3968, %v4014
    %4016 = vmatmul.f32.gmra.mxu0 %v3177
    %v4017 = vpop.f32.mrf.mxu0
    %v4018 = vadd.f32 %v3971, %v4017
    %4019 = vmatmul.f32.gmra.mxu0 %v3184
    %v4020 = vpop.f32.mrf.mxu0
    %v4021 = vadd.f32 %v3974, %v4020
    %4022 = vmatmul.f32.gmra.mxu0 %v3191
    %v4023 = vpop.f32.mrf.mxu0
    %v4024 = vadd.f32 %v3977, %v4023
    %4025 = vmatmul.f32.gmra.mxu0 %v3198
    %v4026 = vpop.f32.mrf.mxu0
    %v4027 = vadd.f32 %v3980, %v4026
    %4028 = vmatmul.f32.gmra.mxu0 %v3205
    %v4029 = vpop.f32.mrf.mxu0
    %v4030 = vadd.f32 %v3983, %v4029
    %4031 = vmatmul.f32.gmra.mxu0 %v3212
    %v4032 = vpop.f32.mrf.mxu0
    %v4033 = vadd.f32 %v3986, %v4032
    %4034 = vdwg.mxu0
    %4035 = vmatpush.msra.mxu0 %v3360
    %4036 = vmatpush.msra.mxu0 %v3357
    %4037 = vmatpush.msra.mxu0 %v3354
    %4038 = vmatpush.msra.mxu0 %v3351
    %4039 = vmatpush.msra.mxu0 %v3348
    %4040 = vmatpush.msra.mxu0 %v3345
    %4041 = vmatpush.msra.mxu0 %v3342
    %4042 = vmatpush.msra.mxu0 %v3339
    %4043 = vmatpush.msra.mxu0 %v3336
    %4044 = vmatpush.msra.mxu0 %v3333
    %4045 = vmatpush.msra.mxu0 %v3330
    %4046 = vmatpush.msra.mxu0 %v3327
    %4047 = vmatpush.msra.mxu0 %v3324
    %4048 = vmatpush.msra.mxu0 %v3321
    %4049 = vmatpush.msra.mxu0 %v3318
    %4050 = vmatpush.msra.mxu0 %v3315
    %4051 = vmatmul.f32.gmra.mxu0 %v3150
    %v4052 = vpop.f32.mrf.mxu0
    %v4053 = vadd.f32 %v4006, %v4052
    %4054 = vmatmul.f32.gmra.mxu0 %v3157
    %v4055 = vpop.f32.mrf.mxu0
    %v4056 = vadd.f32 %v4009, %v4055
    %4057 = vmatmul.f32.gmra.mxu0 %v3164
    %v4058 = vpop.f32.mrf.mxu0
    %v4059 = vadd.f32 %v4012, %v4058
    %4060 = vmatmul.f32.gmra.mxu0 %v3171
    %v4061 = vpop.f32.mrf.mxu0
    %v4062 = vadd.f32 %v4015, %v4061
    %4063 = vmatmul.f32.gmra.mxu0 %v3178
    %v4064 = vpop.f32.mrf.mxu0
    %v4065 = vadd.f32 %v4018, %v4064
    %4066 = vmatmul.f32.gmra.mxu0 %v3185
    %v4067 = vpop.f32.mrf.mxu0
    %v4068 = vadd.f32 %v4021, %v4067
    %4069 = vmatmul.f32.gmra.mxu0 %v3192
    %v4070 = vpop.f32.mrf.mxu0
    %v4071 = vadd.f32 %v4024, %v4070
    %4072 = vmatmul.f32.gmra.mxu0 %v3199
    %v4073 = vpop.f32.mrf.mxu0
    %v4074 = vadd.f32 %v4027, %v4073
    %4075 = vmatmul.f32.gmra.mxu0 %v3206
    %v4076 = vpop.f32.mrf.mxu0
    %v4077 = vadd.f32 %v4030, %v4076
    %4078 = vmatmul.f32.gmra.mxu0 %v3213
    %v4079 = vpop.f32.mrf.mxu0
    %v4080 = vadd.f32 %v4033, %v4079
    %4081 = vdwg.mxu0
    %4082 = vmatpush.msra.mxu0 %v3408
    %4083 = vmatpush.msra.mxu0 %v3405
    %4084 = vmatpush.msra.mxu0 %v3402
    %4085 = vmatpush.msra.mxu0 %v3399
    %4086 = vmatpush.msra.mxu0 %v3396
    %4087 = vmatpush.msra.mxu0 %v3393
    %4088 = vmatpush.msra.mxu0 %v3390
    %4089 = vmatpush.msra.mxu0 %v3387
    %4090 = vmatpush.msra.mxu0 %v3384
    %4091 = vmatpush.msra.mxu0 %v3381
    %4092 = vmatpush.msra.mxu0 %v3378
    %4093 = vmatpush.msra.mxu0 %v3375
    %4094 = vmatpush.msra.mxu0 %v3372
    %4095 = vmatpush.msra.mxu0 %v3369
    %4096 = vmatpush.msra.mxu0 %v3366
    %4097 = vmatpush.msra.mxu0 %v3363
    %4098 = vmatmul.f32.gmra.mxu0 %v3151
    %v4099 = vpop.f32.mrf.mxu0
    %v4100 = vadd.f32 %v4053, %v4099
    %4101 = vmatmul.f32.gmra.mxu0 %v3158
    %v4102 = vpop.f32.mrf.mxu0
    %v4103 = vadd.f32 %v4056, %v4102
    %4104 = vmatmul.f32.gmra.mxu0 %v3165
    %v4105 = vpop.f32.mrf.mxu0
    %v4106 = vadd.f32 %v4059, %v4105
    %4107 = vmatmul.f32.gmra.mxu0 %v3172
    %v4108 = vpop.f32.mrf.mxu0
    %v4109 = vadd.f32 %v4062, %v4108
    %4110 = vmatmul.f32.gmra.mxu0 %v3179
    %v4111 = vpop.f32.mrf.mxu0
    %v4112 = vadd.f32 %v4065, %v4111
    %4113 = vmatmul.f32.gmra.mxu0 %v3186
    %v4114 = vpop.f32.mrf.mxu0
    %v4115 = vadd.f32 %v4068, %v4114
    %4116 = vmatmul.f32.gmra.mxu0 %v3193
    %v4117 = vpop.f32.mrf.mxu0
    %v4118 = vadd.f32 %v4071, %v4117
    %4119 = vmatmul.f32.gmra.mxu0 %v3200
    %v4120 = vpop.f32.mrf.mxu0
    %v4121 = vadd.f32 %v4074, %v4120
    %4122 = vmatmul.f32.gmra.mxu0 %v3207
    %v4123 = vpop.f32.mrf.mxu0
    %v4124 = vadd.f32 %v4077, %v4123
    %4125 = vmatmul.f32.gmra.mxu0 %v3214
    %v4126 = vpop.f32.mrf.mxu0
    %v4127 = vadd.f32 %v4080, %v4126
    %4128 = vdwg.mxu0
    %4129 = vmatpush.msra.mxu0 %v3456
    %4130 = vmatpush.msra.mxu0 %v3453
    %4131 = vmatpush.msra.mxu0 %v3450
    %4132 = vmatpush.msra.mxu0 %v3447
    %4133 = vmatpush.msra.mxu0 %v3444
    %4134 = vmatpush.msra.mxu0 %v3441
    %4135 = vmatpush.msra.mxu0 %v3438
    %4136 = vmatpush.msra.mxu0 %v3435
    %4137 = vmatpush.msra.mxu0 %v3432
    %4138 = vmatpush.msra.mxu0 %v3429
    %4139 = vmatpush.msra.mxu0 %v3426
    %4140 = vmatpush.msra.mxu0 %v3423
    %4141 = vmatpush.msra.mxu0 %v3420
    %4142 = vmatpush.msra.mxu0 %v3417
    %4143 = vmatpush.msra.mxu0 %v3414
    %4144 = vmatpush.msra.mxu0 %v3411
    %4145 = vmatmul.f32.gmra.mxu0 %v3152
    %v4146 = vpop.f32.mrf.mxu0
    %v4147 = vadd.f32 %v4100, %v4146
    %4148 = vmatmul.f32.gmra.mxu0 %v3159
    %v4149 = vpop.f32.mrf.mxu0
    %v4150 = vadd.f32 %v4103, %v4149
    %4151 = vmatmul.f32.gmra.mxu0 %v3166
    %v4152 = vpop.f32.mrf.mxu0
    %v4153 = vadd.f32 %v4106, %v4152
    %4154 = vmatmul.f32.gmra.mxu0 %v3173
    %v4155 = vpop.f32.mrf.mxu0
    %v4156 = vadd.f32 %v4109, %v4155
    %4157 = vmatmul.f32.gmra.mxu0 %v3180
    %v4158 = vpop.f32.mrf.mxu0
    %v4159 = vadd.f32 %v4112, %v4158
    %4160 = vmatmul.f32.gmra.mxu0 %v3187
    %v4161 = vpop.f32.mrf.mxu0
    %v4162 = vadd.f32 %v4115, %v4161
    %4163 = vmatmul.f32.gmra.mxu0 %v3194
    %v4164 = vpop.f32.mrf.mxu0
    %v4165 = vadd.f32 %v4118, %v4164
    %4166 = vmatmul.f32.gmra.mxu0 %v3201
    %v4167 = vpop.f32.mrf.mxu0
    %v4168 = vadd.f32 %v4121, %v4167
    %4169 = vmatmul.f32.gmra.mxu0 %v3208
    %v4170 = vpop.f32.mrf.mxu0
    %v4171 = vadd.f32 %v4124, %v4170
    %4172 = vmatmul.f32.gmra.mxu0 %v3215
    %v4173 = vpop.f32.mrf.mxu0
    %v4174 = vadd.f32 %v4127, %v4173
    %4175 = vdwg.mxu0
    %4176 = vmatpush.msra.mxu0 %v3504
    %4177 = vmatpush.msra.mxu0 %v3501
    %4178 = vmatpush.msra.mxu0 %v3498
    %4179 = vmatpush.msra.mxu0 %v3495
    %4180 = vmatpush.msra.mxu0 %v3492
    %4181 = vmatpush.msra.mxu0 %v3489
    %4182 = vmatpush.msra.mxu0 %v3486
    %4183 = vmatpush.msra.mxu0 %v3483
    %4184 = vmatpush.msra.mxu0 %v3480
    %4185 = vmatpush.msra.mxu0 %v3477
    %4186 = vmatpush.msra.mxu0 %v3474
    %4187 = vmatpush.msra.mxu0 %v3471
    %4188 = vmatpush.msra.mxu0 %v3468
    %4189 = vmatpush.msra.mxu0 %v3465
    %4190 = vmatpush.msra.mxu0 %v3462
    %4191 = vmatpush.msra.mxu0 %v3459
    %4192 = vmatmul.f32.gmra.mxu0 %v3153
    %v4193 = vpop.f32.mrf.mxu0
    %v4194 = vadd.f32 %v4147, %v4193
    %4195 = vmatmul.f32.gmra.mxu0 %v3160
    %v4196 = vpop.f32.mrf.mxu0
    %v4197 = vadd.f32 %v4150, %v4196
    %4198 = vmatmul.f32.gmra.mxu0 %v3167
    %v4199 = vpop.f32.mrf.mxu0
    %v4200 = vadd.f32 %v4153, %v4199
    %4201 = vmatmul.f32.gmra.mxu0 %v3174
    %v4202 = vpop.f32.mrf.mxu0
    %v4203 = vadd.f32 %v4156, %v4202
    %4204 = vmatmul.f32.gmra.mxu0 %v3181
    %v4205 = vpop.f32.mrf.mxu0
    %v4206 = vadd.f32 %v4159, %v4205
    %4207 = vmatmul.f32.gmra.mxu0 %v3188
    %v4208 = vpop.f32.mrf.mxu0
    %v4209 = vadd.f32 %v4162, %v4208
    %4210 = vmatmul.f32.gmra.mxu0 %v3195
    %v4211 = vpop.f32.mrf.mxu0
    %v4212 = vadd.f32 %v4165, %v4211
    %4213 = vmatmul.f32.gmra.mxu0 %v3202
    %v4214 = vpop.f32.mrf.mxu0
    %v4215 = vadd.f32 %v4168, %v4214
    %4216 = vmatmul.f32.gmra.mxu0 %v3209
    %v4217 = vpop.f32.mrf.mxu0
    %v4218 = vadd.f32 %v4171, %v4217
    %4219 = vmatmul.f32.gmra.mxu0 %v3216
    %v4220 = vpop.f32.mrf.mxu0
    %v4221 = vadd.f32 %v4174, %v4220
    %4222 = vdwg.mxu0
    %4223 = vmatpush.msra.mxu0 0.0
    %4224 = vmatpush.msra.mxu0 0.0
    %4225 = vmatpush.msra.mxu0 0.0
    %4226 = vmatpush.msra.mxu0 0.0
    %4227 = vmatpush.msra.mxu0 %v3607
    %4228 = vmatpush.msra.mxu0 %v3537
    %4229 = vmatpush.msra.mxu0 %v3534
    %4230 = vmatpush.msra.mxu0 %v3531
    %4231 = vmatpush.msra.mxu0 %v3528
    %4232 = vmatpush.msra.mxu0 %v3525
    %4233 = vmatpush.msra.mxu0 %v3522
    %4234 = vmatpush.msra.mxu0 %v3519
    %4235 = vmatpush.msra.mxu0 %v3516
    %4236 = vmatpush.msra.mxu0 %v3513
    %4237 = vmatpush.msra.mxu0 %v3510
    %4238 = vmatpush.msra.mxu0 %v3507
    %4239 = vmatmul.f32.gmra.mxu0 %v3573
    %v4240 = vpop.f32.mrf.mxu0
    %v4241 = vadd.f32 %v4194, %v4240
    %4242 = vmatmul.f32.gmra.mxu0 %v3576
    %v4243 = vpop.f32.mrf.mxu0
    %v4244 = vadd.f32 %v4197, %v4243
    %4245 = vmatmul.f32.gmra.mxu0 %v3579
    %v4246 = vpop.f32.mrf.mxu0
    %v4247 = vadd.f32 %v4200, %v4246
    %4248 = vmatmul.f32.gmra.mxu0 %v3582
    %v4249 = vpop.f32.mrf.mxu0
    %v4250 = vadd.f32 %v4203, %v4249
    %4251 = vmatmul.f32.gmra.mxu0 %v3585
    %v4252 = vpop.f32.mrf.mxu0
    %v4253 = vadd.f32 %v4206, %v4252
    %4254 = vmatmul.f32.gmra.mxu0 %v3588
    %v4255 = vpop.f32.mrf.mxu0
    %v4256 = vadd.f32 %v4209, %v4255
    %4257 = vmatmul.f32.gmra.mxu0 %v3591
    %v4258 = vpop.f32.mrf.mxu0
    %v4259 = vadd.f32 %v4212, %v4258
    %4260 = vmatmul.f32.gmra.mxu0 %v3594
    %v4261 = vpop.f32.mrf.mxu0
    %v4262 = vadd.f32 %v4215, %v4261
    %4263 = vmatmul.f32.gmra.mxu0 %v3597
    %v4264 = vpop.f32.mrf.mxu0
    %v4265 = vadd.f32 %v4218, %v4264
    %4266 = vmatmul.f32.gmra.mxu0 %v3600
    %v4267 = vpop.f32.mrf.mxu0
    %v4268 = vadd.f32 %v4221, %v4267
    %4269 = vdwg.mxu0
    %4270 = vmatpush.msra.mxu0 %v3265
    %4271 = vmatpush.msra.mxu0 %v3262
    %4272 = vmatpush.msra.mxu0 %v3259
    %4273 = vmatpush.msra.mxu0 %v3256
    %4274 = vmatpush.msra.mxu0 %v3253
    %4275 = vmatpush.msra.mxu0 %v3250
    %4276 = vmatpush.msra.mxu0 %v3247
    %4277 = vmatpush.msra.mxu0 %v3244
    %4278 = vmatpush.msra.mxu0 %v3241
    %4279 = vmatpush.msra.mxu0 %v3238
    %4280 = vmatpush.msra.mxu0 %v3235
    %4281 = vmatpush.msra.mxu0 %v3232
    %4282 = vmatpush.msra.mxu0 %v3229
    %4283 = vmatpush.msra.mxu0 %v3226
    %4284 = vmatpush.msra.mxu0 %v3223
    %4285 = vmatpush.msra.mxu0 %v3220
    %4286 = vmatmul.f32.gmra.mxu0 %v3148
    %v4287 = vpop.f32.mrf.mxu0
    %v4288 = vadd.f32 %v3544, %v4287
    %4289 = vmatmul.f32.gmra.mxu0 %v3155
    %v4290 = vpop.f32.mrf.mxu0
    %v4291 = vadd.f32 %v3547, %v4290
    %4292 = vmatmul.f32.gmra.mxu0 %v3162
    %v4293 = vpop.f32.mrf.mxu0
    %v4294 = vadd.f32 %v3550, %v4293
    %4295 = vmatmul.f32.gmra.mxu0 %v3169
    %v4296 = vpop.f32.mrf.mxu0
    %v4297 = vadd.f32 %v3553, %v4296
    %4298 = vmatmul.f32.gmra.mxu0 %v3176
    %v4299 = vpop.f32.mrf.mxu0
    %v4300 = vadd.f32 %v3556, %v4299
    %4301 = vmatmul.f32.gmra.mxu0 %v3183
    %v4302 = vpop.f32.mrf.mxu0
    %v4303 = vadd.f32 %v3559, %v4302
    %4304 = vmatmul.f32.gmra.mxu0 %v3190
    %v4305 = vpop.f32.mrf.mxu0
    %v4306 = vadd.f32 %v3562, %v4305
    %4307 = vmatmul.f32.gmra.mxu0 %v3197
    %v4308 = vpop.f32.mrf.mxu0
    %v4309 = vadd.f32 %v3565, %v4308
    %4310 = vmatmul.f32.gmra.mxu0 %v3204
    %v4311 = vpop.f32.mrf.mxu0
    %v4312 = vadd.f32 %v3568, %v4311
    %4313 = vmatmul.f32.gmra.mxu0 %v3211
    %v4314 = vpop.f32.mrf.mxu0
    %v4315 = vadd.f32 %v3571, %v4314
    %4316 = vdwg.mxu0
    %4317 = vmatpush.msra.mxu0 %v3313
    %4318 = vmatpush.msra.mxu0 %v3310
    %4319 = vmatpush.msra.mxu0 %v3307
    %4320 = vmatpush.msra.mxu0 %v3304
    %4321 = vmatpush.msra.mxu0 %v3301
    %4322 = vmatpush.msra.mxu0 %v3298
    %4323 = vmatpush.msra.mxu0 %v3295
    %4324 = vmatpush.msra.mxu0 %v3292
    %4325 = vmatpush.msra.mxu0 %v3289
    %4326 = vmatpush.msra.mxu0 %v3286
    %4327 = vmatpush.msra.mxu0 %v3283
    %4328 = vmatpush.msra.mxu0 %v3280
    %4329 = vmatpush.msra.mxu0 %v3277
    %4330 = vmatpush.msra.mxu0 %v3274
    %4331 = vmatpush.msra.mxu0 %v3271
    %4332 = vmatpush.msra.mxu0 %v3268
    %4333 = vmatmul.f32.gmra.mxu0 %v3149
    %v4334 = vpop.f32.mrf.mxu0
    %v4335 = vadd.f32 %v4288, %v4334
    %4336 = vmatmul.f32.gmra.mxu0 %v3156
    %v4337 = vpop.f32.mrf.mxu0
    %v4338 = vadd.f32 %v4291, %v4337
    %4339 = vmatmul.f32.gmra.mxu0 %v3163
    %v4340 = vpop.f32.mrf.mxu0
    %v4341 = vadd.f32 %v4294, %v4340
    %4342 = vmatmul.f32.gmra.mxu0 %v3170
    %v4343 = vpop.f32.mrf.mxu0
    %v4344 = vadd.f32 %v4297, %v4343
    %4345 = vmatmul.f32.gmra.mxu0 %v3177
    %v4346 = vpop.f32.mrf.mxu0
    %v4347 = vadd.f32 %v4300, %v4346
    %4348 = vmatmul.f32.gmra.mxu0 %v3184
    %v4349 = vpop.f32.mrf.mxu0
    %v4350 = vadd.f32 %v4303, %v4349
    %4351 = vmatmul.f32.gmra.mxu0 %v3191
    %v4352 = vpop.f32.mrf.mxu0
    %v4353 = vadd.f32 %v4306, %v4352
    %4354 = vmatmul.f32.gmra.mxu0 %v3198
    %v4355 = vpop.f32.mrf.mxu0
    %v4356 = vadd.f32 %v4309, %v4355
    %4357 = vmatmul.f32.gmra.mxu0 %v3205
    %v4358 = vpop.f32.mrf.mxu0
    %v4359 = vadd.f32 %v4312, %v4358
    %4360 = vmatmul.f32.gmra.mxu0 %v3212
    %v4361 = vpop.f32.mrf.mxu0
    %v4362 = vadd.f32 %v4315, %v4361
    %4363 = vdwg.mxu0
    %4364 = vmatpush.msra.mxu0 %v3361
    %4365 = vmatpush.msra.mxu0 %v3358
    %4366 = vmatpush.msra.mxu0 %v3355
    %4367 = vmatpush.msra.mxu0 %v3352
    %4368 = vmatpush.msra.mxu0 %v3349
    %4369 = vmatpush.msra.mxu0 %v3346
    %4370 = vmatpush.msra.mxu0 %v3343
    %4371 = vmatpush.msra.mxu0 %v3340
    %4372 = vmatpush.msra.mxu0 %v3337
    %4373 = vmatpush.msra.mxu0 %v3334
    %4374 = vmatpush.msra.mxu0 %v3331
    %4375 = vmatpush.msra.mxu0 %v3328
    %4376 = vmatpush.msra.mxu0 %v3325
    %4377 = vmatpush.msra.mxu0 %v3322
    %4378 = vmatpush.msra.mxu0 %v3319
    %4379 = vmatpush.msra.mxu0 %v3316
    %4380 = vmatmul.f32.gmra.mxu0 %v3150
    %v4381 = vpop.f32.mrf.mxu0
    %v4382 = vadd.f32 %v4335, %v4381
    %4383 = vmatmul.f32.gmra.mxu0 %v3157
    %v4384 = vpop.f32.mrf.mxu0
    %v4385 = vadd.f32 %v4338, %v4384
    %4386 = vmatmul.f32.gmra.mxu0 %v3164
    %v4387 = vpop.f32.mrf.mxu0
    %v4388 = vadd.f32 %v4341, %v4387
    %4389 = vmatmul.f32.gmra.mxu0 %v3171
    %v4390 = vpop.f32.mrf.mxu0
    %v4391 = vadd.f32 %v4344, %v4390
    %4392 = vmatmul.f32.gmra.mxu0 %v3178
    %v4393 = vpop.f32.mrf.mxu0
    %v4394 = vadd.f32 %v4347, %v4393
    %4395 = vmatmul.f32.gmra.mxu0 %v3185
    %v4396 = vpop.f32.mrf.mxu0
    %v4397 = vadd.f32 %v4350, %v4396
    %4398 = vmatmul.f32.gmra.mxu0 %v3192
    %v4399 = vpop.f32.mrf.mxu0
    %v4400 = vadd.f32 %v4353, %v4399
    %4401 = vmatmul.f32.gmra.mxu0 %v3199
    %v4402 = vpop.f32.mrf.mxu0
    %v4403 = vadd.f32 %v4356, %v4402
    %4404 = vmatmul.f32.gmra.mxu0 %v3206
    %v4405 = vpop.f32.mrf.mxu0
    %v4406 = vadd.f32 %v4359, %v4405
    %4407 = vmatmul.f32.gmra.mxu0 %v3213
    %v4408 = vpop.f32.mrf.mxu0
    %v4409 = vadd.f32 %v4362, %v4408
    %4410 = vdwg.mxu0
    %4411 = vmatpush.msra.mxu0 %v3409
    %4412 = vmatpush.msra.mxu0 %v3406
    %4413 = vmatpush.msra.mxu0 %v3403
    %4414 = vmatpush.msra.mxu0 %v3400
    %4415 = vmatpush.msra.mxu0 %v3397
    %4416 = vmatpush.msra.mxu0 %v3394
    %4417 = vmatpush.msra.mxu0 %v3391
    %4418 = vmatpush.msra.mxu0 %v3388
    %4419 = vmatpush.msra.mxu0 %v3385
    %4420 = vmatpush.msra.mxu0 %v3382
    %4421 = vmatpush.msra.mxu0 %v3379
    %4422 = vmatpush.msra.mxu0 %v3376
    %4423 = vmatpush.msra.mxu0 %v3373
    %4424 = vmatpush.msra.mxu0 %v3370
    %4425 = vmatpush.msra.mxu0 %v3367
    %4426 = vmatpush.msra.mxu0 %v3364
    %4427 = vmatmul.f32.gmra.mxu0 %v3151
    %v4428 = vpop.f32.mrf.mxu0
    %v4429 = vadd.f32 %v4382, %v4428
    %4430 = vmatmul.f32.gmra.mxu0 %v3158
    %v4431 = vpop.f32.mrf.mxu0
    %v4432 = vadd.f32 %v4385, %v4431
    %4433 = vmatmul.f32.gmra.mxu0 %v3165
    %v4434 = vpop.f32.mrf.mxu0
    %v4435 = vadd.f32 %v4388, %v4434
    %4436 = vmatmul.f32.gmra.mxu0 %v3172
    %v4437 = vpop.f32.mrf.mxu0
    %v4438 = vadd.f32 %v4391, %v4437
    %4439 = vmatmul.f32.gmra.mxu0 %v3179
    %v4440 = vpop.f32.mrf.mxu0
    %v4441 = vadd.f32 %v4394, %v4440
    %4442 = vmatmul.f32.gmra.mxu0 %v3186
    %v4443 = vpop.f32.mrf.mxu0
    %v4444 = vadd.f32 %v4397, %v4443
    %4445 = vmatmul.f32.gmra.mxu0 %v3193
    %v4446 = vpop.f32.mrf.mxu0
    %v4447 = vadd.f32 %v4400, %v4446
    %4448 = vmatmul.f32.gmra.mxu0 %v3200
    %v4449 = vpop.f32.mrf.mxu0
    %v4450 = vadd.f32 %v4403, %v4449
    %4451 = vmatmul.f32.gmra.mxu0 %v3207
    %v4452 = vpop.f32.mrf.mxu0
    %v4453 = vadd.f32 %v4406, %v4452
    %4454 = vmatmul.f32.gmra.mxu0 %v3214
    %v4455 = vpop.f32.mrf.mxu0
    %v4456 = vadd.f32 %v4409, %v4455
    %4457 = vdwg.mxu0
    %4458 = vmatpush.msra.mxu0 %v3457
    %4459 = vmatpush.msra.mxu0 %v3454
    %4460 = vmatpush.msra.mxu0 %v3451
    %4461 = vmatpush.msra.mxu0 %v3448
    %4462 = vmatpush.msra.mxu0 %v3445
    %4463 = vmatpush.msra.mxu0 %v3442
    %4464 = vmatpush.msra.mxu0 %v3439
    %4465 = vmatpush.msra.mxu0 %v3436
    %4466 = vmatpush.msra.mxu0 %v3433
    %4467 = vmatpush.msra.mxu0 %v3430
    %4468 = vmatpush.msra.mxu0 %v3427
    %4469 = vmatpush.msra.mxu0 %v3424
    %4470 = vmatpush.msra.mxu0 %v3421
    %4471 = vmatpush.msra.mxu0 %v3418
    %4472 = vmatpush.msra.mxu0 %v3415
    %4473 = vmatpush.msra.mxu0 %v3412
    %4474 = vmatmul.f32.gmra.mxu0 %v3152
    %v4475 = vpop.f32.mrf.mxu0
    %v4476 = vadd.f32 %v4429, %v4475
    %4477 = vmatmul.f32.gmra.mxu0 %v3159
    %v4478 = vpop.f32.mrf.mxu0
    %v4479 = vadd.f32 %v4432, %v4478
    %4480 = vmatmul.f32.gmra.mxu0 %v3166
    %v4481 = vpop.f32.mrf.mxu0
    %v4482 = vadd.f32 %v4435, %v4481
    %4483 = vmatmul.f32.gmra.mxu0 %v3173
    %v4484 = vpop.f32.mrf.mxu0
    %v4485 = vadd.f32 %v4438, %v4484
    %4486 = vmatmul.f32.gmra.mxu0 %v3180
    %v4487 = vpop.f32.mrf.mxu0
    %v4488 = vadd.f32 %v4441, %v4487
    %4489 = vmatmul.f32.gmra.mxu0 %v3187
    %v4490 = vpop.f32.mrf.mxu0
    %v4491 = vadd.f32 %v4444, %v4490
    %4492 = vmatmul.f32.gmra.mxu0 %v3194
    %v4493 = vpop.f32.mrf.mxu0
    %v4494 = vadd.f32 %v4447, %v4493
    %4495 = vmatmul.f32.gmra.mxu0 %v3201
    %v4496 = vpop.f32.mrf.mxu0
    %v4497 = vadd.f32 %v4450, %v4496
    %4498 = vmatmul.f32.gmra.mxu0 %v3208
    %v4499 = vpop.f32.mrf.mxu0
    %v4500 = vadd.f32 %v4453, %v4499
    %4501 = vmatmul.f32.gmra.mxu0 %v3215
    %v4502 = vpop.f32.mrf.mxu0
    %v4503 = vadd.f32 %v4456, %v4502
    %4504 = vdwg.mxu0
    %4505 = vmatpush.msra.mxu0 %v3505
    %4506 = vmatpush.msra.mxu0 %v3502
    %4507 = vmatpush.msra.mxu0 %v3499
    %4508 = vmatpush.msra.mxu0 %v3496
    %4509 = vmatpush.msra.mxu0 %v3493
    %4510 = vmatpush.msra.mxu0 %v3490
    %4511 = vmatpush.msra.mxu0 %v3487
    %4512 = vmatpush.msra.mxu0 %v3484
    %4513 = vmatpush.msra.mxu0 %v3481
    %4514 = vmatpush.msra.mxu0 %v3478
    %4515 = vmatpush.msra.mxu0 %v3475
    %4516 = vmatpush.msra.mxu0 %v3472
    %4517 = vmatpush.msra.mxu0 %v3469
    %4518 = vmatpush.msra.mxu0 %v3466
    %4519 = vmatpush.msra.mxu0 %v3463
    %4520 = vmatpush.msra.mxu0 %v3460
    %4521 = vmatmul.f32.gmra.mxu0 %v3153
    %v4522 = vpop.f32.mrf.mxu0
    %v4523 = vadd.f32 %v4476, %v4522
    %4524 = vmatmul.f32.gmra.mxu0 %v3160
    %v4525 = vpop.f32.mrf.mxu0
    %v4526 = vadd.f32 %v4479, %v4525
    %4527 = vmatmul.f32.gmra.mxu0 %v3167
    %v4528 = vpop.f32.mrf.mxu0
    %v4529 = vadd.f32 %v4482, %v4528
    %4530 = vmatmul.f32.gmra.mxu0 %v3174
    %v4531 = vpop.f32.mrf.mxu0
    %v4532 = vadd.f32 %v4485, %v4531
    %4533 = vmatmul.f32.gmra.mxu0 %v3181
    %v4534 = vpop.f32.mrf.mxu0
    %v4535 = vadd.f32 %v4488, %v4534
    %4536 = vmatmul.f32.gmra.mxu0 %v3188
    %v4537 = vpop.f32.mrf.mxu0
    %v4538 = vadd.f32 %v4491, %v4537
    %4539 = vmatmul.f32.gmra.mxu0 %v3195
    %v4540 = vpop.f32.mrf.mxu0
    %v4541 = vadd.f32 %v4494, %v4540
    %4542 = vmatmul.f32.gmra.mxu0 %v3202
    %v4543 = vpop.f32.mrf.mxu0
    %v4544 = vadd.f32 %v4497, %v4543
    %4545 = vmatmul.f32.gmra.mxu0 %v3209
    %v4546 = vpop.f32.mrf.mxu0
    %v4547 = vadd.f32 %v4500, %v4546
    %4548 = vmatmul.f32.gmra.mxu0 %v3216
    %v4549 = vpop.f32.mrf.mxu0
    %v4550 = vadd.f32 %v4503, %v4549
    %4551 = vdwg.mxu0
    %4552 = vmatpush.msra.mxu0 0.0
    %4553 = vmatpush.msra.mxu0 0.0
    %4554 = vmatpush.msra.mxu0 0.0
    %4555 = vmatpush.msra.mxu0 0.0
    %4556 = vmatpush.msra.mxu0 %v3610
    %4557 = vmatpush.msra.mxu0 %v3538
    %4558 = vmatpush.msra.mxu0 %v3535
    %4559 = vmatpush.msra.mxu0 %v3532
    %4560 = vmatpush.msra.mxu0 %v3529
    %4561 = vmatpush.msra.mxu0 %v3526
    %4562 = vmatpush.msra.mxu0 %v3523
    %4563 = vmatpush.msra.mxu0 %v3520
    %4564 = vmatpush.msra.mxu0 %v3517
    %4565 = vmatpush.msra.mxu0 %v3514
    %4566 = vmatpush.msra.mxu0 %v3511
    %4567 = vmatpush.msra.mxu0 %v3508
    %4568 = vmatmul.f32.gmra.mxu0 %v3573
    %v4569 = vpop.f32.mrf.mxu0
    %v4570 = vadd.f32 %v4523, %v4569
    %4571 = vmatmul.f32.gmra.mxu0 %v3576
    %v4572 = vpop.f32.mrf.mxu0
    %v4573 = vadd.f32 %v4526, %v4572
    %4574 = vmatmul.f32.gmra.mxu0 %v3579
    %v4575 = vpop.f32.mrf.mxu0
    %v4576 = vadd.f32 %v4529, %v4575
    %4577 = vmatmul.f32.gmra.mxu0 %v3582
    %v4578 = vpop.f32.mrf.mxu0
    %v4579 = vadd.f32 %v4532, %v4578
    %4580 = vmatmul.f32.gmra.mxu0 %v3585
    %v4581 = vpop.f32.mrf.mxu0
    %v4582 = vadd.f32 %v4535, %v4581
    %4583 = vmatmul.f32.gmra.mxu0 %v3588
    %v4584 = vpop.f32.mrf.mxu0
    %v4585 = vadd.f32 %v4538, %v4584
    %4586 = vmatmul.f32.gmra.mxu0 %v3591
    %v4587 = vpop.f32.mrf.mxu0
    %v4588 = vadd.f32 %v4541, %v4587
    %4589 = vmatmul.f32.gmra.mxu0 %v3594
    %v4590 = vpop.f32.mrf.mxu0
    %v4591 = vadd.f32 %v4544, %v4590
    %4592 = vmatmul.f32.gmra.mxu0 %v3597
    %v4593 = vpop.f32.mrf.mxu0
    %v4594 = vadd.f32 %v4547, %v4593
    %4595 = vmatmul.f32.gmra.mxu0 %v3600
    %v4596 = vpop.f32.mrf.mxu0
    %v4597 = vadd.f32 %v4550, %v4596
    %4598 = vdwg.mxu0
    %v4599 = vmax.f32 %v3912, 0.0
    %v4600 = vmax.f32 %v4241, 0.0
    %v4601 = vmax.f32 %v4570, 0.0
    %v4602 = vmax.f32 %v3915, 0.0
    %v4603 = vmax.f32 %v4244, 0.0
    %v4604 = vmax.f32 %v4573, 0.0
    %v4605 = vmax.f32 %v3918, 0.0
    %v4606 = vmax.f32 %v4247, 0.0
    %v4607 = vmax.f32 %v4576, 0.0
    %v4608 = vmax.f32 %v3921, 0.0
    %v4609 = vmax.f32 %v4250, 0.0
    %v4610 = vmax.f32 %v4579, 0.0
    %v4611 = vmax.f32 %v3924, 0.0
    %v4612 = vmax.f32 %v4253, 0.0
    %v4613 = vmax.f32 %v4582, 0.0
    %v4614 = vmax.f32 %v3927, 0.0
    %v4615 = vmax.f32 %v4256, 0.0
    %v4616 = vmax.f32 %v4585, 0.0
    %v4617 = vmax.f32 %v3930, 0.0
    %v4618 = vmax.f32 %v4259, 0.0
    %v4619 = vmax.f32 %v4588, 0.0
    %v4620 = vmax.f32 %v3933, 0.0
    %v4621 = vmax.f32 %v4262, 0.0
    %v4622 = vmax.f32 %v4591, 0.0
    %v4623 = vmax.f32 %v3936, 0.0
    %v4624 = vmax.f32 %v4265, 0.0
    %v4625 = vmax.f32 %v4594, 0.0
    %v4626 = vmax.f32 %v3939, 0.0
    %v4627 = vmax.f32 %v4268, 0.0
    %v4628 = vmax.f32 %v4597, 0.0
    %v4629 = vld [vmem:[#allocation9] sm:$0xff]
    %v4630 = vld [vmem:[#allocation9 + $0x8] sm:$0xff]
    %v4631 = vld [vmem:[#allocation9 + $0x10] sm:$0xff]
    %v4632 = vld [vmem:[#allocation9 + $0x18] sm:$0xff]
    %v4633 = vld [vmem:[#allocation9 + $0x20] sm:$0xff]
    %v4634 = vld [vmem:[#allocation9 + $0x28] sm:$0xff]
    %v4635 = vld [vmem:[#allocation9 + $0x30] sm:$0xff]
    %v4636 = vld [vmem:[#allocation9 + $0x38] sm:$0xff]
    %v4637 = vld [vmem:[#allocation9 + $0x40] sm:$0xff]
    %v4638 = vld [vmem:[#allocation9 + $0x48] sm:$0xff]
    %v4639 = vld [vmem:[#allocation9 + $0x50] sm:$0xff]
    %v4640 = vld [vmem:[#allocation9 + $0x58] sm:$0xff]
    %v4641 = vld [vmem:[#allocation9 + $0x60] sm:$0xff]
    %v4642 = vld [vmem:[#allocation9 + $0x68] sm:$0xff]
    %v4643 = vld [vmem:[#allocation9 + $0x70] sm:$0xff]
    %v4644 = vld [vmem:[#allocation9 + $0x78] sm:$0xff]
    %v4645 = vld [vmem:[#allocation9 + $0x80] sm:$0xff]
    %v4646 = vld [vmem:[#allocation9 + $0x88] sm:$0xff]
    %v4647 = vld [vmem:[#allocation9 + $0x90] sm:$0xff]
    %v4648 = vld [vmem:[#allocation9 + $0x98] sm:$0xff]
    %4669 = vrot.lane.b32.xlu0 %v4599, 127
    %v4670 = vpop.permute.xlu0 %4669
    %4671 = vrot.lane.b32.xlu0 %v4600, 127
    %v4672 = vpop.permute.xlu0 %4671
    %4673 = vrot.lane.b32.xlu0 %v4602, 127
    %v4674 = vpop.permute.xlu0 %4673
    %4675 = vrot.lane.b32.xlu0 %v4603, 127
    %v4676 = vpop.permute.xlu0 %4675
    %4677 = vrot.lane.b32.xlu0 %v4605, 127
    %v4678 = vpop.permute.xlu0 %4677
    %4679 = vrot.lane.b32.xlu0 %v4606, 127
    %v4680 = vpop.permute.xlu0 %4679
    %4681 = vrot.lane.b32.xlu0 %v4608, 127
    %v4682 = vpop.permute.xlu0 %4681
    %4683 = vrot.lane.b32.xlu0 %v4609, 127
    %v4684 = vpop.permute.xlu0 %4683
    %4685 = vrot.lane.b32.xlu0 %v4611, 127
    %v4686 = vpop.permute.xlu0 %4685
    %4687 = vrot.lane.b32.xlu0 %v4612, 127
    %v4688 = vpop.permute.xlu0 %4687
    %4689 = vrot.lane.b32.xlu0 %v4614, 127
    %v4690 = vpop.permute.xlu0 %4689
    %4691 = vrot.lane.b32.xlu0 %v4615, 127
    %v4692 = vpop.permute.xlu0 %4691
    %4693 = vrot.lane.b32.xlu0 %v4617, 127
    %v4694 = vpop.permute.xlu0 %4693
    %4695 = vrot.lane.b32.xlu0 %v4618, 127
    %v4696 = vpop.permute.xlu0 %4695
    %4697 = vrot.lane.b32.xlu0 %v4620, 127
    %v4698 = vpop.permute.xlu0 %4697
    %4699 = vrot.lane.b32.xlu0 %v4621, 127
    %v4700 = vpop.permute.xlu0 %4699
    %4701 = vrot.lane.b32.xlu0 %v4623, 127
    %v4702 = vpop.permute.xlu0 %4701
    %4703 = vrot.lane.b32.xlu0 %v4624, 127
    %v4704 = vpop.permute.xlu0 %4703
    %4705 = vrot.lane.b32.xlu0 %v4626, 127
    %v4706 = vpop.permute.xlu0 %4705
    %4707 = vrot.lane.b32.xlu0 %v4627, 127
    %v4708 = vpop.permute.xlu0 %4707
    %v4709 = vsel %vm294, %v4670, %v4672
    %v4710 = vsel %vm294, %v4674, %v4676
    %v4711 = vsel %vm294, %v4678, %v4680
    %v4712 = vsel %vm294, %v4682, %v4684
    %v4713 = vsel %vm294, %v4686, %v4688
    %v4714 = vsel %vm294, %v4690, %v4692
    %v4715 = vsel %vm294, %v4694, %v4696
    %v4716 = vsel %vm294, %v4698, %v4700
    %v4717 = vsel %vm294, %v4702, %v4704
    %v4718 = vsel %vm294, %v4706, %v4708
    %vm4739 = vcmask 654336
    %v4741 = vsel %vm4739, %v4639, 0
    %v4744 = vsel %vm4739, %v4640, 0
    %v4747 = vsel %vm4739, %v4641, 0
    %v4750 = vsel %vm4739, %v4642, 0
    %v4753 = vsel %vm4739, %v4643, 0
    %v4756 = vsel %vm4739, %v4644, 0
    %v4759 = vsel %vm4739, %v4645, 0
    %v4762 = vsel %vm4739, %v4646, 0
    %v4765 = vsel %vm4739, %v4647, 0
    %v4768 = vsel %vm4739, %v4648, 0
    %4770 = vmatpush.msra.mxu0 0.0
    %4771 = vmatpush.msra.mxu0 0.0
    %4772 = vmatpush.msra.mxu0 0.0
    %4773 = vmatpush.msra.mxu0 0.0
    %4774 = vmatpush.msra.mxu0 0.0
    %4775 = vmatpush.msra.mxu0 0.0
    %4776 = vmatpush.msra.mxu0 %v4718
    %4777 = vmatpush.msra.mxu0 %v4717
    %4778 = vmatpush.msra.mxu0 %v4716
    %4779 = vmatpush.msra.mxu0 %v4715
    %4780 = vmatpush.msra.mxu0 %v4714
    %4781 = vmatpush.msra.mxu0 %v4713
    %4782 = vmatpush.msra.mxu0 %v4712
    %4783 = vmatpush.msra.mxu0 %v4711
    %4784 = vmatpush.msra.mxu0 %v4710
    %4785 = vmatpush.msra.mxu0 %v4709
    %4786 = vmatmul.f32.gmra.mxu0 %v4741
    %v4787 = vpop.f32.mrf.mxu0
    %v4788 = vadd.f32 0.0, %v4787
    %4789 = vmatmul.f32.gmra.mxu0 %v4744
    %v4790 = vpop.f32.mrf.mxu0
    %v4791 = vadd.f32 0.0, %v4790
    %4792 = vmatmul.f32.gmra.mxu0 %v4747
    %v4793 = vpop.f32.mrf.mxu0
    %v4794 = vadd.f32 0.0, %v4793
    %4795 = vmatmul.f32.gmra.mxu0 %v4750
    %v4796 = vpop.f32.mrf.mxu0
    %v4797 = vadd.f32 0.0, %v4796
    %4798 = vmatmul.f32.gmra.mxu0 %v4753
    %v4799 = vpop.f32.mrf.mxu0
    %v4800 = vadd.f32 0.0, %v4799
    %4801 = vmatmul.f32.gmra.mxu0 %v4756
    %v4802 = vpop.f32.mrf.mxu0
    %v4803 = vadd.f32 0.0, %v4802
    %4804 = vmatmul.f32.gmra.mxu0 %v4759
    %v4805 = vpop.f32.mrf.mxu0
    %v4806 = vadd.f32 0.0, %v4805
    %4807 = vmatmul.f32.gmra.mxu0 %v4762
    %v4808 = vpop.f32.mrf.mxu0
    %v4809 = vadd.f32 0.0, %v4808
    %4810 = vmatmul.f32.gmra.mxu0 %v4765
    %v4811 = vpop.f32.mrf.mxu0
    %v4812 = vadd.f32 0.0, %v4811
    %4813 = vmatmul.f32.gmra.mxu0 %v4768
    %v4814 = vpop.f32.mrf.mxu0
    %v4815 = vadd.f32 0.0, %v4814
    %4816 = vdwg.mxu0
    %4817 = vmatpush.msra.mxu0 0.0
    %4818 = vmatpush.msra.mxu0 0.0
    %4819 = vmatpush.msra.mxu0 0.0
    %4820 = vmatpush.msra.mxu0 0.0
    %4821 = vmatpush.msra.mxu0 0.0
    %4822 = vmatpush.msra.mxu0 0.0
    %4823 = vmatpush.msra.mxu0 %v4708
    %4824 = vmatpush.msra.mxu0 %v4704
    %4825 = vmatpush.msra.mxu0 %v4700
    %4826 = vmatpush.msra.mxu0 %v4696
    %4827 = vmatpush.msra.mxu0 %v4692
    %4828 = vmatpush.msra.mxu0 %v4688
    %4829 = vmatpush.msra.mxu0 %v4684
    %4830 = vmatpush.msra.mxu0 %v4680
    %4831 = vmatpush.msra.mxu0 %v4676
    %4832 = vmatpush.msra.mxu0 %v4672
    %4833 = vmatmul.f32.gmra.mxu0 %v4741
    %v4834 = vpop.f32.mrf.mxu0
    %v4835 = vadd.f32 0.0, %v4834
    %4836 = vmatmul.f32.gmra.mxu0 %v4744
    %v4837 = vpop.f32.mrf.mxu0
    %v4838 = vadd.f32 0.0, %v4837
    %4839 = vmatmul.f32.gmra.mxu0 %v4747
    %v4840 = vpop.f32.mrf.mxu0
    %v4841 = vadd.f32 0.0, %v4840
    %4842 = vmatmul.f32.gmra.mxu0 %v4750
    %v4843 = vpop.f32.mrf.mxu0
    %v4844 = vadd.f32 0.0, %v4843
    %4845 = vmatmul.f32.gmra.mxu0 %v4753
    %v4846 = vpop.f32.mrf.mxu0
    %v4847 = vadd.f32 0.0, %v4846
    %4848 = vmatmul.f32.gmra.mxu0 %v4756
    %v4849 = vpop.f32.mrf.mxu0
    %v4850 = vadd.f32 0.0, %v4849
    %4851 = vmatmul.f32.gmra.mxu0 %v4759
    %v4852 = vpop.f32.mrf.mxu0
    %v4853 = vadd.f32 0.0, %v4852
    %4854 = vmatmul.f32.gmra.mxu0 %v4762
    %v4855 = vpop.f32.mrf.mxu0
    %v4856 = vadd.f32 0.0, %v4855
    %4857 = vmatmul.f32.gmra.mxu0 %v4765
    %v4858 = vpop.f32.mrf.mxu0
    %v4859 = vadd.f32 0.0, %v4858
    %4860 = vmatmul.f32.gmra.mxu0 %v4768
    %v4861 = vpop.f32.mrf.mxu0
    %v4862 = vadd.f32 0.0, %v4861
    %4863 = vdwg.mxu0
    %v4865 = vsel %vm4739, %v4629, 0
    %v4868 = vsel %vm4739, %v4630, 0
    %v4871 = vsel %vm4739, %v4631, 0
    %v4874 = vsel %vm4739, %v4632, 0
    %v4877 = vsel %vm4739, %v4633, 0
    %v4880 = vsel %vm4739, %v4634, 0
    %v4883 = vsel %vm4739, %v4635, 0
    %v4886 = vsel %vm4739, %v4636, 0
    %v4889 = vsel %vm4739, %v4637, 0
    %v4892 = vsel %vm4739, %v4638, 0
    %4894 = vmatpush.msra.mxu0 0.0
    %4895 = vmatpush.msra.mxu0 0.0
    %4896 = vmatpush.msra.mxu0 0.0
    %4897 = vmatpush.msra.mxu0 0.0
    %4898 = vmatpush.msra.mxu0 0.0
    %4899 = vmatpush.msra.mxu0 0.0
    %4900 = vmatpush.msra.mxu0 %v4626
    %4901 = vmatpush.msra.mxu0 %v4623
    %4902 = vmatpush.msra.mxu0 %v4620
    %4903 = vmatpush.msra.mxu0 %v4617
    %4904 = vmatpush.msra.mxu0 %v4614
    %4905 = vmatpush.msra.mxu0 %v4611
    %4906 = vmatpush.msra.mxu0 %v4608
    %4907 = vmatpush.msra.mxu0 %v4605
    %4908 = vmatpush.msra.mxu0 %v4602
    %4909 = vmatpush.msra.mxu0 %v4599
    %4910 = vmatmul.f32.gmra.mxu0 %v4865
    %v4911 = vpop.f32.mrf.mxu0
    %v4912 = vadd.f32 %v4788, %v4911
    %4913 = vmatmul.f32.gmra.mxu0 %v4868
    %v4914 = vpop.f32.mrf.mxu0
    %v4915 = vadd.f32 %v4791, %v4914
    %4916 = vmatmul.f32.gmra.mxu0 %v4871
    %v4917 = vpop.f32.mrf.mxu0
    %v4918 = vadd.f32 %v4794, %v4917
    %4919 = vmatmul.f32.gmra.mxu0 %v4874
    %v4920 = vpop.f32.mrf.mxu0
    %v4921 = vadd.f32 %v4797, %v4920
    %4922 = vmatmul.f32.gmra.mxu0 %v4877
    %v4923 = vpop.f32.mrf.mxu0
    %v4924 = vadd.f32 %v4800, %v4923
    %4925 = vmatmul.f32.gmra.mxu0 %v4880
    %v4926 = vpop.f32.mrf.mxu0
    %v4927 = vadd.f32 %v4803, %v4926
    %4928 = vmatmul.f32.gmra.mxu0 %v4883
    %v4929 = vpop.f32.mrf.mxu0
    %v4930 = vadd.f32 %v4806, %v4929
    %4931 = vmatmul.f32.gmra.mxu0 %v4886
    %v4932 = vpop.f32.mrf.mxu0
    %v4933 = vadd.f32 %v4809, %v4932
    %4934 = vmatmul.f32.gmra.mxu0 %v4889
    %v4935 = vpop.f32.mrf.mxu0
    %v4936 = vadd.f32 %v4812, %v4935
    %4937 = vmatmul.f32.gmra.mxu0 %v4892
    %v4938 = vpop.f32.mrf.mxu0
    %v4939 = vadd.f32 %v4815, %v4938
    %4940 = vdwg.mxu0
    %4941 = vmatpush.msra.mxu0 0.0
    %4942 = vmatpush.msra.mxu0 0.0
    %4943 = vmatpush.msra.mxu0 0.0
    %4944 = vmatpush.msra.mxu0 0.0
    %4945 = vmatpush.msra.mxu0 0.0
    %4946 = vmatpush.msra.mxu0 0.0
    %4947 = vmatpush.msra.mxu0 %v4627
    %4948 = vmatpush.msra.mxu0 %v4624
    %4949 = vmatpush.msra.mxu0 %v4621
    %4950 = vmatpush.msra.mxu0 %v4618
    %4951 = vmatpush.msra.mxu0 %v4615
    %4952 = vmatpush.msra.mxu0 %v4612
    %4953 = vmatpush.msra.mxu0 %v4609
    %4954 = vmatpush.msra.mxu0 %v4606
    %4955 = vmatpush.msra.mxu0 %v4603
    %4956 = vmatpush.msra.mxu0 %v4600
    %4957 = vmatmul.f32.gmra.mxu0 %v4865
    %v4958 = vpop.f32.mrf.mxu0
    %v4959 = vadd.f32 %v4835, %v4958
    %4960 = vmatmul.f32.gmra.mxu0 %v4868
    %v4961 = vpop.f32.mrf.mxu0
    %v4962 = vadd.f32 %v4838, %v4961
    %4963 = vmatmul.f32.gmra.mxu0 %v4871
    %v4964 = vpop.f32.mrf.mxu0
    %v4965 = vadd.f32 %v4841, %v4964
    %4966 = vmatmul.f32.gmra.mxu0 %v4874
    %v4967 = vpop.f32.mrf.mxu0
    %v4968 = vadd.f32 %v4844, %v4967
    %4969 = vmatmul.f32.gmra.mxu0 %v4877
    %v4970 = vpop.f32.mrf.mxu0
    %v4971 = vadd.f32 %v4847, %v4970
    %4972 = vmatmul.f32.gmra.mxu0 %v4880
    %v4973 = vpop.f32.mrf.mxu0
    %v4974 = vadd.f32 %v4850, %v4973
    %4975 = vmatmul.f32.gmra.mxu0 %v4883
    %v4976 = vpop.f32.mrf.mxu0
    %v4977 = vadd.f32 %v4853, %v4976
    %4978 = vmatmul.f32.gmra.mxu0 %v4886
    %v4979 = vpop.f32.mrf.mxu0
    %v4980 = vadd.f32 %v4856, %v4979
    %4981 = vmatmul.f32.gmra.mxu0 %v4889
    %v4982 = vpop.f32.mrf.mxu0
    %v4983 = vadd.f32 %v4859, %v4982
    %4984 = vmatmul.f32.gmra.mxu0 %v4892
    %v4985 = vpop.f32.mrf.mxu0
    %v4986 = vadd.f32 %v4862, %v4985
    %4987 = vdwg.mxu0
    %v4988 = vld [vmem:[#allocation9 + $0xa0] sm:$0xff]
    %v4989 = vld [vmem:[#allocation9 + $0xa8] sm:$0xff]
    %v4990 = vld [vmem:[#allocation9 + $0xb0] sm:$0xff]
    %v4991 = vld [vmem:[#allocation9 + $0xb8] sm:$0xff]
    %v4992 = vld [vmem:[#allocation9 + $0xc0] sm:$0xff]
    %v4993 = vld [vmem:[#allocation9 + $0xc8] sm:$0xff]
    %v4994 = vld [vmem:[#allocation9 + $0xd0] sm:$0xff]
    %v4995 = vld [vmem:[#allocation9 + $0xd8] sm:$0xff]
    %v4996 = vld [vmem:[#allocation9 + $0xe0] sm:$0xff]
    %v4997 = vld [vmem:[#allocation9 + $0xe8] sm:$0xff]
    %4998 = vrot.lane.b32.xlu0 %v4599, 126
    %v4999 = vpop.permute.xlu0 %4998
    %5000 = vrot.lane.b32.xlu0 %v4600, 126
    %v5001 = vpop.permute.xlu0 %5000
    %5002 = vrot.lane.b32.xlu0 %v4602, 126
    %v5003 = vpop.permute.xlu0 %5002
    %5004 = vrot.lane.b32.xlu0 %v4603, 126
    %v5005 = vpop.permute.xlu0 %5004
    %5006 = vrot.lane.b32.xlu0 %v4605, 126
    %v5007 = vpop.permute.xlu0 %5006
    %5008 = vrot.lane.b32.xlu0 %v4606, 126
    %v5009 = vpop.permute.xlu0 %5008
    %5010 = vrot.lane.b32.xlu0 %v4608, 126
    %v5011 = vpop.permute.xlu0 %5010
    %5012 = vrot.lane.b32.xlu0 %v4609, 126
    %v5013 = vpop.permute.xlu0 %5012
    %5014 = vrot.lane.b32.xlu0 %v4611, 126
    %v5015 = vpop.permute.xlu0 %5014
    %5016 = vrot.lane.b32.xlu0 %v4612, 126
    %v5017 = vpop.permute.xlu0 %5016
    %5018 = vrot.lane.b32.xlu0 %v4614, 126
    %v5019 = vpop.permute.xlu0 %5018
    %5020 = vrot.lane.b32.xlu0 %v4615, 126
    %v5021 = vpop.permute.xlu0 %5020
    %5022 = vrot.lane.b32.xlu0 %v4617, 126
    %v5023 = vpop.permute.xlu0 %5022
    %5024 = vrot.lane.b32.xlu0 %v4618, 126
    %v5025 = vpop.permute.xlu0 %5024
    %5026 = vrot.lane.b32.xlu0 %v4620, 126
    %v5027 = vpop.permute.xlu0 %5026
    %5028 = vrot.lane.b32.xlu0 %v4621, 126
    %v5029 = vpop.permute.xlu0 %5028
    %5030 = vrot.lane.b32.xlu0 %v4623, 126
    %v5031 = vpop.permute.xlu0 %5030
    %5032 = vrot.lane.b32.xlu0 %v4624, 126
    %v5033 = vpop.permute.xlu0 %5032
    %5034 = vrot.lane.b32.xlu0 %v4626, 126
    %v5035 = vpop.permute.xlu0 %5034
    %5036 = vrot.lane.b32.xlu0 %v4627, 126
    %v5037 = vpop.permute.xlu0 %5036
    %v5038 = vsel %vm348, %v4999, %v5001
    %v5039 = vsel %vm348, %v5003, %v5005
    %v5040 = vsel %vm348, %v5007, %v5009
    %v5041 = vsel %vm348, %v5011, %v5013
    %v5042 = vsel %vm348, %v5015, %v5017
    %v5043 = vsel %vm348, %v5019, %v5021
    %v5044 = vsel %vm348, %v5023, %v5025
    %v5045 = vsel %vm348, %v5027, %v5029
    %v5046 = vsel %vm348, %v5031, %v5033
    %v5047 = vsel %vm348, %v5035, %v5037
    %v5069 = vsel %vm4739, %v4988, 0
    %v5072 = vsel %vm4739, %v4989, 0
    %v5075 = vsel %vm4739, %v4990, 0
    %v5078 = vsel %vm4739, %v4991, 0
    %v5081 = vsel %vm4739, %v4992, 0
    %v5084 = vsel %vm4739, %v4993, 0
    %v5087 = vsel %vm4739, %v4994, 0
    %v5090 = vsel %vm4739, %v4995, 0
    %v5093 = vsel %vm4739, %v4996, 0
    %v5096 = vsel %vm4739, %v4997, 0
    %5098 = vmatpush.msra.mxu0 0.0
    %5099 = vmatpush.msra.mxu0 0.0
    %5100 = vmatpush.msra.mxu0 0.0
    %5101 = vmatpush.msra.mxu0 0.0
    %5102 = vmatpush.msra.mxu0 0.0
    %5103 = vmatpush.msra.mxu0 0.0
    %5104 = vmatpush.msra.mxu0 %v5047
    %5105 = vmatpush.msra.mxu0 %v5046
    %5106 = vmatpush.msra.mxu0 %v5045
    %5107 = vmatpush.msra.mxu0 %v5044
    %5108 = vmatpush.msra.mxu0 %v5043
    %5109 = vmatpush.msra.mxu0 %v5042
    %5110 = vmatpush.msra.mxu0 %v5041
    %5111 = vmatpush.msra.mxu0 %v5040
    %5112 = vmatpush.msra.mxu0 %v5039
    %5113 = vmatpush.msra.mxu0 %v5038
    %5114 = vmatmul.f32.gmra.mxu0 %v5069
    %v5115 = vpop.f32.mrf.mxu0
    %v5116 = vadd.f32 0.0, %v5115
    %5117 = vmatmul.f32.gmra.mxu0 %v5072
    %v5118 = vpop.f32.mrf.mxu0
    %v5119 = vadd.f32 0.0, %v5118
    %5120 = vmatmul.f32.gmra.mxu0 %v5075
    %v5121 = vpop.f32.mrf.mxu0
    %v5122 = vadd.f32 0.0, %v5121
    %5123 = vmatmul.f32.gmra.mxu0 %v5078
    %v5124 = vpop.f32.mrf.mxu0
    %v5125 = vadd.f32 0.0, %v5124
    %5126 = vmatmul.f32.gmra.mxu0 %v5081
    %v5127 = vpop.f32.mrf.mxu0
    %v5128 = vadd.f32 0.0, %v5127
    %5129 = vmatmul.f32.gmra.mxu0 %v5084
    %v5130 = vpop.f32.mrf.mxu0
    %v5131 = vadd.f32 0.0, %v5130
    %5132 = vmatmul.f32.gmra.mxu0 %v5087
    %v5133 = vpop.f32.mrf.mxu0
    %v5134 = vadd.f32 0.0, %v5133
    %5135 = vmatmul.f32.gmra.mxu0 %v5090
    %v5136 = vpop.f32.mrf.mxu0
    %v5137 = vadd.f32 0.0, %v5136
    %5138 = vmatmul.f32.gmra.mxu0 %v5093
    %v5139 = vpop.f32.mrf.mxu0
    %v5140 = vadd.f32 0.0, %v5139
    %5141 = vmatmul.f32.gmra.mxu0 %v5096
    %v5142 = vpop.f32.mrf.mxu0
    %v5143 = vadd.f32 0.0, %v5142
    %5144 = vdwg.mxu0
    %5145 = vmatpush.msra.mxu0 0.0
    %5146 = vmatpush.msra.mxu0 0.0
    %5147 = vmatpush.msra.mxu0 0.0
    %5148 = vmatpush.msra.mxu0 0.0
    %5149 = vmatpush.msra.mxu0 0.0
    %5150 = vmatpush.msra.mxu0 0.0
    %5151 = vmatpush.msra.mxu0 %v5037
    %5152 = vmatpush.msra.mxu0 %v5033
    %5153 = vmatpush.msra.mxu0 %v5029
    %5154 = vmatpush.msra.mxu0 %v5025
    %5155 = vmatpush.msra.mxu0 %v5021
    %5156 = vmatpush.msra.mxu0 %v5017
    %5157 = vmatpush.msra.mxu0 %v5013
    %5158 = vmatpush.msra.mxu0 %v5009
    %5159 = vmatpush.msra.mxu0 %v5005
    %5160 = vmatpush.msra.mxu0 %v5001
    %5161 = vmatmul.f32.gmra.mxu0 %v5069
    %v5162 = vpop.f32.mrf.mxu0
    %v5163 = vadd.f32 0.0, %v5162
    %5164 = vmatmul.f32.gmra.mxu0 %v5072
    %v5165 = vpop.f32.mrf.mxu0
    %v5166 = vadd.f32 0.0, %v5165
    %5167 = vmatmul.f32.gmra.mxu0 %v5075
    %v5168 = vpop.f32.mrf.mxu0
    %v5169 = vadd.f32 0.0, %v5168
    %5170 = vmatmul.f32.gmra.mxu0 %v5078
    %v5171 = vpop.f32.mrf.mxu0
    %v5172 = vadd.f32 0.0, %v5171
    %5173 = vmatmul.f32.gmra.mxu0 %v5081
    %v5174 = vpop.f32.mrf.mxu0
    %v5175 = vadd.f32 0.0, %v5174
    %5176 = vmatmul.f32.gmra.mxu0 %v5084
    %v5177 = vpop.f32.mrf.mxu0
    %v5178 = vadd.f32 0.0, %v5177
    %5179 = vmatmul.f32.gmra.mxu0 %v5087
    %v5180 = vpop.f32.mrf.mxu0
    %v5181 = vadd.f32 0.0, %v5180
    %5182 = vmatmul.f32.gmra.mxu0 %v5090
    %v5183 = vpop.f32.mrf.mxu0
    %v5184 = vadd.f32 0.0, %v5183
    %5185 = vmatmul.f32.gmra.mxu0 %v5093
    %v5186 = vpop.f32.mrf.mxu0
    %v5187 = vadd.f32 0.0, %v5186
    %5188 = vmatmul.f32.gmra.mxu0 %v5096
    %v5189 = vpop.f32.mrf.mxu0
    %v5190 = vadd.f32 0.0, %v5189
    %5191 = vdwg.mxu0
    %v5192 = vadd.f32 %v4912, %v5116
    %v5193 = vadd.f32 %v4959, %v5163
    %v5194 = vadd.f32 %v4915, %v5119
    %v5195 = vadd.f32 %v4962, %v5166
    %v5196 = vadd.f32 %v4918, %v5122
    %v5197 = vadd.f32 %v4965, %v5169
    %v5198 = vadd.f32 %v4921, %v5125
    %v5199 = vadd.f32 %v4968, %v5172
    %v5200 = vadd.f32 %v4924, %v5128
    %v5201 = vadd.f32 %v4971, %v5175
    %v5202 = vadd.f32 %v4927, %v5131
    %v5203 = vadd.f32 %v4974, %v5178
    %v5204 = vadd.f32 %v4930, %v5134
    %v5205 = vadd.f32 %v4977, %v5181
    %v5206 = vadd.f32 %v4933, %v5137
    %v5207 = vadd.f32 %v4980, %v5184
    %v5208 = vadd.f32 %v4936, %v5140
    %v5209 = vadd.f32 %v4983, %v5187
    %v5210 = vadd.f32 %v4939, %v5143
    %v5211 = vadd.f32 %v4986, %v5190
    %v5212 = vld [vmem:[#allocation9 + $0xf0] sm:$0xff]
    %v5213 = vld [vmem:[#allocation9 + $0xf8] sm:$0xff]
    %v5214 = vld [vmem:[#allocation9 + $0x100] sm:$0xff]
    %v5215 = vld [vmem:[#allocation9 + $0x108] sm:$0xff]
    %v5216 = vld [vmem:[#allocation9 + $0x110] sm:$0xff]
    %v5217 = vld [vmem:[#allocation9 + $0x118] sm:$0xff]
    %v5218 = vld [vmem:[#allocation9 + $0x120] sm:$0xff]
    %v5219 = vld [vmem:[#allocation9 + $0x128] sm:$0xff]
    %v5220 = vld [vmem:[#allocation9 + $0x130] sm:$0xff]
    %v5221 = vld [vmem:[#allocation9 + $0x138] sm:$0xff]
    %5222 = vrot.lane.b32.xlu0 %v4599, 125
    %v5223 = vpop.permute.xlu0 %5222
    %5224 = vrot.lane.b32.xlu0 %v4600, 125
    %v5225 = vpop.permute.xlu0 %5224
    %5226 = vrot.lane.b32.xlu0 %v4602, 125
    %v5227 = vpop.permute.xlu0 %5226
    %5228 = vrot.lane.b32.xlu0 %v4603, 125
    %v5229 = vpop.permute.xlu0 %5228
    %5230 = vrot.lane.b32.xlu0 %v4605, 125
    %v5231 = vpop.permute.xlu0 %5230
    %5232 = vrot.lane.b32.xlu0 %v4606, 125
    %v5233 = vpop.permute.xlu0 %5232
    %5234 = vrot.lane.b32.xlu0 %v4608, 125
    %v5235 = vpop.permute.xlu0 %5234
    %5236 = vrot.lane.b32.xlu0 %v4609, 125
    %v5237 = vpop.permute.xlu0 %5236
    %5238 = vrot.lane.b32.xlu0 %v4611, 125
    %v5239 = vpop.permute.xlu0 %5238
    %5240 = vrot.lane.b32.xlu0 %v4612, 125
    %v5241 = vpop.permute.xlu0 %5240
    %5242 = vrot.lane.b32.xlu0 %v4614, 125
    %v5243 = vpop.permute.xlu0 %5242
    %5244 = vrot.lane.b32.xlu0 %v4615, 125
    %v5245 = vpop.permute.xlu0 %5244
    %5246 = vrot.lane.b32.xlu0 %v4617, 125
    %v5247 = vpop.permute.xlu0 %5246
    %5248 = vrot.lane.b32.xlu0 %v4618, 125
    %v5249 = vpop.permute.xlu0 %5248
    %5250 = vrot.lane.b32.xlu0 %v4620, 125
    %v5251 = vpop.permute.xlu0 %5250
    %5252 = vrot.lane.b32.xlu0 %v4621, 125
    %v5253 = vpop.permute.xlu0 %5252
    %5254 = vrot.lane.b32.xlu0 %v4623, 125
    %v5255 = vpop.permute.xlu0 %5254
    %5256 = vrot.lane.b32.xlu0 %v4624, 125
    %v5257 = vpop.permute.xlu0 %5256
    %5258 = vrot.lane.b32.xlu0 %v4626, 125
    %v5259 = vpop.permute.xlu0 %5258
    %5260 = vrot.lane.b32.xlu0 %v4627, 125
    %v5261 = vpop.permute.xlu0 %5260
    %v5262 = vsel %vm402, %v5223, %v5225
    %v5263 = vsel %vm402, %v5227, %v5229
    %v5264 = vsel %vm402, %v5231, %v5233
    %v5265 = vsel %vm402, %v5235, %v5237
    %v5266 = vsel %vm402, %v5239, %v5241
    %v5267 = vsel %vm402, %v5243, %v5245
    %v5268 = vsel %vm402, %v5247, %v5249
    %v5269 = vsel %vm402, %v5251, %v5253
    %v5270 = vsel %vm402, %v5255, %v5257
    %v5271 = vsel %vm402, %v5259, %v5261
    %v5293 = vsel %vm4739, %v5212, 0
    %v5296 = vsel %vm4739, %v5213, 0
    %v5299 = vsel %vm4739, %v5214, 0
    %v5302 = vsel %vm4739, %v5215, 0
    %v5305 = vsel %vm4739, %v5216, 0
    %v5308 = vsel %vm4739, %v5217, 0
    %v5311 = vsel %vm4739, %v5218, 0
    %v5314 = vsel %vm4739, %v5219, 0
    %v5317 = vsel %vm4739, %v5220, 0
    %v5320 = vsel %vm4739, %v5221, 0
    %5322 = vmatpush.msra.mxu0 0.0
    %5323 = vmatpush.msra.mxu0 0.0
    %5324 = vmatpush.msra.mxu0 0.0
    %5325 = vmatpush.msra.mxu0 0.0
    %5326 = vmatpush.msra.mxu0 0.0
    %5327 = vmatpush.msra.mxu0 0.0
    %5328 = vmatpush.msra.mxu0 %v5271
    %5329 = vmatpush.msra.mxu0 %v5270
    %5330 = vmatpush.msra.mxu0 %v5269
    %5331 = vmatpush.msra.mxu0 %v5268
    %5332 = vmatpush.msra.mxu0 %v5267
    %5333 = vmatpush.msra.mxu0 %v5266
    %5334 = vmatpush.msra.mxu0 %v5265
    %5335 = vmatpush.msra.mxu0 %v5264
    %5336 = vmatpush.msra.mxu0 %v5263
    %5337 = vmatpush.msra.mxu0 %v5262
    %5338 = vmatmul.f32.gmra.mxu0 %v5293
    %v5339 = vpop.f32.mrf.mxu0
    %v5340 = vadd.f32 0.0, %v5339
    %5341 = vmatmul.f32.gmra.mxu0 %v5296
    %v5342 = vpop.f32.mrf.mxu0
    %v5343 = vadd.f32 0.0, %v5342
    %5344 = vmatmul.f32.gmra.mxu0 %v5299
    %v5345 = vpop.f32.mrf.mxu0
    %v5346 = vadd.f32 0.0, %v5345
    %5347 = vmatmul.f32.gmra.mxu0 %v5302
    %v5348 = vpop.f32.mrf.mxu0
    %v5349 = vadd.f32 0.0, %v5348
    %5350 = vmatmul.f32.gmra.mxu0 %v5305
    %v5351 = vpop.f32.mrf.mxu0
    %v5352 = vadd.f32 0.0, %v5351
    %5353 = vmatmul.f32.gmra.mxu0 %v5308
    %v5354 = vpop.f32.mrf.mxu0
    %v5355 = vadd.f32 0.0, %v5354
    %5356 = vmatmul.f32.gmra.mxu0 %v5311
    %v5357 = vpop.f32.mrf.mxu0
    %v5358 = vadd.f32 0.0, %v5357
    %5359 = vmatmul.f32.gmra.mxu0 %v5314
    %v5360 = vpop.f32.mrf.mxu0
    %v5361 = vadd.f32 0.0, %v5360
    %5362 = vmatmul.f32.gmra.mxu0 %v5317
    %v5363 = vpop.f32.mrf.mxu0
    %v5364 = vadd.f32 0.0, %v5363
    %5365 = vmatmul.f32.gmra.mxu0 %v5320
    %v5366 = vpop.f32.mrf.mxu0
    %v5367 = vadd.f32 0.0, %v5366
    %5368 = vdwg.mxu0
    %5369 = vmatpush.msra.mxu0 0.0
    %5370 = vmatpush.msra.mxu0 0.0
    %5371 = vmatpush.msra.mxu0 0.0
    %5372 = vmatpush.msra.mxu0 0.0
    %5373 = vmatpush.msra.mxu0 0.0
    %5374 = vmatpush.msra.mxu0 0.0
    %5375 = vmatpush.msra.mxu0 %v5261
    %5376 = vmatpush.msra.mxu0 %v5257
    %5377 = vmatpush.msra.mxu0 %v5253
    %5378 = vmatpush.msra.mxu0 %v5249
    %5379 = vmatpush.msra.mxu0 %v5245
    %5380 = vmatpush.msra.mxu0 %v5241
    %5381 = vmatpush.msra.mxu0 %v5237
    %5382 = vmatpush.msra.mxu0 %v5233
    %5383 = vmatpush.msra.mxu0 %v5229
    %5384 = vmatpush.msra.mxu0 %v5225
    %5385 = vmatmul.f32.gmra.mxu0 %v5293
    %v5386 = vpop.f32.mrf.mxu0
    %v5387 = vadd.f32 0.0, %v5386
    %5388 = vmatmul.f32.gmra.mxu0 %v5296
    %v5389 = vpop.f32.mrf.mxu0
    %v5390 = vadd.f32 0.0, %v5389
    %5391 = vmatmul.f32.gmra.mxu0 %v5299
    %v5392 = vpop.f32.mrf.mxu0
    %v5393 = vadd.f32 0.0, %v5392
    %5394 = vmatmul.f32.gmra.mxu0 %v5302
    %v5395 = vpop.f32.mrf.mxu0
    %v5396 = vadd.f32 0.0, %v5395
    %5397 = vmatmul.f32.gmra.mxu0 %v5305
    %v5398 = vpop.f32.mrf.mxu0
    %v5399 = vadd.f32 0.0, %v5398
    %5400 = vmatmul.f32.gmra.mxu0 %v5308
    %v5401 = vpop.f32.mrf.mxu0
    %v5402 = vadd.f32 0.0, %v5401
    %5403 = vmatmul.f32.gmra.mxu0 %v5311
    %v5404 = vpop.f32.mrf.mxu0
    %v5405 = vadd.f32 0.0, %v5404
    %5406 = vmatmul.f32.gmra.mxu0 %v5314
    %v5407 = vpop.f32.mrf.mxu0
    %v5408 = vadd.f32 0.0, %v5407
    %5409 = vmatmul.f32.gmra.mxu0 %v5317
    %v5410 = vpop.f32.mrf.mxu0
    %v5411 = vadd.f32 0.0, %v5410
    %5412 = vmatmul.f32.gmra.mxu0 %v5320
    %v5413 = vpop.f32.mrf.mxu0
    %v5414 = vadd.f32 0.0, %v5413
    %5415 = vdwg.mxu0
    %v5416 = vadd.f32 %v5192, %v5340
    %v5417 = vadd.f32 %v5193, %v5387
    %v5418 = vadd.f32 %v5194, %v5343
    %v5419 = vadd.f32 %v5195, %v5390
    %v5420 = vadd.f32 %v5196, %v5346
    %v5421 = vadd.f32 %v5197, %v5393
    %v5422 = vadd.f32 %v5198, %v5349
    %v5423 = vadd.f32 %v5199, %v5396
    %v5424 = vadd.f32 %v5200, %v5352
    %v5425 = vadd.f32 %v5201, %v5399
    %v5426 = vadd.f32 %v5202, %v5355
    %v5427 = vadd.f32 %v5203, %v5402
    %v5428 = vadd.f32 %v5204, %v5358
    %v5429 = vadd.f32 %v5205, %v5405
    %v5430 = vadd.f32 %v5206, %v5361
    %v5431 = vadd.f32 %v5207, %v5408
    %v5432 = vadd.f32 %v5208, %v5364
    %v5433 = vadd.f32 %v5209, %v5411
    %v5434 = vadd.f32 %v5210, %v5367
    %v5435 = vadd.f32 %v5211, %v5414
    %v5436 = vld [vmem:[#allocation9 + $0x140] sm:$0xff]
    %v5437 = vld [vmem:[#allocation9 + $0x148] sm:$0xff]
    %v5438 = vld [vmem:[#allocation9 + $0x150] sm:$0xff]
    %v5439 = vld [vmem:[#allocation9 + $0x158] sm:$0xff]
    %v5440 = vld [vmem:[#allocation9 + $0x160] sm:$0xff]
    %v5441 = vld [vmem:[#allocation9 + $0x168] sm:$0xff]
    %v5442 = vld [vmem:[#allocation9 + $0x170] sm:$0xff]
    %v5443 = vld [vmem:[#allocation9 + $0x178] sm:$0xff]
    %v5444 = vld [vmem:[#allocation9 + $0x180] sm:$0xff]
    %v5445 = vld [vmem:[#allocation9 + $0x188] sm:$0xff]
    %5446 = vrot.lane.b32.xlu0 %v4599, 124
    %v5447 = vpop.permute.xlu0 %5446
    %5448 = vrot.lane.b32.xlu0 %v4600, 124
    %v5449 = vpop.permute.xlu0 %5448
    %5450 = vrot.lane.b32.xlu0 %v4602, 124
    %v5451 = vpop.permute.xlu0 %5450
    %5452 = vrot.lane.b32.xlu0 %v4603, 124
    %v5453 = vpop.permute.xlu0 %5452
    %5454 = vrot.lane.b32.xlu0 %v4605, 124
    %v5455 = vpop.permute.xlu0 %5454
    %5456 = vrot.lane.b32.xlu0 %v4606, 124
    %v5457 = vpop.permute.xlu0 %5456
    %5458 = vrot.lane.b32.xlu0 %v4608, 124
    %v5459 = vpop.permute.xlu0 %5458
    %5460 = vrot.lane.b32.xlu0 %v4609, 124
    %v5461 = vpop.permute.xlu0 %5460
    %5462 = vrot.lane.b32.xlu0 %v4611, 124
    %v5463 = vpop.permute.xlu0 %5462
    %5464 = vrot.lane.b32.xlu0 %v4612, 124
    %v5465 = vpop.permute.xlu0 %5464
    %5466 = vrot.lane.b32.xlu0 %v4614, 124
    %v5467 = vpop.permute.xlu0 %5466
    %5468 = vrot.lane.b32.xlu0 %v4615, 124
    %v5469 = vpop.permute.xlu0 %5468
    %5470 = vrot.lane.b32.xlu0 %v4617, 124
    %v5471 = vpop.permute.xlu0 %5470
    %5472 = vrot.lane.b32.xlu0 %v4618, 124
    %v5473 = vpop.permute.xlu0 %5472
    %5474 = vrot.lane.b32.xlu0 %v4620, 124
    %v5475 = vpop.permute.xlu0 %5474
    %5476 = vrot.lane.b32.xlu0 %v4621, 124
    %v5477 = vpop.permute.xlu0 %5476
    %5478 = vrot.lane.b32.xlu0 %v4623, 124
    %v5479 = vpop.permute.xlu0 %5478
    %5480 = vrot.lane.b32.xlu0 %v4624, 124
    %v5481 = vpop.permute.xlu0 %5480
    %5482 = vrot.lane.b32.xlu0 %v4626, 124
    %v5483 = vpop.permute.xlu0 %5482
    %5484 = vrot.lane.b32.xlu0 %v4627, 124
    %v5485 = vpop.permute.xlu0 %5484
    %v5486 = vsel %vm456, %v5447, %v5449
    %v5487 = vsel %vm456, %v5451, %v5453
    %v5488 = vsel %vm456, %v5455, %v5457
    %v5489 = vsel %vm456, %v5459, %v5461
    %v5490 = vsel %vm456, %v5463, %v5465
    %v5491 = vsel %vm456, %v5467, %v5469
    %v5492 = vsel %vm456, %v5471, %v5473
    %v5493 = vsel %vm456, %v5475, %v5477
    %v5494 = vsel %vm456, %v5479, %v5481
    %v5495 = vsel %vm456, %v5483, %v5485
    %v5517 = vsel %vm4739, %v5436, 0
    %v5520 = vsel %vm4739, %v5437, 0
    %v5523 = vsel %vm4739, %v5438, 0
    %v5526 = vsel %vm4739, %v5439, 0
    %v5529 = vsel %vm4739, %v5440, 0
    %v5532 = vsel %vm4739, %v5441, 0
    %v5535 = vsel %vm4739, %v5442, 0
    %v5538 = vsel %vm4739, %v5443, 0
    %v5541 = vsel %vm4739, %v5444, 0
    %v5544 = vsel %vm4739, %v5445, 0
    %5546 = vmatpush.msra.mxu0 0.0
    %5547 = vmatpush.msra.mxu0 0.0
    %5548 = vmatpush.msra.mxu0 0.0
    %5549 = vmatpush.msra.mxu0 0.0
    %5550 = vmatpush.msra.mxu0 0.0
    %5551 = vmatpush.msra.mxu0 0.0
    %5552 = vmatpush.msra.mxu0 %v5495
    %5553 = vmatpush.msra.mxu0 %v5494
    %5554 = vmatpush.msra.mxu0 %v5493
    %5555 = vmatpush.msra.mxu0 %v5492
    %5556 = vmatpush.msra.mxu0 %v5491
    %5557 = vmatpush.msra.mxu0 %v5490
    %5558 = vmatpush.msra.mxu0 %v5489
    %5559 = vmatpush.msra.mxu0 %v5488
    %5560 = vmatpush.msra.mxu0 %v5487
    %5561 = vmatpush.msra.mxu0 %v5486
    %5562 = vmatmul.f32.gmra.mxu0 %v5517
    %v5563 = vpop.f32.mrf.mxu0
    %v5564 = vadd.f32 0.0, %v5563
    %5565 = vmatmul.f32.gmra.mxu0 %v5520
    %v5566 = vpop.f32.mrf.mxu0
    %v5567 = vadd.f32 0.0, %v5566
    %5568 = vmatmul.f32.gmra.mxu0 %v5523
    %v5569 = vpop.f32.mrf.mxu0
    %v5570 = vadd.f32 0.0, %v5569
    %5571 = vmatmul.f32.gmra.mxu0 %v5526
    %v5572 = vpop.f32.mrf.mxu0
    %v5573 = vadd.f32 0.0, %v5572
    %5574 = vmatmul.f32.gmra.mxu0 %v5529
    %v5575 = vpop.f32.mrf.mxu0
    %v5576 = vadd.f32 0.0, %v5575
    %5577 = vmatmul.f32.gmra.mxu0 %v5532
    %v5578 = vpop.f32.mrf.mxu0
    %v5579 = vadd.f32 0.0, %v5578
    %5580 = vmatmul.f32.gmra.mxu0 %v5535
    %v5581 = vpop.f32.mrf.mxu0
    %v5582 = vadd.f32 0.0, %v5581
    %5583 = vmatmul.f32.gmra.mxu0 %v5538
    %v5584 = vpop.f32.mrf.mxu0
    %v5585 = vadd.f32 0.0, %v5584
    %5586 = vmatmul.f32.gmra.mxu0 %v5541
    %v5587 = vpop.f32.mrf.mxu0
    %v5588 = vadd.f32 0.0, %v5587
    %5589 = vmatmul.f32.gmra.mxu0 %v5544
    %v5590 = vpop.f32.mrf.mxu0
    %v5591 = vadd.f32 0.0, %v5590
    %5592 = vdwg.mxu0
    %5593 = vmatpush.msra.mxu0 0.0
    %5594 = vmatpush.msra.mxu0 0.0
    %5595 = vmatpush.msra.mxu0 0.0
    %5596 = vmatpush.msra.mxu0 0.0
    %5597 = vmatpush.msra.mxu0 0.0
    %5598 = vmatpush.msra.mxu0 0.0
    %5599 = vmatpush.msra.mxu0 %v5485
    %5600 = vmatpush.msra.mxu0 %v5481
    %5601 = vmatpush.msra.mxu0 %v5477
    %5602 = vmatpush.msra.mxu0 %v5473
    %5603 = vmatpush.msra.mxu0 %v5469
    %5604 = vmatpush.msra.mxu0 %v5465
    %5605 = vmatpush.msra.mxu0 %v5461
    %5606 = vmatpush.msra.mxu0 %v5457
    %5607 = vmatpush.msra.mxu0 %v5453
    %5608 = vmatpush.msra.mxu0 %v5449
    %5609 = vmatmul.f32.gmra.mxu0 %v5517
    %v5610 = vpop.f32.mrf.mxu0
    %v5611 = vadd.f32 0.0, %v5610
    %5612 = vmatmul.f32.gmra.mxu0 %v5520
    %v5613 = vpop.f32.mrf.mxu0
    %v5614 = vadd.f32 0.0, %v5613
    %5615 = vmatmul.f32.gmra.mxu0 %v5523
    %v5616 = vpop.f32.mrf.mxu0
    %v5617 = vadd.f32 0.0, %v5616
    %5618 = vmatmul.f32.gmra.mxu0 %v5526
    %v5619 = vpop.f32.mrf.mxu0
    %v5620 = vadd.f32 0.0, %v5619
    %5621 = vmatmul.f32.gmra.mxu0 %v5529
    %v5622 = vpop.f32.mrf.mxu0
    %v5623 = vadd.f32 0.0, %v5622
    %5624 = vmatmul.f32.gmra.mxu0 %v5532
    %v5625 = vpop.f32.mrf.mxu0
    %v5626 = vadd.f32 0.0, %v5625
    %5627 = vmatmul.f32.gmra.mxu0 %v5535
    %v5628 = vpop.f32.mrf.mxu0
    %v5629 = vadd.f32 0.0, %v5628
    %5630 = vmatmul.f32.gmra.mxu0 %v5538
    %v5631 = vpop.f32.mrf.mxu0
    %v5632 = vadd.f32 0.0, %v5631
    %5633 = vmatmul.f32.gmra.mxu0 %v5541
    %v5634 = vpop.f32.mrf.mxu0
    %v5635 = vadd.f32 0.0, %v5634
    %5636 = vmatmul.f32.gmra.mxu0 %v5544
    %v5637 = vpop.f32.mrf.mxu0
    %v5638 = vadd.f32 0.0, %v5637
    %5639 = vdwg.mxu0
    %v5640 = vadd.f32 %v5416, %v5564
    %v5641 = vadd.f32 %v5417, %v5611
    %v5642 = vadd.f32 %v5418, %v5567
    %v5643 = vadd.f32 %v5419, %v5614
    %v5644 = vadd.f32 %v5420, %v5570
    %v5645 = vadd.f32 %v5421, %v5617
    %v5646 = vadd.f32 %v5422, %v5573
    %v5647 = vadd.f32 %v5423, %v5620
    %v5648 = vadd.f32 %v5424, %v5576
    %v5649 = vadd.f32 %v5425, %v5623
    %v5650 = vadd.f32 %v5426, %v5579
    %v5651 = vadd.f32 %v5427, %v5626
    %v5652 = vadd.f32 %v5428, %v5582
    %v5653 = vadd.f32 %v5429, %v5629
    %v5654 = vadd.f32 %v5430, %v5585
    %v5655 = vadd.f32 %v5431, %v5632
    %v5656 = vadd.f32 %v5432, %v5588
    %v5657 = vadd.f32 %v5433, %v5635
    %v5658 = vadd.f32 %v5434, %v5591
    %v5659 = vadd.f32 %v5435, %v5638
    %v5660 = vld [vmem:[#allocation9 + $0x190] sm:$0xff]
    %v5661 = vld [vmem:[#allocation9 + $0x198] sm:$0xff]
    %v5662 = vld [vmem:[#allocation9 + $0x1a0] sm:$0xff]
    %v5663 = vld [vmem:[#allocation9 + $0x1a8] sm:$0xff]
    %v5664 = vld [vmem:[#allocation9 + $0x1b0] sm:$0xff]
    %v5665 = vld [vmem:[#allocation9 + $0x1b8] sm:$0xff]
    %v5666 = vld [vmem:[#allocation9 + $0x1c0] sm:$0xff]
    %v5667 = vld [vmem:[#allocation9 + $0x1c8] sm:$0xff]
    %v5668 = vld [vmem:[#allocation9 + $0x1d0] sm:$0xff]
    %v5669 = vld [vmem:[#allocation9 + $0x1d8] sm:$0xff]
    %5680 = vrot.lane.b32.xlu0 %v4599, 110
    %v5681 = vpop.permute.xlu0 %5680
    %5682 = vrot.lane.b32.xlu0 %v4600, 110
    %v5683 = vpop.permute.xlu0 %5682
    %5684 = vrot.lane.b32.xlu0 %v4601, 110
    %v5685 = vpop.permute.xlu0 %5684
    %5686 = vrot.lane.b32.xlu0 %v4602, 110
    %v5687 = vpop.permute.xlu0 %5686
    %5688 = vrot.lane.b32.xlu0 %v4603, 110
    %v5689 = vpop.permute.xlu0 %5688
    %5690 = vrot.lane.b32.xlu0 %v4604, 110
    %v5691 = vpop.permute.xlu0 %5690
    %5692 = vrot.lane.b32.xlu0 %v4605, 110
    %v5693 = vpop.permute.xlu0 %5692
    %5694 = vrot.lane.b32.xlu0 %v4606, 110
    %v5695 = vpop.permute.xlu0 %5694
    %5696 = vrot.lane.b32.xlu0 %v4607, 110
    %v5697 = vpop.permute.xlu0 %5696
    %5698 = vrot.lane.b32.xlu0 %v4608, 110
    %v5699 = vpop.permute.xlu0 %5698
    %5700 = vrot.lane.b32.xlu0 %v4609, 110
    %v5701 = vpop.permute.xlu0 %5700
    %5702 = vrot.lane.b32.xlu0 %v4610, 110
    %v5703 = vpop.permute.xlu0 %5702
    %5704 = vrot.lane.b32.xlu0 %v4611, 110
    %v5705 = vpop.permute.xlu0 %5704
    %5706 = vrot.lane.b32.xlu0 %v4612, 110
    %v5707 = vpop.permute.xlu0 %5706
    %5708 = vrot.lane.b32.xlu0 %v4613, 110
    %v5709 = vpop.permute.xlu0 %5708
    %5710 = vrot.lane.b32.xlu0 %v4614, 110
    %v5711 = vpop.permute.xlu0 %5710
    %5712 = vrot.lane.b32.xlu0 %v4615, 110
    %v5713 = vpop.permute.xlu0 %5712
    %5714 = vrot.lane.b32.xlu0 %v4616, 110
    %v5715 = vpop.permute.xlu0 %5714
    %5716 = vrot.lane.b32.xlu0 %v4617, 110
    %v5717 = vpop.permute.xlu0 %5716
    %5718 = vrot.lane.b32.xlu0 %v4618, 110
    %v5719 = vpop.permute.xlu0 %5718
    %5720 = vrot.lane.b32.xlu0 %v4619, 110
    %v5721 = vpop.permute.xlu0 %5720
    %5722 = vrot.lane.b32.xlu0 %v4620, 110
    %v5723 = vpop.permute.xlu0 %5722
    %5724 = vrot.lane.b32.xlu0 %v4621, 110
    %v5725 = vpop.permute.xlu0 %5724
    %5726 = vrot.lane.b32.xlu0 %v4622, 110
    %v5727 = vpop.permute.xlu0 %5726
    %5728 = vrot.lane.b32.xlu0 %v4623, 110
    %v5729 = vpop.permute.xlu0 %5728
    %5730 = vrot.lane.b32.xlu0 %v4624, 110
    %v5731 = vpop.permute.xlu0 %5730
    %5732 = vrot.lane.b32.xlu0 %v4625, 110
    %v5733 = vpop.permute.xlu0 %5732
    %5734 = vrot.lane.b32.xlu0 %v4626, 110
    %v5735 = vpop.permute.xlu0 %5734
    %5736 = vrot.lane.b32.xlu0 %v4627, 110
    %v5737 = vpop.permute.xlu0 %5736
    %5738 = vrot.lane.b32.xlu0 %v4628, 110
    %v5739 = vpop.permute.xlu0 %5738
    %vm5740 = vcmask 900096
    %v5741 = vsel %vm5740, %v5681, %v5683
    %v5742 = vsel %vm5740, %v5683, %v5685
    %v5743 = vsel %vm5740, %v5687, %v5689
    %v5744 = vsel %vm5740, %v5689, %v5691
    %v5745 = vsel %vm5740, %v5693, %v5695
    %v5746 = vsel %vm5740, %v5695, %v5697
    %v5747 = vsel %vm5740, %v5699, %v5701
    %v5748 = vsel %vm5740, %v5701, %v5703
    %v5749 = vsel %vm5740, %v5705, %v5707
    %v5750 = vsel %vm5740, %v5707, %v5709
    %v5751 = vsel %vm5740, %v5711, %v5713
    %v5752 = vsel %vm5740, %v5713, %v5715
    %v5753 = vsel %vm5740, %v5717, %v5719
    %v5754 = vsel %vm5740, %v5719, %v5721
    %v5755 = vsel %vm5740, %v5723, %v5725
    %v5756 = vsel %vm5740, %v5725, %v5727
    %v5757 = vsel %vm5740, %v5729, %v5731
    %v5758 = vsel %vm5740, %v5731, %v5733
    %v5759 = vsel %vm5740, %v5735, %v5737
    %v5760 = vsel %vm5740, %v5737, %v5739
    %v5782 = vsel %vm4739, %v5660, 0
    %v5785 = vsel %vm4739, %v5661, 0
    %v5788 = vsel %vm4739, %v5662, 0
    %v5791 = vsel %vm4739, %v5663, 0
    %v5794 = vsel %vm4739, %v5664, 0
    %v5797 = vsel %vm4739, %v5665, 0
    %v5800 = vsel %vm4739, %v5666, 0
    %v5803 = vsel %vm4739, %v5667, 0
    %v5806 = vsel %vm4739, %v5668, 0
    %v5809 = vsel %vm4739, %v5669, 0
    %5811 = vmatpush.msra.mxu0 0.0
    %5812 = vmatpush.msra.mxu0 0.0
    %5813 = vmatpush.msra.mxu0 0.0
    %5814 = vmatpush.msra.mxu0 0.0
    %5815 = vmatpush.msra.mxu0 0.0
    %5816 = vmatpush.msra.mxu0 0.0
    %5817 = vmatpush.msra.mxu0 %v5759
    %5818 = vmatpush.msra.mxu0 %v5757
    %5819 = vmatpush.msra.mxu0 %v5755
    %5820 = vmatpush.msra.mxu0 %v5753
    %5821 = vmatpush.msra.mxu0 %v5751
    %5822 = vmatpush.msra.mxu0 %v5749
    %5823 = vmatpush.msra.mxu0 %v5747
    %5824 = vmatpush.msra.mxu0 %v5745
    %5825 = vmatpush.msra.mxu0 %v5743
    %5826 = vmatpush.msra.mxu0 %v5741
    %5827 = vmatmul.f32.gmra.mxu0 %v5782
    %v5828 = vpop.f32.mrf.mxu0
    %v5829 = vadd.f32 0.0, %v5828
    %5830 = vmatmul.f32.gmra.mxu0 %v5785
    %v5831 = vpop.f32.mrf.mxu0
    %v5832 = vadd.f32 0.0, %v5831
    %5833 = vmatmul.f32.gmra.mxu0 %v5788
    %v5834 = vpop.f32.mrf.mxu0
    %v5835 = vadd.f32 0.0, %v5834
    %5836 = vmatmul.f32.gmra.mxu0 %v5791
    %v5837 = vpop.f32.mrf.mxu0
    %v5838 = vadd.f32 0.0, %v5837
    %5839 = vmatmul.f32.gmra.mxu0 %v5794
    %v5840 = vpop.f32.mrf.mxu0
    %v5841 = vadd.f32 0.0, %v5840
    %5842 = vmatmul.f32.gmra.mxu0 %v5797
    %v5843 = vpop.f32.mrf.mxu0
    %v5844 = vadd.f32 0.0, %v5843
    %5845 = vmatmul.f32.gmra.mxu0 %v5800
    %v5846 = vpop.f32.mrf.mxu0
    %v5847 = vadd.f32 0.0, %v5846
    %5848 = vmatmul.f32.gmra.mxu0 %v5803
    %v5849 = vpop.f32.mrf.mxu0
    %v5850 = vadd.f32 0.0, %v5849
    %5851 = vmatmul.f32.gmra.mxu0 %v5806
    %v5852 = vpop.f32.mrf.mxu0
    %v5853 = vadd.f32 0.0, %v5852
    %5854 = vmatmul.f32.gmra.mxu0 %v5809
    %v5855 = vpop.f32.mrf.mxu0
    %v5856 = vadd.f32 0.0, %v5855
    %5857 = vdwg.mxu0
    %5858 = vmatpush.msra.mxu0 0.0
    %5859 = vmatpush.msra.mxu0 0.0
    %5860 = vmatpush.msra.mxu0 0.0
    %5861 = vmatpush.msra.mxu0 0.0
    %5862 = vmatpush.msra.mxu0 0.0
    %5863 = vmatpush.msra.mxu0 0.0
    %5864 = vmatpush.msra.mxu0 %v5760
    %5865 = vmatpush.msra.mxu0 %v5758
    %5866 = vmatpush.msra.mxu0 %v5756
    %5867 = vmatpush.msra.mxu0 %v5754
    %5868 = vmatpush.msra.mxu0 %v5752
    %5869 = vmatpush.msra.mxu0 %v5750
    %5870 = vmatpush.msra.mxu0 %v5748
    %5871 = vmatpush.msra.mxu0 %v5746
    %5872 = vmatpush.msra.mxu0 %v5744
    %5873 = vmatpush.msra.mxu0 %v5742
    %5874 = vmatmul.f32.gmra.mxu0 %v5782
    %v5875 = vpop.f32.mrf.mxu0
    %v5876 = vadd.f32 0.0, %v5875
    %5877 = vmatmul.f32.gmra.mxu0 %v5785
    %v5878 = vpop.f32.mrf.mxu0
    %v5879 = vadd.f32 0.0, %v5878
    %5880 = vmatmul.f32.gmra.mxu0 %v5788
    %v5881 = vpop.f32.mrf.mxu0
    %v5882 = vadd.f32 0.0, %v5881
    %5883 = vmatmul.f32.gmra.mxu0 %v5791
    %v5884 = vpop.f32.mrf.mxu0
    %v5885 = vadd.f32 0.0, %v5884
    %5886 = vmatmul.f32.gmra.mxu0 %v5794
    %v5887 = vpop.f32.mrf.mxu0
    %v5888 = vadd.f32 0.0, %v5887
    %5889 = vmatmul.f32.gmra.mxu0 %v5797
    %v5890 = vpop.f32.mrf.mxu0
    %v5891 = vadd.f32 0.0, %v5890
    %5892 = vmatmul.f32.gmra.mxu0 %v5800
    %v5893 = vpop.f32.mrf.mxu0
    %v5894 = vadd.f32 0.0, %v5893
    %5895 = vmatmul.f32.gmra.mxu0 %v5803
    %v5896 = vpop.f32.mrf.mxu0
    %v5897 = vadd.f32 0.0, %v5896
    %5898 = vmatmul.f32.gmra.mxu0 %v5806
    %v5899 = vpop.f32.mrf.mxu0
    %v5900 = vadd.f32 0.0, %v5899
    %5901 = vmatmul.f32.gmra.mxu0 %v5809
    %v5902 = vpop.f32.mrf.mxu0
    %v5903 = vadd.f32 0.0, %v5902
    %5904 = vdwg.mxu0
    %v5905 = vadd.f32 %v5640, %v5829
    %v5906 = vadd.f32 %v5641, %v5876
    %v5907 = vadd.f32 %v5642, %v5832
    %v5908 = vadd.f32 %v5643, %v5879
    %v5909 = vadd.f32 %v5644, %v5835
    %v5910 = vadd.f32 %v5645, %v5882
    %v5911 = vadd.f32 %v5646, %v5838
    %v5912 = vadd.f32 %v5647, %v5885
    %v5913 = vadd.f32 %v5648, %v5841
    %v5914 = vadd.f32 %v5649, %v5888
    %v5915 = vadd.f32 %v5650, %v5844
    %v5916 = vadd.f32 %v5651, %v5891
    %v5917 = vadd.f32 %v5652, %v5847
    %v5918 = vadd.f32 %v5653, %v5894
    %v5919 = vadd.f32 %v5654, %v5850
    %v5920 = vadd.f32 %v5655, %v5897
    %v5921 = vadd.f32 %v5656, %v5853
    %v5922 = vadd.f32 %v5657, %v5900
    %v5923 = vadd.f32 %v5658, %v5856
    %v5924 = vadd.f32 %v5659, %v5903
    %v5925 = vld [vmem:[#allocation9 + $0x1e0] sm:$0xff]
    %v5926 = vld [vmem:[#allocation9 + $0x1e8] sm:$0xff]
    %v5927 = vld [vmem:[#allocation9 + $0x1f0] sm:$0xff]
    %v5928 = vld [vmem:[#allocation9 + $0x1f8] sm:$0xff]
    %v5929 = vld [vmem:[#allocation9 + $0x200] sm:$0xff]
    %v5930 = vld [vmem:[#allocation9 + $0x208] sm:$0xff]
    %v5931 = vld [vmem:[#allocation9 + $0x210] sm:$0xff]
    %v5932 = vld [vmem:[#allocation9 + $0x218] sm:$0xff]
    %v5933 = vld [vmem:[#allocation9 + $0x220] sm:$0xff]
    %v5934 = vld [vmem:[#allocation9 + $0x228] sm:$0xff]
    %5935 = vrot.lane.b32.xlu0 %v4599, 109
    %v5936 = vpop.permute.xlu0 %5935
    %5937 = vrot.lane.b32.xlu0 %v4600, 109
    %v5938 = vpop.permute.xlu0 %5937
    %5939 = vrot.lane.b32.xlu0 %v4601, 109
    %v5940 = vpop.permute.xlu0 %5939
    %5941 = vrot.lane.b32.xlu0 %v4602, 109
    %v5942 = vpop.permute.xlu0 %5941
    %5943 = vrot.lane.b32.xlu0 %v4603, 109
    %v5944 = vpop.permute.xlu0 %5943
    %5945 = vrot.lane.b32.xlu0 %v4604, 109
    %v5946 = vpop.permute.xlu0 %5945
    %5947 = vrot.lane.b32.xlu0 %v4605, 109
    %v5948 = vpop.permute.xlu0 %5947
    %5949 = vrot.lane.b32.xlu0 %v4606, 109
    %v5950 = vpop.permute.xlu0 %5949
    %5951 = vrot.lane.b32.xlu0 %v4607, 109
    %v5952 = vpop.permute.xlu0 %5951
    %5953 = vrot.lane.b32.xlu0 %v4608, 109
    %v5954 = vpop.permute.xlu0 %5953
    %5955 = vrot.lane.b32.xlu0 %v4609, 109
    %v5956 = vpop.permute.xlu0 %5955
    %5957 = vrot.lane.b32.xlu0 %v4610, 109
    %v5958 = vpop.permute.xlu0 %5957
    %5959 = vrot.lane.b32.xlu0 %v4611, 109
    %v5960 = vpop.permute.xlu0 %5959
    %5961 = vrot.lane.b32.xlu0 %v4612, 109
    %v5962 = vpop.permute.xlu0 %5961
    %5963 = vrot.lane.b32.xlu0 %v4613, 109
    %v5964 = vpop.permute.xlu0 %5963
    %5965 = vrot.lane.b32.xlu0 %v4614, 109
    %v5966 = vpop.permute.xlu0 %5965
    %5967 = vrot.lane.b32.xlu0 %v4615, 109
    %v5968 = vpop.permute.xlu0 %5967
    %5969 = vrot.lane.b32.xlu0 %v4616, 109
    %v5970 = vpop.permute.xlu0 %5969
    %5971 = vrot.lane.b32.xlu0 %v4617, 109
    %v5972 = vpop.permute.xlu0 %5971
    %5973 = vrot.lane.b32.xlu0 %v4618, 109
    %v5974 = vpop.permute.xlu0 %5973
    %5975 = vrot.lane.b32.xlu0 %v4619, 109
    %v5976 = vpop.permute.xlu0 %5975
    %5977 = vrot.lane.b32.xlu0 %v4620, 109
    %v5978 = vpop.permute.xlu0 %5977
    %5979 = vrot.lane.b32.xlu0 %v4621, 109
    %v5980 = vpop.permute.xlu0 %5979
    %5981 = vrot.lane.b32.xlu0 %v4622, 109
    %v5982 = vpop.permute.xlu0 %5981
    %5983 = vrot.lane.b32.xlu0 %v4623, 109
    %v5984 = vpop.permute.xlu0 %5983
    %5985 = vrot.lane.b32.xlu0 %v4624, 109
    %v5986 = vpop.permute.xlu0 %5985
    %5987 = vrot.lane.b32.xlu0 %v4625, 109
    %v5988 = vpop.permute.xlu0 %5987
    %5989 = vrot.lane.b32.xlu0 %v4626, 109
    %v5990 = vpop.permute.xlu0 %5989
    %5991 = vrot.lane.b32.xlu0 %v4627, 109
    %v5992 = vpop.permute.xlu0 %5991
    %5993 = vrot.lane.b32.xlu0 %v4628, 109
    %v5994 = vpop.permute.xlu0 %5993
    %vm5995 = vcmask 891904
    %v5996 = vsel %vm5995, %v5936, %v5938
    %v5997 = vsel %vm5995, %v5938, %v5940
    %v5998 = vsel %vm5995, %v5942, %v5944
    %v5999 = vsel %vm5995, %v5944, %v5946
    %v6000 = vsel %vm5995, %v5948, %v5950
    %v6001 = vsel %vm5995, %v5950, %v5952
    %v6002 = vsel %vm5995, %v5954, %v5956
    %v6003 = vsel %vm5995, %v5956, %v5958
    %v6004 = vsel %vm5995, %v5960, %v5962
    %v6005 = vsel %vm5995, %v5962, %v5964
    %v6006 = vsel %vm5995, %v5966, %v5968
    %v6007 = vsel %vm5995, %v5968, %v5970
    %v6008 = vsel %vm5995, %v5972, %v5974
    %v6009 = vsel %vm5995, %v5974, %v5976
    %v6010 = vsel %vm5995, %v5978, %v5980
    %v6011 = vsel %vm5995, %v5980, %v5982
    %v6012 = vsel %vm5995, %v5984, %v5986
    %v6013 = vsel %vm5995, %v5986, %v5988
    %v6014 = vsel %vm5995, %v5990, %v5992
    %v6015 = vsel %vm5995, %v5992, %v5994
    %v6037 = vsel %vm4739, %v5925, 0
    %v6040 = vsel %vm4739, %v5926, 0
    %v6043 = vsel %vm4739, %v5927, 0
    %v6046 = vsel %vm4739, %v5928, 0
    %v6049 = vsel %vm4739, %v5929, 0
    %v6052 = vsel %vm4739, %v5930, 0
    %v6055 = vsel %vm4739, %v5931, 0
    %v6058 = vsel %vm4739, %v5932, 0
    %v6061 = vsel %vm4739, %v5933, 0
    %v6064 = vsel %vm4739, %v5934, 0
    %6066 = vmatpush.msra.mxu0 0.0
    %6067 = vmatpush.msra.mxu0 0.0
    %6068 = vmatpush.msra.mxu0 0.0
    %6069 = vmatpush.msra.mxu0 0.0
    %6070 = vmatpush.msra.mxu0 0.0
    %6071 = vmatpush.msra.mxu0 0.0
    %6072 = vmatpush.msra.mxu0 %v6014
    %6073 = vmatpush.msra.mxu0 %v6012
    %6074 = vmatpush.msra.mxu0 %v6010
    %6075 = vmatpush.msra.mxu0 %v6008
    %6076 = vmatpush.msra.mxu0 %v6006
    %6077 = vmatpush.msra.mxu0 %v6004
    %6078 = vmatpush.msra.mxu0 %v6002
    %6079 = vmatpush.msra.mxu0 %v6000
    %6080 = vmatpush.msra.mxu0 %v5998
    %6081 = vmatpush.msra.mxu0 %v5996
    %6082 = vmatmul.f32.gmra.mxu0 %v6037
    %v6083 = vpop.f32.mrf.mxu0
    %v6084 = vadd.f32 0.0, %v6083
    %6085 = vmatmul.f32.gmra.mxu0 %v6040
    %v6086 = vpop.f32.mrf.mxu0
    %v6087 = vadd.f32 0.0, %v6086
    %6088 = vmatmul.f32.gmra.mxu0 %v6043
    %v6089 = vpop.f32.mrf.mxu0
    %v6090 = vadd.f32 0.0, %v6089
    %6091 = vmatmul.f32.gmra.mxu0 %v6046
    %v6092 = vpop.f32.mrf.mxu0
    %v6093 = vadd.f32 0.0, %v6092
    %6094 = vmatmul.f32.gmra.mxu0 %v6049
    %v6095 = vpop.f32.mrf.mxu0
    %v6096 = vadd.f32 0.0, %v6095
    %6097 = vmatmul.f32.gmra.mxu0 %v6052
    %v6098 = vpop.f32.mrf.mxu0
    %v6099 = vadd.f32 0.0, %v6098
    %6100 = vmatmul.f32.gmra.mxu0 %v6055
    %v6101 = vpop.f32.mrf.mxu0
    %v6102 = vadd.f32 0.0, %v6101
    %6103 = vmatmul.f32.gmra.mxu0 %v6058
    %v6104 = vpop.f32.mrf.mxu0
    %v6105 = vadd.f32 0.0, %v6104
    %6106 = vmatmul.f32.gmra.mxu0 %v6061
    %v6107 = vpop.f32.mrf.mxu0
    %v6108 = vadd.f32 0.0, %v6107
    %6109 = vmatmul.f32.gmra.mxu0 %v6064
    %v6110 = vpop.f32.mrf.mxu0
    %v6111 = vadd.f32 0.0, %v6110
    %6112 = vdwg.mxu0
    %6113 = vmatpush.msra.mxu0 0.0
    %6114 = vmatpush.msra.mxu0 0.0
    %6115 = vmatpush.msra.mxu0 0.0
    %6116 = vmatpush.msra.mxu0 0.0
    %6117 = vmatpush.msra.mxu0 0.0
    %6118 = vmatpush.msra.mxu0 0.0
    %6119 = vmatpush.msra.mxu0 %v6015
    %6120 = vmatpush.msra.mxu0 %v6013
    %6121 = vmatpush.msra.mxu0 %v6011
    %6122 = vmatpush.msra.mxu0 %v6009
    %6123 = vmatpush.msra.mxu0 %v6007
    %6124 = vmatpush.msra.mxu0 %v6005
    %6125 = vmatpush.msra.mxu0 %v6003
    %6126 = vmatpush.msra.mxu0 %v6001
    %6127 = vmatpush.msra.mxu0 %v5999
    %6128 = vmatpush.msra.mxu0 %v5997
    %6129 = vmatmul.f32.gmra.mxu0 %v6037
    %v6130 = vpop.f32.mrf.mxu0
    %v6131 = vadd.f32 0.0, %v6130
    %6132 = vmatmul.f32.gmra.mxu0 %v6040
    %v6133 = vpop.f32.mrf.mxu0
    %v6134 = vadd.f32 0.0, %v6133
    %6135 = vmatmul.f32.gmra.mxu0 %v6043
    %v6136 = vpop.f32.mrf.mxu0
    %v6137 = vadd.f32 0.0, %v6136
    %6138 = vmatmul.f32.gmra.mxu0 %v6046
    %v6139 = vpop.f32.mrf.mxu0
    %v6140 = vadd.f32 0.0, %v6139
    %6141 = vmatmul.f32.gmra.mxu0 %v6049
    %v6142 = vpop.f32.mrf.mxu0
    %v6143 = vadd.f32 0.0, %v6142
    %6144 = vmatmul.f32.gmra.mxu0 %v6052
    %v6145 = vpop.f32.mrf.mxu0
    %v6146 = vadd.f32 0.0, %v6145
    %6147 = vmatmul.f32.gmra.mxu0 %v6055
    %v6148 = vpop.f32.mrf.mxu0
    %v6149 = vadd.f32 0.0, %v6148
    %6150 = vmatmul.f32.gmra.mxu0 %v6058
    %v6151 = vpop.f32.mrf.mxu0
    %v6152 = vadd.f32 0.0, %v6151
    %6153 = vmatmul.f32.gmra.mxu0 %v6061
    %v6154 = vpop.f32.mrf.mxu0
    %v6155 = vadd.f32 0.0, %v6154
    %6156 = vmatmul.f32.gmra.mxu0 %v6064
    %v6157 = vpop.f32.mrf.mxu0
    %v6158 = vadd.f32 0.0, %v6157
    %6159 = vdwg.mxu0
    %v6160 = vadd.f32 %v5905, %v6084
    %v6161 = vadd.f32 %v5906, %v6131
    %v6162 = vadd.f32 %v5907, %v6087
    %v6163 = vadd.f32 %v5908, %v6134
    %v6164 = vadd.f32 %v5909, %v6090
    %v6165 = vadd.f32 %v5910, %v6137
    %v6166 = vadd.f32 %v5911, %v6093
    %v6167 = vadd.f32 %v5912, %v6140
    %v6168 = vadd.f32 %v5913, %v6096
    %v6169 = vadd.f32 %v5914, %v6143
    %v6170 = vadd.f32 %v5915, %v6099
    %v6171 = vadd.f32 %v5916, %v6146
    %v6172 = vadd.f32 %v5917, %v6102
    %v6173 = vadd.f32 %v5918, %v6149
    %v6174 = vadd.f32 %v5919, %v6105
    %v6175 = vadd.f32 %v5920, %v6152
    %v6176 = vadd.f32 %v5921, %v6108
    %v6177 = vadd.f32 %v5922, %v6155
    %v6178 = vadd.f32 %v5923, %v6111
    %v6179 = vadd.f32 %v5924, %v6158
    %v6180 = vld [vmem:[#allocation9 + $0x230] sm:$0xff]
    %v6181 = vld [vmem:[#allocation9 + $0x238] sm:$0xff]
    %v6182 = vld [vmem:[#allocation9 + $0x240] sm:$0xff]
    %v6183 = vld [vmem:[#allocation9 + $0x248] sm:$0xff]
    %v6184 = vld [vmem:[#allocation9 + $0x250] sm:$0xff]
    %v6185 = vld [vmem:[#allocation9 + $0x258] sm:$0xff]
    %v6186 = vld [vmem:[#allocation9 + $0x260] sm:$0xff]
    %v6187 = vld [vmem:[#allocation9 + $0x268] sm:$0xff]
    %v6188 = vld [vmem:[#allocation9 + $0x270] sm:$0xff]
    %v6189 = vld [vmem:[#allocation9 + $0x278] sm:$0xff]
    %6190 = vrot.lane.b32.xlu0 %v4599, 108
    %v6191 = vpop.permute.xlu0 %6190
    %6192 = vrot.lane.b32.xlu0 %v4600, 108
    %v6193 = vpop.permute.xlu0 %6192
    %6194 = vrot.lane.b32.xlu0 %v4601, 108
    %v6195 = vpop.permute.xlu0 %6194
    %6196 = vrot.lane.b32.xlu0 %v4602, 108
    %v6197 = vpop.permute.xlu0 %6196
    %6198 = vrot.lane.b32.xlu0 %v4603, 108
    %v6199 = vpop.permute.xlu0 %6198
    %6200 = vrot.lane.b32.xlu0 %v4604, 108
    %v6201 = vpop.permute.xlu0 %6200
    %6202 = vrot.lane.b32.xlu0 %v4605, 108
    %v6203 = vpop.permute.xlu0 %6202
    %6204 = vrot.lane.b32.xlu0 %v4606, 108
    %v6205 = vpop.permute.xlu0 %6204
    %6206 = vrot.lane.b32.xlu0 %v4607, 108
    %v6207 = vpop.permute.xlu0 %6206
    %6208 = vrot.lane.b32.xlu0 %v4608, 108
    %v6209 = vpop.permute.xlu0 %6208
    %6210 = vrot.lane.b32.xlu0 %v4609, 108
    %v6211 = vpop.permute.xlu0 %6210
    %6212 = vrot.lane.b32.xlu0 %v4610, 108
    %v6213 = vpop.permute.xlu0 %6212
    %6214 = vrot.lane.b32.xlu0 %v4611, 108
    %v6215 = vpop.permute.xlu0 %6214
    %6216 = vrot.lane.b32.xlu0 %v4612, 108
    %v6217 = vpop.permute.xlu0 %6216
    %6218 = vrot.lane.b32.xlu0 %v4613, 108
    %v6219 = vpop.permute.xlu0 %6218
    %6220 = vrot.lane.b32.xlu0 %v4614, 108
    %v6221 = vpop.permute.xlu0 %6220
    %6222 = vrot.lane.b32.xlu0 %v4615, 108
    %v6223 = vpop.permute.xlu0 %6222
    %6224 = vrot.lane.b32.xlu0 %v4616, 108
    %v6225 = vpop.permute.xlu0 %6224
    %6226 = vrot.lane.b32.xlu0 %v4617, 108
    %v6227 = vpop.permute.xlu0 %6226
    %6228 = vrot.lane.b32.xlu0 %v4618, 108
    %v6229 = vpop.permute.xlu0 %6228
    %6230 = vrot.lane.b32.xlu0 %v4619, 108
    %v6231 = vpop.permute.xlu0 %6230
    %6232 = vrot.lane.b32.xlu0 %v4620, 108
    %v6233 = vpop.permute.xlu0 %6232
    %6234 = vrot.lane.b32.xlu0 %v4621, 108
    %v6235 = vpop.permute.xlu0 %6234
    %6236 = vrot.lane.b32.xlu0 %v4622, 108
    %v6237 = vpop.permute.xlu0 %6236
    %6238 = vrot.lane.b32.xlu0 %v4623, 108
    %v6239 = vpop.permute.xlu0 %6238
    %6240 = vrot.lane.b32.xlu0 %v4624, 108
    %v6241 = vpop.permute.xlu0 %6240
    %6242 = vrot.lane.b32.xlu0 %v4625, 108
    %v6243 = vpop.permute.xlu0 %6242
    %6244 = vrot.lane.b32.xlu0 %v4626, 108
    %v6245 = vpop.permute.xlu0 %6244
    %6246 = vrot.lane.b32.xlu0 %v4627, 108
    %v6247 = vpop.permute.xlu0 %6246
    %6248 = vrot.lane.b32.xlu0 %v4628, 108
    %v6249 = vpop.permute.xlu0 %6248
    %vm6250 = vcmask 883712
    %v6251 = vsel %vm6250, %v6191, %v6193
    %v6252 = vsel %vm6250, %v6193, %v6195
    %v6253 = vsel %vm6250, %v6197, %v6199
    %v6254 = vsel %vm6250, %v6199, %v6201
    %v6255 = vsel %vm6250, %v6203, %v6205
    %v6256 = vsel %vm6250, %v6205, %v6207
    %v6257 = vsel %vm6250, %v6209, %v6211
    %v6258 = vsel %vm6250, %v6211, %v6213
    %v6259 = vsel %vm6250, %v6215, %v6217
    %v6260 = vsel %vm6250, %v6217, %v6219
    %v6261 = vsel %vm6250, %v6221, %v6223
    %v6262 = vsel %vm6250, %v6223, %v6225
    %v6263 = vsel %vm6250, %v6227, %v6229
    %v6264 = vsel %vm6250, %v6229, %v6231
    %v6265 = vsel %vm6250, %v6233, %v6235
    %v6266 = vsel %vm6250, %v6235, %v6237
    %v6267 = vsel %vm6250, %v6239, %v6241
    %v6268 = vsel %vm6250, %v6241, %v6243
    %v6269 = vsel %vm6250, %v6245, %v6247
    %v6270 = vsel %vm6250, %v6247, %v6249
    %v6292 = vsel %vm4739, %v6180, 0
    %v6295 = vsel %vm4739, %v6181, 0
    %v6298 = vsel %vm4739, %v6182, 0
    %v6301 = vsel %vm4739, %v6183, 0
    %v6304 = vsel %vm4739, %v6184, 0
    %v6307 = vsel %vm4739, %v6185, 0
    %v6310 = vsel %vm4739, %v6186, 0
    %v6313 = vsel %vm4739, %v6187, 0
    %v6316 = vsel %vm4739, %v6188, 0
    %v6319 = vsel %vm4739, %v6189, 0
    %6321 = vmatpush.msra.mxu0 0.0
    %6322 = vmatpush.msra.mxu0 0.0
    %6323 = vmatpush.msra.mxu0 0.0
    %6324 = vmatpush.msra.mxu0 0.0
    %6325 = vmatpush.msra.mxu0 0.0
    %6326 = vmatpush.msra.mxu0 0.0
    %6327 = vmatpush.msra.mxu0 %v6269
    %6328 = vmatpush.msra.mxu0 %v6267
    %6329 = vmatpush.msra.mxu0 %v6265
    %6330 = vmatpush.msra.mxu0 %v6263
    %6331 = vmatpush.msra.mxu0 %v6261
    %6332 = vmatpush.msra.mxu0 %v6259
    %6333 = vmatpush.msra.mxu0 %v6257
    %6334 = vmatpush.msra.mxu0 %v6255
    %6335 = vmatpush.msra.mxu0 %v6253
    %6336 = vmatpush.msra.mxu0 %v6251
    %6337 = vmatmul.f32.gmra.mxu0 %v6292
    %v6338 = vpop.f32.mrf.mxu0
    %v6339 = vadd.f32 0.0, %v6338
    %6340 = vmatmul.f32.gmra.mxu0 %v6295
    %v6341 = vpop.f32.mrf.mxu0
    %v6342 = vadd.f32 0.0, %v6341
    %6343 = vmatmul.f32.gmra.mxu0 %v6298
    %v6344 = vpop.f32.mrf.mxu0
    %v6345 = vadd.f32 0.0, %v6344
    %6346 = vmatmul.f32.gmra.mxu0 %v6301
    %v6347 = vpop.f32.mrf.mxu0
    %v6348 = vadd.f32 0.0, %v6347
    %6349 = vmatmul.f32.gmra.mxu0 %v6304
    %v6350 = vpop.f32.mrf.mxu0
    %v6351 = vadd.f32 0.0, %v6350
    %6352 = vmatmul.f32.gmra.mxu0 %v6307
    %v6353 = vpop.f32.mrf.mxu0
    %v6354 = vadd.f32 0.0, %v6353
    %6355 = vmatmul.f32.gmra.mxu0 %v6310
    %v6356 = vpop.f32.mrf.mxu0
    %v6357 = vadd.f32 0.0, %v6356
    %6358 = vmatmul.f32.gmra.mxu0 %v6313
    %v6359 = vpop.f32.mrf.mxu0
    %v6360 = vadd.f32 0.0, %v6359
    %6361 = vmatmul.f32.gmra.mxu0 %v6316
    %v6362 = vpop.f32.mrf.mxu0
    %v6363 = vadd.f32 0.0, %v6362
    %6364 = vmatmul.f32.gmra.mxu0 %v6319
    %v6365 = vpop.f32.mrf.mxu0
    %v6366 = vadd.f32 0.0, %v6365
    %6367 = vdwg.mxu0
    %6368 = vmatpush.msra.mxu0 0.0
    %6369 = vmatpush.msra.mxu0 0.0
    %6370 = vmatpush.msra.mxu0 0.0
    %6371 = vmatpush.msra.mxu0 0.0
    %6372 = vmatpush.msra.mxu0 0.0
    %6373 = vmatpush.msra.mxu0 0.0
    %6374 = vmatpush.msra.mxu0 %v6270
    %6375 = vmatpush.msra.mxu0 %v6268
    %6376 = vmatpush.msra.mxu0 %v6266
    %6377 = vmatpush.msra.mxu0 %v6264
    %6378 = vmatpush.msra.mxu0 %v6262
    %6379 = vmatpush.msra.mxu0 %v6260
    %6380 = vmatpush.msra.mxu0 %v6258
    %6381 = vmatpush.msra.mxu0 %v6256
    %6382 = vmatpush.msra.mxu0 %v6254
    %6383 = vmatpush.msra.mxu0 %v6252
    %6384 = vmatmul.f32.gmra.mxu0 %v6292
    %v6385 = vpop.f32.mrf.mxu0
    %v6386 = vadd.f32 0.0, %v6385
    %6387 = vmatmul.f32.gmra.mxu0 %v6295
    %v6388 = vpop.f32.mrf.mxu0
    %v6389 = vadd.f32 0.0, %v6388
    %6390 = vmatmul.f32.gmra.mxu0 %v6298
    %v6391 = vpop.f32.mrf.mxu0
    %v6392 = vadd.f32 0.0, %v6391
    %6393 = vmatmul.f32.gmra.mxu0 %v6301
    %v6394 = vpop.f32.mrf.mxu0
    %v6395 = vadd.f32 0.0, %v6394
    %6396 = vmatmul.f32.gmra.mxu0 %v6304
    %v6397 = vpop.f32.mrf.mxu0
    %v6398 = vadd.f32 0.0, %v6397
    %6399 = vmatmul.f32.gmra.mxu0 %v6307
    %v6400 = vpop.f32.mrf.mxu0
    %v6401 = vadd.f32 0.0, %v6400
    %6402 = vmatmul.f32.gmra.mxu0 %v6310
    %v6403 = vpop.f32.mrf.mxu0
    %v6404 = vadd.f32 0.0, %v6403
    %6405 = vmatmul.f32.gmra.mxu0 %v6313
    %v6406 = vpop.f32.mrf.mxu0
    %v6407 = vadd.f32 0.0, %v6406
    %6408 = vmatmul.f32.gmra.mxu0 %v6316
    %v6409 = vpop.f32.mrf.mxu0
    %v6410 = vadd.f32 0.0, %v6409
    %6411 = vmatmul.f32.gmra.mxu0 %v6319
    %v6412 = vpop.f32.mrf.mxu0
    %v6413 = vadd.f32 0.0, %v6412
    %6414 = vdwg.mxu0
    %v6415 = vadd.f32 %v6160, %v6339
    %v6416 = vadd.f32 %v6161, %v6386
    %v6417 = vadd.f32 %v6162, %v6342
    %v6418 = vadd.f32 %v6163, %v6389
    %v6419 = vadd.f32 %v6164, %v6345
    %v6420 = vadd.f32 %v6165, %v6392
    %v6421 = vadd.f32 %v6166, %v6348
    %v6422 = vadd.f32 %v6167, %v6395
    %v6423 = vadd.f32 %v6168, %v6351
    %v6424 = vadd.f32 %v6169, %v6398
    %v6425 = vadd.f32 %v6170, %v6354
    %v6426 = vadd.f32 %v6171, %v6401
    %v6427 = vadd.f32 %v6172, %v6357
    %v6428 = vadd.f32 %v6173, %v6404
    %v6429 = vadd.f32 %v6174, %v6360
    %v6430 = vadd.f32 %v6175, %v6407
    %v6431 = vadd.f32 %v6176, %v6363
    %v6432 = vadd.f32 %v6177, %v6410
    %v6433 = vadd.f32 %v6178, %v6366
    %v6434 = vadd.f32 %v6179, %v6413
    %v6435 = vld [vmem:[#allocation9 + $0x280] sm:$0xff]
    %v6436 = vld [vmem:[#allocation9 + $0x288] sm:$0xff]
    %v6437 = vld [vmem:[#allocation9 + $0x290] sm:$0xff]
    %v6438 = vld [vmem:[#allocation9 + $0x298] sm:$0xff]
    %v6439 = vld [vmem:[#allocation9 + $0x2a0] sm:$0xff]
    %v6440 = vld [vmem:[#allocation9 + $0x2a8] sm:$0xff]
    %v6441 = vld [vmem:[#allocation9 + $0x2b0] sm:$0xff]
    %v6442 = vld [vmem:[#allocation9 + $0x2b8] sm:$0xff]
    %v6443 = vld [vmem:[#allocation9 + $0x2c0] sm:$0xff]
    %v6444 = vld [vmem:[#allocation9 + $0x2c8] sm:$0xff]
    %6445 = vrot.lane.b32.xlu0 %v4599, 107
    %v6446 = vpop.permute.xlu0 %6445
    %6447 = vrot.lane.b32.xlu0 %v4600, 107
    %v6448 = vpop.permute.xlu0 %6447
    %6449 = vrot.lane.b32.xlu0 %v4601, 107
    %v6450 = vpop.permute.xlu0 %6449
    %6451 = vrot.lane.b32.xlu0 %v4602, 107
    %v6452 = vpop.permute.xlu0 %6451
    %6453 = vrot.lane.b32.xlu0 %v4603, 107
    %v6454 = vpop.permute.xlu0 %6453
    %6455 = vrot.lane.b32.xlu0 %v4604, 107
    %v6456 = vpop.permute.xlu0 %6455
    %6457 = vrot.lane.b32.xlu0 %v4605, 107
    %v6458 = vpop.permute.xlu0 %6457
    %6459 = vrot.lane.b32.xlu0 %v4606, 107
    %v6460 = vpop.permute.xlu0 %6459
    %6461 = vrot.lane.b32.xlu0 %v4607, 107
    %v6462 = vpop.permute.xlu0 %6461
    %6463 = vrot.lane.b32.xlu0 %v4608, 107
    %v6464 = vpop.permute.xlu0 %6463
    %6465 = vrot.lane.b32.xlu0 %v4609, 107
    %v6466 = vpop.permute.xlu0 %6465
    %6467 = vrot.lane.b32.xlu0 %v4610, 107
    %v6468 = vpop.permute.xlu0 %6467
    %6469 = vrot.lane.b32.xlu0 %v4611, 107
    %v6470 = vpop.permute.xlu0 %6469
    %6471 = vrot.lane.b32.xlu0 %v4612, 107
    %v6472 = vpop.permute.xlu0 %6471
    %6473 = vrot.lane.b32.xlu0 %v4613, 107
    %v6474 = vpop.permute.xlu0 %6473
    %6475 = vrot.lane.b32.xlu0 %v4614, 107
    %v6476 = vpop.permute.xlu0 %6475
    %6477 = vrot.lane.b32.xlu0 %v4615, 107
    %v6478 = vpop.permute.xlu0 %6477
    %6479 = vrot.lane.b32.xlu0 %v4616, 107
    %v6480 = vpop.permute.xlu0 %6479
    %6481 = vrot.lane.b32.xlu0 %v4617, 107
    %v6482 = vpop.permute.xlu0 %6481
    %6483 = vrot.lane.b32.xlu0 %v4618, 107
    %v6484 = vpop.permute.xlu0 %6483
    %6485 = vrot.lane.b32.xlu0 %v4619, 107
    %v6486 = vpop.permute.xlu0 %6485
    %6487 = vrot.lane.b32.xlu0 %v4620, 107
    %v6488 = vpop.permute.xlu0 %6487
    %6489 = vrot.lane.b32.xlu0 %v4621, 107
    %v6490 = vpop.permute.xlu0 %6489
    %6491 = vrot.lane.b32.xlu0 %v4622, 107
    %v6492 = vpop.permute.xlu0 %6491
    %6493 = vrot.lane.b32.xlu0 %v4623, 107
    %v6494 = vpop.permute.xlu0 %6493
    %6495 = vrot.lane.b32.xlu0 %v4624, 107
    %v6496 = vpop.permute.xlu0 %6495
    %6497 = vrot.lane.b32.xlu0 %v4625, 107
    %v6498 = vpop.permute.xlu0 %6497
    %6499 = vrot.lane.b32.xlu0 %v4626, 107
    %v6500 = vpop.permute.xlu0 %6499
    %6501 = vrot.lane.b32.xlu0 %v4627, 107
    %v6502 = vpop.permute.xlu0 %6501
    %6503 = vrot.lane.b32.xlu0 %v4628, 107
    %v6504 = vpop.permute.xlu0 %6503
    %vm6505 = vcmask 875520
    %v6506 = vsel %vm6505, %v6446, %v6448
    %v6507 = vsel %vm6505, %v6448, %v6450
    %v6508 = vsel %vm6505, %v6452, %v6454
    %v6509 = vsel %vm6505, %v6454, %v6456
    %v6510 = vsel %vm6505, %v6458, %v6460
    %v6511 = vsel %vm6505, %v6460, %v6462
    %v6512 = vsel %vm6505, %v6464, %v6466
    %v6513 = vsel %vm6505, %v6466, %v6468
    %v6514 = vsel %vm6505, %v6470, %v6472
    %v6515 = vsel %vm6505, %v6472, %v6474
    %v6516 = vsel %vm6505, %v6476, %v6478
    %v6517 = vsel %vm6505, %v6478, %v6480
    %v6518 = vsel %vm6505, %v6482, %v6484
    %v6519 = vsel %vm6505, %v6484, %v6486
    %v6520 = vsel %vm6505, %v6488, %v6490
    %v6521 = vsel %vm6505, %v6490, %v6492
    %v6522 = vsel %vm6505, %v6494, %v6496
    %v6523 = vsel %vm6505, %v6496, %v6498
    %v6524 = vsel %vm6505, %v6500, %v6502
    %v6525 = vsel %vm6505, %v6502, %v6504
    %v6547 = vsel %vm4739, %v6435, 0
    %v6550 = vsel %vm4739, %v6436, 0
    %v6553 = vsel %vm4739, %v6437, 0
    %v6556 = vsel %vm4739, %v6438, 0
    %v6559 = vsel %vm4739, %v6439, 0
    %v6562 = vsel %vm4739, %v6440, 0
    %v6565 = vsel %vm4739, %v6441, 0
    %v6568 = vsel %vm4739, %v6442, 0
    %v6571 = vsel %vm4739, %v6443, 0
    %v6574 = vsel %vm4739, %v6444, 0
    %6576 = vmatpush.msra.mxu0 0.0
    %6577 = vmatpush.msra.mxu0 0.0
    %6578 = vmatpush.msra.mxu0 0.0
    %6579 = vmatpush.msra.mxu0 0.0
    %6580 = vmatpush.msra.mxu0 0.0
    %6581 = vmatpush.msra.mxu0 0.0
    %6582 = vmatpush.msra.mxu0 %v6524
    %6583 = vmatpush.msra.mxu0 %v6522
    %6584 = vmatpush.msra.mxu0 %v6520
    %6585 = vmatpush.msra.mxu0 %v6518
    %6586 = vmatpush.msra.mxu0 %v6516
    %6587 = vmatpush.msra.mxu0 %v6514
    %6588 = vmatpush.msra.mxu0 %v6512
    %6589 = vmatpush.msra.mxu0 %v6510
    %6590 = vmatpush.msra.mxu0 %v6508
    %6591 = vmatpush.msra.mxu0 %v6506
    %6592 = vmatmul.f32.gmra.mxu0 %v6547
    %v6593 = vpop.f32.mrf.mxu0
    %v6594 = vadd.f32 0.0, %v6593
    %6595 = vmatmul.f32.gmra.mxu0 %v6550
    %v6596 = vpop.f32.mrf.mxu0
    %v6597 = vadd.f32 0.0, %v6596
    %6598 = vmatmul.f32.gmra.mxu0 %v6553
    %v6599 = vpop.f32.mrf.mxu0
    %v6600 = vadd.f32 0.0, %v6599
    %6601 = vmatmul.f32.gmra.mxu0 %v6556
    %v6602 = vpop.f32.mrf.mxu0
    %v6603 = vadd.f32 0.0, %v6602
    %6604 = vmatmul.f32.gmra.mxu0 %v6559
    %v6605 = vpop.f32.mrf.mxu0
    %v6606 = vadd.f32 0.0, %v6605
    %6607 = vmatmul.f32.gmra.mxu0 %v6562
    %v6608 = vpop.f32.mrf.mxu0
    %v6609 = vadd.f32 0.0, %v6608
    %6610 = vmatmul.f32.gmra.mxu0 %v6565
    %v6611 = vpop.f32.mrf.mxu0
    %v6612 = vadd.f32 0.0, %v6611
    %6613 = vmatmul.f32.gmra.mxu0 %v6568
    %v6614 = vpop.f32.mrf.mxu0
    %v6615 = vadd.f32 0.0, %v6614
    %6616 = vmatmul.f32.gmra.mxu0 %v6571
    %v6617 = vpop.f32.mrf.mxu0
    %v6618 = vadd.f32 0.0, %v6617
    %6619 = vmatmul.f32.gmra.mxu0 %v6574
    %v6620 = vpop.f32.mrf.mxu0
    %v6621 = vadd.f32 0.0, %v6620
    %6622 = vdwg.mxu0
    %6623 = vmatpush.msra.mxu0 0.0
    %6624 = vmatpush.msra.mxu0 0.0
    %6625 = vmatpush.msra.mxu0 0.0
    %6626 = vmatpush.msra.mxu0 0.0
    %6627 = vmatpush.msra.mxu0 0.0
    %6628 = vmatpush.msra.mxu0 0.0
    %6629 = vmatpush.msra.mxu0 %v6525
    %6630 = vmatpush.msra.mxu0 %v6523
    %6631 = vmatpush.msra.mxu0 %v6521
    %6632 = vmatpush.msra.mxu0 %v6519
    %6633 = vmatpush.msra.mxu0 %v6517
    %6634 = vmatpush.msra.mxu0 %v6515
    %6635 = vmatpush.msra.mxu0 %v6513
    %6636 = vmatpush.msra.mxu0 %v6511
    %6637 = vmatpush.msra.mxu0 %v6509
    %6638 = vmatpush.msra.mxu0 %v6507
    %6639 = vmatmul.f32.gmra.mxu0 %v6547
    %v6640 = vpop.f32.mrf.mxu0
    %v6641 = vadd.f32 0.0, %v6640
    %6642 = vmatmul.f32.gmra.mxu0 %v6550
    %v6643 = vpop.f32.mrf.mxu0
    %v6644 = vadd.f32 0.0, %v6643
    %6645 = vmatmul.f32.gmra.mxu0 %v6553
    %v6646 = vpop.f32.mrf.mxu0
    %v6647 = vadd.f32 0.0, %v6646
    %6648 = vmatmul.f32.gmra.mxu0 %v6556
    %v6649 = vpop.f32.mrf.mxu0
    %v6650 = vadd.f32 0.0, %v6649
    %6651 = vmatmul.f32.gmra.mxu0 %v6559
    %v6652 = vpop.f32.mrf.mxu0
    %v6653 = vadd.f32 0.0, %v6652
    %6654 = vmatmul.f32.gmra.mxu0 %v6562
    %v6655 = vpop.f32.mrf.mxu0
    %v6656 = vadd.f32 0.0, %v6655
    %6657 = vmatmul.f32.gmra.mxu0 %v6565
    %v6658 = vpop.f32.mrf.mxu0
    %v6659 = vadd.f32 0.0, %v6658
    %6660 = vmatmul.f32.gmra.mxu0 %v6568
    %v6661 = vpop.f32.mrf.mxu0
    %v6662 = vadd.f32 0.0, %v6661
    %6663 = vmatmul.f32.gmra.mxu0 %v6571
    %v6664 = vpop.f32.mrf.mxu0
    %v6665 = vadd.f32 0.0, %v6664
    %6666 = vmatmul.f32.gmra.mxu0 %v6574
    %v6667 = vpop.f32.mrf.mxu0
    %v6668 = vadd.f32 0.0, %v6667
    %6669 = vdwg.mxu0
    %v6670 = vadd.f32 %v6415, %v6594
    %v6671 = vadd.f32 %v6416, %v6641
    %v6672 = vadd.f32 %v6417, %v6597
    %v6673 = vadd.f32 %v6418, %v6644
    %v6674 = vadd.f32 %v6419, %v6600
    %v6675 = vadd.f32 %v6420, %v6647
    %v6676 = vadd.f32 %v6421, %v6603
    %v6677 = vadd.f32 %v6422, %v6650
    %v6678 = vadd.f32 %v6423, %v6606
    %v6679 = vadd.f32 %v6424, %v6653
    %v6680 = vadd.f32 %v6425, %v6609
    %v6681 = vadd.f32 %v6426, %v6656
    %v6682 = vadd.f32 %v6427, %v6612
    %v6683 = vadd.f32 %v6428, %v6659
    %v6684 = vadd.f32 %v6429, %v6615
    %v6685 = vadd.f32 %v6430, %v6662
    %v6686 = vadd.f32 %v6431, %v6618
    %v6687 = vadd.f32 %v6432, %v6665
    %v6688 = vadd.f32 %v6433, %v6621
    %v6689 = vadd.f32 %v6434, %v6668
    %v6690 = vld [vmem:[#allocation9 + $0x2d0] sm:$0xff]
    %v6691 = vld [vmem:[#allocation9 + $0x2d8] sm:$0xff]
    %v6692 = vld [vmem:[#allocation9 + $0x2e0] sm:$0xff]
    %v6693 = vld [vmem:[#allocation9 + $0x2e8] sm:$0xff]
    %v6694 = vld [vmem:[#allocation9 + $0x2f0] sm:$0xff]
    %v6695 = vld [vmem:[#allocation9 + $0x2f8] sm:$0xff]
    %v6696 = vld [vmem:[#allocation9 + $0x300] sm:$0xff]
    %v6697 = vld [vmem:[#allocation9 + $0x308] sm:$0xff]
    %v6698 = vld [vmem:[#allocation9 + $0x310] sm:$0xff]
    %v6699 = vld [vmem:[#allocation9 + $0x318] sm:$0xff]
    %6700 = vrot.lane.b32.xlu0 %v4599, 106
    %v6701 = vpop.permute.xlu0 %6700
    %6702 = vrot.lane.b32.xlu0 %v4600, 106
    %v6703 = vpop.permute.xlu0 %6702
    %6704 = vrot.lane.b32.xlu0 %v4601, 106
    %v6705 = vpop.permute.xlu0 %6704
    %6706 = vrot.lane.b32.xlu0 %v4602, 106
    %v6707 = vpop.permute.xlu0 %6706
    %6708 = vrot.lane.b32.xlu0 %v4603, 106
    %v6709 = vpop.permute.xlu0 %6708
    %6710 = vrot.lane.b32.xlu0 %v4604, 106
    %v6711 = vpop.permute.xlu0 %6710
    %6712 = vrot.lane.b32.xlu0 %v4605, 106
    %v6713 = vpop.permute.xlu0 %6712
    %6714 = vrot.lane.b32.xlu0 %v4606, 106
    %v6715 = vpop.permute.xlu0 %6714
    %6716 = vrot.lane.b32.xlu0 %v4607, 106
    %v6717 = vpop.permute.xlu0 %6716
    %6718 = vrot.lane.b32.xlu0 %v4608, 106
    %v6719 = vpop.permute.xlu0 %6718
    %6720 = vrot.lane.b32.xlu0 %v4609, 106
    %v6721 = vpop.permute.xlu0 %6720
    %6722 = vrot.lane.b32.xlu0 %v4610, 106
    %v6723 = vpop.permute.xlu0 %6722
    %6724 = vrot.lane.b32.xlu0 %v4611, 106
    %v6725 = vpop.permute.xlu0 %6724
    %6726 = vrot.lane.b32.xlu0 %v4612, 106
    %v6727 = vpop.permute.xlu0 %6726
    %6728 = vrot.lane.b32.xlu0 %v4613, 106
    %v6729 = vpop.permute.xlu0 %6728
    %6730 = vrot.lane.b32.xlu0 %v4614, 106
    %v6731 = vpop.permute.xlu0 %6730
    %6732 = vrot.lane.b32.xlu0 %v4615, 106
    %v6733 = vpop.permute.xlu0 %6732
    %6734 = vrot.lane.b32.xlu0 %v4616, 106
    %v6735 = vpop.permute.xlu0 %6734
    %6736 = vrot.lane.b32.xlu0 %v4617, 106
    %v6737 = vpop.permute.xlu0 %6736
    %6738 = vrot.lane.b32.xlu0 %v4618, 106
    %v6739 = vpop.permute.xlu0 %6738
    %6740 = vrot.lane.b32.xlu0 %v4619, 106
    %v6741 = vpop.permute.xlu0 %6740
    %6742 = vrot.lane.b32.xlu0 %v4620, 106
    %v6743 = vpop.permute.xlu0 %6742
    %6744 = vrot.lane.b32.xlu0 %v4621, 106
    %v6745 = vpop.permute.xlu0 %6744
    %6746 = vrot.lane.b32.xlu0 %v4622, 106
    %v6747 = vpop.permute.xlu0 %6746
    %6748 = vrot.lane.b32.xlu0 %v4623, 106
    %v6749 = vpop.permute.xlu0 %6748
    %6750 = vrot.lane.b32.xlu0 %v4624, 106
    %v6751 = vpop.permute.xlu0 %6750
    %6752 = vrot.lane.b32.xlu0 %v4625, 106
    %v6753 = vpop.permute.xlu0 %6752
    %6754 = vrot.lane.b32.xlu0 %v4626, 106
    %v6755 = vpop.permute.xlu0 %6754
    %6756 = vrot.lane.b32.xlu0 %v4627, 106
    %v6757 = vpop.permute.xlu0 %6756
    %6758 = vrot.lane.b32.xlu0 %v4628, 106
    %v6759 = vpop.permute.xlu0 %6758
    %vm6760 = vcmask 867328
    %v6761 = vsel %vm6760, %v6701, %v6703
    %v6762 = vsel %vm6760, %v6703, %v6705
    %v6763 = vsel %vm6760, %v6707, %v6709
    %v6764 = vsel %vm6760, %v6709, %v6711
    %v6765 = vsel %vm6760, %v6713, %v6715
    %v6766 = vsel %vm6760, %v6715, %v6717
    %v6767 = vsel %vm6760, %v6719, %v6721
    %v6768 = vsel %vm6760, %v6721, %v6723
    %v6769 = vsel %vm6760, %v6725, %v6727
    %v6770 = vsel %vm6760, %v6727, %v6729
    %v6771 = vsel %vm6760, %v6731, %v6733
    %v6772 = vsel %vm6760, %v6733, %v6735
    %v6773 = vsel %vm6760, %v6737, %v6739
    %v6774 = vsel %vm6760, %v6739, %v6741
    %v6775 = vsel %vm6760, %v6743, %v6745
    %v6776 = vsel %vm6760, %v6745, %v6747
    %v6777 = vsel %vm6760, %v6749, %v6751
    %v6778 = vsel %vm6760, %v6751, %v6753
    %v6779 = vsel %vm6760, %v6755, %v6757
    %v6780 = vsel %vm6760, %v6757, %v6759
    %v6802 = vsel %vm4739, %v6690, 0
    %v6805 = vsel %vm4739, %v6691, 0
    %v6808 = vsel %vm4739, %v6692, 0
    %v6811 = vsel %vm4739, %v6693, 0
    %v6814 = vsel %vm4739, %v6694, 0
    %v6817 = vsel %vm4739, %v6695, 0
    %v6820 = vsel %vm4739, %v6696, 0
    %v6823 = vsel %vm4739, %v6697, 0
    %v6826 = vsel %vm4739, %v6698, 0
    %v6829 = vsel %vm4739, %v6699, 0
    %6831 = vmatpush.msra.mxu0 0.0
    %6832 = vmatpush.msra.mxu0 0.0
    %6833 = vmatpush.msra.mxu0 0.0
    %6834 = vmatpush.msra.mxu0 0.0
    %6835 = vmatpush.msra.mxu0 0.0
    %6836 = vmatpush.msra.mxu0 0.0
    %6837 = vmatpush.msra.mxu0 %v6779
    %6838 = vmatpush.msra.mxu0 %v6777
    %6839 = vmatpush.msra.mxu0 %v6775
    %6840 = vmatpush.msra.mxu0 %v6773
    %6841 = vmatpush.msra.mxu0 %v6771
    %6842 = vmatpush.msra.mxu0 %v6769
    %6843 = vmatpush.msra.mxu0 %v6767
    %6844 = vmatpush.msra.mxu0 %v6765
    %6845 = vmatpush.msra.mxu0 %v6763
    %6846 = vmatpush.msra.mxu0 %v6761
    %6847 = vmatmul.f32.gmra.mxu0 %v6802
    %v6848 = vpop.f32.mrf.mxu0
    %v6849 = vadd.f32 0.0, %v6848
    %6850 = vmatmul.f32.gmra.mxu0 %v6805
    %v6851 = vpop.f32.mrf.mxu0
    %v6852 = vadd.f32 0.0, %v6851
    %6853 = vmatmul.f32.gmra.mxu0 %v6808
    %v6854 = vpop.f32.mrf.mxu0
    %v6855 = vadd.f32 0.0, %v6854
    %6856 = vmatmul.f32.gmra.mxu0 %v6811
    %v6857 = vpop.f32.mrf.mxu0
    %v6858 = vadd.f32 0.0, %v6857
    %6859 = vmatmul.f32.gmra.mxu0 %v6814
    %v6860 = vpop.f32.mrf.mxu0
    %v6861 = vadd.f32 0.0, %v6860
    %6862 = vmatmul.f32.gmra.mxu0 %v6817
    %v6863 = vpop.f32.mrf.mxu0
    %v6864 = vadd.f32 0.0, %v6863
    %6865 = vmatmul.f32.gmra.mxu0 %v6820
    %v6866 = vpop.f32.mrf.mxu0
    %v6867 = vadd.f32 0.0, %v6866
    %6868 = vmatmul.f32.gmra.mxu0 %v6823
    %v6869 = vpop.f32.mrf.mxu0
    %v6870 = vadd.f32 0.0, %v6869
    %6871 = vmatmul.f32.gmra.mxu0 %v6826
    %v6872 = vpop.f32.mrf.mxu0
    %v6873 = vadd.f32 0.0, %v6872
    %6874 = vmatmul.f32.gmra.mxu0 %v6829
    %v6875 = vpop.f32.mrf.mxu0
    %v6876 = vadd.f32 0.0, %v6875
    %6877 = vdwg.mxu0
    %6878 = vmatpush.msra.mxu0 0.0
    %6879 = vmatpush.msra.mxu0 0.0
    %6880 = vmatpush.msra.mxu0 0.0
    %6881 = vmatpush.msra.mxu0 0.0
    %6882 = vmatpush.msra.mxu0 0.0
    %6883 = vmatpush.msra.mxu0 0.0
    %6884 = vmatpush.msra.mxu0 %v6780
    %6885 = vmatpush.msra.mxu0 %v6778
    %6886 = vmatpush.msra.mxu0 %v6776
    %6887 = vmatpush.msra.mxu0 %v6774
    %6888 = vmatpush.msra.mxu0 %v6772
    %6889 = vmatpush.msra.mxu0 %v6770
    %6890 = vmatpush.msra.mxu0 %v6768
    %6891 = vmatpush.msra.mxu0 %v6766
    %6892 = vmatpush.msra.mxu0 %v6764
    %6893 = vmatpush.msra.mxu0 %v6762
    %6894 = vmatmul.f32.gmra.mxu0 %v6802
    %v6895 = vpop.f32.mrf.mxu0
    %v6896 = vadd.f32 0.0, %v6895
    %6897 = vmatmul.f32.gmra.mxu0 %v6805
    %v6898 = vpop.f32.mrf.mxu0
    %v6899 = vadd.f32 0.0, %v6898
    %6900 = vmatmul.f32.gmra.mxu0 %v6808
    %v6901 = vpop.f32.mrf.mxu0
    %v6902 = vadd.f32 0.0, %v6901
    %6903 = vmatmul.f32.gmra.mxu0 %v6811
    %v6904 = vpop.f32.mrf.mxu0
    %v6905 = vadd.f32 0.0, %v6904
    %6906 = vmatmul.f32.gmra.mxu0 %v6814
    %v6907 = vpop.f32.mrf.mxu0
    %v6908 = vadd.f32 0.0, %v6907
    %6909 = vmatmul.f32.gmra.mxu0 %v6817
    %v6910 = vpop.f32.mrf.mxu0
    %v6911 = vadd.f32 0.0, %v6910
    %6912 = vmatmul.f32.gmra.mxu0 %v6820
    %v6913 = vpop.f32.mrf.mxu0
    %v6914 = vadd.f32 0.0, %v6913
    %6915 = vmatmul.f32.gmra.mxu0 %v6823
    %v6916 = vpop.f32.mrf.mxu0
    %v6917 = vadd.f32 0.0, %v6916
    %6918 = vmatmul.f32.gmra.mxu0 %v6826
    %v6919 = vpop.f32.mrf.mxu0
    %v6920 = vadd.f32 0.0, %v6919
    %6921 = vmatmul.f32.gmra.mxu0 %v6829
    %v6922 = vpop.f32.mrf.mxu0
    %v6923 = vadd.f32 0.0, %v6922
    %6924 = vdwg.mxu0
    %v6925 = vadd.f32 %v6670, %v6849
    %v6926 = vadd.f32 %v6671, %v6896
    %v6927 = vadd.f32 %v6672, %v6852
    %v6928 = vadd.f32 %v6673, %v6899
    %v6929 = vadd.f32 %v6674, %v6855
    %v6930 = vadd.f32 %v6675, %v6902
    %v6931 = vadd.f32 %v6676, %v6858
    %v6932 = vadd.f32 %v6677, %v6905
    %v6933 = vadd.f32 %v6678, %v6861
    %v6934 = vadd.f32 %v6679, %v6908
    %v6935 = vadd.f32 %v6680, %v6864
    %v6936 = vadd.f32 %v6681, %v6911
    %v6937 = vadd.f32 %v6682, %v6867
    %v6938 = vadd.f32 %v6683, %v6914
    %v6939 = vadd.f32 %v6684, %v6870
    %v6940 = vadd.f32 %v6685, %v6917
    %v6941 = vadd.f32 %v6686, %v6873
    %v6942 = vadd.f32 %v6687, %v6920
    %v6943 = vadd.f32 %v6688, %v6876
    %v6944 = vadd.f32 %v6689, %v6923
    %v6945 = vld [vmem:[#allocation9 + $0x320] sm:$0xff]
    %v6946 = vld [vmem:[#allocation9 + $0x328] sm:$0xff]
    %v6947 = vld [vmem:[#allocation9 + $0x330] sm:$0xff]
    %v6948 = vld [vmem:[#allocation9 + $0x338] sm:$0xff]
    %v6949 = vld [vmem:[#allocation9 + $0x340] sm:$0xff]
    %v6950 = vld [vmem:[#allocation9 + $0x348] sm:$0xff]
    %v6951 = vld [vmem:[#allocation9 + $0x350] sm:$0xff]
    %v6952 = vld [vmem:[#allocation9 + $0x358] sm:$0xff]
    %v6953 = vld [vmem:[#allocation9 + $0x360] sm:$0xff]
    %v6954 = vld [vmem:[#allocation9 + $0x368] sm:$0xff]
    %6955 = vrot.lane.b32.xlu0 %v4599, 92
    %v6956 = vpop.permute.xlu0 %6955
    %6957 = vrot.lane.b32.xlu0 %v4600, 92
    %v6958 = vpop.permute.xlu0 %6957
    %6959 = vrot.lane.b32.xlu0 %v4601, 92
    %v6960 = vpop.permute.xlu0 %6959
    %6961 = vrot.lane.b32.xlu0 %v4602, 92
    %v6962 = vpop.permute.xlu0 %6961
    %6963 = vrot.lane.b32.xlu0 %v4603, 92
    %v6964 = vpop.permute.xlu0 %6963
    %6965 = vrot.lane.b32.xlu0 %v4604, 92
    %v6966 = vpop.permute.xlu0 %6965
    %6967 = vrot.lane.b32.xlu0 %v4605, 92
    %v6968 = vpop.permute.xlu0 %6967
    %6969 = vrot.lane.b32.xlu0 %v4606, 92
    %v6970 = vpop.permute.xlu0 %6969
    %6971 = vrot.lane.b32.xlu0 %v4607, 92
    %v6972 = vpop.permute.xlu0 %6971
    %6973 = vrot.lane.b32.xlu0 %v4608, 92
    %v6974 = vpop.permute.xlu0 %6973
    %6975 = vrot.lane.b32.xlu0 %v4609, 92
    %v6976 = vpop.permute.xlu0 %6975
    %6977 = vrot.lane.b32.xlu0 %v4610, 92
    %v6978 = vpop.permute.xlu0 %6977
    %6979 = vrot.lane.b32.xlu0 %v4611, 92
    %v6980 = vpop.permute.xlu0 %6979
    %6981 = vrot.lane.b32.xlu0 %v4612, 92
    %v6982 = vpop.permute.xlu0 %6981
    %6983 = vrot.lane.b32.xlu0 %v4613, 92
    %v6984 = vpop.permute.xlu0 %6983
    %6985 = vrot.lane.b32.xlu0 %v4614, 92
    %v6986 = vpop.permute.xlu0 %6985
    %6987 = vrot.lane.b32.xlu0 %v4615, 92
    %v6988 = vpop.permute.xlu0 %6987
    %6989 = vrot.lane.b32.xlu0 %v4616, 92
    %v6990 = vpop.permute.xlu0 %6989
    %6991 = vrot.lane.b32.xlu0 %v4617, 92
    %v6992 = vpop.permute.xlu0 %6991
    %6993 = vrot.lane.b32.xlu0 %v4618, 92
    %v6994 = vpop.permute.xlu0 %6993
    %6995 = vrot.lane.b32.xlu0 %v4619, 92
    %v6996 = vpop.permute.xlu0 %6995
    %6997 = vrot.lane.b32.xlu0 %v4620, 92
    %v6998 = vpop.permute.xlu0 %6997
    %6999 = vrot.lane.b32.xlu0 %v4621, 92
    %v7000 = vpop.permute.xlu0 %6999
    %7001 = vrot.lane.b32.xlu0 %v4622, 92
    %v7002 = vpop.permute.xlu0 %7001
    %7003 = vrot.lane.b32.xlu0 %v4623, 92
    %v7004 = vpop.permute.xlu0 %7003
    %7005 = vrot.lane.b32.xlu0 %v4624, 92
    %v7006 = vpop.permute.xlu0 %7005
    %7007 = vrot.lane.b32.xlu0 %v4625, 92
    %v7008 = vpop.permute.xlu0 %7007
    %7009 = vrot.lane.b32.xlu0 %v4626, 92
    %v7010 = vpop.permute.xlu0 %7009
    %7011 = vrot.lane.b32.xlu0 %v4627, 92
    %v7012 = vpop.permute.xlu0 %7011
    %7013 = vrot.lane.b32.xlu0 %v4628, 92
    %v7014 = vpop.permute.xlu0 %7013
    %v7015 = vsel %vm726, %v6956, %v6958
    %v7016 = vsel %vm726, %v6958, %v6960
    %v7017 = vsel %vm726, %v6962, %v6964
    %v7018 = vsel %vm726, %v6964, %v6966
    %v7019 = vsel %vm726, %v6968, %v6970
    %v7020 = vsel %vm726, %v6970, %v6972
    %v7021 = vsel %vm726, %v6974, %v6976
    %v7022 = vsel %vm726, %v6976, %v6978
    %v7023 = vsel %vm726, %v6980, %v6982
    %v7024 = vsel %vm726, %v6982, %v6984
    %v7025 = vsel %vm726, %v6986, %v6988
    %v7026 = vsel %vm726, %v6988, %v6990
    %v7027 = vsel %vm726, %v6992, %v6994
    %v7028 = vsel %vm726, %v6994, %v6996
    %v7029 = vsel %vm726, %v6998, %v7000
    %v7030 = vsel %vm726, %v7000, %v7002
    %v7031 = vsel %vm726, %v7004, %v7006
    %v7032 = vsel %vm726, %v7006, %v7008
    %v7033 = vsel %vm726, %v7010, %v7012
    %v7034 = vsel %vm726, %v7012, %v7014
    %v7056 = vsel %vm4739, %v6945, 0
    %v7059 = vsel %vm4739, %v6946, 0
    %v7062 = vsel %vm4739, %v6947, 0
    %v7065 = vsel %vm4739, %v6948, 0
    %v7068 = vsel %vm4739, %v6949, 0
    %v7071 = vsel %vm4739, %v6950, 0
    %v7074 = vsel %vm4739, %v6951, 0
    %v7077 = vsel %vm4739, %v6952, 0
    %v7080 = vsel %vm4739, %v6953, 0
    %v7083 = vsel %vm4739, %v6954, 0
    %7085 = vmatpush.msra.mxu0 0.0
    %7086 = vmatpush.msra.mxu0 0.0
    %7087 = vmatpush.msra.mxu0 0.0
    %7088 = vmatpush.msra.mxu0 0.0
    %7089 = vmatpush.msra.mxu0 0.0
    %7090 = vmatpush.msra.mxu0 0.0
    %7091 = vmatpush.msra.mxu0 %v7033
    %7092 = vmatpush.msra.mxu0 %v7031
    %7093 = vmatpush.msra.mxu0 %v7029
    %7094 = vmatpush.msra.mxu0 %v7027
    %7095 = vmatpush.msra.mxu0 %v7025
    %7096 = vmatpush.msra.mxu0 %v7023
    %7097 = vmatpush.msra.mxu0 %v7021
    %7098 = vmatpush.msra.mxu0 %v7019
    %7099 = vmatpush.msra.mxu0 %v7017
    %7100 = vmatpush.msra.mxu0 %v7015
    %7101 = vmatmul.f32.gmra.mxu0 %v7056
    %v7102 = vpop.f32.mrf.mxu0
    %v7103 = vadd.f32 0.0, %v7102
    %7104 = vmatmul.f32.gmra.mxu0 %v7059
    %v7105 = vpop.f32.mrf.mxu0
    %v7106 = vadd.f32 0.0, %v7105
    %7107 = vmatmul.f32.gmra.mxu0 %v7062
    %v7108 = vpop.f32.mrf.mxu0
    %v7109 = vadd.f32 0.0, %v7108
    %7110 = vmatmul.f32.gmra.mxu0 %v7065
    %v7111 = vpop.f32.mrf.mxu0
    %v7112 = vadd.f32 0.0, %v7111
    %7113 = vmatmul.f32.gmra.mxu0 %v7068
    %v7114 = vpop.f32.mrf.mxu0
    %v7115 = vadd.f32 0.0, %v7114
    %7116 = vmatmul.f32.gmra.mxu0 %v7071
    %v7117 = vpop.f32.mrf.mxu0
    %v7118 = vadd.f32 0.0, %v7117
    %7119 = vmatmul.f32.gmra.mxu0 %v7074
    %v7120 = vpop.f32.mrf.mxu0
    %v7121 = vadd.f32 0.0, %v7120
    %7122 = vmatmul.f32.gmra.mxu0 %v7077
    %v7123 = vpop.f32.mrf.mxu0
    %v7124 = vadd.f32 0.0, %v7123
    %7125 = vmatmul.f32.gmra.mxu0 %v7080
    %v7126 = vpop.f32.mrf.mxu0
    %v7127 = vadd.f32 0.0, %v7126
    %7128 = vmatmul.f32.gmra.mxu0 %v7083
    %v7129 = vpop.f32.mrf.mxu0
    %v7130 = vadd.f32 0.0, %v7129
    %7131 = vdwg.mxu0
    %7132 = vmatpush.msra.mxu0 0.0
    %7133 = vmatpush.msra.mxu0 0.0
    %7134 = vmatpush.msra.mxu0 0.0
    %7135 = vmatpush.msra.mxu0 0.0
    %7136 = vmatpush.msra.mxu0 0.0
    %7137 = vmatpush.msra.mxu0 0.0
    %7138 = vmatpush.msra.mxu0 %v7034
    %7139 = vmatpush.msra.mxu0 %v7032
    %7140 = vmatpush.msra.mxu0 %v7030
    %7141 = vmatpush.msra.mxu0 %v7028
    %7142 = vmatpush.msra.mxu0 %v7026
    %7143 = vmatpush.msra.mxu0 %v7024
    %7144 = vmatpush.msra.mxu0 %v7022
    %7145 = vmatpush.msra.mxu0 %v7020
    %7146 = vmatpush.msra.mxu0 %v7018
    %7147 = vmatpush.msra.mxu0 %v7016
    %7148 = vmatmul.f32.gmra.mxu0 %v7056
    %v7149 = vpop.f32.mrf.mxu0
    %v7150 = vadd.f32 0.0, %v7149
    %7151 = vmatmul.f32.gmra.mxu0 %v7059
    %v7152 = vpop.f32.mrf.mxu0
    %v7153 = vadd.f32 0.0, %v7152
    %7154 = vmatmul.f32.gmra.mxu0 %v7062
    %v7155 = vpop.f32.mrf.mxu0
    %v7156 = vadd.f32 0.0, %v7155
    %7157 = vmatmul.f32.gmra.mxu0 %v7065
    %v7158 = vpop.f32.mrf.mxu0
    %v7159 = vadd.f32 0.0, %v7158
    %7160 = vmatmul.f32.gmra.mxu0 %v7068
    %v7161 = vpop.f32.mrf.mxu0
    %v7162 = vadd.f32 0.0, %v7161
    %7163 = vmatmul.f32.gmra.mxu0 %v7071
    %v7164 = vpop.f32.mrf.mxu0
    %v7165 = vadd.f32 0.0, %v7164
    %7166 = vmatmul.f32.gmra.mxu0 %v7074
    %v7167 = vpop.f32.mrf.mxu0
    %v7168 = vadd.f32 0.0, %v7167
    %7169 = vmatmul.f32.gmra.mxu0 %v7077
    %v7170 = vpop.f32.mrf.mxu0
    %v7171 = vadd.f32 0.0, %v7170
    %7172 = vmatmul.f32.gmra.mxu0 %v7080
    %v7173 = vpop.f32.mrf.mxu0
    %v7174 = vadd.f32 0.0, %v7173
    %7175 = vmatmul.f32.gmra.mxu0 %v7083
    %v7176 = vpop.f32.mrf.mxu0
    %v7177 = vadd.f32 0.0, %v7176
    %7178 = vdwg.mxu0
    %v7179 = vadd.f32 %v6925, %v7103
    %v7180 = vadd.f32 %v6926, %v7150
    %v7181 = vadd.f32 %v6927, %v7106
    %v7182 = vadd.f32 %v6928, %v7153
    %v7183 = vadd.f32 %v6929, %v7109
    %v7184 = vadd.f32 %v6930, %v7156
    %v7185 = vadd.f32 %v6931, %v7112
    %v7186 = vadd.f32 %v6932, %v7159
    %v7187 = vadd.f32 %v6933, %v7115
    %v7188 = vadd.f32 %v6934, %v7162
    %v7189 = vadd.f32 %v6935, %v7118
    %v7190 = vadd.f32 %v6936, %v7165
    %v7191 = vadd.f32 %v6937, %v7121
    %v7192 = vadd.f32 %v6938, %v7168
    %v7193 = vadd.f32 %v6939, %v7124
    %v7194 = vadd.f32 %v6940, %v7171
    %v7195 = vadd.f32 %v6941, %v7127
    %v7196 = vadd.f32 %v6942, %v7174
    %v7197 = vadd.f32 %v6943, %v7130
    %v7198 = vadd.f32 %v6944, %v7177
    %v7199 = vld [vmem:[#allocation9 + $0x370] sm:$0xff]
    %v7200 = vld [vmem:[#allocation9 + $0x378] sm:$0xff]
    %v7201 = vld [vmem:[#allocation9 + $0x380] sm:$0xff]
    %v7202 = vld [vmem:[#allocation9 + $0x388] sm:$0xff]
    %v7203 = vld [vmem:[#allocation9 + $0x390] sm:$0xff]
    %v7204 = vld [vmem:[#allocation9 + $0x398] sm:$0xff]
    %v7205 = vld [vmem:[#allocation9 + $0x3a0] sm:$0xff]
    %v7206 = vld [vmem:[#allocation9 + $0x3a8] sm:$0xff]
    %v7207 = vld [vmem:[#allocation9 + $0x3b0] sm:$0xff]
    %v7208 = vld [vmem:[#allocation9 + $0x3b8] sm:$0xff]
    %7209 = vrot.lane.b32.xlu0 %v4599, 91
    %v7210 = vpop.permute.xlu0 %7209
    %7211 = vrot.lane.b32.xlu0 %v4600, 91
    %v7212 = vpop.permute.xlu0 %7211
    %7213 = vrot.lane.b32.xlu0 %v4601, 91
    %v7214 = vpop.permute.xlu0 %7213
    %7215 = vrot.lane.b32.xlu0 %v4602, 91
    %v7216 = vpop.permute.xlu0 %7215
    %7217 = vrot.lane.b32.xlu0 %v4603, 91
    %v7218 = vpop.permute.xlu0 %7217
    %7219 = vrot.lane.b32.xlu0 %v4604, 91
    %v7220 = vpop.permute.xlu0 %7219
    %7221 = vrot.lane.b32.xlu0 %v4605, 91
    %v7222 = vpop.permute.xlu0 %7221
    %7223 = vrot.lane.b32.xlu0 %v4606, 91
    %v7224 = vpop.permute.xlu0 %7223
    %7225 = vrot.lane.b32.xlu0 %v4607, 91
    %v7226 = vpop.permute.xlu0 %7225
    %7227 = vrot.lane.b32.xlu0 %v4608, 91
    %v7228 = vpop.permute.xlu0 %7227
    %7229 = vrot.lane.b32.xlu0 %v4609, 91
    %v7230 = vpop.permute.xlu0 %7229
    %7231 = vrot.lane.b32.xlu0 %v4610, 91
    %v7232 = vpop.permute.xlu0 %7231
    %7233 = vrot.lane.b32.xlu0 %v4611, 91
    %v7234 = vpop.permute.xlu0 %7233
    %7235 = vrot.lane.b32.xlu0 %v4612, 91
    %v7236 = vpop.permute.xlu0 %7235
    %7237 = vrot.lane.b32.xlu0 %v4613, 91
    %v7238 = vpop.permute.xlu0 %7237
    %7239 = vrot.lane.b32.xlu0 %v4614, 91
    %v7240 = vpop.permute.xlu0 %7239
    %7241 = vrot.lane.b32.xlu0 %v4615, 91
    %v7242 = vpop.permute.xlu0 %7241
    %7243 = vrot.lane.b32.xlu0 %v4616, 91
    %v7244 = vpop.permute.xlu0 %7243
    %7245 = vrot.lane.b32.xlu0 %v4617, 91
    %v7246 = vpop.permute.xlu0 %7245
    %7247 = vrot.lane.b32.xlu0 %v4618, 91
    %v7248 = vpop.permute.xlu0 %7247
    %7249 = vrot.lane.b32.xlu0 %v4619, 91
    %v7250 = vpop.permute.xlu0 %7249
    %7251 = vrot.lane.b32.xlu0 %v4620, 91
    %v7252 = vpop.permute.xlu0 %7251
    %7253 = vrot.lane.b32.xlu0 %v4621, 91
    %v7254 = vpop.permute.xlu0 %7253
    %7255 = vrot.lane.b32.xlu0 %v4622, 91
    %v7256 = vpop.permute.xlu0 %7255
    %7257 = vrot.lane.b32.xlu0 %v4623, 91
    %v7258 = vpop.permute.xlu0 %7257
    %7259 = vrot.lane.b32.xlu0 %v4624, 91
    %v7260 = vpop.permute.xlu0 %7259
    %7261 = vrot.lane.b32.xlu0 %v4625, 91
    %v7262 = vpop.permute.xlu0 %7261
    %7263 = vrot.lane.b32.xlu0 %v4626, 91
    %v7264 = vpop.permute.xlu0 %7263
    %7265 = vrot.lane.b32.xlu0 %v4627, 91
    %v7266 = vpop.permute.xlu0 %7265
    %7267 = vrot.lane.b32.xlu0 %v4628, 91
    %v7268 = vpop.permute.xlu0 %7267
    %vm7269 = vcmask 744448
    %v7270 = vsel %vm7269, %v7210, %v7212
    %v7271 = vsel %vm7269, %v7212, %v7214
    %v7272 = vsel %vm7269, %v7216, %v7218
    %v7273 = vsel %vm7269, %v7218, %v7220
    %v7274 = vsel %vm7269, %v7222, %v7224
    %v7275 = vsel %vm7269, %v7224, %v7226
    %v7276 = vsel %vm7269, %v7228, %v7230
    %v7277 = vsel %vm7269, %v7230, %v7232
    %v7278 = vsel %vm7269, %v7234, %v7236
    %v7279 = vsel %vm7269, %v7236, %v7238
    %v7280 = vsel %vm7269, %v7240, %v7242
    %v7281 = vsel %vm7269, %v7242, %v7244
    %v7282 = vsel %vm7269, %v7246, %v7248
    %v7283 = vsel %vm7269, %v7248, %v7250
    %v7284 = vsel %vm7269, %v7252, %v7254
    %v7285 = vsel %vm7269, %v7254, %v7256
    %v7286 = vsel %vm7269, %v7258, %v7260
    %v7287 = vsel %vm7269, %v7260, %v7262
    %v7288 = vsel %vm7269, %v7264, %v7266
    %v7289 = vsel %vm7269, %v7266, %v7268
    %v7311 = vsel %vm4739, %v7199, 0
    %v7314 = vsel %vm4739, %v7200, 0
    %v7317 = vsel %vm4739, %v7201, 0
    %v7320 = vsel %vm4739, %v7202, 0
    %v7323 = vsel %vm4739, %v7203, 0
    %v7326 = vsel %vm4739, %v7204, 0
    %v7329 = vsel %vm4739, %v7205, 0
    %v7332 = vsel %vm4739, %v7206, 0
    %v7335 = vsel %vm4739, %v7207, 0
    %v7338 = vsel %vm4739, %v7208, 0
    %7340 = vmatpush.msra.mxu0 0.0
    %7341 = vmatpush.msra.mxu0 0.0
    %7342 = vmatpush.msra.mxu0 0.0
    %7343 = vmatpush.msra.mxu0 0.0
    %7344 = vmatpush.msra.mxu0 0.0
    %7345 = vmatpush.msra.mxu0 0.0
    %7346 = vmatpush.msra.mxu0 %v7288
    %7347 = vmatpush.msra.mxu0 %v7286
    %7348 = vmatpush.msra.mxu0 %v7284
    %7349 = vmatpush.msra.mxu0 %v7282
    %7350 = vmatpush.msra.mxu0 %v7280
    %7351 = vmatpush.msra.mxu0 %v7278
    %7352 = vmatpush.msra.mxu0 %v7276
    %7353 = vmatpush.msra.mxu0 %v7274
    %7354 = vmatpush.msra.mxu0 %v7272
    %7355 = vmatpush.msra.mxu0 %v7270
    %7356 = vmatmul.f32.gmra.mxu0 %v7311
    %v7357 = vpop.f32.mrf.mxu0
    %v7358 = vadd.f32 0.0, %v7357
    %7359 = vmatmul.f32.gmra.mxu0 %v7314
    %v7360 = vpop.f32.mrf.mxu0
    %v7361 = vadd.f32 0.0, %v7360
    %7362 = vmatmul.f32.gmra.mxu0 %v7317
    %v7363 = vpop.f32.mrf.mxu0
    %v7364 = vadd.f32 0.0, %v7363
    %7365 = vmatmul.f32.gmra.mxu0 %v7320
    %v7366 = vpop.f32.mrf.mxu0
    %v7367 = vadd.f32 0.0, %v7366
    %7368 = vmatmul.f32.gmra.mxu0 %v7323
    %v7369 = vpop.f32.mrf.mxu0
    %v7370 = vadd.f32 0.0, %v7369
    %7371 = vmatmul.f32.gmra.mxu0 %v7326
    %v7372 = vpop.f32.mrf.mxu0
    %v7373 = vadd.f32 0.0, %v7372
    %7374 = vmatmul.f32.gmra.mxu0 %v7329
    %v7375 = vpop.f32.mrf.mxu0
    %v7376 = vadd.f32 0.0, %v7375
    %7377 = vmatmul.f32.gmra.mxu0 %v7332
    %v7378 = vpop.f32.mrf.mxu0
    %v7379 = vadd.f32 0.0, %v7378
    %7380 = vmatmul.f32.gmra.mxu0 %v7335
    %v7381 = vpop.f32.mrf.mxu0
    %v7382 = vadd.f32 0.0, %v7381
    %7383 = vmatmul.f32.gmra.mxu0 %v7338
    %v7384 = vpop.f32.mrf.mxu0
    %v7385 = vadd.f32 0.0, %v7384
    %7386 = vdwg.mxu0
    %7387 = vmatpush.msra.mxu0 0.0
    %7388 = vmatpush.msra.mxu0 0.0
    %7389 = vmatpush.msra.mxu0 0.0
    %7390 = vmatpush.msra.mxu0 0.0
    %7391 = vmatpush.msra.mxu0 0.0
    %7392 = vmatpush.msra.mxu0 0.0
    %7393 = vmatpush.msra.mxu0 %v7289
    %7394 = vmatpush.msra.mxu0 %v7287
    %7395 = vmatpush.msra.mxu0 %v7285
    %7396 = vmatpush.msra.mxu0 %v7283
    %7397 = vmatpush.msra.mxu0 %v7281
    %7398 = vmatpush.msra.mxu0 %v7279
    %7399 = vmatpush.msra.mxu0 %v7277
    %7400 = vmatpush.msra.mxu0 %v7275
    %7401 = vmatpush.msra.mxu0 %v7273
    %7402 = vmatpush.msra.mxu0 %v7271
    %7403 = vmatmul.f32.gmra.mxu0 %v7311
    %v7404 = vpop.f32.mrf.mxu0
    %v7405 = vadd.f32 0.0, %v7404
    %7406 = vmatmul.f32.gmra.mxu0 %v7314
    %v7407 = vpop.f32.mrf.mxu0
    %v7408 = vadd.f32 0.0, %v7407
    %7409 = vmatmul.f32.gmra.mxu0 %v7317
    %v7410 = vpop.f32.mrf.mxu0
    %v7411 = vadd.f32 0.0, %v7410
    %7412 = vmatmul.f32.gmra.mxu0 %v7320
    %v7413 = vpop.f32.mrf.mxu0
    %v7414 = vadd.f32 0.0, %v7413
    %7415 = vmatmul.f32.gmra.mxu0 %v7323
    %v7416 = vpop.f32.mrf.mxu0
    %v7417 = vadd.f32 0.0, %v7416
    %7418 = vmatmul.f32.gmra.mxu0 %v7326
    %v7419 = vpop.f32.mrf.mxu0
    %v7420 = vadd.f32 0.0, %v7419
    %7421 = vmatmul.f32.gmra.mxu0 %v7329
    %v7422 = vpop.f32.mrf.mxu0
    %v7423 = vadd.f32 0.0, %v7422
    %7424 = vmatmul.f32.gmra.mxu0 %v7332
    %v7425 = vpop.f32.mrf.mxu0
    %v7426 = vadd.f32 0.0, %v7425
    %7427 = vmatmul.f32.gmra.mxu0 %v7335
    %v7428 = vpop.f32.mrf.mxu0
    %v7429 = vadd.f32 0.0, %v7428
    %7430 = vmatmul.f32.gmra.mxu0 %v7338
    %v7431 = vpop.f32.mrf.mxu0
    %v7432 = vadd.f32 0.0, %v7431
    %7433 = vdwg.mxu0
    %v7434 = vadd.f32 %v7179, %v7358
    %v7435 = vadd.f32 %v7180, %v7405
    %v7436 = vadd.f32 %v7181, %v7361
    %v7437 = vadd.f32 %v7182, %v7408
    %v7438 = vadd.f32 %v7183, %v7364
    %v7439 = vadd.f32 %v7184, %v7411
    %v7440 = vadd.f32 %v7185, %v7367
    %v7441 = vadd.f32 %v7186, %v7414
    %v7442 = vadd.f32 %v7187, %v7370
    %v7443 = vadd.f32 %v7188, %v7417
    %v7444 = vadd.f32 %v7189, %v7373
    %v7445 = vadd.f32 %v7190, %v7420
    %v7446 = vadd.f32 %v7191, %v7376
    %v7447 = vadd.f32 %v7192, %v7423
    %v7448 = vadd.f32 %v7193, %v7379
    %v7449 = vadd.f32 %v7194, %v7426
    %v7450 = vadd.f32 %v7195, %v7382
    %v7451 = vadd.f32 %v7196, %v7429
    %v7452 = vadd.f32 %v7197, %v7385
    %v7453 = vadd.f32 %v7198, %v7432
    %v7454 = vld [vmem:[#allocation9 + $0x3c0] sm:$0xff]
    %v7455 = vld [vmem:[#allocation9 + $0x3c8] sm:$0xff]
    %v7456 = vld [vmem:[#allocation9 + $0x3d0] sm:$0xff]
    %v7457 = vld [vmem:[#allocation9 + $0x3d8] sm:$0xff]
    %v7458 = vld [vmem:[#allocation9 + $0x3e0] sm:$0xff]
    %v7459 = vld [vmem:[#allocation9 + $0x3e8] sm:$0xff]
    %v7460 = vld [vmem:[#allocation9 + $0x3f0] sm:$0xff]
    %v7461 = vld [vmem:[#allocation9 + $0x3f8] sm:$0xff]
    %v7462 = vld [vmem:[#allocation9 + $0x400] sm:$0xff]
    %v7463 = vld [vmem:[#allocation9 + $0x408] sm:$0xff]
    %7464 = vrot.lane.b32.xlu0 %v4599, 90
    %v7465 = vpop.permute.xlu0 %7464
    %7466 = vrot.lane.b32.xlu0 %v4600, 90
    %v7467 = vpop.permute.xlu0 %7466
    %7468 = vrot.lane.b32.xlu0 %v4601, 90
    %v7469 = vpop.permute.xlu0 %7468
    %7470 = vrot.lane.b32.xlu0 %v4602, 90
    %v7471 = vpop.permute.xlu0 %7470
    %7472 = vrot.lane.b32.xlu0 %v4603, 90
    %v7473 = vpop.permute.xlu0 %7472
    %7474 = vrot.lane.b32.xlu0 %v4604, 90
    %v7475 = vpop.permute.xlu0 %7474
    %7476 = vrot.lane.b32.xlu0 %v4605, 90
    %v7477 = vpop.permute.xlu0 %7476
    %7478 = vrot.lane.b32.xlu0 %v4606, 90
    %v7479 = vpop.permute.xlu0 %7478
    %7480 = vrot.lane.b32.xlu0 %v4607, 90
    %v7481 = vpop.permute.xlu0 %7480
    %7482 = vrot.lane.b32.xlu0 %v4608, 90
    %v7483 = vpop.permute.xlu0 %7482
    %7484 = vrot.lane.b32.xlu0 %v4609, 90
    %v7485 = vpop.permute.xlu0 %7484
    %7486 = vrot.lane.b32.xlu0 %v4610, 90
    %v7487 = vpop.permute.xlu0 %7486
    %7488 = vrot.lane.b32.xlu0 %v4611, 90
    %v7489 = vpop.permute.xlu0 %7488
    %7490 = vrot.lane.b32.xlu0 %v4612, 90
    %v7491 = vpop.permute.xlu0 %7490
    %7492 = vrot.lane.b32.xlu0 %v4613, 90
    %v7493 = vpop.permute.xlu0 %7492
    %7494 = vrot.lane.b32.xlu0 %v4614, 90
    %v7495 = vpop.permute.xlu0 %7494
    %7496 = vrot.lane.b32.xlu0 %v4615, 90
    %v7497 = vpop.permute.xlu0 %7496
    %7498 = vrot.lane.b32.xlu0 %v4616, 90
    %v7499 = vpop.permute.xlu0 %7498
    %7500 = vrot.lane.b32.xlu0 %v4617, 90
    %v7501 = vpop.permute.xlu0 %7500
    %7502 = vrot.lane.b32.xlu0 %v4618, 90
    %v7503 = vpop.permute.xlu0 %7502
    %7504 = vrot.lane.b32.xlu0 %v4619, 90
    %v7505 = vpop.permute.xlu0 %7504
    %7506 = vrot.lane.b32.xlu0 %v4620, 90
    %v7507 = vpop.permute.xlu0 %7506
    %7508 = vrot.lane.b32.xlu0 %v4621, 90
    %v7509 = vpop.permute.xlu0 %7508
    %7510 = vrot.lane.b32.xlu0 %v4622, 90
    %v7511 = vpop.permute.xlu0 %7510
    %7512 = vrot.lane.b32.xlu0 %v4623, 90
    %v7513 = vpop.permute.xlu0 %7512
    %7514 = vrot.lane.b32.xlu0 %v4624, 90
    %v7515 = vpop.permute.xlu0 %7514
    %7516 = vrot.lane.b32.xlu0 %v4625, 90
    %v7517 = vpop.permute.xlu0 %7516
    %7518 = vrot.lane.b32.xlu0 %v4626, 90
    %v7519 = vpop.permute.xlu0 %7518
    %7520 = vrot.lane.b32.xlu0 %v4627, 90
    %v7521 = vpop.permute.xlu0 %7520
    %7522 = vrot.lane.b32.xlu0 %v4628, 90
    %v7523 = vpop.permute.xlu0 %7522
    %vm7524 = vcmask 736256
    %v7525 = vsel %vm7524, %v7465, %v7467
    %v7526 = vsel %vm7524, %v7467, %v7469
    %v7527 = vsel %vm7524, %v7471, %v7473
    %v7528 = vsel %vm7524, %v7473, %v7475
    %v7529 = vsel %vm7524, %v7477, %v7479
    %v7530 = vsel %vm7524, %v7479, %v7481
    %v7531 = vsel %vm7524, %v7483, %v7485
    %v7532 = vsel %vm7524, %v7485, %v7487
    %v7533 = vsel %vm7524, %v7489, %v7491
    %v7534 = vsel %vm7524, %v7491, %v7493
    %v7535 = vsel %vm7524, %v7495, %v7497
    %v7536 = vsel %vm7524, %v7497, %v7499
    %v7537 = vsel %vm7524, %v7501, %v7503
    %v7538 = vsel %vm7524, %v7503, %v7505
    %v7539 = vsel %vm7524, %v7507, %v7509
    %v7540 = vsel %vm7524, %v7509, %v7511
    %v7541 = vsel %vm7524, %v7513, %v7515
    %v7542 = vsel %vm7524, %v7515, %v7517
    %v7543 = vsel %vm7524, %v7519, %v7521
    %v7544 = vsel %vm7524, %v7521, %v7523
    %v7566 = vsel %vm4739, %v7454, 0
    %v7569 = vsel %vm4739, %v7455, 0
    %v7572 = vsel %vm4739, %v7456, 0
    %v7575 = vsel %vm4739, %v7457, 0
    %v7578 = vsel %vm4739, %v7458, 0
    %v7581 = vsel %vm4739, %v7459, 0
    %v7584 = vsel %vm4739, %v7460, 0
    %v7587 = vsel %vm4739, %v7461, 0
    %v7590 = vsel %vm4739, %v7462, 0
    %v7593 = vsel %vm4739, %v7463, 0
    %7595 = vmatpush.msra.mxu0 0.0
    %7596 = vmatpush.msra.mxu0 0.0
    %7597 = vmatpush.msra.mxu0 0.0
    %7598 = vmatpush.msra.mxu0 0.0
    %7599 = vmatpush.msra.mxu0 0.0
    %7600 = vmatpush.msra.mxu0 0.0
    %7601 = vmatpush.msra.mxu0 %v7543
    %7602 = vmatpush.msra.mxu0 %v7541
    %7603 = vmatpush.msra.mxu0 %v7539
    %7604 = vmatpush.msra.mxu0 %v7537
    %7605 = vmatpush.msra.mxu0 %v7535
    %7606 = vmatpush.msra.mxu0 %v7533
    %7607 = vmatpush.msra.mxu0 %v7531
    %7608 = vmatpush.msra.mxu0 %v7529
    %7609 = vmatpush.msra.mxu0 %v7527
    %7610 = vmatpush.msra.mxu0 %v7525
    %7611 = vmatmul.f32.gmra.mxu0 %v7566
    %v7612 = vpop.f32.mrf.mxu0
    %v7613 = vadd.f32 0.0, %v7612
    %7614 = vmatmul.f32.gmra.mxu0 %v7569
    %v7615 = vpop.f32.mrf.mxu0
    %v7616 = vadd.f32 0.0, %v7615
    %7617 = vmatmul.f32.gmra.mxu0 %v7572
    %v7618 = vpop.f32.mrf.mxu0
    %v7619 = vadd.f32 0.0, %v7618
    %7620 = vmatmul.f32.gmra.mxu0 %v7575
    %v7621 = vpop.f32.mrf.mxu0
    %v7622 = vadd.f32 0.0, %v7621
    %7623 = vmatmul.f32.gmra.mxu0 %v7578
    %v7624 = vpop.f32.mrf.mxu0
    %v7625 = vadd.f32 0.0, %v7624
    %7626 = vmatmul.f32.gmra.mxu0 %v7581
    %v7627 = vpop.f32.mrf.mxu0
    %v7628 = vadd.f32 0.0, %v7627
    %7629 = vmatmul.f32.gmra.mxu0 %v7584
    %v7630 = vpop.f32.mrf.mxu0
    %v7631 = vadd.f32 0.0, %v7630
    %7632 = vmatmul.f32.gmra.mxu0 %v7587
    %v7633 = vpop.f32.mrf.mxu0
    %v7634 = vadd.f32 0.0, %v7633
    %7635 = vmatmul.f32.gmra.mxu0 %v7590
    %v7636 = vpop.f32.mrf.mxu0
    %v7637 = vadd.f32 0.0, %v7636
    %7638 = vmatmul.f32.gmra.mxu0 %v7593
    %v7639 = vpop.f32.mrf.mxu0
    %v7640 = vadd.f32 0.0, %v7639
    %7641 = vdwg.mxu0
    %7642 = vmatpush.msra.mxu0 0.0
    %7643 = vmatpush.msra.mxu0 0.0
    %7644 = vmatpush.msra.mxu0 0.0
    %7645 = vmatpush.msra.mxu0 0.0
    %7646 = vmatpush.msra.mxu0 0.0
    %7647 = vmatpush.msra.mxu0 0.0
    %7648 = vmatpush.msra.mxu0 %v7544
    %7649 = vmatpush.msra.mxu0 %v7542
    %7650 = vmatpush.msra.mxu0 %v7540
    %7651 = vmatpush.msra.mxu0 %v7538
    %7652 = vmatpush.msra.mxu0 %v7536
    %7653 = vmatpush.msra.mxu0 %v7534
    %7654 = vmatpush.msra.mxu0 %v7532
    %7655 = vmatpush.msra.mxu0 %v7530
    %7656 = vmatpush.msra.mxu0 %v7528
    %7657 = vmatpush.msra.mxu0 %v7526
    %7658 = vmatmul.f32.gmra.mxu0 %v7566
    %v7659 = vpop.f32.mrf.mxu0
    %v7660 = vadd.f32 0.0, %v7659
    %7661 = vmatmul.f32.gmra.mxu0 %v7569
    %v7662 = vpop.f32.mrf.mxu0
    %v7663 = vadd.f32 0.0, %v7662
    %7664 = vmatmul.f32.gmra.mxu0 %v7572
    %v7665 = vpop.f32.mrf.mxu0
    %v7666 = vadd.f32 0.0, %v7665
    %7667 = vmatmul.f32.gmra.mxu0 %v7575
    %v7668 = vpop.f32.mrf.mxu0
    %v7669 = vadd.f32 0.0, %v7668
    %7670 = vmatmul.f32.gmra.mxu0 %v7578
    %v7671 = vpop.f32.mrf.mxu0
    %v7672 = vadd.f32 0.0, %v7671
    %7673 = vmatmul.f32.gmra.mxu0 %v7581
    %v7674 = vpop.f32.mrf.mxu0
    %v7675 = vadd.f32 0.0, %v7674
    %7676 = vmatmul.f32.gmra.mxu0 %v7584
    %v7677 = vpop.f32.mrf.mxu0
    %v7678 = vadd.f32 0.0, %v7677
    %7679 = vmatmul.f32.gmra.mxu0 %v7587
    %v7680 = vpop.f32.mrf.mxu0
    %v7681 = vadd.f32 0.0, %v7680
    %7682 = vmatmul.f32.gmra.mxu0 %v7590
    %v7683 = vpop.f32.mrf.mxu0
    %v7684 = vadd.f32 0.0, %v7683
    %7685 = vmatmul.f32.gmra.mxu0 %v7593
    %v7686 = vpop.f32.mrf.mxu0
    %v7687 = vadd.f32 0.0, %v7686
    %7688 = vdwg.mxu0
    %v7689 = vadd.f32 %v7434, %v7613
    %v7690 = vadd.f32 %v7435, %v7660
    %v7691 = vadd.f32 %v7436, %v7616
    %v7692 = vadd.f32 %v7437, %v7663
    %v7693 = vadd.f32 %v7438, %v7619
    %v7694 = vadd.f32 %v7439, %v7666
    %v7695 = vadd.f32 %v7440, %v7622
    %v7696 = vadd.f32 %v7441, %v7669
    %v7697 = vadd.f32 %v7442, %v7625
    %v7698 = vadd.f32 %v7443, %v7672
    %v7699 = vadd.f32 %v7444, %v7628
    %v7700 = vadd.f32 %v7445, %v7675
    %v7701 = vadd.f32 %v7446, %v7631
    %v7702 = vadd.f32 %v7447, %v7678
    %v7703 = vadd.f32 %v7448, %v7634
    %v7704 = vadd.f32 %v7449, %v7681
    %v7705 = vadd.f32 %v7450, %v7637
    %v7706 = vadd.f32 %v7451, %v7684
    %v7707 = vadd.f32 %v7452, %v7640
    %v7708 = vadd.f32 %v7453, %v7687
    %v7709 = vld [vmem:[#allocation9 + $0x410] sm:$0xff]
    %v7710 = vld [vmem:[#allocation9 + $0x418] sm:$0xff]
    %v7711 = vld [vmem:[#allocation9 + $0x420] sm:$0xff]
    %v7712 = vld [vmem:[#allocation9 + $0x428] sm:$0xff]
    %v7713 = vld [vmem:[#allocation9 + $0x430] sm:$0xff]
    %v7714 = vld [vmem:[#allocation9 + $0x438] sm:$0xff]
    %v7715 = vld [vmem:[#allocation9 + $0x440] sm:$0xff]
    %v7716 = vld [vmem:[#allocation9 + $0x448] sm:$0xff]
    %v7717 = vld [vmem:[#allocation9 + $0x450] sm:$0xff]
    %v7718 = vld [vmem:[#allocation9 + $0x458] sm:$0xff]
    %7719 = vrot.lane.b32.xlu0 %v4599, 89
    %v7720 = vpop.permute.xlu0 %7719
    %7721 = vrot.lane.b32.xlu0 %v4600, 89
    %v7722 = vpop.permute.xlu0 %7721
    %7723 = vrot.lane.b32.xlu0 %v4601, 89
    %v7724 = vpop.permute.xlu0 %7723
    %7725 = vrot.lane.b32.xlu0 %v4602, 89
    %v7726 = vpop.permute.xlu0 %7725
    %7727 = vrot.lane.b32.xlu0 %v4603, 89
    %v7728 = vpop.permute.xlu0 %7727
    %7729 = vrot.lane.b32.xlu0 %v4604, 89
    %v7730 = vpop.permute.xlu0 %7729
    %7731 = vrot.lane.b32.xlu0 %v4605, 89
    %v7732 = vpop.permute.xlu0 %7731
    %7733 = vrot.lane.b32.xlu0 %v4606, 89
    %v7734 = vpop.permute.xlu0 %7733
    %7735 = vrot.lane.b32.xlu0 %v4607, 89
    %v7736 = vpop.permute.xlu0 %7735
    %7737 = vrot.lane.b32.xlu0 %v4608, 89
    %v7738 = vpop.permute.xlu0 %7737
    %7739 = vrot.lane.b32.xlu0 %v4609, 89
    %v7740 = vpop.permute.xlu0 %7739
    %7741 = vrot.lane.b32.xlu0 %v4610, 89
    %v7742 = vpop.permute.xlu0 %7741
    %7743 = vrot.lane.b32.xlu0 %v4611, 89
    %v7744 = vpop.permute.xlu0 %7743
    %7745 = vrot.lane.b32.xlu0 %v4612, 89
    %v7746 = vpop.permute.xlu0 %7745
    %7747 = vrot.lane.b32.xlu0 %v4613, 89
    %v7748 = vpop.permute.xlu0 %7747
    %7749 = vrot.lane.b32.xlu0 %v4614, 89
    %v7750 = vpop.permute.xlu0 %7749
    %7751 = vrot.lane.b32.xlu0 %v4615, 89
    %v7752 = vpop.permute.xlu0 %7751
    %7753 = vrot.lane.b32.xlu0 %v4616, 89
    %v7754 = vpop.permute.xlu0 %7753
    %7755 = vrot.lane.b32.xlu0 %v4617, 89
    %v7756 = vpop.permute.xlu0 %7755
    %7757 = vrot.lane.b32.xlu0 %v4618, 89
    %v7758 = vpop.permute.xlu0 %7757
    %7759 = vrot.lane.b32.xlu0 %v4619, 89
    %v7760 = vpop.permute.xlu0 %7759
    %7761 = vrot.lane.b32.xlu0 %v4620, 89
    %v7762 = vpop.permute.xlu0 %7761
    %7763 = vrot.lane.b32.xlu0 %v4621, 89
    %v7764 = vpop.permute.xlu0 %7763
    %7765 = vrot.lane.b32.xlu0 %v4622, 89
    %v7766 = vpop.permute.xlu0 %7765
    %7767 = vrot.lane.b32.xlu0 %v4623, 89
    %v7768 = vpop.permute.xlu0 %7767
    %7769 = vrot.lane.b32.xlu0 %v4624, 89
    %v7770 = vpop.permute.xlu0 %7769
    %7771 = vrot.lane.b32.xlu0 %v4625, 89
    %v7772 = vpop.permute.xlu0 %7771
    %7773 = vrot.lane.b32.xlu0 %v4626, 89
    %v7774 = vpop.permute.xlu0 %7773
    %7775 = vrot.lane.b32.xlu0 %v4627, 89
    %v7776 = vpop.permute.xlu0 %7775
    %7777 = vrot.lane.b32.xlu0 %v4628, 89
    %v7778 = vpop.permute.xlu0 %7777
    %vm7779 = vcmask 728064
    %v7780 = vsel %vm7779, %v7720, %v7722
    %v7781 = vsel %vm7779, %v7722, %v7724
    %v7782 = vsel %vm7779, %v7726, %v7728
    %v7783 = vsel %vm7779, %v7728, %v7730
    %v7784 = vsel %vm7779, %v7732, %v7734
    %v7785 = vsel %vm7779, %v7734, %v7736
    %v7786 = vsel %vm7779, %v7738, %v7740
    %v7787 = vsel %vm7779, %v7740, %v7742
    %v7788 = vsel %vm7779, %v7744, %v7746
    %v7789 = vsel %vm7779, %v7746, %v7748
    %v7790 = vsel %vm7779, %v7750, %v7752
    %v7791 = vsel %vm7779, %v7752, %v7754
    %v7792 = vsel %vm7779, %v7756, %v7758
    %v7793 = vsel %vm7779, %v7758, %v7760
    %v7794 = vsel %vm7779, %v7762, %v7764
    %v7795 = vsel %vm7779, %v7764, %v7766
    %v7796 = vsel %vm7779, %v7768, %v7770
    %v7797 = vsel %vm7779, %v7770, %v7772
    %v7798 = vsel %vm7779, %v7774, %v7776
    %v7799 = vsel %vm7779, %v7776, %v7778
    %v7821 = vsel %vm4739, %v7709, 0
    %v7824 = vsel %vm4739, %v7710, 0
    %v7827 = vsel %vm4739, %v7711, 0
    %v7830 = vsel %vm4739, %v7712, 0
    %v7833 = vsel %vm4739, %v7713, 0
    %v7836 = vsel %vm4739, %v7714, 0
    %v7839 = vsel %vm4739, %v7715, 0
    %v7842 = vsel %vm4739, %v7716, 0
    %v7845 = vsel %vm4739, %v7717, 0
    %v7848 = vsel %vm4739, %v7718, 0
    %7850 = vmatpush.msra.mxu0 0.0
    %7851 = vmatpush.msra.mxu0 0.0
    %7852 = vmatpush.msra.mxu0 0.0
    %7853 = vmatpush.msra.mxu0 0.0
    %7854 = vmatpush.msra.mxu0 0.0
    %7855 = vmatpush.msra.mxu0 0.0
    %7856 = vmatpush.msra.mxu0 %v7798
    %7857 = vmatpush.msra.mxu0 %v7796
    %7858 = vmatpush.msra.mxu0 %v7794
    %7859 = vmatpush.msra.mxu0 %v7792
    %7860 = vmatpush.msra.mxu0 %v7790
    %7861 = vmatpush.msra.mxu0 %v7788
    %7862 = vmatpush.msra.mxu0 %v7786
    %7863 = vmatpush.msra.mxu0 %v7784
    %7864 = vmatpush.msra.mxu0 %v7782
    %7865 = vmatpush.msra.mxu0 %v7780
    %7866 = vmatmul.f32.gmra.mxu0 %v7821
    %v7867 = vpop.f32.mrf.mxu0
    %v7868 = vadd.f32 0.0, %v7867
    %7869 = vmatmul.f32.gmra.mxu0 %v7824
    %v7870 = vpop.f32.mrf.mxu0
    %v7871 = vadd.f32 0.0, %v7870
    %7872 = vmatmul.f32.gmra.mxu0 %v7827
    %v7873 = vpop.f32.mrf.mxu0
    %v7874 = vadd.f32 0.0, %v7873
    %7875 = vmatmul.f32.gmra.mxu0 %v7830
    %v7876 = vpop.f32.mrf.mxu0
    %v7877 = vadd.f32 0.0, %v7876
    %7878 = vmatmul.f32.gmra.mxu0 %v7833
    %v7879 = vpop.f32.mrf.mxu0
    %v7880 = vadd.f32 0.0, %v7879
    %7881 = vmatmul.f32.gmra.mxu0 %v7836
    %v7882 = vpop.f32.mrf.mxu0
    %v7883 = vadd.f32 0.0, %v7882
    %7884 = vmatmul.f32.gmra.mxu0 %v7839
    %v7885 = vpop.f32.mrf.mxu0
    %v7886 = vadd.f32 0.0, %v7885
    %7887 = vmatmul.f32.gmra.mxu0 %v7842
    %v7888 = vpop.f32.mrf.mxu0
    %v7889 = vadd.f32 0.0, %v7888
    %7890 = vmatmul.f32.gmra.mxu0 %v7845
    %v7891 = vpop.f32.mrf.mxu0
    %v7892 = vadd.f32 0.0, %v7891
    %7893 = vmatmul.f32.gmra.mxu0 %v7848
    %v7894 = vpop.f32.mrf.mxu0
    %v7895 = vadd.f32 0.0, %v7894
    %7896 = vdwg.mxu0
    %7897 = vmatpush.msra.mxu0 0.0
    %7898 = vmatpush.msra.mxu0 0.0
    %7899 = vmatpush.msra.mxu0 0.0
    %7900 = vmatpush.msra.mxu0 0.0
    %7901 = vmatpush.msra.mxu0 0.0
    %7902 = vmatpush.msra.mxu0 0.0
    %7903 = vmatpush.msra.mxu0 %v7799
    %7904 = vmatpush.msra.mxu0 %v7797
    %7905 = vmatpush.msra.mxu0 %v7795
    %7906 = vmatpush.msra.mxu0 %v7793
    %7907 = vmatpush.msra.mxu0 %v7791
    %7908 = vmatpush.msra.mxu0 %v7789
    %7909 = vmatpush.msra.mxu0 %v7787
    %7910 = vmatpush.msra.mxu0 %v7785
    %7911 = vmatpush.msra.mxu0 %v7783
    %7912 = vmatpush.msra.mxu0 %v7781
    %7913 = vmatmul.f32.gmra.mxu0 %v7821
    %v7914 = vpop.f32.mrf.mxu0
    %v7915 = vadd.f32 0.0, %v7914
    %7916 = vmatmul.f32.gmra.mxu0 %v7824
    %v7917 = vpop.f32.mrf.mxu0
    %v7918 = vadd.f32 0.0, %v7917
    %7919 = vmatmul.f32.gmra.mxu0 %v7827
    %v7920 = vpop.f32.mrf.mxu0
    %v7921 = vadd.f32 0.0, %v7920
    %7922 = vmatmul.f32.gmra.mxu0 %v7830
    %v7923 = vpop.f32.mrf.mxu0
    %v7924 = vadd.f32 0.0, %v7923
    %7925 = vmatmul.f32.gmra.mxu0 %v7833
    %v7926 = vpop.f32.mrf.mxu0
    %v7927 = vadd.f32 0.0, %v7926
    %7928 = vmatmul.f32.gmra.mxu0 %v7836
    %v7929 = vpop.f32.mrf.mxu0
    %v7930 = vadd.f32 0.0, %v7929
    %7931 = vmatmul.f32.gmra.mxu0 %v7839
    %v7932 = vpop.f32.mrf.mxu0
    %v7933 = vadd.f32 0.0, %v7932
    %7934 = vmatmul.f32.gmra.mxu0 %v7842
    %v7935 = vpop.f32.mrf.mxu0
    %v7936 = vadd.f32 0.0, %v7935
    %7937 = vmatmul.f32.gmra.mxu0 %v7845
    %v7938 = vpop.f32.mrf.mxu0
    %v7939 = vadd.f32 0.0, %v7938
    %7940 = vmatmul.f32.gmra.mxu0 %v7848
    %v7941 = vpop.f32.mrf.mxu0
    %v7942 = vadd.f32 0.0, %v7941
    %7943 = vdwg.mxu0
    %v7944 = vadd.f32 %v7689, %v7868
    %v7945 = vadd.f32 %v7690, %v7915
    %v7946 = vadd.f32 %v7691, %v7871
    %v7947 = vadd.f32 %v7692, %v7918
    %v7948 = vadd.f32 %v7693, %v7874
    %v7949 = vadd.f32 %v7694, %v7921
    %v7950 = vadd.f32 %v7695, %v7877
    %v7951 = vadd.f32 %v7696, %v7924
    %v7952 = vadd.f32 %v7697, %v7880
    %v7953 = vadd.f32 %v7698, %v7927
    %v7954 = vadd.f32 %v7699, %v7883
    %v7955 = vadd.f32 %v7700, %v7930
    %v7956 = vadd.f32 %v7701, %v7886
    %v7957 = vadd.f32 %v7702, %v7933
    %v7958 = vadd.f32 %v7703, %v7889
    %v7959 = vadd.f32 %v7704, %v7936
    %v7960 = vadd.f32 %v7705, %v7892
    %v7961 = vadd.f32 %v7706, %v7939
    %v7962 = vadd.f32 %v7707, %v7895
    %v7963 = vadd.f32 %v7708, %v7942
    %v7964 = vld [vmem:[#allocation9 + $0x460] sm:$0xff]
    %v7965 = vld [vmem:[#allocation9 + $0x468] sm:$0xff]
    %v7966 = vld [vmem:[#allocation9 + $0x470] sm:$0xff]
    %v7967 = vld [vmem:[#allocation9 + $0x478] sm:$0xff]
    %v7968 = vld [vmem:[#allocation9 + $0x480] sm:$0xff]
    %v7969 = vld [vmem:[#allocation9 + $0x488] sm:$0xff]
    %v7970 = vld [vmem:[#allocation9 + $0x490] sm:$0xff]
    %v7971 = vld [vmem:[#allocation9 + $0x498] sm:$0xff]
    %v7972 = vld [vmem:[#allocation9 + $0x4a0] sm:$0xff]
    %v7973 = vld [vmem:[#allocation9 + $0x4a8] sm:$0xff]
    %7974 = vrot.lane.b32.xlu0 %v4599, 88
    %v7975 = vpop.permute.xlu0 %7974
    %7976 = vrot.lane.b32.xlu0 %v4600, 88
    %v7977 = vpop.permute.xlu0 %7976
    %7978 = vrot.lane.b32.xlu0 %v4601, 88
    %v7979 = vpop.permute.xlu0 %7978
    %7980 = vrot.lane.b32.xlu0 %v4602, 88
    %v7981 = vpop.permute.xlu0 %7980
    %7982 = vrot.lane.b32.xlu0 %v4603, 88
    %v7983 = vpop.permute.xlu0 %7982
    %7984 = vrot.lane.b32.xlu0 %v4604, 88
    %v7985 = vpop.permute.xlu0 %7984
    %7986 = vrot.lane.b32.xlu0 %v4605, 88
    %v7987 = vpop.permute.xlu0 %7986
    %7988 = vrot.lane.b32.xlu0 %v4606, 88
    %v7989 = vpop.permute.xlu0 %7988
    %7990 = vrot.lane.b32.xlu0 %v4607, 88
    %v7991 = vpop.permute.xlu0 %7990
    %7992 = vrot.lane.b32.xlu0 %v4608, 88
    %v7993 = vpop.permute.xlu0 %7992
    %7994 = vrot.lane.b32.xlu0 %v4609, 88
    %v7995 = vpop.permute.xlu0 %7994
    %7996 = vrot.lane.b32.xlu0 %v4610, 88
    %v7997 = vpop.permute.xlu0 %7996
    %7998 = vrot.lane.b32.xlu0 %v4611, 88
    %v7999 = vpop.permute.xlu0 %7998
    %8000 = vrot.lane.b32.xlu0 %v4612, 88
    %v8001 = vpop.permute.xlu0 %8000
    %8002 = vrot.lane.b32.xlu0 %v4613, 88
    %v8003 = vpop.permute.xlu0 %8002
    %8004 = vrot.lane.b32.xlu0 %v4614, 88
    %v8005 = vpop.permute.xlu0 %8004
    %8006 = vrot.lane.b32.xlu0 %v4615, 88
    %v8007 = vpop.permute.xlu0 %8006
    %8008 = vrot.lane.b32.xlu0 %v4616, 88
    %v8009 = vpop.permute.xlu0 %8008
    %8010 = vrot.lane.b32.xlu0 %v4617, 88
    %v8011 = vpop.permute.xlu0 %8010
    %8012 = vrot.lane.b32.xlu0 %v4618, 88
    %v8013 = vpop.permute.xlu0 %8012
    %8014 = vrot.lane.b32.xlu0 %v4619, 88
    %v8015 = vpop.permute.xlu0 %8014
    %8016 = vrot.lane.b32.xlu0 %v4620, 88
    %v8017 = vpop.permute.xlu0 %8016
    %8018 = vrot.lane.b32.xlu0 %v4621, 88
    %v8019 = vpop.permute.xlu0 %8018
    %8020 = vrot.lane.b32.xlu0 %v4622, 88
    %v8021 = vpop.permute.xlu0 %8020
    %8022 = vrot.lane.b32.xlu0 %v4623, 88
    %v8023 = vpop.permute.xlu0 %8022
    %8024 = vrot.lane.b32.xlu0 %v4624, 88
    %v8025 = vpop.permute.xlu0 %8024
    %8026 = vrot.lane.b32.xlu0 %v4625, 88
    %v8027 = vpop.permute.xlu0 %8026
    %8028 = vrot.lane.b32.xlu0 %v4626, 88
    %v8029 = vpop.permute.xlu0 %8028
    %8030 = vrot.lane.b32.xlu0 %v4627, 88
    %v8031 = vpop.permute.xlu0 %8030
    %8032 = vrot.lane.b32.xlu0 %v4628, 88
    %v8033 = vpop.permute.xlu0 %8032
    %vm8034 = vcmask 719872
    %v8035 = vsel %vm8034, %v7975, %v7977
    %v8036 = vsel %vm8034, %v7977, %v7979
    %v8037 = vsel %vm8034, %v7981, %v7983
    %v8038 = vsel %vm8034, %v7983, %v7985
    %v8039 = vsel %vm8034, %v7987, %v7989
    %v8040 = vsel %vm8034, %v7989, %v7991
    %v8041 = vsel %vm8034, %v7993, %v7995
    %v8042 = vsel %vm8034, %v7995, %v7997
    %v8043 = vsel %vm8034, %v7999, %v8001
    %v8044 = vsel %vm8034, %v8001, %v8003
    %v8045 = vsel %vm8034, %v8005, %v8007
    %v8046 = vsel %vm8034, %v8007, %v8009
    %v8047 = vsel %vm8034, %v8011, %v8013
    %v8048 = vsel %vm8034, %v8013, %v8015
    %v8049 = vsel %vm8034, %v8017, %v8019
    %v8050 = vsel %vm8034, %v8019, %v8021
    %v8051 = vsel %vm8034, %v8023, %v8025
    %v8052 = vsel %vm8034, %v8025, %v8027
    %v8053 = vsel %vm8034, %v8029, %v8031
    %v8054 = vsel %vm8034, %v8031, %v8033
    %v8076 = vsel %vm4739, %v7964, 0
    %v8079 = vsel %vm4739, %v7965, 0
    %v8082 = vsel %vm4739, %v7966, 0
    %v8085 = vsel %vm4739, %v7967, 0
    %v8088 = vsel %vm4739, %v7968, 0
    %v8091 = vsel %vm4739, %v7969, 0
    %v8094 = vsel %vm4739, %v7970, 0
    %v8097 = vsel %vm4739, %v7971, 0
    %v8100 = vsel %vm4739, %v7972, 0
    %v8103 = vsel %vm4739, %v7973, 0
    %8105 = vmatpush.msra.mxu0 0.0
    %8106 = vmatpush.msra.mxu0 0.0
    %8107 = vmatpush.msra.mxu0 0.0
    %8108 = vmatpush.msra.mxu0 0.0
    %8109 = vmatpush.msra.mxu0 0.0
    %8110 = vmatpush.msra.mxu0 0.0
    %8111 = vmatpush.msra.mxu0 %v8053
    %8112 = vmatpush.msra.mxu0 %v8051
    %8113 = vmatpush.msra.mxu0 %v8049
    %8114 = vmatpush.msra.mxu0 %v8047
    %8115 = vmatpush.msra.mxu0 %v8045
    %8116 = vmatpush.msra.mxu0 %v8043
    %8117 = vmatpush.msra.mxu0 %v8041
    %8118 = vmatpush.msra.mxu0 %v8039
    %8119 = vmatpush.msra.mxu0 %v8037
    %8120 = vmatpush.msra.mxu0 %v8035
    %8121 = vmatmul.f32.gmra.mxu0 %v8076
    %v8122 = vpop.f32.mrf.mxu0
    %v8123 = vadd.f32 0.0, %v8122
    %8124 = vmatmul.f32.gmra.mxu0 %v8079
    %v8125 = vpop.f32.mrf.mxu0
    %v8126 = vadd.f32 0.0, %v8125
    %8127 = vmatmul.f32.gmra.mxu0 %v8082
    %v8128 = vpop.f32.mrf.mxu0
    %v8129 = vadd.f32 0.0, %v8128
    %8130 = vmatmul.f32.gmra.mxu0 %v8085
    %v8131 = vpop.f32.mrf.mxu0
    %v8132 = vadd.f32 0.0, %v8131
    %8133 = vmatmul.f32.gmra.mxu0 %v8088
    %v8134 = vpop.f32.mrf.mxu0
    %v8135 = vadd.f32 0.0, %v8134
    %8136 = vmatmul.f32.gmra.mxu0 %v8091
    %v8137 = vpop.f32.mrf.mxu0
    %v8138 = vadd.f32 0.0, %v8137
    %8139 = vmatmul.f32.gmra.mxu0 %v8094
    %v8140 = vpop.f32.mrf.mxu0
    %v8141 = vadd.f32 0.0, %v8140
    %8142 = vmatmul.f32.gmra.mxu0 %v8097
    %v8143 = vpop.f32.mrf.mxu0
    %v8144 = vadd.f32 0.0, %v8143
    %8145 = vmatmul.f32.gmra.mxu0 %v8100
    %v8146 = vpop.f32.mrf.mxu0
    %v8147 = vadd.f32 0.0, %v8146
    %8148 = vmatmul.f32.gmra.mxu0 %v8103
    %v8149 = vpop.f32.mrf.mxu0
    %v8150 = vadd.f32 0.0, %v8149
    %8151 = vdwg.mxu0
    %8152 = vmatpush.msra.mxu0 0.0
    %8153 = vmatpush.msra.mxu0 0.0
    %8154 = vmatpush.msra.mxu0 0.0
    %8155 = vmatpush.msra.mxu0 0.0
    %8156 = vmatpush.msra.mxu0 0.0
    %8157 = vmatpush.msra.mxu0 0.0
    %8158 = vmatpush.msra.mxu0 %v8054
    %8159 = vmatpush.msra.mxu0 %v8052
    %8160 = vmatpush.msra.mxu0 %v8050
    %8161 = vmatpush.msra.mxu0 %v8048
    %8162 = vmatpush.msra.mxu0 %v8046
    %8163 = vmatpush.msra.mxu0 %v8044
    %8164 = vmatpush.msra.mxu0 %v8042
    %8165 = vmatpush.msra.mxu0 %v8040
    %8166 = vmatpush.msra.mxu0 %v8038
    %8167 = vmatpush.msra.mxu0 %v8036
    %8168 = vmatmul.f32.gmra.mxu0 %v8076
    %v8169 = vpop.f32.mrf.mxu0
    %v8170 = vadd.f32 0.0, %v8169
    %8171 = vmatmul.f32.gmra.mxu0 %v8079
    %v8172 = vpop.f32.mrf.mxu0
    %v8173 = vadd.f32 0.0, %v8172
    %8174 = vmatmul.f32.gmra.mxu0 %v8082
    %v8175 = vpop.f32.mrf.mxu0
    %v8176 = vadd.f32 0.0, %v8175
    %8177 = vmatmul.f32.gmra.mxu0 %v8085
    %v8178 = vpop.f32.mrf.mxu0
    %v8179 = vadd.f32 0.0, %v8178
    %8180 = vmatmul.f32.gmra.mxu0 %v8088
    %v8181 = vpop.f32.mrf.mxu0
    %v8182 = vadd.f32 0.0, %v8181
    %8183 = vmatmul.f32.gmra.mxu0 %v8091
    %v8184 = vpop.f32.mrf.mxu0
    %v8185 = vadd.f32 0.0, %v8184
    %8186 = vmatmul.f32.gmra.mxu0 %v8094
    %v8187 = vpop.f32.mrf.mxu0
    %v8188 = vadd.f32 0.0, %v8187
    %8189 = vmatmul.f32.gmra.mxu0 %v8097
    %v8190 = vpop.f32.mrf.mxu0
    %v8191 = vadd.f32 0.0, %v8190
    %8192 = vmatmul.f32.gmra.mxu0 %v8100
    %v8193 = vpop.f32.mrf.mxu0
    %v8194 = vadd.f32 0.0, %v8193
    %8195 = vmatmul.f32.gmra.mxu0 %v8103
    %v8196 = vpop.f32.mrf.mxu0
    %v8197 = vadd.f32 0.0, %v8196
    %8198 = vdwg.mxu0
    %v8199 = vadd.f32 %v7944, %v8123
    %v8200 = vadd.f32 %v7945, %v8170
    %v8201 = vadd.f32 %v7946, %v8126
    %v8202 = vadd.f32 %v7947, %v8173
    %v8203 = vadd.f32 %v7948, %v8129
    %v8204 = vadd.f32 %v7949, %v8176
    %v8205 = vadd.f32 %v7950, %v8132
    %v8206 = vadd.f32 %v7951, %v8179
    %v8207 = vadd.f32 %v7952, %v8135
    %v8208 = vadd.f32 %v7953, %v8182
    %v8209 = vadd.f32 %v7954, %v8138
    %v8210 = vadd.f32 %v7955, %v8185
    %v8211 = vadd.f32 %v7956, %v8141
    %v8212 = vadd.f32 %v7957, %v8188
    %v8213 = vadd.f32 %v7958, %v8144
    %v8214 = vadd.f32 %v7959, %v8191
    %v8215 = vadd.f32 %v7960, %v8147
    %v8216 = vadd.f32 %v7961, %v8194
    %v8217 = vadd.f32 %v7962, %v8150
    %v8218 = vadd.f32 %v7963, %v8197
    %v8219 = vld [vmem:[#allocation9 + $0x4b0] sm:$0xff]
    %v8220 = vld [vmem:[#allocation9 + $0x4b8] sm:$0xff]
    %v8221 = vld [vmem:[#allocation9 + $0x4c0] sm:$0xff]
    %v8222 = vld [vmem:[#allocation9 + $0x4c8] sm:$0xff]
    %v8223 = vld [vmem:[#allocation9 + $0x4d0] sm:$0xff]
    %v8224 = vld [vmem:[#allocation9 + $0x4d8] sm:$0xff]
    %v8225 = vld [vmem:[#allocation9 + $0x4e0] sm:$0xff]
    %v8226 = vld [vmem:[#allocation9 + $0x4e8] sm:$0xff]
    %v8227 = vld [vmem:[#allocation9 + $0x4f0] sm:$0xff]
    %v8228 = vld [vmem:[#allocation9 + $0x4f8] sm:$0xff]
    %8229 = vrot.lane.b32.xlu0 %v4599, 74
    %v8230 = vpop.permute.xlu0 %8229
    %8231 = vrot.lane.b32.xlu0 %v4600, 74
    %v8232 = vpop.permute.xlu0 %8231
    %8233 = vrot.lane.b32.xlu0 %v4601, 74
    %v8234 = vpop.permute.xlu0 %8233
    %8235 = vrot.lane.b32.xlu0 %v4602, 74
    %v8236 = vpop.permute.xlu0 %8235
    %8237 = vrot.lane.b32.xlu0 %v4603, 74
    %v8238 = vpop.permute.xlu0 %8237
    %8239 = vrot.lane.b32.xlu0 %v4604, 74
    %v8240 = vpop.permute.xlu0 %8239
    %8241 = vrot.lane.b32.xlu0 %v4605, 74
    %v8242 = vpop.permute.xlu0 %8241
    %8243 = vrot.lane.b32.xlu0 %v4606, 74
    %v8244 = vpop.permute.xlu0 %8243
    %8245 = vrot.lane.b32.xlu0 %v4607, 74
    %v8246 = vpop.permute.xlu0 %8245
    %8247 = vrot.lane.b32.xlu0 %v4608, 74
    %v8248 = vpop.permute.xlu0 %8247
    %8249 = vrot.lane.b32.xlu0 %v4609, 74
    %v8250 = vpop.permute.xlu0 %8249
    %8251 = vrot.lane.b32.xlu0 %v4610, 74
    %v8252 = vpop.permute.xlu0 %8251
    %8253 = vrot.lane.b32.xlu0 %v4611, 74
    %v8254 = vpop.permute.xlu0 %8253
    %8255 = vrot.lane.b32.xlu0 %v4612, 74
    %v8256 = vpop.permute.xlu0 %8255
    %8257 = vrot.lane.b32.xlu0 %v4613, 74
    %v8258 = vpop.permute.xlu0 %8257
    %8259 = vrot.lane.b32.xlu0 %v4614, 74
    %v8260 = vpop.permute.xlu0 %8259
    %8261 = vrot.lane.b32.xlu0 %v4615, 74
    %v8262 = vpop.permute.xlu0 %8261
    %8263 = vrot.lane.b32.xlu0 %v4616, 74
    %v8264 = vpop.permute.xlu0 %8263
    %8265 = vrot.lane.b32.xlu0 %v4617, 74
    %v8266 = vpop.permute.xlu0 %8265
    %8267 = vrot.lane.b32.xlu0 %v4618, 74
    %v8268 = vpop.permute.xlu0 %8267
    %8269 = vrot.lane.b32.xlu0 %v4619, 74
    %v8270 = vpop.permute.xlu0 %8269
    %8271 = vrot.lane.b32.xlu0 %v4620, 74
    %v8272 = vpop.permute.xlu0 %8271
    %8273 = vrot.lane.b32.xlu0 %v4621, 74
    %v8274 = vpop.permute.xlu0 %8273
    %8275 = vrot.lane.b32.xlu0 %v4622, 74
    %v8276 = vpop.permute.xlu0 %8275
    %8277 = vrot.lane.b32.xlu0 %v4623, 74
    %v8278 = vpop.permute.xlu0 %8277
    %8279 = vrot.lane.b32.xlu0 %v4624, 74
    %v8280 = vpop.permute.xlu0 %8279
    %8281 = vrot.lane.b32.xlu0 %v4625, 74
    %v8282 = vpop.permute.xlu0 %8281
    %8283 = vrot.lane.b32.xlu0 %v4626, 74
    %v8284 = vpop.permute.xlu0 %8283
    %8285 = vrot.lane.b32.xlu0 %v4627, 74
    %v8286 = vpop.permute.xlu0 %8285
    %8287 = vrot.lane.b32.xlu0 %v4628, 74
    %v8288 = vpop.permute.xlu0 %8287
    %vm8289 = vcmask 605184
    %v8290 = vsel %vm8289, %v8230, %v8232
    %v8291 = vsel %vm8289, %v8232, %v8234
    %v8292 = vsel %vm8289, %v8236, %v8238
    %v8293 = vsel %vm8289, %v8238, %v8240
    %v8294 = vsel %vm8289, %v8242, %v8244
    %v8295 = vsel %vm8289, %v8244, %v8246
    %v8296 = vsel %vm8289, %v8248, %v8250
    %v8297 = vsel %vm8289, %v8250, %v8252
    %v8298 = vsel %vm8289, %v8254, %v8256
    %v8299 = vsel %vm8289, %v8256, %v8258
    %v8300 = vsel %vm8289, %v8260, %v8262
    %v8301 = vsel %vm8289, %v8262, %v8264
    %v8302 = vsel %vm8289, %v8266, %v8268
    %v8303 = vsel %vm8289, %v8268, %v8270
    %v8304 = vsel %vm8289, %v8272, %v8274
    %v8305 = vsel %vm8289, %v8274, %v8276
    %v8306 = vsel %vm8289, %v8278, %v8280
    %v8307 = vsel %vm8289, %v8280, %v8282
    %v8308 = vsel %vm8289, %v8284, %v8286
    %v8309 = vsel %vm8289, %v8286, %v8288
    %v8331 = vsel %vm4739, %v8219, 0
    %v8334 = vsel %vm4739, %v8220, 0
    %v8337 = vsel %vm4739, %v8221, 0
    %v8340 = vsel %vm4739, %v8222, 0
    %v8343 = vsel %vm4739, %v8223, 0
    %v8346 = vsel %vm4739, %v8224, 0
    %v8349 = vsel %vm4739, %v8225, 0
    %v8352 = vsel %vm4739, %v8226, 0
    %v8355 = vsel %vm4739, %v8227, 0
    %v8358 = vsel %vm4739, %v8228, 0
    %8360 = vmatpush.msra.mxu0 0.0
    %8361 = vmatpush.msra.mxu0 0.0
    %8362 = vmatpush.msra.mxu0 0.0
    %8363 = vmatpush.msra.mxu0 0.0
    %8364 = vmatpush.msra.mxu0 0.0
    %8365 = vmatpush.msra.mxu0 0.0
    %8366 = vmatpush.msra.mxu0 %v8308
    %8367 = vmatpush.msra.mxu0 %v8306
    %8368 = vmatpush.msra.mxu0 %v8304
    %8369 = vmatpush.msra.mxu0 %v8302
    %8370 = vmatpush.msra.mxu0 %v8300
    %8371 = vmatpush.msra.mxu0 %v8298
    %8372 = vmatpush.msra.mxu0 %v8296
    %8373 = vmatpush.msra.mxu0 %v8294
    %8374 = vmatpush.msra.mxu0 %v8292
    %8375 = vmatpush.msra.mxu0 %v8290
    %8376 = vmatmul.f32.gmra.mxu0 %v8331
    %v8377 = vpop.f32.mrf.mxu0
    %v8378 = vadd.f32 0.0, %v8377
    %8379 = vmatmul.f32.gmra.mxu0 %v8334
    %v8380 = vpop.f32.mrf.mxu0
    %v8381 = vadd.f32 0.0, %v8380
    %8382 = vmatmul.f32.gmra.mxu0 %v8337
    %v8383 = vpop.f32.mrf.mxu0
    %v8384 = vadd.f32 0.0, %v8383
    %8385 = vmatmul.f32.gmra.mxu0 %v8340
    %v8386 = vpop.f32.mrf.mxu0
    %v8387 = vadd.f32 0.0, %v8386
    %8388 = vmatmul.f32.gmra.mxu0 %v8343
    %v8389 = vpop.f32.mrf.mxu0
    %v8390 = vadd.f32 0.0, %v8389
    %8391 = vmatmul.f32.gmra.mxu0 %v8346
    %v8392 = vpop.f32.mrf.mxu0
    %v8393 = vadd.f32 0.0, %v8392
    %8394 = vmatmul.f32.gmra.mxu0 %v8349
    %v8395 = vpop.f32.mrf.mxu0
    %v8396 = vadd.f32 0.0, %v8395
    %8397 = vmatmul.f32.gmra.mxu0 %v8352
    %v8398 = vpop.f32.mrf.mxu0
    %v8399 = vadd.f32 0.0, %v8398
    %8400 = vmatmul.f32.gmra.mxu0 %v8355
    %v8401 = vpop.f32.mrf.mxu0
    %v8402 = vadd.f32 0.0, %v8401
    %8403 = vmatmul.f32.gmra.mxu0 %v8358
    %v8404 = vpop.f32.mrf.mxu0
    %v8405 = vadd.f32 0.0, %v8404
    %8406 = vdwg.mxu0
    %8407 = vmatpush.msra.mxu0 0.0
    %8408 = vmatpush.msra.mxu0 0.0
    %8409 = vmatpush.msra.mxu0 0.0
    %8410 = vmatpush.msra.mxu0 0.0
    %8411 = vmatpush.msra.mxu0 0.0
    %8412 = vmatpush.msra.mxu0 0.0
    %8413 = vmatpush.msra.mxu0 %v8309
    %8414 = vmatpush.msra.mxu0 %v8307
    %8415 = vmatpush.msra.mxu0 %v8305
    %8416 = vmatpush.msra.mxu0 %v8303
    %8417 = vmatpush.msra.mxu0 %v8301
    %8418 = vmatpush.msra.mxu0 %v8299
    %8419 = vmatpush.msra.mxu0 %v8297
    %8420 = vmatpush.msra.mxu0 %v8295
    %8421 = vmatpush.msra.mxu0 %v8293
    %8422 = vmatpush.msra.mxu0 %v8291
    %8423 = vmatmul.f32.gmra.mxu0 %v8331
    %v8424 = vpop.f32.mrf.mxu0
    %v8425 = vadd.f32 0.0, %v8424
    %8426 = vmatmul.f32.gmra.mxu0 %v8334
    %v8427 = vpop.f32.mrf.mxu0
    %v8428 = vadd.f32 0.0, %v8427
    %8429 = vmatmul.f32.gmra.mxu0 %v8337
    %v8430 = vpop.f32.mrf.mxu0
    %v8431 = vadd.f32 0.0, %v8430
    %8432 = vmatmul.f32.gmra.mxu0 %v8340
    %v8433 = vpop.f32.mrf.mxu0
    %v8434 = vadd.f32 0.0, %v8433
    %8435 = vmatmul.f32.gmra.mxu0 %v8343
    %v8436 = vpop.f32.mrf.mxu0
    %v8437 = vadd.f32 0.0, %v8436
    %8438 = vmatmul.f32.gmra.mxu0 %v8346
    %v8439 = vpop.f32.mrf.mxu0
    %v8440 = vadd.f32 0.0, %v8439
    %8441 = vmatmul.f32.gmra.mxu0 %v8349
    %v8442 = vpop.f32.mrf.mxu0
    %v8443 = vadd.f32 0.0, %v8442
    %8444 = vmatmul.f32.gmra.mxu0 %v8352
    %v8445 = vpop.f32.mrf.mxu0
    %v8446 = vadd.f32 0.0, %v8445
    %8447 = vmatmul.f32.gmra.mxu0 %v8355
    %v8448 = vpop.f32.mrf.mxu0
    %v8449 = vadd.f32 0.0, %v8448
    %8450 = vmatmul.f32.gmra.mxu0 %v8358
    %v8451 = vpop.f32.mrf.mxu0
    %v8452 = vadd.f32 0.0, %v8451
    %8453 = vdwg.mxu0
    %v8454 = vadd.f32 %v8199, %v8378
    %v8455 = vadd.f32 %v8200, %v8425
    %v8456 = vadd.f32 %v8201, %v8381
    %v8457 = vadd.f32 %v8202, %v8428
    %v8458 = vadd.f32 %v8203, %v8384
    %v8459 = vadd.f32 %v8204, %v8431
    %v8460 = vadd.f32 %v8205, %v8387
    %v8461 = vadd.f32 %v8206, %v8434
    %v8462 = vadd.f32 %v8207, %v8390
    %v8463 = vadd.f32 %v8208, %v8437
    %v8464 = vadd.f32 %v8209, %v8393
    %v8465 = vadd.f32 %v8210, %v8440
    %v8466 = vadd.f32 %v8211, %v8396
    %v8467 = vadd.f32 %v8212, %v8443
    %v8468 = vadd.f32 %v8213, %v8399
    %v8469 = vadd.f32 %v8214, %v8446
    %v8470 = vadd.f32 %v8215, %v8402
    %v8471 = vadd.f32 %v8216, %v8449
    %v8472 = vadd.f32 %v8217, %v8405
    %v8473 = vadd.f32 %v8218, %v8452
    %v8474 = vld [vmem:[#allocation9 + $0x500] sm:$0xff]
    %v8475 = vld [vmem:[#allocation9 + $0x508] sm:$0xff]
    %v8476 = vld [vmem:[#allocation9 + $0x510] sm:$0xff]
    %v8477 = vld [vmem:[#allocation9 + $0x518] sm:$0xff]
    %v8478 = vld [vmem:[#allocation9 + $0x520] sm:$0xff]
    %v8479 = vld [vmem:[#allocation9 + $0x528] sm:$0xff]
    %v8480 = vld [vmem:[#allocation9 + $0x530] sm:$0xff]
    %v8481 = vld [vmem:[#allocation9 + $0x538] sm:$0xff]
    %v8482 = vld [vmem:[#allocation9 + $0x540] sm:$0xff]
    %v8483 = vld [vmem:[#allocation9 + $0x548] sm:$0xff]
    %8484 = vrot.lane.b32.xlu0 %v4599, 73
    %v8485 = vpop.permute.xlu0 %8484
    %8486 = vrot.lane.b32.xlu0 %v4600, 73
    %v8487 = vpop.permute.xlu0 %8486
    %8488 = vrot.lane.b32.xlu0 %v4601, 73
    %v8489 = vpop.permute.xlu0 %8488
    %8490 = vrot.lane.b32.xlu0 %v4602, 73
    %v8491 = vpop.permute.xlu0 %8490
    %8492 = vrot.lane.b32.xlu0 %v4603, 73
    %v8493 = vpop.permute.xlu0 %8492
    %8494 = vrot.lane.b32.xlu0 %v4604, 73
    %v8495 = vpop.permute.xlu0 %8494
    %8496 = vrot.lane.b32.xlu0 %v4605, 73
    %v8497 = vpop.permute.xlu0 %8496
    %8498 = vrot.lane.b32.xlu0 %v4606, 73
    %v8499 = vpop.permute.xlu0 %8498
    %8500 = vrot.lane.b32.xlu0 %v4607, 73
    %v8501 = vpop.permute.xlu0 %8500
    %8502 = vrot.lane.b32.xlu0 %v4608, 73
    %v8503 = vpop.permute.xlu0 %8502
    %8504 = vrot.lane.b32.xlu0 %v4609, 73
    %v8505 = vpop.permute.xlu0 %8504
    %8506 = vrot.lane.b32.xlu0 %v4610, 73
    %v8507 = vpop.permute.xlu0 %8506
    %8508 = vrot.lane.b32.xlu0 %v4611, 73
    %v8509 = vpop.permute.xlu0 %8508
    %8510 = vrot.lane.b32.xlu0 %v4612, 73
    %v8511 = vpop.permute.xlu0 %8510
    %8512 = vrot.lane.b32.xlu0 %v4613, 73
    %v8513 = vpop.permute.xlu0 %8512
    %8514 = vrot.lane.b32.xlu0 %v4614, 73
    %v8515 = vpop.permute.xlu0 %8514
    %8516 = vrot.lane.b32.xlu0 %v4615, 73
    %v8517 = vpop.permute.xlu0 %8516
    %8518 = vrot.lane.b32.xlu0 %v4616, 73
    %v8519 = vpop.permute.xlu0 %8518
    %8520 = vrot.lane.b32.xlu0 %v4617, 73
    %v8521 = vpop.permute.xlu0 %8520
    %8522 = vrot.lane.b32.xlu0 %v4618, 73
    %v8523 = vpop.permute.xlu0 %8522
    %8524 = vrot.lane.b32.xlu0 %v4619, 73
    %v8525 = vpop.permute.xlu0 %8524
    %8526 = vrot.lane.b32.xlu0 %v4620, 73
    %v8527 = vpop.permute.xlu0 %8526
    %8528 = vrot.lane.b32.xlu0 %v4621, 73
    %v8529 = vpop.permute.xlu0 %8528
    %8530 = vrot.lane.b32.xlu0 %v4622, 73
    %v8531 = vpop.permute.xlu0 %8530
    %8532 = vrot.lane.b32.xlu0 %v4623, 73
    %v8533 = vpop.permute.xlu0 %8532
    %8534 = vrot.lane.b32.xlu0 %v4624, 73
    %v8535 = vpop.permute.xlu0 %8534
    %8536 = vrot.lane.b32.xlu0 %v4625, 73
    %v8537 = vpop.permute.xlu0 %8536
    %8538 = vrot.lane.b32.xlu0 %v4626, 73
    %v8539 = vpop.permute.xlu0 %8538
    %8540 = vrot.lane.b32.xlu0 %v4627, 73
    %v8541 = vpop.permute.xlu0 %8540
    %8542 = vrot.lane.b32.xlu0 %v4628, 73
    %v8543 = vpop.permute.xlu0 %8542
    %vm8544 = vcmask 596992
    %v8545 = vsel %vm8544, %v8485, %v8487
    %v8546 = vsel %vm8544, %v8487, %v8489
    %v8547 = vsel %vm8544, %v8491, %v8493
    %v8548 = vsel %vm8544, %v8493, %v8495
    %v8549 = vsel %vm8544, %v8497, %v8499
    %v8550 = vsel %vm8544, %v8499, %v8501
    %v8551 = vsel %vm8544, %v8503, %v8505
    %v8552 = vsel %vm8544, %v8505, %v8507
    %v8553 = vsel %vm8544, %v8509, %v8511
    %v8554 = vsel %vm8544, %v8511, %v8513
    %v8555 = vsel %vm8544, %v8515, %v8517
    %v8556 = vsel %vm8544, %v8517, %v8519
    %v8557 = vsel %vm8544, %v8521, %v8523
    %v8558 = vsel %vm8544, %v8523, %v8525
    %v8559 = vsel %vm8544, %v8527, %v8529
    %v8560 = vsel %vm8544, %v8529, %v8531
    %v8561 = vsel %vm8544, %v8533, %v8535
    %v8562 = vsel %vm8544, %v8535, %v8537
    %v8563 = vsel %vm8544, %v8539, %v8541
    %v8564 = vsel %vm8544, %v8541, %v8543
    %v8586 = vsel %vm4739, %v8474, 0
    %v8589 = vsel %vm4739, %v8475, 0
    %v8592 = vsel %vm4739, %v8476, 0
    %v8595 = vsel %vm4739, %v8477, 0
    %v8598 = vsel %vm4739, %v8478, 0
    %v8601 = vsel %vm4739, %v8479, 0
    %v8604 = vsel %vm4739, %v8480, 0
    %v8607 = vsel %vm4739, %v8481, 0
    %v8610 = vsel %vm4739, %v8482, 0
    %v8613 = vsel %vm4739, %v8483, 0
    %8615 = vmatpush.msra.mxu0 0.0
    %8616 = vmatpush.msra.mxu0 0.0
    %8617 = vmatpush.msra.mxu0 0.0
    %8618 = vmatpush.msra.mxu0 0.0
    %8619 = vmatpush.msra.mxu0 0.0
    %8620 = vmatpush.msra.mxu0 0.0
    %8621 = vmatpush.msra.mxu0 %v8563
    %8622 = vmatpush.msra.mxu0 %v8561
    %8623 = vmatpush.msra.mxu0 %v8559
    %8624 = vmatpush.msra.mxu0 %v8557
    %8625 = vmatpush.msra.mxu0 %v8555
    %8626 = vmatpush.msra.mxu0 %v8553
    %8627 = vmatpush.msra.mxu0 %v8551
    %8628 = vmatpush.msra.mxu0 %v8549
    %8629 = vmatpush.msra.mxu0 %v8547
    %8630 = vmatpush.msra.mxu0 %v8545
    %8631 = vmatmul.f32.gmra.mxu0 %v8586
    %v8632 = vpop.f32.mrf.mxu0
    %v8633 = vadd.f32 0.0, %v8632
    %8634 = vmatmul.f32.gmra.mxu0 %v8589
    %v8635 = vpop.f32.mrf.mxu0
    %v8636 = vadd.f32 0.0, %v8635
    %8637 = vmatmul.f32.gmra.mxu0 %v8592
    %v8638 = vpop.f32.mrf.mxu0
    %v8639 = vadd.f32 0.0, %v8638
    %8640 = vmatmul.f32.gmra.mxu0 %v8595
    %v8641 = vpop.f32.mrf.mxu0
    %v8642 = vadd.f32 0.0, %v8641
    %8643 = vmatmul.f32.gmra.mxu0 %v8598
    %v8644 = vpop.f32.mrf.mxu0
    %v8645 = vadd.f32 0.0, %v8644
    %8646 = vmatmul.f32.gmra.mxu0 %v8601
    %v8647 = vpop.f32.mrf.mxu0
    %v8648 = vadd.f32 0.0, %v8647
    %8649 = vmatmul.f32.gmra.mxu0 %v8604
    %v8650 = vpop.f32.mrf.mxu0
    %v8651 = vadd.f32 0.0, %v8650
    %8652 = vmatmul.f32.gmra.mxu0 %v8607
    %v8653 = vpop.f32.mrf.mxu0
    %v8654 = vadd.f32 0.0, %v8653
    %8655 = vmatmul.f32.gmra.mxu0 %v8610
    %v8656 = vpop.f32.mrf.mxu0
    %v8657 = vadd.f32 0.0, %v8656
    %8658 = vmatmul.f32.gmra.mxu0 %v8613
    %v8659 = vpop.f32.mrf.mxu0
    %v8660 = vadd.f32 0.0, %v8659
    %8661 = vdwg.mxu0
    %8662 = vmatpush.msra.mxu0 0.0
    %8663 = vmatpush.msra.mxu0 0.0
    %8664 = vmatpush.msra.mxu0 0.0
    %8665 = vmatpush.msra.mxu0 0.0
    %8666 = vmatpush.msra.mxu0 0.0
    %8667 = vmatpush.msra.mxu0 0.0
    %8668 = vmatpush.msra.mxu0 %v8564
    %8669 = vmatpush.msra.mxu0 %v8562
    %8670 = vmatpush.msra.mxu0 %v8560
    %8671 = vmatpush.msra.mxu0 %v8558
    %8672 = vmatpush.msra.mxu0 %v8556
    %8673 = vmatpush.msra.mxu0 %v8554
    %8674 = vmatpush.msra.mxu0 %v8552
    %8675 = vmatpush.msra.mxu0 %v8550
    %8676 = vmatpush.msra.mxu0 %v8548
    %8677 = vmatpush.msra.mxu0 %v8546
    %8678 = vmatmul.f32.gmra.mxu0 %v8586
    %v8679 = vpop.f32.mrf.mxu0
    %v8680 = vadd.f32 0.0, %v8679
    %8681 = vmatmul.f32.gmra.mxu0 %v8589
    %v8682 = vpop.f32.mrf.mxu0
    %v8683 = vadd.f32 0.0, %v8682
    %8684 = vmatmul.f32.gmra.mxu0 %v8592
    %v8685 = vpop.f32.mrf.mxu0
    %v8686 = vadd.f32 0.0, %v8685
    %8687 = vmatmul.f32.gmra.mxu0 %v8595
    %v8688 = vpop.f32.mrf.mxu0
    %v8689 = vadd.f32 0.0, %v8688
    %8690 = vmatmul.f32.gmra.mxu0 %v8598
    %v8691 = vpop.f32.mrf.mxu0
    %v8692 = vadd.f32 0.0, %v8691
    %8693 = vmatmul.f32.gmra.mxu0 %v8601
    %v8694 = vpop.f32.mrf.mxu0
    %v8695 = vadd.f32 0.0, %v8694
    %8696 = vmatmul.f32.gmra.mxu0 %v8604
    %v8697 = vpop.f32.mrf.mxu0
    %v8698 = vadd.f32 0.0, %v8697
    %8699 = vmatmul.f32.gmra.mxu0 %v8607
    %v8700 = vpop.f32.mrf.mxu0
    %v8701 = vadd.f32 0.0, %v8700
    %8702 = vmatmul.f32.gmra.mxu0 %v8610
    %v8703 = vpop.f32.mrf.mxu0
    %v8704 = vadd.f32 0.0, %v8703
    %8705 = vmatmul.f32.gmra.mxu0 %v8613
    %v8706 = vpop.f32.mrf.mxu0
    %v8707 = vadd.f32 0.0, %v8706
    %8708 = vdwg.mxu0
    %v8709 = vadd.f32 %v8454, %v8633
    %v8710 = vadd.f32 %v8455, %v8680
    %v8711 = vadd.f32 %v8456, %v8636
    %v8712 = vadd.f32 %v8457, %v8683
    %v8713 = vadd.f32 %v8458, %v8639
    %v8714 = vadd.f32 %v8459, %v8686
    %v8715 = vadd.f32 %v8460, %v8642
    %v8716 = vadd.f32 %v8461, %v8689
    %v8717 = vadd.f32 %v8462, %v8645
    %v8718 = vadd.f32 %v8463, %v8692
    %v8719 = vadd.f32 %v8464, %v8648
    %v8720 = vadd.f32 %v8465, %v8695
    %v8721 = vadd.f32 %v8466, %v8651
    %v8722 = vadd.f32 %v8467, %v8698
    %v8723 = vadd.f32 %v8468, %v8654
    %v8724 = vadd.f32 %v8469, %v8701
    %v8725 = vadd.f32 %v8470, %v8657
    %v8726 = vadd.f32 %v8471, %v8704
    %v8727 = vadd.f32 %v8472, %v8660
    %v8728 = vadd.f32 %v8473, %v8707
    %v8729 = vld [vmem:[#allocation9 + $0x550] sm:$0xff]
    %v8730 = vld [vmem:[#allocation9 + $0x558] sm:$0xff]
    %v8731 = vld [vmem:[#allocation9 + $0x560] sm:$0xff]
    %v8732 = vld [vmem:[#allocation9 + $0x568] sm:$0xff]
    %v8733 = vld [vmem:[#allocation9 + $0x570] sm:$0xff]
    %v8734 = vld [vmem:[#allocation9 + $0x578] sm:$0xff]
    %v8735 = vld [vmem:[#allocation9 + $0x580] sm:$0xff]
    %v8736 = vld [vmem:[#allocation9 + $0x588] sm:$0xff]
    %v8737 = vld [vmem:[#allocation9 + $0x590] sm:$0xff]
    %v8738 = vld [vmem:[#allocation9 + $0x598] sm:$0xff]
    %8739 = vrot.lane.b32.xlu0 %v4599, 72
    %v8740 = vpop.permute.xlu0 %8739
    %8741 = vrot.lane.b32.xlu0 %v4600, 72
    %v8742 = vpop.permute.xlu0 %8741
    %8743 = vrot.lane.b32.xlu0 %v4601, 72
    %v8744 = vpop.permute.xlu0 %8743
    %8745 = vrot.lane.b32.xlu0 %v4602, 72
    %v8746 = vpop.permute.xlu0 %8745
    %8747 = vrot.lane.b32.xlu0 %v4603, 72
    %v8748 = vpop.permute.xlu0 %8747
    %8749 = vrot.lane.b32.xlu0 %v4604, 72
    %v8750 = vpop.permute.xlu0 %8749
    %8751 = vrot.lane.b32.xlu0 %v4605, 72
    %v8752 = vpop.permute.xlu0 %8751
    %8753 = vrot.lane.b32.xlu0 %v4606, 72
    %v8754 = vpop.permute.xlu0 %8753
    %8755 = vrot.lane.b32.xlu0 %v4607, 72
    %v8756 = vpop.permute.xlu0 %8755
    %8757 = vrot.lane.b32.xlu0 %v4608, 72
    %v8758 = vpop.permute.xlu0 %8757
    %8759 = vrot.lane.b32.xlu0 %v4609, 72
    %v8760 = vpop.permute.xlu0 %8759
    %8761 = vrot.lane.b32.xlu0 %v4610, 72
    %v8762 = vpop.permute.xlu0 %8761
    %8763 = vrot.lane.b32.xlu0 %v4611, 72
    %v8764 = vpop.permute.xlu0 %8763
    %8765 = vrot.lane.b32.xlu0 %v4612, 72
    %v8766 = vpop.permute.xlu0 %8765
    %8767 = vrot.lane.b32.xlu0 %v4613, 72
    %v8768 = vpop.permute.xlu0 %8767
    %8769 = vrot.lane.b32.xlu0 %v4614, 72
    %v8770 = vpop.permute.xlu0 %8769
    %8771 = vrot.lane.b32.xlu0 %v4615, 72
    %v8772 = vpop.permute.xlu0 %8771
    %8773 = vrot.lane.b32.xlu0 %v4616, 72
    %v8774 = vpop.permute.xlu0 %8773
    %8775 = vrot.lane.b32.xlu0 %v4617, 72
    %v8776 = vpop.permute.xlu0 %8775
    %8777 = vrot.lane.b32.xlu0 %v4618, 72
    %v8778 = vpop.permute.xlu0 %8777
    %8779 = vrot.lane.b32.xlu0 %v4619, 72
    %v8780 = vpop.permute.xlu0 %8779
    %8781 = vrot.lane.b32.xlu0 %v4620, 72
    %v8782 = vpop.permute.xlu0 %8781
    %8783 = vrot.lane.b32.xlu0 %v4621, 72
    %v8784 = vpop.permute.xlu0 %8783
    %8785 = vrot.lane.b32.xlu0 %v4622, 72
    %v8786 = vpop.permute.xlu0 %8785
    %8787 = vrot.lane.b32.xlu0 %v4623, 72
    %v8788 = vpop.permute.xlu0 %8787
    %8789 = vrot.lane.b32.xlu0 %v4624, 72
    %v8790 = vpop.permute.xlu0 %8789
    %8791 = vrot.lane.b32.xlu0 %v4625, 72
    %v8792 = vpop.permute.xlu0 %8791
    %8793 = vrot.lane.b32.xlu0 %v4626, 72
    %v8794 = vpop.permute.xlu0 %8793
    %8795 = vrot.lane.b32.xlu0 %v4627, 72
    %v8796 = vpop.permute.xlu0 %8795
    %8797 = vrot.lane.b32.xlu0 %v4628, 72
    %v8798 = vpop.permute.xlu0 %8797
    %v8799 = vsel %vm1709, %v8740, %v8742
    %v8800 = vsel %vm1709, %v8742, %v8744
    %v8801 = vsel %vm1709, %v8746, %v8748
    %v8802 = vsel %vm1709, %v8748, %v8750
    %v8803 = vsel %vm1709, %v8752, %v8754
    %v8804 = vsel %vm1709, %v8754, %v8756
    %v8805 = vsel %vm1709, %v8758, %v8760
    %v8806 = vsel %vm1709, %v8760, %v8762
    %v8807 = vsel %vm1709, %v8764, %v8766
    %v8808 = vsel %vm1709, %v8766, %v8768
    %v8809 = vsel %vm1709, %v8770, %v8772
    %v8810 = vsel %vm1709, %v8772, %v8774
    %v8811 = vsel %vm1709, %v8776, %v8778
    %v8812 = vsel %vm1709, %v8778, %v8780
    %v8813 = vsel %vm1709, %v8782, %v8784
    %v8814 = vsel %vm1709, %v8784, %v8786
    %v8815 = vsel %vm1709, %v8788, %v8790
    %v8816 = vsel %vm1709, %v8790, %v8792
    %v8817 = vsel %vm1709, %v8794, %v8796
    %v8818 = vsel %vm1709, %v8796, %v8798
    %v8840 = vsel %vm4739, %v8729, 0
    %v8843 = vsel %vm4739, %v8730, 0
    %v8846 = vsel %vm4739, %v8731, 0
    %v8849 = vsel %vm4739, %v8732, 0
    %v8852 = vsel %vm4739, %v8733, 0
    %v8855 = vsel %vm4739, %v8734, 0
    %v8858 = vsel %vm4739, %v8735, 0
    %v8861 = vsel %vm4739, %v8736, 0
    %v8864 = vsel %vm4739, %v8737, 0
    %v8867 = vsel %vm4739, %v8738, 0
    %8869 = vmatpush.msra.mxu0 0.0
    %8870 = vmatpush.msra.mxu0 0.0
    %8871 = vmatpush.msra.mxu0 0.0
    %8872 = vmatpush.msra.mxu0 0.0
    %8873 = vmatpush.msra.mxu0 0.0
    %8874 = vmatpush.msra.mxu0 0.0
    %8875 = vmatpush.msra.mxu0 %v8817
    %8876 = vmatpush.msra.mxu0 %v8815
    %8877 = vmatpush.msra.mxu0 %v8813
    %8878 = vmatpush.msra.mxu0 %v8811
    %8879 = vmatpush.msra.mxu0 %v8809
    %8880 = vmatpush.msra.mxu0 %v8807
    %8881 = vmatpush.msra.mxu0 %v8805
    %8882 = vmatpush.msra.mxu0 %v8803
    %8883 = vmatpush.msra.mxu0 %v8801
    %8884 = vmatpush.msra.mxu0 %v8799
    %8885 = vmatmul.f32.gmra.mxu0 %v8840
    %v8886 = vpop.f32.mrf.mxu0
    %v8887 = vadd.f32 0.0, %v8886
    %8888 = vmatmul.f32.gmra.mxu0 %v8843
    %v8889 = vpop.f32.mrf.mxu0
    %v8890 = vadd.f32 0.0, %v8889
    %8891 = vmatmul.f32.gmra.mxu0 %v8846
    %v8892 = vpop.f32.mrf.mxu0
    %v8893 = vadd.f32 0.0, %v8892
    %8894 = vmatmul.f32.gmra.mxu0 %v8849
    %v8895 = vpop.f32.mrf.mxu0
    %v8896 = vadd.f32 0.0, %v8895
    %8897 = vmatmul.f32.gmra.mxu0 %v8852
    %v8898 = vpop.f32.mrf.mxu0
    %v8899 = vadd.f32 0.0, %v8898
    %8900 = vmatmul.f32.gmra.mxu0 %v8855
    %v8901 = vpop.f32.mrf.mxu0
    %v8902 = vadd.f32 0.0, %v8901
    %8903 = vmatmul.f32.gmra.mxu0 %v8858
    %v8904 = vpop.f32.mrf.mxu0
    %v8905 = vadd.f32 0.0, %v8904
    %8906 = vmatmul.f32.gmra.mxu0 %v8861
    %v8907 = vpop.f32.mrf.mxu0
    %v8908 = vadd.f32 0.0, %v8907
    %8909 = vmatmul.f32.gmra.mxu0 %v8864
    %v8910 = vpop.f32.mrf.mxu0
    %v8911 = vadd.f32 0.0, %v8910
    %8912 = vmatmul.f32.gmra.mxu0 %v8867
    %v8913 = vpop.f32.mrf.mxu0
    %v8914 = vadd.f32 0.0, %v8913
    %8915 = vdwg.mxu0
    %8916 = vmatpush.msra.mxu0 0.0
    %8917 = vmatpush.msra.mxu0 0.0
    %8918 = vmatpush.msra.mxu0 0.0
    %8919 = vmatpush.msra.mxu0 0.0
    %8920 = vmatpush.msra.mxu0 0.0
    %8921 = vmatpush.msra.mxu0 0.0
    %8922 = vmatpush.msra.mxu0 %v8818
    %8923 = vmatpush.msra.mxu0 %v8816
    %8924 = vmatpush.msra.mxu0 %v8814
    %8925 = vmatpush.msra.mxu0 %v8812
    %8926 = vmatpush.msra.mxu0 %v8810
    %8927 = vmatpush.msra.mxu0 %v8808
    %8928 = vmatpush.msra.mxu0 %v8806
    %8929 = vmatpush.msra.mxu0 %v8804
    %8930 = vmatpush.msra.mxu0 %v8802
    %8931 = vmatpush.msra.mxu0 %v8800
    %8932 = vmatmul.f32.gmra.mxu0 %v8840
    %v8933 = vpop.f32.mrf.mxu0
    %v8934 = vadd.f32 0.0, %v8933
    %8935 = vmatmul.f32.gmra.mxu0 %v8843
    %v8936 = vpop.f32.mrf.mxu0
    %v8937 = vadd.f32 0.0, %v8936
    %8938 = vmatmul.f32.gmra.mxu0 %v8846
    %v8939 = vpop.f32.mrf.mxu0
    %v8940 = vadd.f32 0.0, %v8939
    %8941 = vmatmul.f32.gmra.mxu0 %v8849
    %v8942 = vpop.f32.mrf.mxu0
    %v8943 = vadd.f32 0.0, %v8942
    %8944 = vmatmul.f32.gmra.mxu0 %v8852
    %v8945 = vpop.f32.mrf.mxu0
    %v8946 = vadd.f32 0.0, %v8945
    %8947 = vmatmul.f32.gmra.mxu0 %v8855
    %v8948 = vpop.f32.mrf.mxu0
    %v8949 = vadd.f32 0.0, %v8948
    %8950 = vmatmul.f32.gmra.mxu0 %v8858
    %v8951 = vpop.f32.mrf.mxu0
    %v8952 = vadd.f32 0.0, %v8951
    %8953 = vmatmul.f32.gmra.mxu0 %v8861
    %v8954 = vpop.f32.mrf.mxu0
    %v8955 = vadd.f32 0.0, %v8954
    %8956 = vmatmul.f32.gmra.mxu0 %v8864
    %v8957 = vpop.f32.mrf.mxu0
    %v8958 = vadd.f32 0.0, %v8957
    %8959 = vmatmul.f32.gmra.mxu0 %v8867
    %v8960 = vpop.f32.mrf.mxu0
    %v8961 = vadd.f32 0.0, %v8960
    %8962 = vdwg.mxu0
    %v8963 = vadd.f32 %v8709, %v8887
    %v8964 = vadd.f32 %v8710, %v8934
    %v8965 = vadd.f32 %v8711, %v8890
    %v8966 = vadd.f32 %v8712, %v8937
    %v8967 = vadd.f32 %v8713, %v8893
    %v8968 = vadd.f32 %v8714, %v8940
    %v8969 = vadd.f32 %v8715, %v8896
    %v8970 = vadd.f32 %v8716, %v8943
    %v8971 = vadd.f32 %v8717, %v8899
    %v8972 = vadd.f32 %v8718, %v8946
    %v8973 = vadd.f32 %v8719, %v8902
    %v8974 = vadd.f32 %v8720, %v8949
    %v8975 = vadd.f32 %v8721, %v8905
    %v8976 = vadd.f32 %v8722, %v8952
    %v8977 = vadd.f32 %v8723, %v8908
    %v8978 = vadd.f32 %v8724, %v8955
    %v8979 = vadd.f32 %v8725, %v8911
    %v8980 = vadd.f32 %v8726, %v8958
    %v8981 = vadd.f32 %v8727, %v8914
    %v8982 = vadd.f32 %v8728, %v8961
    %v8983 = vld [vmem:[#allocation9 + $0x5a0] sm:$0xff]
    %v8984 = vld [vmem:[#allocation9 + $0x5a8] sm:$0xff]
    %v8985 = vld [vmem:[#allocation9 + $0x5b0] sm:$0xff]
    %v8986 = vld [vmem:[#allocation9 + $0x5b8] sm:$0xff]
    %v8987 = vld [vmem:[#allocation9 + $0x5c0] sm:$0xff]
    %v8988 = vld [vmem:[#allocation9 + $0x5c8] sm:$0xff]
    %v8989 = vld [vmem:[#allocation9 + $0x5d0] sm:$0xff]
    %v8990 = vld [vmem:[#allocation9 + $0x5d8] sm:$0xff]
    %v8991 = vld [vmem:[#allocation9 + $0x5e0] sm:$0xff]
    %v8992 = vld [vmem:[#allocation9 + $0x5e8] sm:$0xff]
    %8993 = vrot.lane.b32.xlu0 %v4599, 71
    %v8994 = vpop.permute.xlu0 %8993
    %8995 = vrot.lane.b32.xlu0 %v4600, 71
    %v8996 = vpop.permute.xlu0 %8995
    %8997 = vrot.lane.b32.xlu0 %v4601, 71
    %v8998 = vpop.permute.xlu0 %8997
    %8999 = vrot.lane.b32.xlu0 %v4602, 71
    %v9000 = vpop.permute.xlu0 %8999
    %9001 = vrot.lane.b32.xlu0 %v4603, 71
    %v9002 = vpop.permute.xlu0 %9001
    %9003 = vrot.lane.b32.xlu0 %v4604, 71
    %v9004 = vpop.permute.xlu0 %9003
    %9005 = vrot.lane.b32.xlu0 %v4605, 71
    %v9006 = vpop.permute.xlu0 %9005
    %9007 = vrot.lane.b32.xlu0 %v4606, 71
    %v9008 = vpop.permute.xlu0 %9007
    %9009 = vrot.lane.b32.xlu0 %v4607, 71
    %v9010 = vpop.permute.xlu0 %9009
    %9011 = vrot.lane.b32.xlu0 %v4608, 71
    %v9012 = vpop.permute.xlu0 %9011
    %9013 = vrot.lane.b32.xlu0 %v4609, 71
    %v9014 = vpop.permute.xlu0 %9013
    %9015 = vrot.lane.b32.xlu0 %v4610, 71
    %v9016 = vpop.permute.xlu0 %9015
    %9017 = vrot.lane.b32.xlu0 %v4611, 71
    %v9018 = vpop.permute.xlu0 %9017
    %9019 = vrot.lane.b32.xlu0 %v4612, 71
    %v9020 = vpop.permute.xlu0 %9019
    %9021 = vrot.lane.b32.xlu0 %v4613, 71
    %v9022 = vpop.permute.xlu0 %9021
    %9023 = vrot.lane.b32.xlu0 %v4614, 71
    %v9024 = vpop.permute.xlu0 %9023
    %9025 = vrot.lane.b32.xlu0 %v4615, 71
    %v9026 = vpop.permute.xlu0 %9025
    %9027 = vrot.lane.b32.xlu0 %v4616, 71
    %v9028 = vpop.permute.xlu0 %9027
    %9029 = vrot.lane.b32.xlu0 %v4617, 71
    %v9030 = vpop.permute.xlu0 %9029
    %9031 = vrot.lane.b32.xlu0 %v4618, 71
    %v9032 = vpop.permute.xlu0 %9031
    %9033 = vrot.lane.b32.xlu0 %v4619, 71
    %v9034 = vpop.permute.xlu0 %9033
    %9035 = vrot.lane.b32.xlu0 %v4620, 71
    %v9036 = vpop.permute.xlu0 %9035
    %9037 = vrot.lane.b32.xlu0 %v4621, 71
    %v9038 = vpop.permute.xlu0 %9037
    %9039 = vrot.lane.b32.xlu0 %v4622, 71
    %v9040 = vpop.permute.xlu0 %9039
    %9041 = vrot.lane.b32.xlu0 %v4623, 71
    %v9042 = vpop.permute.xlu0 %9041
    %9043 = vrot.lane.b32.xlu0 %v4624, 71
    %v9044 = vpop.permute.xlu0 %9043
    %9045 = vrot.lane.b32.xlu0 %v4625, 71
    %v9046 = vpop.permute.xlu0 %9045
    %9047 = vrot.lane.b32.xlu0 %v4626, 71
    %v9048 = vpop.permute.xlu0 %9047
    %9049 = vrot.lane.b32.xlu0 %v4627, 71
    %v9050 = vpop.permute.xlu0 %9049
    %9051 = vrot.lane.b32.xlu0 %v4628, 71
    %v9052 = vpop.permute.xlu0 %9051
    %vm9053 = vcmask 580608
    %v9054 = vsel %vm9053, %v8994, %v8996
    %v9055 = vsel %vm9053, %v8996, %v8998
    %v9056 = vsel %vm9053, %v9000, %v9002
    %v9057 = vsel %vm9053, %v9002, %v9004
    %v9058 = vsel %vm9053, %v9006, %v9008
    %v9059 = vsel %vm9053, %v9008, %v9010
    %v9060 = vsel %vm9053, %v9012, %v9014
    %v9061 = vsel %vm9053, %v9014, %v9016
    %v9062 = vsel %vm9053, %v9018, %v9020
    %v9063 = vsel %vm9053, %v9020, %v9022
    %v9064 = vsel %vm9053, %v9024, %v9026
    %v9065 = vsel %vm9053, %v9026, %v9028
    %v9066 = vsel %vm9053, %v9030, %v9032
    %v9067 = vsel %vm9053, %v9032, %v9034
    %v9068 = vsel %vm9053, %v9036, %v9038
    %v9069 = vsel %vm9053, %v9038, %v9040
    %v9070 = vsel %vm9053, %v9042, %v9044
    %v9071 = vsel %vm9053, %v9044, %v9046
    %v9072 = vsel %vm9053, %v9048, %v9050
    %v9073 = vsel %vm9053, %v9050, %v9052
    %v9095 = vsel %vm4739, %v8983, 0
    %v9098 = vsel %vm4739, %v8984, 0
    %v9101 = vsel %vm4739, %v8985, 0
    %v9104 = vsel %vm4739, %v8986, 0
    %v9107 = vsel %vm4739, %v8987, 0
    %v9110 = vsel %vm4739, %v8988, 0
    %v9113 = vsel %vm4739, %v8989, 0
    %v9116 = vsel %vm4739, %v8990, 0
    %v9119 = vsel %vm4739, %v8991, 0
    %v9122 = vsel %vm4739, %v8992, 0
    %9124 = vmatpush.msra.mxu0 0.0
    %9125 = vmatpush.msra.mxu0 0.0
    %9126 = vmatpush.msra.mxu0 0.0
    %9127 = vmatpush.msra.mxu0 0.0
    %9128 = vmatpush.msra.mxu0 0.0
    %9129 = vmatpush.msra.mxu0 0.0
    %9130 = vmatpush.msra.mxu0 %v9072
    %9131 = vmatpush.msra.mxu0 %v9070
    %9132 = vmatpush.msra.mxu0 %v9068
    %9133 = vmatpush.msra.mxu0 %v9066
    %9134 = vmatpush.msra.mxu0 %v9064
    %9135 = vmatpush.msra.mxu0 %v9062
    %9136 = vmatpush.msra.mxu0 %v9060
    %9137 = vmatpush.msra.mxu0 %v9058
    %9138 = vmatpush.msra.mxu0 %v9056
    %9139 = vmatpush.msra.mxu0 %v9054
    %9140 = vmatmul.f32.gmra.mxu0 %v9095
    %v9141 = vpop.f32.mrf.mxu0
    %v9142 = vadd.f32 0.0, %v9141
    %9143 = vmatmul.f32.gmra.mxu0 %v9098
    %v9144 = vpop.f32.mrf.mxu0
    %v9145 = vadd.f32 0.0, %v9144
    %9146 = vmatmul.f32.gmra.mxu0 %v9101
    %v9147 = vpop.f32.mrf.mxu0
    %v9148 = vadd.f32 0.0, %v9147
    %9149 = vmatmul.f32.gmra.mxu0 %v9104
    %v9150 = vpop.f32.mrf.mxu0
    %v9151 = vadd.f32 0.0, %v9150
    %9152 = vmatmul.f32.gmra.mxu0 %v9107
    %v9153 = vpop.f32.mrf.mxu0
    %v9154 = vadd.f32 0.0, %v9153
    %9155 = vmatmul.f32.gmra.mxu0 %v9110
    %v9156 = vpop.f32.mrf.mxu0
    %v9157 = vadd.f32 0.0, %v9156
    %9158 = vmatmul.f32.gmra.mxu0 %v9113
    %v9159 = vpop.f32.mrf.mxu0
    %v9160 = vadd.f32 0.0, %v9159
    %9161 = vmatmul.f32.gmra.mxu0 %v9116
    %v9162 = vpop.f32.mrf.mxu0
    %v9163 = vadd.f32 0.0, %v9162
    %9164 = vmatmul.f32.gmra.mxu0 %v9119
    %v9165 = vpop.f32.mrf.mxu0
    %v9166 = vadd.f32 0.0, %v9165
    %9167 = vmatmul.f32.gmra.mxu0 %v9122
    %v9168 = vpop.f32.mrf.mxu0
    %v9169 = vadd.f32 0.0, %v9168
    %9170 = vdwg.mxu0
    %9171 = vmatpush.msra.mxu0 0.0
    %9172 = vmatpush.msra.mxu0 0.0
    %9173 = vmatpush.msra.mxu0 0.0
    %9174 = vmatpush.msra.mxu0 0.0
    %9175 = vmatpush.msra.mxu0 0.0
    %9176 = vmatpush.msra.mxu0 0.0
    %9177 = vmatpush.msra.mxu0 %v9073
    %9178 = vmatpush.msra.mxu0 %v9071
    %9179 = vmatpush.msra.mxu0 %v9069
    %9180 = vmatpush.msra.mxu0 %v9067
    %9181 = vmatpush.msra.mxu0 %v9065
    %9182 = vmatpush.msra.mxu0 %v9063
    %9183 = vmatpush.msra.mxu0 %v9061
    %9184 = vmatpush.msra.mxu0 %v9059
    %9185 = vmatpush.msra.mxu0 %v9057
    %9186 = vmatpush.msra.mxu0 %v9055
    %9187 = vmatmul.f32.gmra.mxu0 %v9095
    %v9188 = vpop.f32.mrf.mxu0
    %v9189 = vadd.f32 0.0, %v9188
    %9190 = vmatmul.f32.gmra.mxu0 %v9098
    %v9191 = vpop.f32.mrf.mxu0
    %v9192 = vadd.f32 0.0, %v9191
    %9193 = vmatmul.f32.gmra.mxu0 %v9101
    %v9194 = vpop.f32.mrf.mxu0
    %v9195 = vadd.f32 0.0, %v9194
    %9196 = vmatmul.f32.gmra.mxu0 %v9104
    %v9197 = vpop.f32.mrf.mxu0
    %v9198 = vadd.f32 0.0, %v9197
    %9199 = vmatmul.f32.gmra.mxu0 %v9107
    %v9200 = vpop.f32.mrf.mxu0
    %v9201 = vadd.f32 0.0, %v9200
    %9202 = vmatmul.f32.gmra.mxu0 %v9110
    %v9203 = vpop.f32.mrf.mxu0
    %v9204 = vadd.f32 0.0, %v9203
    %9205 = vmatmul.f32.gmra.mxu0 %v9113
    %v9206 = vpop.f32.mrf.mxu0
    %v9207 = vadd.f32 0.0, %v9206
    %9208 = vmatmul.f32.gmra.mxu0 %v9116
    %v9209 = vpop.f32.mrf.mxu0
    %v9210 = vadd.f32 0.0, %v9209
    %9211 = vmatmul.f32.gmra.mxu0 %v9119
    %v9212 = vpop.f32.mrf.mxu0
    %v9213 = vadd.f32 0.0, %v9212
    %9214 = vmatmul.f32.gmra.mxu0 %v9122
    %v9215 = vpop.f32.mrf.mxu0
    %v9216 = vadd.f32 0.0, %v9215
    %9217 = vdwg.mxu0
    %v9218 = vadd.f32 %v8963, %v9142
    %v9219 = vadd.f32 %v8964, %v9189
    %v9220 = vadd.f32 %v8965, %v9145
    %v9221 = vadd.f32 %v8966, %v9192
    %v9222 = vadd.f32 %v8967, %v9148
    %v9223 = vadd.f32 %v8968, %v9195
    %v9224 = vadd.f32 %v8969, %v9151
    %v9225 = vadd.f32 %v8970, %v9198
    %v9226 = vadd.f32 %v8971, %v9154
    %v9227 = vadd.f32 %v8972, %v9201
    %v9228 = vadd.f32 %v8973, %v9157
    %v9229 = vadd.f32 %v8974, %v9204
    %v9230 = vadd.f32 %v8975, %v9160
    %v9231 = vadd.f32 %v8976, %v9207
    %v9232 = vadd.f32 %v8977, %v9163
    %v9233 = vadd.f32 %v8978, %v9210
    %v9234 = vadd.f32 %v8979, %v9166
    %v9235 = vadd.f32 %v8980, %v9213
    %v9236 = vadd.f32 %v8981, %v9169
    %v9237 = vadd.f32 %v8982, %v9216
    %v9238 = vld [vmem:[#allocation9 + $0x5f0] sm:$0xff]
    %v9239 = vld [vmem:[#allocation9 + $0x5f8] sm:$0xff]
    %v9240 = vld [vmem:[#allocation9 + $0x600] sm:$0xff]
    %v9241 = vld [vmem:[#allocation9 + $0x608] sm:$0xff]
    %v9242 = vld [vmem:[#allocation9 + $0x610] sm:$0xff]
    %v9243 = vld [vmem:[#allocation9 + $0x618] sm:$0xff]
    %v9244 = vld [vmem:[#allocation9 + $0x620] sm:$0xff]
    %v9245 = vld [vmem:[#allocation9 + $0x628] sm:$0xff]
    %v9246 = vld [vmem:[#allocation9 + $0x630] sm:$0xff]
    %v9247 = vld [vmem:[#allocation9 + $0x638] sm:$0xff]
    %9248 = vrot.lane.b32.xlu0 %v4599, 70
    %v9249 = vpop.permute.xlu0 %9248
    %9250 = vrot.lane.b32.xlu0 %v4600, 70
    %v9251 = vpop.permute.xlu0 %9250
    %9252 = vrot.lane.b32.xlu0 %v4601, 70
    %v9253 = vpop.permute.xlu0 %9252
    %9254 = vrot.lane.b32.xlu0 %v4602, 70
    %v9255 = vpop.permute.xlu0 %9254
    %9256 = vrot.lane.b32.xlu0 %v4603, 70
    %v9257 = vpop.permute.xlu0 %9256
    %9258 = vrot.lane.b32.xlu0 %v4604, 70
    %v9259 = vpop.permute.xlu0 %9258
    %9260 = vrot.lane.b32.xlu0 %v4605, 70
    %v9261 = vpop.permute.xlu0 %9260
    %9262 = vrot.lane.b32.xlu0 %v4606, 70
    %v9263 = vpop.permute.xlu0 %9262
    %9264 = vrot.lane.b32.xlu0 %v4607, 70
    %v9265 = vpop.permute.xlu0 %9264
    %9266 = vrot.lane.b32.xlu0 %v4608, 70
    %v9267 = vpop.permute.xlu0 %9266
    %9268 = vrot.lane.b32.xlu0 %v4609, 70
    %v9269 = vpop.permute.xlu0 %9268
    %9270 = vrot.lane.b32.xlu0 %v4610, 70
    %v9271 = vpop.permute.xlu0 %9270
    %9272 = vrot.lane.b32.xlu0 %v4611, 70
    %v9273 = vpop.permute.xlu0 %9272
    %9274 = vrot.lane.b32.xlu0 %v4612, 70
    %v9275 = vpop.permute.xlu0 %9274
    %9276 = vrot.lane.b32.xlu0 %v4613, 70
    %v9277 = vpop.permute.xlu0 %9276
    %9278 = vrot.lane.b32.xlu0 %v4614, 70
    %v9279 = vpop.permute.xlu0 %9278
    %9280 = vrot.lane.b32.xlu0 %v4615, 70
    %v9281 = vpop.permute.xlu0 %9280
    %9282 = vrot.lane.b32.xlu0 %v4616, 70
    %v9283 = vpop.permute.xlu0 %9282
    %9284 = vrot.lane.b32.xlu0 %v4617, 70
    %v9285 = vpop.permute.xlu0 %9284
    %9286 = vrot.lane.b32.xlu0 %v4618, 70
    %v9287 = vpop.permute.xlu0 %9286
    %9288 = vrot.lane.b32.xlu0 %v4619, 70
    %v9289 = vpop.permute.xlu0 %9288
    %9290 = vrot.lane.b32.xlu0 %v4620, 70
    %v9291 = vpop.permute.xlu0 %9290
    %9292 = vrot.lane.b32.xlu0 %v4621, 70
    %v9293 = vpop.permute.xlu0 %9292
    %9294 = vrot.lane.b32.xlu0 %v4622, 70
    %v9295 = vpop.permute.xlu0 %9294
    %9296 = vrot.lane.b32.xlu0 %v4623, 70
    %v9297 = vpop.permute.xlu0 %9296
    %9298 = vrot.lane.b32.xlu0 %v4624, 70
    %v9299 = vpop.permute.xlu0 %9298
    %9300 = vrot.lane.b32.xlu0 %v4625, 70
    %v9301 = vpop.permute.xlu0 %9300
    %9302 = vrot.lane.b32.xlu0 %v4626, 70
    %v9303 = vpop.permute.xlu0 %9302
    %9304 = vrot.lane.b32.xlu0 %v4627, 70
    %v9305 = vpop.permute.xlu0 %9304
    %9306 = vrot.lane.b32.xlu0 %v4628, 70
    %v9307 = vpop.permute.xlu0 %9306
    %vm9308 = vcmask 572416
    %v9309 = vsel %vm9308, %v9249, %v9251
    %v9310 = vsel %vm9308, %v9251, %v9253
    %v9311 = vsel %vm9308, %v9255, %v9257
    %v9312 = vsel %vm9308, %v9257, %v9259
    %v9313 = vsel %vm9308, %v9261, %v9263
    %v9314 = vsel %vm9308, %v9263, %v9265
    %v9315 = vsel %vm9308, %v9267, %v9269
    %v9316 = vsel %vm9308, %v9269, %v9271
    %v9317 = vsel %vm9308, %v9273, %v9275
    %v9318 = vsel %vm9308, %v9275, %v9277
    %v9319 = vsel %vm9308, %v9279, %v9281
    %v9320 = vsel %vm9308, %v9281, %v9283
    %v9321 = vsel %vm9308, %v9285, %v9287
    %v9322 = vsel %vm9308, %v9287, %v9289
    %v9323 = vsel %vm9308, %v9291, %v9293
    %v9324 = vsel %vm9308, %v9293, %v9295
    %v9325 = vsel %vm9308, %v9297, %v9299
    %v9326 = vsel %vm9308, %v9299, %v9301
    %v9327 = vsel %vm9308, %v9303, %v9305
    %v9328 = vsel %vm9308, %v9305, %v9307
    %v9350 = vsel %vm4739, %v9238, 0
    %v9353 = vsel %vm4739, %v9239, 0
    %v9356 = vsel %vm4739, %v9240, 0
    %v9359 = vsel %vm4739, %v9241, 0
    %v9362 = vsel %vm4739, %v9242, 0
    %v9365 = vsel %vm4739, %v9243, 0
    %v9368 = vsel %vm4739, %v9244, 0
    %v9371 = vsel %vm4739, %v9245, 0
    %v9374 = vsel %vm4739, %v9246, 0
    %v9377 = vsel %vm4739, %v9247, 0
    %9379 = vmatpush.msra.mxu0 0.0
    %9380 = vmatpush.msra.mxu0 0.0
    %9381 = vmatpush.msra.mxu0 0.0
    %9382 = vmatpush.msra.mxu0 0.0
    %9383 = vmatpush.msra.mxu0 0.0
    %9384 = vmatpush.msra.mxu0 0.0
    %9385 = vmatpush.msra.mxu0 %v9327
    %9386 = vmatpush.msra.mxu0 %v9325
    %9387 = vmatpush.msra.mxu0 %v9323
    %9388 = vmatpush.msra.mxu0 %v9321
    %9389 = vmatpush.msra.mxu0 %v9319
    %9390 = vmatpush.msra.mxu0 %v9317
    %9391 = vmatpush.msra.mxu0 %v9315
    %9392 = vmatpush.msra.mxu0 %v9313
    %9393 = vmatpush.msra.mxu0 %v9311
    %9394 = vmatpush.msra.mxu0 %v9309
    %9395 = vmatmul.f32.gmra.mxu0 %v9350
    %v9396 = vpop.f32.mrf.mxu0
    %v9397 = vadd.f32 0.0, %v9396
    %9398 = vmatmul.f32.gmra.mxu0 %v9353
    %v9399 = vpop.f32.mrf.mxu0
    %v9400 = vadd.f32 0.0, %v9399
    %9401 = vmatmul.f32.gmra.mxu0 %v9356
    %v9402 = vpop.f32.mrf.mxu0
    %v9403 = vadd.f32 0.0, %v9402
    %9404 = vmatmul.f32.gmra.mxu0 %v9359
    %v9405 = vpop.f32.mrf.mxu0
    %v9406 = vadd.f32 0.0, %v9405
    %9407 = vmatmul.f32.gmra.mxu0 %v9362
    %v9408 = vpop.f32.mrf.mxu0
    %v9409 = vadd.f32 0.0, %v9408
    %9410 = vmatmul.f32.gmra.mxu0 %v9365
    %v9411 = vpop.f32.mrf.mxu0
    %v9412 = vadd.f32 0.0, %v9411
    %9413 = vmatmul.f32.gmra.mxu0 %v9368
    %v9414 = vpop.f32.mrf.mxu0
    %v9415 = vadd.f32 0.0, %v9414
    %9416 = vmatmul.f32.gmra.mxu0 %v9371
    %v9417 = vpop.f32.mrf.mxu0
    %v9418 = vadd.f32 0.0, %v9417
    %9419 = vmatmul.f32.gmra.mxu0 %v9374
    %v9420 = vpop.f32.mrf.mxu0
    %v9421 = vadd.f32 0.0, %v9420
    %9422 = vmatmul.f32.gmra.mxu0 %v9377
    %v9423 = vpop.f32.mrf.mxu0
    %v9424 = vadd.f32 0.0, %v9423
    %9425 = vdwg.mxu0
    %9426 = vmatpush.msra.mxu0 0.0
    %9427 = vmatpush.msra.mxu0 0.0
    %9428 = vmatpush.msra.mxu0 0.0
    %9429 = vmatpush.msra.mxu0 0.0
    %9430 = vmatpush.msra.mxu0 0.0
    %9431 = vmatpush.msra.mxu0 0.0
    %9432 = vmatpush.msra.mxu0 %v9328
    %9433 = vmatpush.msra.mxu0 %v9326
    %9434 = vmatpush.msra.mxu0 %v9324
    %9435 = vmatpush.msra.mxu0 %v9322
    %9436 = vmatpush.msra.mxu0 %v9320
    %9437 = vmatpush.msra.mxu0 %v9318
    %9438 = vmatpush.msra.mxu0 %v9316
    %9439 = vmatpush.msra.mxu0 %v9314
    %9440 = vmatpush.msra.mxu0 %v9312
    %9441 = vmatpush.msra.mxu0 %v9310
    %9442 = vmatmul.f32.gmra.mxu0 %v9350
    %v9443 = vpop.f32.mrf.mxu0
    %v9444 = vadd.f32 0.0, %v9443
    %9445 = vmatmul.f32.gmra.mxu0 %v9353
    %v9446 = vpop.f32.mrf.mxu0
    %v9447 = vadd.f32 0.0, %v9446
    %9448 = vmatmul.f32.gmra.mxu0 %v9356
    %v9449 = vpop.f32.mrf.mxu0
    %v9450 = vadd.f32 0.0, %v9449
    %9451 = vmatmul.f32.gmra.mxu0 %v9359
    %v9452 = vpop.f32.mrf.mxu0
    %v9453 = vadd.f32 0.0, %v9452
    %9454 = vmatmul.f32.gmra.mxu0 %v9362
    %v9455 = vpop.f32.mrf.mxu0
    %v9456 = vadd.f32 0.0, %v9455
    %9457 = vmatmul.f32.gmra.mxu0 %v9365
    %v9458 = vpop.f32.mrf.mxu0
    %v9459 = vadd.f32 0.0, %v9458
    %9460 = vmatmul.f32.gmra.mxu0 %v9368
    %v9461 = vpop.f32.mrf.mxu0
    %v9462 = vadd.f32 0.0, %v9461
    %9463 = vmatmul.f32.gmra.mxu0 %v9371
    %v9464 = vpop.f32.mrf.mxu0
    %v9465 = vadd.f32 0.0, %v9464
    %9466 = vmatmul.f32.gmra.mxu0 %v9374
    %v9467 = vpop.f32.mrf.mxu0
    %v9468 = vadd.f32 0.0, %v9467
    %9469 = vmatmul.f32.gmra.mxu0 %v9377
    %v9470 = vpop.f32.mrf.mxu0
    %v9471 = vadd.f32 0.0, %v9470
    %9472 = vdwg.mxu0
    %v9473 = vadd.f32 %v9218, %v9397
    %v9474 = vadd.f32 %v9219, %v9444
    %v9475 = vadd.f32 %v9220, %v9400
    %v9476 = vadd.f32 %v9221, %v9447
    %v9477 = vadd.f32 %v9222, %v9403
    %v9478 = vadd.f32 %v9223, %v9450
    %v9479 = vadd.f32 %v9224, %v9406
    %v9480 = vadd.f32 %v9225, %v9453
    %v9481 = vadd.f32 %v9226, %v9409
    %v9482 = vadd.f32 %v9227, %v9456
    %v9483 = vadd.f32 %v9228, %v9412
    %v9484 = vadd.f32 %v9229, %v9459
    %v9485 = vadd.f32 %v9230, %v9415
    %v9486 = vadd.f32 %v9231, %v9462
    %v9487 = vadd.f32 %v9232, %v9418
    %v9488 = vadd.f32 %v9233, %v9465
    %v9489 = vadd.f32 %v9234, %v9421
    %v9490 = vadd.f32 %v9235, %v9468
    %v9491 = vadd.f32 %v9236, %v9424
    %v9492 = vadd.f32 %v9237, %v9471
    %v9493 = vld [vmem:[#allocation9 + $0x640] sm:$0xff]
    %v9494 = vld [vmem:[#allocation9 + $0x648] sm:$0xff]
    %v9495 = vld [vmem:[#allocation9 + $0x650] sm:$0xff]
    %v9496 = vld [vmem:[#allocation9 + $0x658] sm:$0xff]
    %v9497 = vld [vmem:[#allocation9 + $0x660] sm:$0xff]
    %v9498 = vld [vmem:[#allocation9 + $0x668] sm:$0xff]
    %v9499 = vld [vmem:[#allocation9 + $0x670] sm:$0xff]
    %v9500 = vld [vmem:[#allocation9 + $0x678] sm:$0xff]
    %v9501 = vld [vmem:[#allocation9 + $0x680] sm:$0xff]
    %v9502 = vld [vmem:[#allocation9 + $0x688] sm:$0xff]
    %9503 = vrot.lane.b32.xlu0 %v4599, 56
    %v9504 = vpop.permute.xlu0 %9503
    %9505 = vrot.lane.b32.xlu0 %v4600, 56
    %v9506 = vpop.permute.xlu0 %9505
    %9507 = vrot.lane.b32.xlu0 %v4601, 56
    %v9508 = vpop.permute.xlu0 %9507
    %9509 = vrot.lane.b32.xlu0 %v4602, 56
    %v9510 = vpop.permute.xlu0 %9509
    %9511 = vrot.lane.b32.xlu0 %v4603, 56
    %v9512 = vpop.permute.xlu0 %9511
    %9513 = vrot.lane.b32.xlu0 %v4604, 56
    %v9514 = vpop.permute.xlu0 %9513
    %9515 = vrot.lane.b32.xlu0 %v4605, 56
    %v9516 = vpop.permute.xlu0 %9515
    %9517 = vrot.lane.b32.xlu0 %v4606, 56
    %v9518 = vpop.permute.xlu0 %9517
    %9519 = vrot.lane.b32.xlu0 %v4607, 56
    %v9520 = vpop.permute.xlu0 %9519
    %9521 = vrot.lane.b32.xlu0 %v4608, 56
    %v9522 = vpop.permute.xlu0 %9521
    %9523 = vrot.lane.b32.xlu0 %v4609, 56
    %v9524 = vpop.permute.xlu0 %9523
    %9525 = vrot.lane.b32.xlu0 %v4610, 56
    %v9526 = vpop.permute.xlu0 %9525
    %9527 = vrot.lane.b32.xlu0 %v4611, 56
    %v9528 = vpop.permute.xlu0 %9527
    %9529 = vrot.lane.b32.xlu0 %v4612, 56
    %v9530 = vpop.permute.xlu0 %9529
    %9531 = vrot.lane.b32.xlu0 %v4613, 56
    %v9532 = vpop.permute.xlu0 %9531
    %9533 = vrot.lane.b32.xlu0 %v4614, 56
    %v9534 = vpop.permute.xlu0 %9533
    %9535 = vrot.lane.b32.xlu0 %v4615, 56
    %v9536 = vpop.permute.xlu0 %9535
    %9537 = vrot.lane.b32.xlu0 %v4616, 56
    %v9538 = vpop.permute.xlu0 %9537
    %9539 = vrot.lane.b32.xlu0 %v4617, 56
    %v9540 = vpop.permute.xlu0 %9539
    %9541 = vrot.lane.b32.xlu0 %v4618, 56
    %v9542 = vpop.permute.xlu0 %9541
    %9543 = vrot.lane.b32.xlu0 %v4619, 56
    %v9544 = vpop.permute.xlu0 %9543
    %9545 = vrot.lane.b32.xlu0 %v4620, 56
    %v9546 = vpop.permute.xlu0 %9545
    %9547 = vrot.lane.b32.xlu0 %v4621, 56
    %v9548 = vpop.permute.xlu0 %9547
    %9549 = vrot.lane.b32.xlu0 %v4622, 56
    %v9550 = vpop.permute.xlu0 %9549
    %9551 = vrot.lane.b32.xlu0 %v4623, 56
    %v9552 = vpop.permute.xlu0 %9551
    %9553 = vrot.lane.b32.xlu0 %v4624, 56
    %v9554 = vpop.permute.xlu0 %9553
    %9555 = vrot.lane.b32.xlu0 %v4625, 56
    %v9556 = vpop.permute.xlu0 %9555
    %9557 = vrot.lane.b32.xlu0 %v4626, 56
    %v9558 = vpop.permute.xlu0 %9557
    %9559 = vrot.lane.b32.xlu0 %v4627, 56
    %v9560 = vpop.permute.xlu0 %9559
    %9561 = vrot.lane.b32.xlu0 %v4628, 56
    %v9562 = vpop.permute.xlu0 %9561
    %vm9563 = vcmask 457728
    %v9564 = vsel %vm9563, %v9504, %v9506
    %v9565 = vsel %vm9563, %v9506, %v9508
    %v9566 = vsel %vm9563, %v9510, %v9512
    %v9567 = vsel %vm9563, %v9512, %v9514
    %v9568 = vsel %vm9563, %v9516, %v9518
    %v9569 = vsel %vm9563, %v9518, %v9520
    %v9570 = vsel %vm9563, %v9522, %v9524
    %v9571 = vsel %vm9563, %v9524, %v9526
    %v9572 = vsel %vm9563, %v9528, %v9530
    %v9573 = vsel %vm9563, %v9530, %v9532
    %v9574 = vsel %vm9563, %v9534, %v9536
    %v9575 = vsel %vm9563, %v9536, %v9538
    %v9576 = vsel %vm9563, %v9540, %v9542
    %v9577 = vsel %vm9563, %v9542, %v9544
    %v9578 = vsel %vm9563, %v9546, %v9548
    %v9579 = vsel %vm9563, %v9548, %v9550
    %v9580 = vsel %vm9563, %v9552, %v9554
    %v9581 = vsel %vm9563, %v9554, %v9556
    %v9582 = vsel %vm9563, %v9558, %v9560
    %v9583 = vsel %vm9563, %v9560, %v9562
    %v9605 = vsel %vm4739, %v9493, 0
    %v9608 = vsel %vm4739, %v9494, 0
    %v9611 = vsel %vm4739, %v9495, 0
    %v9614 = vsel %vm4739, %v9496, 0
    %v9617 = vsel %vm4739, %v9497, 0
    %v9620 = vsel %vm4739, %v9498, 0
    %v9623 = vsel %vm4739, %v9499, 0
    %v9626 = vsel %vm4739, %v9500, 0
    %v9629 = vsel %vm4739, %v9501, 0
    %v9632 = vsel %vm4739, %v9502, 0
    %9634 = vmatpush.msra.mxu0 0.0
    %9635 = vmatpush.msra.mxu0 0.0
    %9636 = vmatpush.msra.mxu0 0.0
    %9637 = vmatpush.msra.mxu0 0.0
    %9638 = vmatpush.msra.mxu0 0.0
    %9639 = vmatpush.msra.mxu0 0.0
    %9640 = vmatpush.msra.mxu0 %v9582
    %9641 = vmatpush.msra.mxu0 %v9580
    %9642 = vmatpush.msra.mxu0 %v9578
    %9643 = vmatpush.msra.mxu0 %v9576
    %9644 = vmatpush.msra.mxu0 %v9574
    %9645 = vmatpush.msra.mxu0 %v9572
    %9646 = vmatpush.msra.mxu0 %v9570
    %9647 = vmatpush.msra.mxu0 %v9568
    %9648 = vmatpush.msra.mxu0 %v9566
    %9649 = vmatpush.msra.mxu0 %v9564
    %9650 = vmatmul.f32.gmra.mxu0 %v9605
    %v9651 = vpop.f32.mrf.mxu0
    %v9652 = vadd.f32 0.0, %v9651
    %9653 = vmatmul.f32.gmra.mxu0 %v9608
    %v9654 = vpop.f32.mrf.mxu0
    %v9655 = vadd.f32 0.0, %v9654
    %9656 = vmatmul.f32.gmra.mxu0 %v9611
    %v9657 = vpop.f32.mrf.mxu0
    %v9658 = vadd.f32 0.0, %v9657
    %9659 = vmatmul.f32.gmra.mxu0 %v9614
    %v9660 = vpop.f32.mrf.mxu0
    %v9661 = vadd.f32 0.0, %v9660
    %9662 = vmatmul.f32.gmra.mxu0 %v9617
    %v9663 = vpop.f32.mrf.mxu0
    %v9664 = vadd.f32 0.0, %v9663
    %9665 = vmatmul.f32.gmra.mxu0 %v9620
    %v9666 = vpop.f32.mrf.mxu0
    %v9667 = vadd.f32 0.0, %v9666
    %9668 = vmatmul.f32.gmra.mxu0 %v9623
    %v9669 = vpop.f32.mrf.mxu0
    %v9670 = vadd.f32 0.0, %v9669
    %9671 = vmatmul.f32.gmra.mxu0 %v9626
    %v9672 = vpop.f32.mrf.mxu0
    %v9673 = vadd.f32 0.0, %v9672
    %9674 = vmatmul.f32.gmra.mxu0 %v9629
    %v9675 = vpop.f32.mrf.mxu0
    %v9676 = vadd.f32 0.0, %v9675
    %9677 = vmatmul.f32.gmra.mxu0 %v9632
    %v9678 = vpop.f32.mrf.mxu0
    %v9679 = vadd.f32 0.0, %v9678
    %9680 = vdwg.mxu0
    %9681 = vmatpush.msra.mxu0 0.0
    %9682 = vmatpush.msra.mxu0 0.0
    %9683 = vmatpush.msra.mxu0 0.0
    %9684 = vmatpush.msra.mxu0 0.0
    %9685 = vmatpush.msra.mxu0 0.0
    %9686 = vmatpush.msra.mxu0 0.0
    %9687 = vmatpush.msra.mxu0 %v9583
    %9688 = vmatpush.msra.mxu0 %v9581
    %9689 = vmatpush.msra.mxu0 %v9579
    %9690 = vmatpush.msra.mxu0 %v9577
    %9691 = vmatpush.msra.mxu0 %v9575
    %9692 = vmatpush.msra.mxu0 %v9573
    %9693 = vmatpush.msra.mxu0 %v9571
    %9694 = vmatpush.msra.mxu0 %v9569
    %9695 = vmatpush.msra.mxu0 %v9567
    %9696 = vmatpush.msra.mxu0 %v9565
    %9697 = vmatmul.f32.gmra.mxu0 %v9605
    %v9698 = vpop.f32.mrf.mxu0
    %v9699 = vadd.f32 0.0, %v9698
    %9700 = vmatmul.f32.gmra.mxu0 %v9608
    %v9701 = vpop.f32.mrf.mxu0
    %v9702 = vadd.f32 0.0, %v9701
    %9703 = vmatmul.f32.gmra.mxu0 %v9611
    %v9704 = vpop.f32.mrf.mxu0
    %v9705 = vadd.f32 0.0, %v9704
    %9706 = vmatmul.f32.gmra.mxu0 %v9614
    %v9707 = vpop.f32.mrf.mxu0
    %v9708 = vadd.f32 0.0, %v9707
    %9709 = vmatmul.f32.gmra.mxu0 %v9617
    %v9710 = vpop.f32.mrf.mxu0
    %v9711 = vadd.f32 0.0, %v9710
    %9712 = vmatmul.f32.gmra.mxu0 %v9620
    %v9713 = vpop.f32.mrf.mxu0
    %v9714 = vadd.f32 0.0, %v9713
    %9715 = vmatmul.f32.gmra.mxu0 %v9623
    %v9716 = vpop.f32.mrf.mxu0
    %v9717 = vadd.f32 0.0, %v9716
    %9718 = vmatmul.f32.gmra.mxu0 %v9626
    %v9719 = vpop.f32.mrf.mxu0
    %v9720 = vadd.f32 0.0, %v9719
    %9721 = vmatmul.f32.gmra.mxu0 %v9629
    %v9722 = vpop.f32.mrf.mxu0
    %v9723 = vadd.f32 0.0, %v9722
    %9724 = vmatmul.f32.gmra.mxu0 %v9632
    %v9725 = vpop.f32.mrf.mxu0
    %v9726 = vadd.f32 0.0, %v9725
    %9727 = vdwg.mxu0
    %v9728 = vadd.f32 %v9473, %v9652
    %v9729 = vadd.f32 %v9474, %v9699
    %v9730 = vadd.f32 %v9475, %v9655
    %v9731 = vadd.f32 %v9476, %v9702
    %v9732 = vadd.f32 %v9477, %v9658
    %v9733 = vadd.f32 %v9478, %v9705
    %v9734 = vadd.f32 %v9479, %v9661
    %v9735 = vadd.f32 %v9480, %v9708
    %v9736 = vadd.f32 %v9481, %v9664
    %v9737 = vadd.f32 %v9482, %v9711
    %v9738 = vadd.f32 %v9483, %v9667
    %v9739 = vadd.f32 %v9484, %v9714
    %v9740 = vadd.f32 %v9485, %v9670
    %v9741 = vadd.f32 %v9486, %v9717
    %v9742 = vadd.f32 %v9487, %v9673
    %v9743 = vadd.f32 %v9488, %v9720
    %v9744 = vadd.f32 %v9489, %v9676
    %v9745 = vadd.f32 %v9490, %v9723
    %v9746 = vadd.f32 %v9491, %v9679
    %v9747 = vadd.f32 %v9492, %v9726
    %v9748 = vld [vmem:[#allocation9 + $0x690] sm:$0xff]
    %v9749 = vld [vmem:[#allocation9 + $0x698] sm:$0xff]
    %v9750 = vld [vmem:[#allocation9 + $0x6a0] sm:$0xff]
    %v9751 = vld [vmem:[#allocation9 + $0x6a8] sm:$0xff]
    %v9752 = vld [vmem:[#allocation9 + $0x6b0] sm:$0xff]
    %v9753 = vld [vmem:[#allocation9 + $0x6b8] sm:$0xff]
    %v9754 = vld [vmem:[#allocation9 + $0x6c0] sm:$0xff]
    %v9755 = vld [vmem:[#allocation9 + $0x6c8] sm:$0xff]
    %v9756 = vld [vmem:[#allocation9 + $0x6d0] sm:$0xff]
    %v9757 = vld [vmem:[#allocation9 + $0x6d8] sm:$0xff]
    %9758 = vrot.lane.b32.xlu0 %v4599, 55
    %v9759 = vpop.permute.xlu0 %9758
    %9760 = vrot.lane.b32.xlu0 %v4600, 55
    %v9761 = vpop.permute.xlu0 %9760
    %9762 = vrot.lane.b32.xlu0 %v4601, 55
    %v9763 = vpop.permute.xlu0 %9762
    %9764 = vrot.lane.b32.xlu0 %v4602, 55
    %v9765 = vpop.permute.xlu0 %9764
    %9766 = vrot.lane.b32.xlu0 %v4603, 55
    %v9767 = vpop.permute.xlu0 %9766
    %9768 = vrot.lane.b32.xlu0 %v4604, 55
    %v9769 = vpop.permute.xlu0 %9768
    %9770 = vrot.lane.b32.xlu0 %v4605, 55
    %v9771 = vpop.permute.xlu0 %9770
    %9772 = vrot.lane.b32.xlu0 %v4606, 55
    %v9773 = vpop.permute.xlu0 %9772
    %9774 = vrot.lane.b32.xlu0 %v4607, 55
    %v9775 = vpop.permute.xlu0 %9774
    %9776 = vrot.lane.b32.xlu0 %v4608, 55
    %v9777 = vpop.permute.xlu0 %9776
    %9778 = vrot.lane.b32.xlu0 %v4609, 55
    %v9779 = vpop.permute.xlu0 %9778
    %9780 = vrot.lane.b32.xlu0 %v4610, 55
    %v9781 = vpop.permute.xlu0 %9780
    %9782 = vrot.lane.b32.xlu0 %v4611, 55
    %v9783 = vpop.permute.xlu0 %9782
    %9784 = vrot.lane.b32.xlu0 %v4612, 55
    %v9785 = vpop.permute.xlu0 %9784
    %9786 = vrot.lane.b32.xlu0 %v4613, 55
    %v9787 = vpop.permute.xlu0 %9786
    %9788 = vrot.lane.b32.xlu0 %v4614, 55
    %v9789 = vpop.permute.xlu0 %9788
    %9790 = vrot.lane.b32.xlu0 %v4615, 55
    %v9791 = vpop.permute.xlu0 %9790
    %9792 = vrot.lane.b32.xlu0 %v4616, 55
    %v9793 = vpop.permute.xlu0 %9792
    %9794 = vrot.lane.b32.xlu0 %v4617, 55
    %v9795 = vpop.permute.xlu0 %9794
    %9796 = vrot.lane.b32.xlu0 %v4618, 55
    %v9797 = vpop.permute.xlu0 %9796
    %9798 = vrot.lane.b32.xlu0 %v4619, 55
    %v9799 = vpop.permute.xlu0 %9798
    %9800 = vrot.lane.b32.xlu0 %v4620, 55
    %v9801 = vpop.permute.xlu0 %9800
    %9802 = vrot.lane.b32.xlu0 %v4621, 55
    %v9803 = vpop.permute.xlu0 %9802
    %9804 = vrot.lane.b32.xlu0 %v4622, 55
    %v9805 = vpop.permute.xlu0 %9804
    %9806 = vrot.lane.b32.xlu0 %v4623, 55
    %v9807 = vpop.permute.xlu0 %9806
    %9808 = vrot.lane.b32.xlu0 %v4624, 55
    %v9809 = vpop.permute.xlu0 %9808
    %9810 = vrot.lane.b32.xlu0 %v4625, 55
    %v9811 = vpop.permute.xlu0 %9810
    %9812 = vrot.lane.b32.xlu0 %v4626, 55
    %v9813 = vpop.permute.xlu0 %9812
    %9814 = vrot.lane.b32.xlu0 %v4627, 55
    %v9815 = vpop.permute.xlu0 %9814
    %9816 = vrot.lane.b32.xlu0 %v4628, 55
    %v9817 = vpop.permute.xlu0 %9816
    %vm9818 = vcmask 449536
    %v9819 = vsel %vm9818, %v9759, %v9761
    %v9820 = vsel %vm9818, %v9761, %v9763
    %v9821 = vsel %vm9818, %v9765, %v9767
    %v9822 = vsel %vm9818, %v9767, %v9769
    %v9823 = vsel %vm9818, %v9771, %v9773
    %v9824 = vsel %vm9818, %v9773, %v9775
    %v9825 = vsel %vm9818, %v9777, %v9779
    %v9826 = vsel %vm9818, %v9779, %v9781
    %v9827 = vsel %vm9818, %v9783, %v9785
    %v9828 = vsel %vm9818, %v9785, %v9787
    %v9829 = vsel %vm9818, %v9789, %v9791
    %v9830 = vsel %vm9818, %v9791, %v9793
    %v9831 = vsel %vm9818, %v9795, %v9797
    %v9832 = vsel %vm9818, %v9797, %v9799
    %v9833 = vsel %vm9818, %v9801, %v9803
    %v9834 = vsel %vm9818, %v9803, %v9805
    %v9835 = vsel %vm9818, %v9807, %v9809
    %v9836 = vsel %vm9818, %v9809, %v9811
    %v9837 = vsel %vm9818, %v9813, %v9815
    %v9838 = vsel %vm9818, %v9815, %v9817
    %v9860 = vsel %vm4739, %v9748, 0
    %v9863 = vsel %vm4739, %v9749, 0
    %v9866 = vsel %vm4739, %v9750, 0
    %v9869 = vsel %vm4739, %v9751, 0
    %v9872 = vsel %vm4739, %v9752, 0
    %v9875 = vsel %vm4739, %v9753, 0
    %v9878 = vsel %vm4739, %v9754, 0
    %v9881 = vsel %vm4739, %v9755, 0
    %v9884 = vsel %vm4739, %v9756, 0
    %v9887 = vsel %vm4739, %v9757, 0
    %9889 = vmatpush.msra.mxu0 0.0
    %9890 = vmatpush.msra.mxu0 0.0
    %9891 = vmatpush.msra.mxu0 0.0
    %9892 = vmatpush.msra.mxu0 0.0
    %9893 = vmatpush.msra.mxu0 0.0
    %9894 = vmatpush.msra.mxu0 0.0
    %9895 = vmatpush.msra.mxu0 %v9837
    %9896 = vmatpush.msra.mxu0 %v9835
    %9897 = vmatpush.msra.mxu0 %v9833
    %9898 = vmatpush.msra.mxu0 %v9831
    %9899 = vmatpush.msra.mxu0 %v9829
    %9900 = vmatpush.msra.mxu0 %v9827
    %9901 = vmatpush.msra.mxu0 %v9825
    %9902 = vmatpush.msra.mxu0 %v9823
    %9903 = vmatpush.msra.mxu0 %v9821
    %9904 = vmatpush.msra.mxu0 %v9819
    %9905 = vmatmul.f32.gmra.mxu0 %v9860
    %v9906 = vpop.f32.mrf.mxu0
    %v9907 = vadd.f32 0.0, %v9906
    %9908 = vmatmul.f32.gmra.mxu0 %v9863
    %v9909 = vpop.f32.mrf.mxu0
    %v9910 = vadd.f32 0.0, %v9909
    %9911 = vmatmul.f32.gmra.mxu0 %v9866
    %v9912 = vpop.f32.mrf.mxu0
    %v9913 = vadd.f32 0.0, %v9912
    %9914 = vmatmul.f32.gmra.mxu0 %v9869
    %v9915 = vpop.f32.mrf.mxu0
    %v9916 = vadd.f32 0.0, %v9915
    %9917 = vmatmul.f32.gmra.mxu0 %v9872
    %v9918 = vpop.f32.mrf.mxu0
    %v9919 = vadd.f32 0.0, %v9918
    %9920 = vmatmul.f32.gmra.mxu0 %v9875
    %v9921 = vpop.f32.mrf.mxu0
    %v9922 = vadd.f32 0.0, %v9921
    %9923 = vmatmul.f32.gmra.mxu0 %v9878
    %v9924 = vpop.f32.mrf.mxu0
    %v9925 = vadd.f32 0.0, %v9924
    %9926 = vmatmul.f32.gmra.mxu0 %v9881
    %v9927 = vpop.f32.mrf.mxu0
    %v9928 = vadd.f32 0.0, %v9927
    %9929 = vmatmul.f32.gmra.mxu0 %v9884
    %v9930 = vpop.f32.mrf.mxu0
    %v9931 = vadd.f32 0.0, %v9930
    %9932 = vmatmul.f32.gmra.mxu0 %v9887
    %v9933 = vpop.f32.mrf.mxu0
    %v9934 = vadd.f32 0.0, %v9933
    %9935 = vdwg.mxu0
    %9936 = vmatpush.msra.mxu0 0.0
    %9937 = vmatpush.msra.mxu0 0.0
    %9938 = vmatpush.msra.mxu0 0.0
    %9939 = vmatpush.msra.mxu0 0.0
    %9940 = vmatpush.msra.mxu0 0.0
    %9941 = vmatpush.msra.mxu0 0.0
    %9942 = vmatpush.msra.mxu0 %v9838
    %9943 = vmatpush.msra.mxu0 %v9836
    %9944 = vmatpush.msra.mxu0 %v9834
    %9945 = vmatpush.msra.mxu0 %v9832
    %9946 = vmatpush.msra.mxu0 %v9830
    %9947 = vmatpush.msra.mxu0 %v9828
    %9948 = vmatpush.msra.mxu0 %v9826
    %9949 = vmatpush.msra.mxu0 %v9824
    %9950 = vmatpush.msra.mxu0 %v9822
    %9951 = vmatpush.msra.mxu0 %v9820
    %9952 = vmatmul.f32.gmra.mxu0 %v9860
    %v9953 = vpop.f32.mrf.mxu0
    %v9954 = vadd.f32 0.0, %v9953
    %9955 = vmatmul.f32.gmra.mxu0 %v9863
    %v9956 = vpop.f32.mrf.mxu0
    %v9957 = vadd.f32 0.0, %v9956
    %9958 = vmatmul.f32.gmra.mxu0 %v9866
    %v9959 = vpop.f32.mrf.mxu0
    %v9960 = vadd.f32 0.0, %v9959
    %9961 = vmatmul.f32.gmra.mxu0 %v9869
    %v9962 = vpop.f32.mrf.mxu0
    %v9963 = vadd.f32 0.0, %v9962
    %9964 = vmatmul.f32.gmra.mxu0 %v9872
    %v9965 = vpop.f32.mrf.mxu0
    %v9966 = vadd.f32 0.0, %v9965
    %9967 = vmatmul.f32.gmra.mxu0 %v9875
    %v9968 = vpop.f32.mrf.mxu0
    %v9969 = vadd.f32 0.0, %v9968
    %9970 = vmatmul.f32.gmra.mxu0 %v9878
    %v9971 = vpop.f32.mrf.mxu0
    %v9972 = vadd.f32 0.0, %v9971
    %9973 = vmatmul.f32.gmra.mxu0 %v9881
    %v9974 = vpop.f32.mrf.mxu0
    %v9975 = vadd.f32 0.0, %v9974
    %9976 = vmatmul.f32.gmra.mxu0 %v9884
    %v9977 = vpop.f32.mrf.mxu0
    %v9978 = vadd.f32 0.0, %v9977
    %9979 = vmatmul.f32.gmra.mxu0 %v9887
    %v9980 = vpop.f32.mrf.mxu0
    %v9981 = vadd.f32 0.0, %v9980
    %9982 = vdwg.mxu0
    %v9983 = vadd.f32 %v9728, %v9907
    %v9984 = vadd.f32 %v9729, %v9954
    %v9985 = vadd.f32 %v9730, %v9910
    %v9986 = vadd.f32 %v9731, %v9957
    %v9987 = vadd.f32 %v9732, %v9913
    %v9988 = vadd.f32 %v9733, %v9960
    %v9989 = vadd.f32 %v9734, %v9916
    %v9990 = vadd.f32 %v9735, %v9963
    %v9991 = vadd.f32 %v9736, %v9919
    %v9992 = vadd.f32 %v9737, %v9966
    %v9993 = vadd.f32 %v9738, %v9922
    %v9994 = vadd.f32 %v9739, %v9969
    %v9995 = vadd.f32 %v9740, %v9925
    %v9996 = vadd.f32 %v9741, %v9972
    %v9997 = vadd.f32 %v9742, %v9928
    %v9998 = vadd.f32 %v9743, %v9975
    %v9999 = vadd.f32 %v9744, %v9931
    %v10000 = vadd.f32 %v9745, %v9978
    %v10001 = vadd.f32 %v9746, %v9934
    %v10002 = vadd.f32 %v9747, %v9981
    %v10003 = vld [vmem:[#allocation9 + $0x6e0] sm:$0xff]
    %v10004 = vld [vmem:[#allocation9 + $0x6e8] sm:$0xff]
    %v10005 = vld [vmem:[#allocation9 + $0x6f0] sm:$0xff]
    %v10006 = vld [vmem:[#allocation9 + $0x6f8] sm:$0xff]
    %v10007 = vld [vmem:[#allocation9 + $0x700] sm:$0xff]
    %v10008 = vld [vmem:[#allocation9 + $0x708] sm:$0xff]
    %v10009 = vld [vmem:[#allocation9 + $0x710] sm:$0xff]
    %v10010 = vld [vmem:[#allocation9 + $0x718] sm:$0xff]
    %v10011 = vld [vmem:[#allocation9 + $0x720] sm:$0xff]
    %v10012 = vld [vmem:[#allocation9 + $0x728] sm:$0xff]
    %10013 = vrot.lane.b32.xlu0 %v4599, 54
    %v10014 = vpop.permute.xlu0 %10013
    %10015 = vrot.lane.b32.xlu0 %v4600, 54
    %v10016 = vpop.permute.xlu0 %10015
    %10017 = vrot.lane.b32.xlu0 %v4601, 54
    %v10018 = vpop.permute.xlu0 %10017
    %10019 = vrot.lane.b32.xlu0 %v4602, 54
    %v10020 = vpop.permute.xlu0 %10019
    %10021 = vrot.lane.b32.xlu0 %v4603, 54
    %v10022 = vpop.permute.xlu0 %10021
    %10023 = vrot.lane.b32.xlu0 %v4604, 54
    %v10024 = vpop.permute.xlu0 %10023
    %10025 = vrot.lane.b32.xlu0 %v4605, 54
    %v10026 = vpop.permute.xlu0 %10025
    %10027 = vrot.lane.b32.xlu0 %v4606, 54
    %v10028 = vpop.permute.xlu0 %10027
    %10029 = vrot.lane.b32.xlu0 %v4607, 54
    %v10030 = vpop.permute.xlu0 %10029
    %10031 = vrot.lane.b32.xlu0 %v4608, 54
    %v10032 = vpop.permute.xlu0 %10031
    %10033 = vrot.lane.b32.xlu0 %v4609, 54
    %v10034 = vpop.permute.xlu0 %10033
    %10035 = vrot.lane.b32.xlu0 %v4610, 54
    %v10036 = vpop.permute.xlu0 %10035
    %10037 = vrot.lane.b32.xlu0 %v4611, 54
    %v10038 = vpop.permute.xlu0 %10037
    %10039 = vrot.lane.b32.xlu0 %v4612, 54
    %v10040 = vpop.permute.xlu0 %10039
    %10041 = vrot.lane.b32.xlu0 %v4613, 54
    %v10042 = vpop.permute.xlu0 %10041
    %10043 = vrot.lane.b32.xlu0 %v4614, 54
    %v10044 = vpop.permute.xlu0 %10043
    %10045 = vrot.lane.b32.xlu0 %v4615, 54
    %v10046 = vpop.permute.xlu0 %10045
    %10047 = vrot.lane.b32.xlu0 %v4616, 54
    %v10048 = vpop.permute.xlu0 %10047
    %10049 = vrot.lane.b32.xlu0 %v4617, 54
    %v10050 = vpop.permute.xlu0 %10049
    %10051 = vrot.lane.b32.xlu0 %v4618, 54
    %v10052 = vpop.permute.xlu0 %10051
    %10053 = vrot.lane.b32.xlu0 %v4619, 54
    %v10054 = vpop.permute.xlu0 %10053
    %10055 = vrot.lane.b32.xlu0 %v4620, 54
    %v10056 = vpop.permute.xlu0 %10055
    %10057 = vrot.lane.b32.xlu0 %v4621, 54
    %v10058 = vpop.permute.xlu0 %10057
    %10059 = vrot.lane.b32.xlu0 %v4622, 54
    %v10060 = vpop.permute.xlu0 %10059
    %10061 = vrot.lane.b32.xlu0 %v4623, 54
    %v10062 = vpop.permute.xlu0 %10061
    %10063 = vrot.lane.b32.xlu0 %v4624, 54
    %v10064 = vpop.permute.xlu0 %10063
    %10065 = vrot.lane.b32.xlu0 %v4625, 54
    %v10066 = vpop.permute.xlu0 %10065
    %10067 = vrot.lane.b32.xlu0 %v4626, 54
    %v10068 = vpop.permute.xlu0 %10067
    %10069 = vrot.lane.b32.xlu0 %v4627, 54
    %v10070 = vpop.permute.xlu0 %10069
    %10071 = vrot.lane.b32.xlu0 %v4628, 54
    %v10072 = vpop.permute.xlu0 %10071
    %vm10073 = vcmask 441344
    %v10074 = vsel %vm10073, %v10014, %v10016
    %v10075 = vsel %vm10073, %v10016, %v10018
    %v10076 = vsel %vm10073, %v10020, %v10022
    %v10077 = vsel %vm10073, %v10022, %v10024
    %v10078 = vsel %vm10073, %v10026, %v10028
    %v10079 = vsel %vm10073, %v10028, %v10030
    %v10080 = vsel %vm10073, %v10032, %v10034
    %v10081 = vsel %vm10073, %v10034, %v10036
    %v10082 = vsel %vm10073, %v10038, %v10040
    %v10083 = vsel %vm10073, %v10040, %v10042
    %v10084 = vsel %vm10073, %v10044, %v10046
    %v10085 = vsel %vm10073, %v10046, %v10048
    %v10086 = vsel %vm10073, %v10050, %v10052
    %v10087 = vsel %vm10073, %v10052, %v10054
    %v10088 = vsel %vm10073, %v10056, %v10058
    %v10089 = vsel %vm10073, %v10058, %v10060
    %v10090 = vsel %vm10073, %v10062, %v10064
    %v10091 = vsel %vm10073, %v10064, %v10066
    %v10092 = vsel %vm10073, %v10068, %v10070
    %v10093 = vsel %vm10073, %v10070, %v10072
    %v10115 = vsel %vm4739, %v10003, 0
    %v10118 = vsel %vm4739, %v10004, 0
    %v10121 = vsel %vm4739, %v10005, 0
    %v10124 = vsel %vm4739, %v10006, 0
    %v10127 = vsel %vm4739, %v10007, 0
    %v10130 = vsel %vm4739, %v10008, 0
    %v10133 = vsel %vm4739, %v10009, 0
    %v10136 = vsel %vm4739, %v10010, 0
    %v10139 = vsel %vm4739, %v10011, 0
    %v10142 = vsel %vm4739, %v10012, 0
    %10144 = vmatpush.msra.mxu0 0.0
    %10145 = vmatpush.msra.mxu0 0.0
    %10146 = vmatpush.msra.mxu0 0.0
    %10147 = vmatpush.msra.mxu0 0.0
    %10148 = vmatpush.msra.mxu0 0.0
    %10149 = vmatpush.msra.mxu0 0.0
    %10150 = vmatpush.msra.mxu0 %v10092
    %10151 = vmatpush.msra.mxu0 %v10090
    %10152 = vmatpush.msra.mxu0 %v10088
    %10153 = vmatpush.msra.mxu0 %v10086
    %10154 = vmatpush.msra.mxu0 %v10084
    %10155 = vmatpush.msra.mxu0 %v10082
    %10156 = vmatpush.msra.mxu0 %v10080
    %10157 = vmatpush.msra.mxu0 %v10078
    %10158 = vmatpush.msra.mxu0 %v10076
    %10159 = vmatpush.msra.mxu0 %v10074
    %10160 = vmatmul.f32.gmra.mxu0 %v10115
    %v10161 = vpop.f32.mrf.mxu0
    %v10162 = vadd.f32 0.0, %v10161
    %10163 = vmatmul.f32.gmra.mxu0 %v10118
    %v10164 = vpop.f32.mrf.mxu0
    %v10165 = vadd.f32 0.0, %v10164
    %10166 = vmatmul.f32.gmra.mxu0 %v10121
    %v10167 = vpop.f32.mrf.mxu0
    %v10168 = vadd.f32 0.0, %v10167
    %10169 = vmatmul.f32.gmra.mxu0 %v10124
    %v10170 = vpop.f32.mrf.mxu0
    %v10171 = vadd.f32 0.0, %v10170
    %10172 = vmatmul.f32.gmra.mxu0 %v10127
    %v10173 = vpop.f32.mrf.mxu0
    %v10174 = vadd.f32 0.0, %v10173
    %10175 = vmatmul.f32.gmra.mxu0 %v10130
    %v10176 = vpop.f32.mrf.mxu0
    %v10177 = vadd.f32 0.0, %v10176
    %10178 = vmatmul.f32.gmra.mxu0 %v10133
    %v10179 = vpop.f32.mrf.mxu0
    %v10180 = vadd.f32 0.0, %v10179
    %10181 = vmatmul.f32.gmra.mxu0 %v10136
    %v10182 = vpop.f32.mrf.mxu0
    %v10183 = vadd.f32 0.0, %v10182
    %10184 = vmatmul.f32.gmra.mxu0 %v10139
    %v10185 = vpop.f32.mrf.mxu0
    %v10186 = vadd.f32 0.0, %v10185
    %10187 = vmatmul.f32.gmra.mxu0 %v10142
    %v10188 = vpop.f32.mrf.mxu0
    %v10189 = vadd.f32 0.0, %v10188
    %10190 = vdwg.mxu0
    %10191 = vmatpush.msra.mxu0 0.0
    %10192 = vmatpush.msra.mxu0 0.0
    %10193 = vmatpush.msra.mxu0 0.0
    %10194 = vmatpush.msra.mxu0 0.0
    %10195 = vmatpush.msra.mxu0 0.0
    %10196 = vmatpush.msra.mxu0 0.0
    %10197 = vmatpush.msra.mxu0 %v10093
    %10198 = vmatpush.msra.mxu0 %v10091
    %10199 = vmatpush.msra.mxu0 %v10089
    %10200 = vmatpush.msra.mxu0 %v10087
    %10201 = vmatpush.msra.mxu0 %v10085
    %10202 = vmatpush.msra.mxu0 %v10083
    %10203 = vmatpush.msra.mxu0 %v10081
    %10204 = vmatpush.msra.mxu0 %v10079
    %10205 = vmatpush.msra.mxu0 %v10077
    %10206 = vmatpush.msra.mxu0 %v10075
    %10207 = vmatmul.f32.gmra.mxu0 %v10115
    %v10208 = vpop.f32.mrf.mxu0
    %v10209 = vadd.f32 0.0, %v10208
    %10210 = vmatmul.f32.gmra.mxu0 %v10118
    %v10211 = vpop.f32.mrf.mxu0
    %v10212 = vadd.f32 0.0, %v10211
    %10213 = vmatmul.f32.gmra.mxu0 %v10121
    %v10214 = vpop.f32.mrf.mxu0
    %v10215 = vadd.f32 0.0, %v10214
    %10216 = vmatmul.f32.gmra.mxu0 %v10124
    %v10217 = vpop.f32.mrf.mxu0
    %v10218 = vadd.f32 0.0, %v10217
    %10219 = vmatmul.f32.gmra.mxu0 %v10127
    %v10220 = vpop.f32.mrf.mxu0
    %v10221 = vadd.f32 0.0, %v10220
    %10222 = vmatmul.f32.gmra.mxu0 %v10130
    %v10223 = vpop.f32.mrf.mxu0
    %v10224 = vadd.f32 0.0, %v10223
    %10225 = vmatmul.f32.gmra.mxu0 %v10133
    %v10226 = vpop.f32.mrf.mxu0
    %v10227 = vadd.f32 0.0, %v10226
    %10228 = vmatmul.f32.gmra.mxu0 %v10136
    %v10229 = vpop.f32.mrf.mxu0
    %v10230 = vadd.f32 0.0, %v10229
    %10231 = vmatmul.f32.gmra.mxu0 %v10139
    %v10232 = vpop.f32.mrf.mxu0
    %v10233 = vadd.f32 0.0, %v10232
    %10234 = vmatmul.f32.gmra.mxu0 %v10142
    %v10235 = vpop.f32.mrf.mxu0
    %v10236 = vadd.f32 0.0, %v10235
    %10237 = vdwg.mxu0
    %v10238 = vadd.f32 %v9983, %v10162
    %v10239 = vadd.f32 %v9984, %v10209
    %v10240 = vadd.f32 %v9985, %v10165
    %v10241 = vadd.f32 %v9986, %v10212
    %v10242 = vadd.f32 %v9987, %v10168
    %v10243 = vadd.f32 %v9988, %v10215
    %v10244 = vadd.f32 %v9989, %v10171
    %v10245 = vadd.f32 %v9990, %v10218
    %v10246 = vadd.f32 %v9991, %v10174
    %v10247 = vadd.f32 %v9992, %v10221
    %v10248 = vadd.f32 %v9993, %v10177
    %v10249 = vadd.f32 %v9994, %v10224
    %v10250 = vadd.f32 %v9995, %v10180
    %v10251 = vadd.f32 %v9996, %v10227
    %v10252 = vadd.f32 %v9997, %v10183
    %v10253 = vadd.f32 %v9998, %v10230
    %v10254 = vadd.f32 %v9999, %v10186
    %v10255 = vadd.f32 %v10000, %v10233
    %v10256 = vadd.f32 %v10001, %v10189
    %v10257 = vadd.f32 %v10002, %v10236
    %v10258 = vld [vmem:[#allocation9 + $0x730] sm:$0xff]
    %v10259 = vld [vmem:[#allocation9 + $0x738] sm:$0xff]
    %v10260 = vld [vmem:[#allocation9 + $0x740] sm:$0xff]
    %v10261 = vld [vmem:[#allocation9 + $0x748] sm:$0xff]
    %v10262 = vld [vmem:[#allocation9 + $0x750] sm:$0xff]
    %v10263 = vld [vmem:[#allocation9 + $0x758] sm:$0xff]
    %v10264 = vld [vmem:[#allocation9 + $0x760] sm:$0xff]
    %v10265 = vld [vmem:[#allocation9 + $0x768] sm:$0xff]
    %v10266 = vld [vmem:[#allocation9 + $0x770] sm:$0xff]
    %v10267 = vld [vmem:[#allocation9 + $0x778] sm:$0xff]
    %10268 = vrot.lane.b32.xlu0 %v4599, 53
    %v10269 = vpop.permute.xlu0 %10268
    %10270 = vrot.lane.b32.xlu0 %v4600, 53
    %v10271 = vpop.permute.xlu0 %10270
    %10272 = vrot.lane.b32.xlu0 %v4601, 53
    %v10273 = vpop.permute.xlu0 %10272
    %10274 = vrot.lane.b32.xlu0 %v4602, 53
    %v10275 = vpop.permute.xlu0 %10274
    %10276 = vrot.lane.b32.xlu0 %v4603, 53
    %v10277 = vpop.permute.xlu0 %10276
    %10278 = vrot.lane.b32.xlu0 %v4604, 53
    %v10279 = vpop.permute.xlu0 %10278
    %10280 = vrot.lane.b32.xlu0 %v4605, 53
    %v10281 = vpop.permute.xlu0 %10280
    %10282 = vrot.lane.b32.xlu0 %v4606, 53
    %v10283 = vpop.permute.xlu0 %10282
    %10284 = vrot.lane.b32.xlu0 %v4607, 53
    %v10285 = vpop.permute.xlu0 %10284
    %10286 = vrot.lane.b32.xlu0 %v4608, 53
    %v10287 = vpop.permute.xlu0 %10286
    %10288 = vrot.lane.b32.xlu0 %v4609, 53
    %v10289 = vpop.permute.xlu0 %10288
    %10290 = vrot.lane.b32.xlu0 %v4610, 53
    %v10291 = vpop.permute.xlu0 %10290
    %10292 = vrot.lane.b32.xlu0 %v4611, 53
    %v10293 = vpop.permute.xlu0 %10292
    %10294 = vrot.lane.b32.xlu0 %v4612, 53
    %v10295 = vpop.permute.xlu0 %10294
    %10296 = vrot.lane.b32.xlu0 %v4613, 53
    %v10297 = vpop.permute.xlu0 %10296
    %10298 = vrot.lane.b32.xlu0 %v4614, 53
    %v10299 = vpop.permute.xlu0 %10298
    %10300 = vrot.lane.b32.xlu0 %v4615, 53
    %v10301 = vpop.permute.xlu0 %10300
    %10302 = vrot.lane.b32.xlu0 %v4616, 53
    %v10303 = vpop.permute.xlu0 %10302
    %10304 = vrot.lane.b32.xlu0 %v4617, 53
    %v10305 = vpop.permute.xlu0 %10304
    %10306 = vrot.lane.b32.xlu0 %v4618, 53
    %v10307 = vpop.permute.xlu0 %10306
    %10308 = vrot.lane.b32.xlu0 %v4619, 53
    %v10309 = vpop.permute.xlu0 %10308
    %10310 = vrot.lane.b32.xlu0 %v4620, 53
    %v10311 = vpop.permute.xlu0 %10310
    %10312 = vrot.lane.b32.xlu0 %v4621, 53
    %v10313 = vpop.permute.xlu0 %10312
    %10314 = vrot.lane.b32.xlu0 %v4622, 53
    %v10315 = vpop.permute.xlu0 %10314
    %10316 = vrot.lane.b32.xlu0 %v4623, 53
    %v10317 = vpop.permute.xlu0 %10316
    %10318 = vrot.lane.b32.xlu0 %v4624, 53
    %v10319 = vpop.permute.xlu0 %10318
    %10320 = vrot.lane.b32.xlu0 %v4625, 53
    %v10321 = vpop.permute.xlu0 %10320
    %10322 = vrot.lane.b32.xlu0 %v4626, 53
    %v10323 = vpop.permute.xlu0 %10322
    %10324 = vrot.lane.b32.xlu0 %v4627, 53
    %v10325 = vpop.permute.xlu0 %10324
    %10326 = vrot.lane.b32.xlu0 %v4628, 53
    %v10327 = vpop.permute.xlu0 %10326
    %vm10328 = vcmask 433152
    %v10329 = vsel %vm10328, %v10269, %v10271
    %v10330 = vsel %vm10328, %v10271, %v10273
    %v10331 = vsel %vm10328, %v10275, %v10277
    %v10332 = vsel %vm10328, %v10277, %v10279
    %v10333 = vsel %vm10328, %v10281, %v10283
    %v10334 = vsel %vm10328, %v10283, %v10285
    %v10335 = vsel %vm10328, %v10287, %v10289
    %v10336 = vsel %vm10328, %v10289, %v10291
    %v10337 = vsel %vm10328, %v10293, %v10295
    %v10338 = vsel %vm10328, %v10295, %v10297
    %v10339 = vsel %vm10328, %v10299, %v10301
    %v10340 = vsel %vm10328, %v10301, %v10303
    %v10341 = vsel %vm10328, %v10305, %v10307
    %v10342 = vsel %vm10328, %v10307, %v10309
    %v10343 = vsel %vm10328, %v10311, %v10313
    %v10344 = vsel %vm10328, %v10313, %v10315
    %v10345 = vsel %vm10328, %v10317, %v10319
    %v10346 = vsel %vm10328, %v10319, %v10321
    %v10347 = vsel %vm10328, %v10323, %v10325
    %v10348 = vsel %vm10328, %v10325, %v10327
    %v10370 = vsel %vm4739, %v10258, 0
    %v10373 = vsel %vm4739, %v10259, 0
    %v10376 = vsel %vm4739, %v10260, 0
    %v10379 = vsel %vm4739, %v10261, 0
    %v10382 = vsel %vm4739, %v10262, 0
    %v10385 = vsel %vm4739, %v10263, 0
    %v10388 = vsel %vm4739, %v10264, 0
    %v10391 = vsel %vm4739, %v10265, 0
    %v10394 = vsel %vm4739, %v10266, 0
    %v10397 = vsel %vm4739, %v10267, 0
    %10399 = vmatpush.msra.mxu0 0.0
    %10400 = vmatpush.msra.mxu0 0.0
    %10401 = vmatpush.msra.mxu0 0.0
    %10402 = vmatpush.msra.mxu0 0.0
    %10403 = vmatpush.msra.mxu0 0.0
    %10404 = vmatpush.msra.mxu0 0.0
    %10405 = vmatpush.msra.mxu0 %v10347
    %10406 = vmatpush.msra.mxu0 %v10345
    %10407 = vmatpush.msra.mxu0 %v10343
    %10408 = vmatpush.msra.mxu0 %v10341
    %10409 = vmatpush.msra.mxu0 %v10339
    %10410 = vmatpush.msra.mxu0 %v10337
    %10411 = vmatpush.msra.mxu0 %v10335
    %10412 = vmatpush.msra.mxu0 %v10333
    %10413 = vmatpush.msra.mxu0 %v10331
    %10414 = vmatpush.msra.mxu0 %v10329
    %10415 = vmatmul.f32.gmra.mxu0 %v10370
    %v10416 = vpop.f32.mrf.mxu0
    %v10417 = vadd.f32 0.0, %v10416
    %10418 = vmatmul.f32.gmra.mxu0 %v10373
    %v10419 = vpop.f32.mrf.mxu0
    %v10420 = vadd.f32 0.0, %v10419
    %10421 = vmatmul.f32.gmra.mxu0 %v10376
    %v10422 = vpop.f32.mrf.mxu0
    %v10423 = vadd.f32 0.0, %v10422
    %10424 = vmatmul.f32.gmra.mxu0 %v10379
    %v10425 = vpop.f32.mrf.mxu0
    %v10426 = vadd.f32 0.0, %v10425
    %10427 = vmatmul.f32.gmra.mxu0 %v10382
    %v10428 = vpop.f32.mrf.mxu0
    %v10429 = vadd.f32 0.0, %v10428
    %10430 = vmatmul.f32.gmra.mxu0 %v10385
    %v10431 = vpop.f32.mrf.mxu0
    %v10432 = vadd.f32 0.0, %v10431
    %10433 = vmatmul.f32.gmra.mxu0 %v10388
    %v10434 = vpop.f32.mrf.mxu0
    %v10435 = vadd.f32 0.0, %v10434
    %10436 = vmatmul.f32.gmra.mxu0 %v10391
    %v10437 = vpop.f32.mrf.mxu0
    %v10438 = vadd.f32 0.0, %v10437
    %10439 = vmatmul.f32.gmra.mxu0 %v10394
    %v10440 = vpop.f32.mrf.mxu0
    %v10441 = vadd.f32 0.0, %v10440
    %10442 = vmatmul.f32.gmra.mxu0 %v10397
    %v10443 = vpop.f32.mrf.mxu0
    %v10444 = vadd.f32 0.0, %v10443
    %10445 = vdwg.mxu0
    %10446 = vmatpush.msra.mxu0 0.0
    %10447 = vmatpush.msra.mxu0 0.0
    %10448 = vmatpush.msra.mxu0 0.0
    %10449 = vmatpush.msra.mxu0 0.0
    %10450 = vmatpush.msra.mxu0 0.0
    %10451 = vmatpush.msra.mxu0 0.0
    %10452 = vmatpush.msra.mxu0 %v10348
    %10453 = vmatpush.msra.mxu0 %v10346
    %10454 = vmatpush.msra.mxu0 %v10344
    %10455 = vmatpush.msra.mxu0 %v10342
    %10456 = vmatpush.msra.mxu0 %v10340
    %10457 = vmatpush.msra.mxu0 %v10338
    %10458 = vmatpush.msra.mxu0 %v10336
    %10459 = vmatpush.msra.mxu0 %v10334
    %10460 = vmatpush.msra.mxu0 %v10332
    %10461 = vmatpush.msra.mxu0 %v10330
    %10462 = vmatmul.f32.gmra.mxu0 %v10370
    %v10463 = vpop.f32.mrf.mxu0
    %v10464 = vadd.f32 0.0, %v10463
    %10465 = vmatmul.f32.gmra.mxu0 %v10373
    %v10466 = vpop.f32.mrf.mxu0
    %v10467 = vadd.f32 0.0, %v10466
    %10468 = vmatmul.f32.gmra.mxu0 %v10376
    %v10469 = vpop.f32.mrf.mxu0
    %v10470 = vadd.f32 0.0, %v10469
    %10471 = vmatmul.f32.gmra.mxu0 %v10379
    %v10472 = vpop.f32.mrf.mxu0
    %v10473 = vadd.f32 0.0, %v10472
    %10474 = vmatmul.f32.gmra.mxu0 %v10382
    %v10475 = vpop.f32.mrf.mxu0
    %v10476 = vadd.f32 0.0, %v10475
    %10477 = vmatmul.f32.gmra.mxu0 %v10385
    %v10478 = vpop.f32.mrf.mxu0
    %v10479 = vadd.f32 0.0, %v10478
    %10480 = vmatmul.f32.gmra.mxu0 %v10388
    %v10481 = vpop.f32.mrf.mxu0
    %v10482 = vadd.f32 0.0, %v10481
    %10483 = vmatmul.f32.gmra.mxu0 %v10391
    %v10484 = vpop.f32.mrf.mxu0
    %v10485 = vadd.f32 0.0, %v10484
    %10486 = vmatmul.f32.gmra.mxu0 %v10394
    %v10487 = vpop.f32.mrf.mxu0
    %v10488 = vadd.f32 0.0, %v10487
    %10489 = vmatmul.f32.gmra.mxu0 %v10397
    %v10490 = vpop.f32.mrf.mxu0
    %v10491 = vadd.f32 0.0, %v10490
    %10492 = vdwg.mxu0
    %v10493 = vadd.f32 %v10238, %v10417
    %v10494 = vadd.f32 %v10239, %v10464
    %v10495 = vadd.f32 %v10240, %v10420
    %v10496 = vadd.f32 %v10241, %v10467
    %v10497 = vadd.f32 %v10242, %v10423
    %v10498 = vadd.f32 %v10243, %v10470
    %v10499 = vadd.f32 %v10244, %v10426
    %v10500 = vadd.f32 %v10245, %v10473
    %v10501 = vadd.f32 %v10246, %v10429
    %v10502 = vadd.f32 %v10247, %v10476
    %v10503 = vadd.f32 %v10248, %v10432
    %v10504 = vadd.f32 %v10249, %v10479
    %v10505 = vadd.f32 %v10250, %v10435
    %v10506 = vadd.f32 %v10251, %v10482
    %v10507 = vadd.f32 %v10252, %v10438
    %v10508 = vadd.f32 %v10253, %v10485
    %v10509 = vadd.f32 %v10254, %v10441
    %v10510 = vadd.f32 %v10255, %v10488
    %v10511 = vadd.f32 %v10256, %v10444
    %v10512 = vadd.f32 %v10257, %v10491
    %v10513 = vld [vmem:[#allocation9 + $0x780] sm:$0xff]
    %v10514 = vld [vmem:[#allocation9 + $0x788] sm:$0xff]
    %v10515 = vld [vmem:[#allocation9 + $0x790] sm:$0xff]
    %v10516 = vld [vmem:[#allocation9 + $0x798] sm:$0xff]
    %v10517 = vld [vmem:[#allocation9 + $0x7a0] sm:$0xff]
    %v10518 = vld [vmem:[#allocation9 + $0x7a8] sm:$0xff]
    %v10519 = vld [vmem:[#allocation9 + $0x7b0] sm:$0xff]
    %v10520 = vld [vmem:[#allocation9 + $0x7b8] sm:$0xff]
    %v10521 = vld [vmem:[#allocation9 + $0x7c0] sm:$0xff]
    %v10522 = vld [vmem:[#allocation9 + $0x7c8] sm:$0xff]
    %10523 = vrot.lane.b32.xlu0 %v4599, 52
    %v10524 = vpop.permute.xlu0 %10523
    %10525 = vrot.lane.b32.xlu0 %v4600, 52
    %v10526 = vpop.permute.xlu0 %10525
    %10527 = vrot.lane.b32.xlu0 %v4601, 52
    %v10528 = vpop.permute.xlu0 %10527
    %10529 = vrot.lane.b32.xlu0 %v4602, 52
    %v10530 = vpop.permute.xlu0 %10529
    %10531 = vrot.lane.b32.xlu0 %v4603, 52
    %v10532 = vpop.permute.xlu0 %10531
    %10533 = vrot.lane.b32.xlu0 %v4604, 52
    %v10534 = vpop.permute.xlu0 %10533
    %10535 = vrot.lane.b32.xlu0 %v4605, 52
    %v10536 = vpop.permute.xlu0 %10535
    %10537 = vrot.lane.b32.xlu0 %v4606, 52
    %v10538 = vpop.permute.xlu0 %10537
    %10539 = vrot.lane.b32.xlu0 %v4607, 52
    %v10540 = vpop.permute.xlu0 %10539
    %10541 = vrot.lane.b32.xlu0 %v4608, 52
    %v10542 = vpop.permute.xlu0 %10541
    %10543 = vrot.lane.b32.xlu0 %v4609, 52
    %v10544 = vpop.permute.xlu0 %10543
    %10545 = vrot.lane.b32.xlu0 %v4610, 52
    %v10546 = vpop.permute.xlu0 %10545
    %10547 = vrot.lane.b32.xlu0 %v4611, 52
    %v10548 = vpop.permute.xlu0 %10547
    %10549 = vrot.lane.b32.xlu0 %v4612, 52
    %v10550 = vpop.permute.xlu0 %10549
    %10551 = vrot.lane.b32.xlu0 %v4613, 52
    %v10552 = vpop.permute.xlu0 %10551
    %10553 = vrot.lane.b32.xlu0 %v4614, 52
    %v10554 = vpop.permute.xlu0 %10553
    %10555 = vrot.lane.b32.xlu0 %v4615, 52
    %v10556 = vpop.permute.xlu0 %10555
    %10557 = vrot.lane.b32.xlu0 %v4616, 52
    %v10558 = vpop.permute.xlu0 %10557
    %10559 = vrot.lane.b32.xlu0 %v4617, 52
    %v10560 = vpop.permute.xlu0 %10559
    %10561 = vrot.lane.b32.xlu0 %v4618, 52
    %v10562 = vpop.permute.xlu0 %10561
    %10563 = vrot.lane.b32.xlu0 %v4619, 52
    %v10564 = vpop.permute.xlu0 %10563
    %10565 = vrot.lane.b32.xlu0 %v4620, 52
    %v10566 = vpop.permute.xlu0 %10565
    %10567 = vrot.lane.b32.xlu0 %v4621, 52
    %v10568 = vpop.permute.xlu0 %10567
    %10569 = vrot.lane.b32.xlu0 %v4622, 52
    %v10570 = vpop.permute.xlu0 %10569
    %10571 = vrot.lane.b32.xlu0 %v4623, 52
    %v10572 = vpop.permute.xlu0 %10571
    %10573 = vrot.lane.b32.xlu0 %v4624, 52
    %v10574 = vpop.permute.xlu0 %10573
    %10575 = vrot.lane.b32.xlu0 %v4625, 52
    %v10576 = vpop.permute.xlu0 %10575
    %10577 = vrot.lane.b32.xlu0 %v4626, 52
    %v10578 = vpop.permute.xlu0 %10577
    %10579 = vrot.lane.b32.xlu0 %v4627, 52
    %v10580 = vpop.permute.xlu0 %10579
    %10581 = vrot.lane.b32.xlu0 %v4628, 52
    %v10582 = vpop.permute.xlu0 %10581
    %vm10583 = vcmask 424960
    %v10584 = vsel %vm10583, %v10524, %v10526
    %v10585 = vsel %vm10583, %v10526, %v10528
    %v10586 = vsel %vm10583, %v10530, %v10532
    %v10587 = vsel %vm10583, %v10532, %v10534
    %v10588 = vsel %vm10583, %v10536, %v10538
    %v10589 = vsel %vm10583, %v10538, %v10540
    %v10590 = vsel %vm10583, %v10542, %v10544
    %v10591 = vsel %vm10583, %v10544, %v10546
    %v10592 = vsel %vm10583, %v10548, %v10550
    %v10593 = vsel %vm10583, %v10550, %v10552
    %v10594 = vsel %vm10583, %v10554, %v10556
    %v10595 = vsel %vm10583, %v10556, %v10558
    %v10596 = vsel %vm10583, %v10560, %v10562
    %v10597 = vsel %vm10583, %v10562, %v10564
    %v10598 = vsel %vm10583, %v10566, %v10568
    %v10599 = vsel %vm10583, %v10568, %v10570
    %v10600 = vsel %vm10583, %v10572, %v10574
    %v10601 = vsel %vm10583, %v10574, %v10576
    %v10602 = vsel %vm10583, %v10578, %v10580
    %v10603 = vsel %vm10583, %v10580, %v10582
    %v10625 = vsel %vm4739, %v10513, 0
    %v10628 = vsel %vm4739, %v10514, 0
    %v10631 = vsel %vm4739, %v10515, 0
    %v10634 = vsel %vm4739, %v10516, 0
    %v10637 = vsel %vm4739, %v10517, 0
    %v10640 = vsel %vm4739, %v10518, 0
    %v10643 = vsel %vm4739, %v10519, 0
    %v10646 = vsel %vm4739, %v10520, 0
    %v10649 = vsel %vm4739, %v10521, 0
    %v10652 = vsel %vm4739, %v10522, 0
    %10654 = vmatpush.msra.mxu0 0.0
    %10655 = vmatpush.msra.mxu0 0.0
    %10656 = vmatpush.msra.mxu0 0.0
    %10657 = vmatpush.msra.mxu0 0.0
    %10658 = vmatpush.msra.mxu0 0.0
    %10659 = vmatpush.msra.mxu0 0.0
    %10660 = vmatpush.msra.mxu0 %v10602
    %10661 = vmatpush.msra.mxu0 %v10600
    %10662 = vmatpush.msra.mxu0 %v10598
    %10663 = vmatpush.msra.mxu0 %v10596
    %10664 = vmatpush.msra.mxu0 %v10594
    %10665 = vmatpush.msra.mxu0 %v10592
    %10666 = vmatpush.msra.mxu0 %v10590
    %10667 = vmatpush.msra.mxu0 %v10588
    %10668 = vmatpush.msra.mxu0 %v10586
    %10669 = vmatpush.msra.mxu0 %v10584
    %10670 = vmatmul.f32.gmra.mxu0 %v10625
    %v10671 = vpop.f32.mrf.mxu0
    %v10672 = vadd.f32 0.0, %v10671
    %10673 = vmatmul.f32.gmra.mxu0 %v10628
    %v10674 = vpop.f32.mrf.mxu0
    %v10675 = vadd.f32 0.0, %v10674
    %10676 = vmatmul.f32.gmra.mxu0 %v10631
    %v10677 = vpop.f32.mrf.mxu0
    %v10678 = vadd.f32 0.0, %v10677
    %10679 = vmatmul.f32.gmra.mxu0 %v10634
    %v10680 = vpop.f32.mrf.mxu0
    %v10681 = vadd.f32 0.0, %v10680
    %10682 = vmatmul.f32.gmra.mxu0 %v10637
    %v10683 = vpop.f32.mrf.mxu0
    %v10684 = vadd.f32 0.0, %v10683
    %10685 = vmatmul.f32.gmra.mxu0 %v10640
    %v10686 = vpop.f32.mrf.mxu0
    %v10687 = vadd.f32 0.0, %v10686
    %10688 = vmatmul.f32.gmra.mxu0 %v10643
    %v10689 = vpop.f32.mrf.mxu0
    %v10690 = vadd.f32 0.0, %v10689
    %10691 = vmatmul.f32.gmra.mxu0 %v10646
    %v10692 = vpop.f32.mrf.mxu0
    %v10693 = vadd.f32 0.0, %v10692
    %10694 = vmatmul.f32.gmra.mxu0 %v10649
    %v10695 = vpop.f32.mrf.mxu0
    %v10696 = vadd.f32 0.0, %v10695
    %10697 = vmatmul.f32.gmra.mxu0 %v10652
    %v10698 = vpop.f32.mrf.mxu0
    %v10699 = vadd.f32 0.0, %v10698
    %10700 = vdwg.mxu0
    %10701 = vmatpush.msra.mxu0 0.0
    %10702 = vmatpush.msra.mxu0 0.0
    %10703 = vmatpush.msra.mxu0 0.0
    %10704 = vmatpush.msra.mxu0 0.0
    %10705 = vmatpush.msra.mxu0 0.0
    %10706 = vmatpush.msra.mxu0 0.0
    %10707 = vmatpush.msra.mxu0 %v10603
    %10708 = vmatpush.msra.mxu0 %v10601
    %10709 = vmatpush.msra.mxu0 %v10599
    %10710 = vmatpush.msra.mxu0 %v10597
    %10711 = vmatpush.msra.mxu0 %v10595
    %10712 = vmatpush.msra.mxu0 %v10593
    %10713 = vmatpush.msra.mxu0 %v10591
    %10714 = vmatpush.msra.mxu0 %v10589
    %10715 = vmatpush.msra.mxu0 %v10587
    %10716 = vmatpush.msra.mxu0 %v10585
    %10717 = vmatmul.f32.gmra.mxu0 %v10625
    %v10718 = vpop.f32.mrf.mxu0
    %v10719 = vadd.f32 0.0, %v10718
    %10720 = vmatmul.f32.gmra.mxu0 %v10628
    %v10721 = vpop.f32.mrf.mxu0
    %v10722 = vadd.f32 0.0, %v10721
    %10723 = vmatmul.f32.gmra.mxu0 %v10631
    %v10724 = vpop.f32.mrf.mxu0
    %v10725 = vadd.f32 0.0, %v10724
    %10726 = vmatmul.f32.gmra.mxu0 %v10634
    %v10727 = vpop.f32.mrf.mxu0
    %v10728 = vadd.f32 0.0, %v10727
    %10729 = vmatmul.f32.gmra.mxu0 %v10637
    %v10730 = vpop.f32.mrf.mxu0
    %v10731 = vadd.f32 0.0, %v10730
    %10732 = vmatmul.f32.gmra.mxu0 %v10640
    %v10733 = vpop.f32.mrf.mxu0
    %v10734 = vadd.f32 0.0, %v10733
    %10735 = vmatmul.f32.gmra.mxu0 %v10643
    %v10736 = vpop.f32.mrf.mxu0
    %v10737 = vadd.f32 0.0, %v10736
    %10738 = vmatmul.f32.gmra.mxu0 %v10646
    %v10739 = vpop.f32.mrf.mxu0
    %v10740 = vadd.f32 0.0, %v10739
    %10741 = vmatmul.f32.gmra.mxu0 %v10649
    %v10742 = vpop.f32.mrf.mxu0
    %v10743 = vadd.f32 0.0, %v10742
    %10744 = vmatmul.f32.gmra.mxu0 %v10652
    %v10745 = vpop.f32.mrf.mxu0
    %v10746 = vadd.f32 0.0, %v10745
    %10747 = vdwg.mxu0
    %v10748 = vadd.f32 %v10493, %v10672
    %v10749 = vadd.f32 %v10494, %v10719
    %v10750 = vadd.f32 %v10495, %v10675
    %v10751 = vadd.f32 %v10496, %v10722
    %v10752 = vadd.f32 %v10497, %v10678
    %v10753 = vadd.f32 %v10498, %v10725
    %v10754 = vadd.f32 %v10499, %v10681
    %v10755 = vadd.f32 %v10500, %v10728
    %v10756 = vadd.f32 %v10501, %v10684
    %v10757 = vadd.f32 %v10502, %v10731
    %v10758 = vadd.f32 %v10503, %v10687
    %v10759 = vadd.f32 %v10504, %v10734
    %v10760 = vadd.f32 %v10505, %v10690
    %v10761 = vadd.f32 %v10506, %v10737
    %v10762 = vadd.f32 %v10507, %v10693
    %v10763 = vadd.f32 %v10508, %v10740
    %v10764 = vadd.f32 %v10509, %v10696
    %v10765 = vadd.f32 %v10510, %v10743
    %v10766 = vadd.f32 %v10511, %v10699
    %v10767 = vadd.f32 %v10512, %v10746
    %10788 = vrot.lane.b32.xlu0 %v10748, 110
    %v10789 = vpop.permute.xlu0 %10788
    %10790 = vrot.lane.b32.xlu0 %v10749, 110
    %v10791 = vpop.permute.xlu0 %10790
    %10792 = vrot.lane.b32.xlu0 %v10750, 110
    %v10793 = vpop.permute.xlu0 %10792
    %10794 = vrot.lane.b32.xlu0 %v10751, 110
    %v10795 = vpop.permute.xlu0 %10794
    %10796 = vrot.lane.b32.xlu0 %v10752, 110
    %v10797 = vpop.permute.xlu0 %10796
    %10798 = vrot.lane.b32.xlu0 %v10753, 110
    %v10799 = vpop.permute.xlu0 %10798
    %10800 = vrot.lane.b32.xlu0 %v10754, 110
    %v10801 = vpop.permute.xlu0 %10800
    %10802 = vrot.lane.b32.xlu0 %v10755, 110
    %v10803 = vpop.permute.xlu0 %10802
    %10804 = vrot.lane.b32.xlu0 %v10756, 110
    %v10805 = vpop.permute.xlu0 %10804
    %10806 = vrot.lane.b32.xlu0 %v10757, 110
    %v10807 = vpop.permute.xlu0 %10806
    %10808 = vrot.lane.b32.xlu0 %v10758, 110
    %v10809 = vpop.permute.xlu0 %10808
    %10810 = vrot.lane.b32.xlu0 %v10759, 110
    %v10811 = vpop.permute.xlu0 %10810
    %10812 = vrot.lane.b32.xlu0 %v10760, 110
    %v10813 = vpop.permute.xlu0 %10812
    %10814 = vrot.lane.b32.xlu0 %v10761, 110
    %v10815 = vpop.permute.xlu0 %10814
    %10816 = vrot.lane.b32.xlu0 %v10762, 110
    %v10817 = vpop.permute.xlu0 %10816
    %10818 = vrot.lane.b32.xlu0 %v10763, 110
    %v10819 = vpop.permute.xlu0 %10818
    %10820 = vrot.lane.b32.xlu0 %v10764, 110
    %v10821 = vpop.permute.xlu0 %10820
    %10822 = vrot.lane.b32.xlu0 %v10765, 110
    %v10823 = vpop.permute.xlu0 %10822
    %10824 = vrot.lane.b32.xlu0 %v10766, 110
    %v10825 = vpop.permute.xlu0 %10824
    %10826 = vrot.lane.b32.xlu0 %v10767, 110
    %v10827 = vpop.permute.xlu0 %10826
    %v10828 = vsel %vm5740, %v10789, %v10791
    %v10829 = vsel %vm5740, %v10793, %v10795
    %v10830 = vsel %vm5740, %v10797, %v10799
    %v10831 = vsel %vm5740, %v10801, %v10803
    %v10832 = vsel %vm5740, %v10805, %v10807
    %v10833 = vsel %vm5740, %v10809, %v10811
    %v10834 = vsel %vm5740, %v10813, %v10815
    %v10835 = vsel %vm5740, %v10817, %v10819
    %v10836 = vsel %vm5740, %v10821, %v10823
    %v10837 = vsel %vm5740, %v10825, %v10827
    %v10858 = vmax.f32 %v10748, %v10828
    %v10859 = vmax.f32 %v10749, %v10791
    %v10860 = vmax.f32 %v10750, %v10829
    %v10861 = vmax.f32 %v10751, %v10795
    %v10862 = vmax.f32 %v10752, %v10830
    %v10863 = vmax.f32 %v10753, %v10799
    %v10864 = vmax.f32 %v10754, %v10831
    %v10865 = vmax.f32 %v10755, %v10803
    %v10866 = vmax.f32 %v10756, %v10832
    %v10867 = vmax.f32 %v10757, %v10807
    %v10868 = vmax.f32 %v10758, %v10833
    %v10869 = vmax.f32 %v10759, %v10811
    %v10870 = vmax.f32 %v10760, %v10834
    %v10871 = vmax.f32 %v10761, %v10815
    %v10872 = vmax.f32 %v10762, %v10835
    %v10873 = vmax.f32 %v10763, %v10819
    %v10874 = vmax.f32 %v10764, %v10836
    %v10875 = vmax.f32 %v10765, %v10823
    %v10876 = vmax.f32 %v10766, %v10837
    %v10877 = vmax.f32 %v10767, %v10827
    %10898 = vrot.lane.b32.xlu0 %v10858, 127
    %v10899 = vpop.permute.xlu0 %10898
    %10900 = vrot.lane.b32.xlu0 %v10859, 127
    %v10901 = vpop.permute.xlu0 %10900
    %10902 = vrot.lane.b32.xlu0 %v10860, 127
    %v10903 = vpop.permute.xlu0 %10902
    %10904 = vrot.lane.b32.xlu0 %v10861, 127
    %v10905 = vpop.permute.xlu0 %10904
    %10906 = vrot.lane.b32.xlu0 %v10862, 127
    %v10907 = vpop.permute.xlu0 %10906
    %10908 = vrot.lane.b32.xlu0 %v10863, 127
    %v10909 = vpop.permute.xlu0 %10908
    %10910 = vrot.lane.b32.xlu0 %v10864, 127
    %v10911 = vpop.permute.xlu0 %10910
    %10912 = vrot.lane.b32.xlu0 %v10865, 127
    %v10913 = vpop.permute.xlu0 %10912
    %10914 = vrot.lane.b32.xlu0 %v10866, 127
    %v10915 = vpop.permute.xlu0 %10914
    %10916 = vrot.lane.b32.xlu0 %v10867, 127
    %v10917 = vpop.permute.xlu0 %10916
    %10918 = vrot.lane.b32.xlu0 %v10868, 127
    %v10919 = vpop.permute.xlu0 %10918
    %10920 = vrot.lane.b32.xlu0 %v10869, 127
    %v10921 = vpop.permute.xlu0 %10920
    %10922 = vrot.lane.b32.xlu0 %v10870, 127
    %v10923 = vpop.permute.xlu0 %10922
    %10924 = vrot.lane.b32.xlu0 %v10871, 127
    %v10925 = vpop.permute.xlu0 %10924
    %10926 = vrot.lane.b32.xlu0 %v10872, 127
    %v10927 = vpop.permute.xlu0 %10926
    %10928 = vrot.lane.b32.xlu0 %v10873, 127
    %v10929 = vpop.permute.xlu0 %10928
    %10930 = vrot.lane.b32.xlu0 %v10874, 127
    %v10931 = vpop.permute.xlu0 %10930
    %10932 = vrot.lane.b32.xlu0 %v10875, 127
    %v10933 = vpop.permute.xlu0 %10932
    %10934 = vrot.lane.b32.xlu0 %v10876, 127
    %v10935 = vpop.permute.xlu0 %10934
    %10936 = vrot.lane.b32.xlu0 %v10877, 127
    %v10937 = vpop.permute.xlu0 %10936
    %v10938 = vsel %vm294, %v10899, %v10901
    %v10939 = vsel %vm294, %v10903, %v10905
    %v10940 = vsel %vm294, %v10907, %v10909
    %v10941 = vsel %vm294, %v10911, %v10913
    %v10942 = vsel %vm294, %v10915, %v10917
    %v10943 = vsel %vm294, %v10919, %v10921
    %v10944 = vsel %vm294, %v10923, %v10925
    %v10945 = vsel %vm294, %v10927, %v10929
    %v10946 = vsel %vm294, %v10931, %v10933
    %v10947 = vsel %vm294, %v10935, %v10937
    %v10968 = vmax.f32 %v10858, %v10938
    %v10969 = vmax.f32 %v10859, %v10901
    %v10970 = vmax.f32 %v10860, %v10939
    %v10971 = vmax.f32 %v10861, %v10905
    %v10972 = vmax.f32 %v10862, %v10940
    %v10973 = vmax.f32 %v10863, %v10909
    %v10974 = vmax.f32 %v10864, %v10941
    %v10975 = vmax.f32 %v10865, %v10913
    %v10976 = vmax.f32 %v10866, %v10942
    %v10977 = vmax.f32 %v10867, %v10917
    %v10978 = vmax.f32 %v10868, %v10943
    %v10979 = vmax.f32 %v10869, %v10921
    %v10980 = vmax.f32 %v10870, %v10944
    %v10981 = vmax.f32 %v10871, %v10925
    %v10982 = vmax.f32 %v10872, %v10945
    %v10983 = vmax.f32 %v10873, %v10929
    %v10984 = vmax.f32 %v10874, %v10946
    %v10985 = vmax.f32 %v10875, %v10933
    %v10986 = vmax.f32 %v10876, %v10947
    %v10987 = vmax.f32 %v10877, %v10937
    %v10988 = vld [vmem:[#allocation12] sm:$0xff]
    %v10989 = vld [vmem:[#allocation12 + $0x8] sm:$0xff]
    %v10990 = vld [vmem:[#allocation12 + $0x10] sm:$0xff]
    %v10991 = vld [vmem:[#allocation12 + $0x18] sm:$0xff]
    %v10992 = vld [vmem:[#allocation12 + $0x20] sm:$0xff]
    %v10993 = vld [vmem:[#allocation12 + $0x28] sm:$0xff]
    %v10994 = vld [vmem:[#allocation12 + $0x30] sm:$0xff]
    %v10995 = vld [vmem:[#allocation12 + $0x38] sm:$0xff]
    %v10996 = vld [vmem:[#allocation12 + $0x40] sm:$0xff]
    %v10997 = vld [vmem:[#allocation12 + $0x48] sm:$0xff]
    %v10998 = vld [vmem:[#allocation12 + $0x50] sm:$0xff]
    %v10999 = vld [vmem:[#allocation12 + $0x58] sm:$0xff]
    %v11000 = vld [vmem:[#allocation12 + $0x60] sm:$0xff]
    %v11001 = vld [vmem:[#allocation12 + $0x68] sm:$0xff]
    %v11002 = vld [vmem:[#allocation12 + $0x70] sm:$0xff]
    %v11003 = vld [vmem:[#allocation12 + $0x78] sm:$0xff]
    %v11004 = vld [vmem:[#allocation12 + $0x80] sm:$0xff]
    %v11005 = vld [vmem:[#allocation12 + $0x88] sm:$0xff]
    %v11006 = vld [vmem:[#allocation12 + $0x90] sm:$0xff]
    %v11007 = vld [vmem:[#allocation12 + $0x98] sm:$0xff]
    %v11008 = vld [vmem:[#allocation12 + $0xa0] sm:$0xff]
    %v11009 = vld [vmem:[#allocation12 + $0xa8] sm:$0xff]
    %v11010 = vld [vmem:[#allocation12 + $0xb0] sm:$0xff]
    %v11011 = vld [vmem:[#allocation12 + $0xb8] sm:$0xff]
    %v11012 = vld [vmem:[#allocation12 + $0xc0] sm:$0xff]
    %v11013 = vld [vmem:[#allocation12 + $0xc8] sm:$0xff]
    %v11014 = vld [vmem:[#allocation12 + $0xd0] sm:$0xff]
    %v11015 = vld [vmem:[#allocation12 + $0xd8] sm:$0xff]
    %v11016 = vld [vmem:[#allocation12 + $0xe0] sm:$0xff]
    %v11017 = vld [vmem:[#allocation12 + $0xe8] sm:$0x1]
    %v11018 = vld [vmem:[#allocation11] sm:$0xff]
    %v11019 = vld [vmem:[#allocation11 + $0x8] sm:$0xff]
    %v11020 = vld [vmem:[#allocation11 + $0x10] sm:$0xff]
    %v11021 = vld [vmem:[#allocation11 + $0x18] sm:$0xff]
    %v11022 = vld [vmem:[#allocation11 + $0x20] sm:$0xff]
    %v11023 = vld [vmem:[#allocation11 + $0x28] sm:$0xff]
    %v11024 = vld [vmem:[#allocation11 + $0x30] sm:$0xff]
    %v11025 = vld [vmem:[#allocation11 + $0x38] sm:$0xff]
    %v11026 = vld [vmem:[#allocation11 + $0x40] sm:$0xff]
    %v11027 = vld [vmem:[#allocation11 + $0x48] sm:$0xff]
    %11029 = vset.pattern.permute.xlu0 0
    %11030 = vperm.xlu0 %11029, %v11018
    %v11031 = vpop.permute.xlu0 %11030
    %11034 = vset.pattern.permute.xlu0 0
    %11035 = vperm.xlu0 %11034, %v11019
    %v11036 = vpop.permute.xlu0 %11035
    %11039 = vset.pattern.permute.xlu0 0
    %11040 = vperm.xlu0 %11039, %v11020
    %v11041 = vpop.permute.xlu0 %11040
    %11044 = vset.pattern.permute.xlu0 0
    %11045 = vperm.xlu0 %11044, %v11021
    %v11046 = vpop.permute.xlu0 %11045
    %11049 = vset.pattern.permute.xlu0 0
    %11050 = vperm.xlu0 %11049, %v11022
    %v11051 = vpop.permute.xlu0 %11050
    %11054 = vset.pattern.permute.xlu0 0
    %11055 = vperm.xlu0 %11054, %v11023
    %v11056 = vpop.permute.xlu0 %11055
    %11059 = vset.pattern.permute.xlu0 0
    %11060 = vperm.xlu0 %11059, %v11024
    %v11061 = vpop.permute.xlu0 %11060
    %11064 = vset.pattern.permute.xlu0 0
    %11065 = vperm.xlu0 %11064, %v11025
    %v11066 = vpop.permute.xlu0 %11065
    %11069 = vset.pattern.permute.xlu0 0
    %11070 = vperm.xlu0 %11069, %v11026
    %v11071 = vpop.permute.xlu0 %11070
    %11074 = vset.pattern.permute.xlu0 0
    %11075 = vperm.xlu0 %11074, %v11027
    %v11076 = vpop.permute.xlu0 %11075
    %vm11078 = vcmask 859136
    %v11080 = vsel %vm11078, %v10969, 0
    %v11083 = vsel %vm11078, %v10971, 0
    %v11086 = vsel %vm11078, %v10973, 0
    %v11089 = vsel %vm11078, %v10975, 0
    %v11092 = vsel %vm11078, %v10977, 0
    %v11095 = vsel %vm11078, %v10979, 0
    %v11098 = vsel %vm11078, %v10981, 0
    %v11101 = vsel %vm11078, %v10983, 0
    %v11104 = vsel %vm11078, %v10985, 0
    %v11107 = vsel %vm11078, %v10987, 0
    %vm11109 = vcmask 1040384
    %v11111 = vsel %vm11109, %v11017, 0
    %11113 = vmatpush.msra.mxu0 %v11003
    %11114 = vmatpush.msra.mxu0 %v11002
    %11115 = vmatpush.msra.mxu0 %v11001
    %11116 = vmatpush.msra.mxu0 %v11000
    %11117 = vmatpush.msra.mxu0 %v10999
    %11118 = vmatpush.msra.mxu0 %v10998
    %11119 = vmatpush.msra.mxu0 %v10997
    %11120 = vmatpush.msra.mxu0 %v10996
    %11121 = vmatpush.msra.mxu0 %v10995
    %11122 = vmatpush.msra.mxu0 %v10994
    %11123 = vmatpush.msra.mxu0 %v10993
    %11124 = vmatpush.msra.mxu0 %v10992
    %11125 = vmatpush.msra.mxu0 %v10991
    %11126 = vmatpush.msra.mxu0 %v10990
    %11127 = vmatpush.msra.mxu0 %v10989
    %11128 = vmatpush.msra.mxu0 %v10988
    %11129 = vmatmul.f32.gmra.mxu0 %v10968
    %v11130 = vpop.f32.mrf.mxu0
    %v11131 = vadd.f32 %v11031, %v11130
    %11132 = vmatmul.f32.gmra.mxu0 %v10970
    %v11133 = vpop.f32.mrf.mxu0
    %v11134 = vadd.f32 %v11036, %v11133
    %11135 = vmatmul.f32.gmra.mxu0 %v10972
    %v11136 = vpop.f32.mrf.mxu0
    %v11137 = vadd.f32 %v11041, %v11136
    %11138 = vmatmul.f32.gmra.mxu0 %v10974
    %v11139 = vpop.f32.mrf.mxu0
    %v11140 = vadd.f32 %v11046, %v11139
    %11141 = vmatmul.f32.gmra.mxu0 %v10976
    %v11142 = vpop.f32.mrf.mxu0
    %v11143 = vadd.f32 %v11051, %v11142
    %11144 = vmatmul.f32.gmra.mxu0 %v10978
    %v11145 = vpop.f32.mrf.mxu0
    %v11146 = vadd.f32 %v11056, %v11145
    %11147 = vmatmul.f32.gmra.mxu0 %v10980
    %v11148 = vpop.f32.mrf.mxu0
    %v11149 = vadd.f32 %v11061, %v11148
    %11150 = vmatmul.f32.gmra.mxu0 %v10982
    %v11151 = vpop.f32.mrf.mxu0
    %v11152 = vadd.f32 %v11066, %v11151
    %11153 = vmatmul.f32.gmra.mxu0 %v10984
    %v11154 = vpop.f32.mrf.mxu0
    %v11155 = vadd.f32 %v11071, %v11154
    %11156 = vmatmul.f32.gmra.mxu0 %v10986
    %v11157 = vpop.f32.mrf.mxu0
    %v11158 = vadd.f32 %v11076, %v11157
    %11159 = vdwg.mxu0
    %11160 = vmatpush.msra.mxu0 0.0
    %11161 = vmatpush.msra.mxu0 0.0
    %11162 = vmatpush.msra.mxu0 %v11111
    %11163 = vmatpush.msra.mxu0 %v11016
    %11164 = vmatpush.msra.mxu0 %v11015
    %11165 = vmatpush.msra.mxu0 %v11014
    %11166 = vmatpush.msra.mxu0 %v11013
    %11167 = vmatpush.msra.mxu0 %v11012
    %11168 = vmatpush.msra.mxu0 %v11011
    %11169 = vmatpush.msra.mxu0 %v11010
    %11170 = vmatpush.msra.mxu0 %v11009
    %11171 = vmatpush.msra.mxu0 %v11008
    %11172 = vmatpush.msra.mxu0 %v11007
    %11173 = vmatpush.msra.mxu0 %v11006
    %11174 = vmatpush.msra.mxu0 %v11005
    %11175 = vmatpush.msra.mxu0 %v11004
    %11176 = vmatmul.f32.gmra.mxu0 %v11080
    %v11177 = vpop.f32.mrf.mxu0
    %v11178 = vadd.f32 %v11131, %v11177
    %11179 = vmatmul.f32.gmra.mxu0 %v11083
    %v11180 = vpop.f32.mrf.mxu0
    %v11181 = vadd.f32 %v11134, %v11180
    %11182 = vmatmul.f32.gmra.mxu0 %v11086
    %v11183 = vpop.f32.mrf.mxu0
    %v11184 = vadd.f32 %v11137, %v11183
    %11185 = vmatmul.f32.gmra.mxu0 %v11089
    %v11186 = vpop.f32.mrf.mxu0
    %v11187 = vadd.f32 %v11140, %v11186
    %11188 = vmatmul.f32.gmra.mxu0 %v11092
    %v11189 = vpop.f32.mrf.mxu0
    %v11190 = vadd.f32 %v11143, %v11189
    %11191 = vmatmul.f32.gmra.mxu0 %v11095
    %v11192 = vpop.f32.mrf.mxu0
    %v11193 = vadd.f32 %v11146, %v11192
    %11194 = vmatmul.f32.gmra.mxu0 %v11098
    %v11195 = vpop.f32.mrf.mxu0
    %v11196 = vadd.f32 %v11149, %v11195
    %11197 = vmatmul.f32.gmra.mxu0 %v11101
    %v11198 = vpop.f32.mrf.mxu0
    %v11199 = vadd.f32 %v11152, %v11198
    %11200 = vmatmul.f32.gmra.mxu0 %v11104
    %v11201 = vpop.f32.mrf.mxu0
    %v11202 = vadd.f32 %v11155, %v11201
    %11203 = vmatmul.f32.gmra.mxu0 %v11107
    %v11204 = vpop.f32.mrf.mxu0
    %v11205 = vadd.f32 %v11158, %v11204
    %11206 = vdwg.mxu0
    %v11207 = vmax.f32 %v11178, 0.0
    %v11208 = vmax.f32 %v11181, 0.0
    %v11209 = vmax.f32 %v11184, 0.0
    %v11210 = vmax.f32 %v11187, 0.0
    %v11211 = vmax.f32 %v11190, 0.0
    %v11212 = vmax.f32 %v11193, 0.0
    %v11213 = vmax.f32 %v11196, 0.0
    %v11214 = vmax.f32 %v11199, 0.0
    %v11215 = vmax.f32 %v11202, 0.0
    %v11216 = vmax.f32 %v11205, 0.0
    %v11217 = vld [vmem:[#allocation14] sm:$0xff]
    %v11218 = vld [vmem:[#allocation14 + $0x8] sm:$0xff]
    %v11219 = vld [vmem:[#allocation14 + $0x10] sm:$0xff]
    %v11220 = vld [vmem:[#allocation14 + $0x18] sm:$0xff]
    %v11221 = vld [vmem:[#allocation14 + $0x20] sm:$0xff]
    %v11222 = vld [vmem:[#allocation14 + $0x28] sm:$0xff]
    %v11223 = vld [vmem:[#allocation14 + $0x30] sm:$0x1]
    %v11224 = vld [vmem:[#allocation14 + $0x38] sm:$0xff]
    %v11225 = vld [vmem:[#allocation14 + $0x40] sm:$0xff]
    %v11226 = vld [vmem:[#allocation14 + $0x48] sm:$0xff]
    %v11227 = vld [vmem:[#allocation14 + $0x50] sm:$0xff]
    %v11228 = vld [vmem:[#allocation14 + $0x58] sm:$0xff]
    %v11229 = vld [vmem:[#allocation14 + $0x60] sm:$0xff]
    %v11230 = vld [vmem:[#allocation14 + $0x68] sm:$0x1]
    %vm11231 = vcmask 400384
    %v11233 = vsel %vm11231, %v11208, 0
    %v11236 = vsel %vm11109, %v11230, 0
    %11238 = vmatpush.msra.mxu0 0.0
    %11239 = vmatpush.msra.mxu0 0.0
    %11240 = vmatpush.msra.mxu0 0.0
    %11241 = vmatpush.msra.mxu0 0.0
    %11242 = vmatpush.msra.mxu0 0.0
    %11243 = vmatpush.msra.mxu0 0.0
    %11244 = vmatpush.msra.mxu0 0.0
    %11245 = vmatpush.msra.mxu0 0.0
    %11246 = vmatpush.msra.mxu0 0.0
    %11247 = vmatpush.msra.mxu0 %v11236
    %11248 = vmatpush.msra.mxu0 %v11229
    %11249 = vmatpush.msra.mxu0 %v11228
    %11250 = vmatpush.msra.mxu0 %v11227
    %11251 = vmatpush.msra.mxu0 %v11226
    %11252 = vmatpush.msra.mxu0 %v11225
    %11253 = vmatpush.msra.mxu0 %v11224
    %11254 = vmatmul.f32.gmra.mxu0 %v11233
    %v11255 = vpop.f32.mrf.mxu0
    %v11256 = vadd.f32 0.0, %v11255
    %11257 = vdwg.mxu0
    %v11259 = vsel %vm11231, %v11207, 0
    %v11262 = vsel %vm11109, %v11223, 0
    %11264 = vmatpush.msra.mxu0 0.0
    %11265 = vmatpush.msra.mxu0 0.0
    %11266 = vmatpush.msra.mxu0 0.0
    %11267 = vmatpush.msra.mxu0 0.0
    %11268 = vmatpush.msra.mxu0 0.0
    %11269 = vmatpush.msra.mxu0 0.0
    %11270 = vmatpush.msra.mxu0 0.0
    %11271 = vmatpush.msra.mxu0 0.0
    %11272 = vmatpush.msra.mxu0 0.0
    %11273 = vmatpush.msra.mxu0 %v11262
    %11274 = vmatpush.msra.mxu0 %v11222
    %11275 = vmatpush.msra.mxu0 %v11221
    %11276 = vmatpush.msra.mxu0 %v11220
    %11277 = vmatpush.msra.mxu0 %v11219
    %11278 = vmatpush.msra.mxu0 %v11218
    %11279 = vmatpush.msra.mxu0 %v11217
    %11280 = vmatmul.f32.gmra.mxu0 %v11259
    %v11281 = vpop.f32.mrf.mxu0
    %v11282 = vadd.f32 %v11256, %v11281
    %11283 = vdwg.mxu0
    %v11284 = vld [vmem:[#allocation14 + $0x70] sm:$0xff]
    %v11285 = vld [vmem:[#allocation14 + $0x78] sm:$0xff]
    %v11286 = vld [vmem:[#allocation14 + $0x80] sm:$0xff]
    %v11287 = vld [vmem:[#allocation14 + $0x88] sm:$0xff]
    %v11288 = vld [vmem:[#allocation14 + $0x90] sm:$0xff]
    %v11289 = vld [vmem:[#allocation14 + $0x98] sm:$0xff]
    %v11290 = vld [vmem:[#allocation14 + $0xa0] sm:$0x1]
    %v11292 = vsel %vm11231, %v11209, 0
    %v11295 = vsel %vm11109, %v11290, 0
    %11297 = vmatpush.msra.mxu0 0.0
    %11298 = vmatpush.msra.mxu0 0.0
    %11299 = vmatpush.msra.mxu0 0.0
    %11300 = vmatpush.msra.mxu0 0.0
    %11301 = vmatpush.msra.mxu0 0.0
    %11302 = vmatpush.msra.mxu0 0.0
    %11303 = vmatpush.msra.mxu0 0.0
    %11304 = vmatpush.msra.mxu0 0.0
    %11305 = vmatpush.msra.mxu0 0.0
    %11306 = vmatpush.msra.mxu0 %v11295
    %11307 = vmatpush.msra.mxu0 %v11289
    %11308 = vmatpush.msra.mxu0 %v11288
    %11309 = vmatpush.msra.mxu0 %v11287
    %11310 = vmatpush.msra.mxu0 %v11286
    %11311 = vmatpush.msra.mxu0 %v11285
    %11312 = vmatpush.msra.mxu0 %v11284
    %11313 = vmatmul.f32.gmra.mxu0 %v11292
    %v11314 = vpop.f32.mrf.mxu0
    %v11315 = vadd.f32 0.0, %v11314
    %11316 = vdwg.mxu0
    %v11317 = vadd.f32 %v11282, %v11315
    %v11318 = vld [vmem:[#allocation14 + $0xa8] sm:$0xff]
    %v11319 = vld [vmem:[#allocation14 + $0xb0] sm:$0xff]
    %v11320 = vld [vmem:[#allocation14 + $0xb8] sm:$0xff]
    %v11321 = vld [vmem:[#allocation14 + $0xc0] sm:$0xff]
    %v11322 = vld [vmem:[#allocation14 + $0xc8] sm:$0xff]
    %v11323 = vld [vmem:[#allocation14 + $0xd0] sm:$0xff]
    %v11324 = vld [vmem:[#allocation14 + $0xd8] sm:$0x1]
    %v11326 = vsel %vm11231, %v11210, 0
    %v11329 = vsel %vm11109, %v11324, 0
    %11331 = vmatpush.msra.mxu0 0.0
    %11332 = vmatpush.msra.mxu0 0.0
    %11333 = vmatpush.msra.mxu0 0.0
    %11334 = vmatpush.msra.mxu0 0.0
    %11335 = vmatpush.msra.mxu0 0.0
    %11336 = vmatpush.msra.mxu0 0.0
    %11337 = vmatpush.msra.mxu0 0.0
    %11338 = vmatpush.msra.mxu0 0.0
    %11339 = vmatpush.msra.mxu0 0.0
    %11340 = vmatpush.msra.mxu0 %v11329
    %11341 = vmatpush.msra.mxu0 %v11323
    %11342 = vmatpush.msra.mxu0 %v11322
    %11343 = vmatpush.msra.mxu0 %v11321
    %11344 = vmatpush.msra.mxu0 %v11320
    %11345 = vmatpush.msra.mxu0 %v11319
    %11346 = vmatpush.msra.mxu0 %v11318
    %11347 = vmatmul.f32.gmra.mxu0 %v11326
    %v11348 = vpop.f32.mrf.mxu0
    %v11349 = vadd.f32 0.0, %v11348
    %11350 = vdwg.mxu0
    %v11351 = vadd.f32 %v11317, %v11349
    %v11352 = vld [vmem:[#allocation14 + $0xe0] sm:$0xff]
    %v11353 = vld [vmem:[#allocation14 + $0xe8] sm:$0xff]
    %v11354 = vld [vmem:[#allocation14 + $0xf0] sm:$0xff]
    %v11355 = vld [vmem:[#allocation14 + $0xf8] sm:$0xff]
    %v11356 = vld [vmem:[#allocation14 + $0x100] sm:$0xff]
    %v11357 = vld [vmem:[#allocation14 + $0x108] sm:$0xff]
    %v11358 = vld [vmem:[#allocation14 + $0x110] sm:$0x1]
    %v11360 = vsel %vm11231, %v11211, 0
    %v11363 = vsel %vm11109, %v11358, 0
    %11365 = vmatpush.msra.mxu0 0.0
    %11366 = vmatpush.msra.mxu0 0.0
    %11367 = vmatpush.msra.mxu0 0.0
    %11368 = vmatpush.msra.mxu0 0.0
    %11369 = vmatpush.msra.mxu0 0.0
    %11370 = vmatpush.msra.mxu0 0.0
    %11371 = vmatpush.msra.mxu0 0.0
    %11372 = vmatpush.msra.mxu0 0.0
    %11373 = vmatpush.msra.mxu0 0.0
    %11374 = vmatpush.msra.mxu0 %v11363
    %11375 = vmatpush.msra.mxu0 %v11357
    %11376 = vmatpush.msra.mxu0 %v11356
    %11377 = vmatpush.msra.mxu0 %v11355
    %11378 = vmatpush.msra.mxu0 %v11354
    %11379 = vmatpush.msra.mxu0 %v11353
    %11380 = vmatpush.msra.mxu0 %v11352
    %11381 = vmatmul.f32.gmra.mxu0 %v11360
    %v11382 = vpop.f32.mrf.mxu0
    %v11383 = vadd.f32 0.0, %v11382
    %11384 = vdwg.mxu0
    %v11385 = vadd.f32 %v11351, %v11383
    %v11386 = vld [vmem:[#allocation14 + $0x118] sm:$0xff]
    %v11387 = vld [vmem:[#allocation14 + $0x120] sm:$0xff]
    %v11388 = vld [vmem:[#allocation14 + $0x128] sm:$0xff]
    %v11389 = vld [vmem:[#allocation14 + $0x130] sm:$0xff]
    %v11390 = vld [vmem:[#allocation14 + $0x138] sm:$0xff]
    %v11391 = vld [vmem:[#allocation14 + $0x140] sm:$0xff]
    %v11392 = vld [vmem:[#allocation14 + $0x148] sm:$0x1]
    %v11394 = vsel %vm11231, %v11212, 0
    %v11397 = vsel %vm11109, %v11392, 0
    %11399 = vmatpush.msra.mxu0 0.0
    %11400 = vmatpush.msra.mxu0 0.0
    %11401 = vmatpush.msra.mxu0 0.0
    %11402 = vmatpush.msra.mxu0 0.0
    %11403 = vmatpush.msra.mxu0 0.0
    %11404 = vmatpush.msra.mxu0 0.0
    %11405 = vmatpush.msra.mxu0 0.0
    %11406 = vmatpush.msra.mxu0 0.0
    %11407 = vmatpush.msra.mxu0 0.0
    %11408 = vmatpush.msra.mxu0 %v11397
    %11409 = vmatpush.msra.mxu0 %v11391
    %11410 = vmatpush.msra.mxu0 %v11390
    %11411 = vmatpush.msra.mxu0 %v11389
    %11412 = vmatpush.msra.mxu0 %v11388
    %11413 = vmatpush.msra.mxu0 %v11387
    %11414 = vmatpush.msra.mxu0 %v11386
    %11415 = vmatmul.f32.gmra.mxu0 %v11394
    %v11416 = vpop.f32.mrf.mxu0
    %v11417 = vadd.f32 0.0, %v11416
    %11418 = vdwg.mxu0
    %v11419 = vadd.f32 %v11385, %v11417
    %v11420 = vld [vmem:[#allocation14 + $0x150] sm:$0xff]
    %v11421 = vld [vmem:[#allocation14 + $0x158] sm:$0xff]
    %v11422 = vld [vmem:[#allocation14 + $0x160] sm:$0xff]
    %v11423 = vld [vmem:[#allocation14 + $0x168] sm:$0xff]
    %v11424 = vld [vmem:[#allocation14 + $0x170] sm:$0xff]
    %v11425 = vld [vmem:[#allocation14 + $0x178] sm:$0xff]
    %v11426 = vld [vmem:[#allocation14 + $0x180] sm:$0x1]
    %v11428 = vsel %vm11231, %v11213, 0
    %v11431 = vsel %vm11109, %v11426, 0
    %11433 = vmatpush.msra.mxu0 0.0
    %11434 = vmatpush.msra.mxu0 0.0
    %11435 = vmatpush.msra.mxu0 0.0
    %11436 = vmatpush.msra.mxu0 0.0
    %11437 = vmatpush.msra.mxu0 0.0
    %11438 = vmatpush.msra.mxu0 0.0
    %11439 = vmatpush.msra.mxu0 0.0
    %11440 = vmatpush.msra.mxu0 0.0
    %11441 = vmatpush.msra.mxu0 0.0
    %11442 = vmatpush.msra.mxu0 %v11431
    %11443 = vmatpush.msra.mxu0 %v11425
    %11444 = vmatpush.msra.mxu0 %v11424
    %11445 = vmatpush.msra.mxu0 %v11423
    %11446 = vmatpush.msra.mxu0 %v11422
    %11447 = vmatpush.msra.mxu0 %v11421
    %11448 = vmatpush.msra.mxu0 %v11420
    %11449 = vmatmul.f32.gmra.mxu0 %v11428
    %v11450 = vpop.f32.mrf.mxu0
    %v11451 = vadd.f32 0.0, %v11450
    %11452 = vdwg.mxu0
    %v11453 = vadd.f32 %v11419, %v11451
    %v11454 = vld [vmem:[#allocation14 + $0x188] sm:$0xff]
    %v11455 = vld [vmem:[#allocation14 + $0x190] sm:$0xff]
    %v11456 = vld [vmem:[#allocation14 + $0x198] sm:$0xff]
    %v11457 = vld [vmem:[#allocation14 + $0x1a0] sm:$0xff]
    %v11458 = vld [vmem:[#allocation14 + $0x1a8] sm:$0xff]
    %v11459 = vld [vmem:[#allocation14 + $0x1b0] sm:$0xff]
    %v11460 = vld [vmem:[#allocation14 + $0x1b8] sm:$0x1]
    %v11462 = vsel %vm11231, %v11214, 0
    %v11465 = vsel %vm11109, %v11460, 0
    %11467 = vmatpush.msra.mxu0 0.0
    %11468 = vmatpush.msra.mxu0 0.0
    %11469 = vmatpush.msra.mxu0 0.0
    %11470 = vmatpush.msra.mxu0 0.0
    %11471 = vmatpush.msra.mxu0 0.0
    %11472 = vmatpush.msra.mxu0 0.0
    %11473 = vmatpush.msra.mxu0 0.0
    %11474 = vmatpush.msra.mxu0 0.0
    %11475 = vmatpush.msra.mxu0 0.0
    %11476 = vmatpush.msra.mxu0 %v11465
    %11477 = vmatpush.msra.mxu0 %v11459
    %11478 = vmatpush.msra.mxu0 %v11458
    %11479 = vmatpush.msra.mxu0 %v11457
    %11480 = vmatpush.msra.mxu0 %v11456
    %11481 = vmatpush.msra.mxu0 %v11455
    %11482 = vmatpush.msra.mxu0 %v11454
    %11483 = vmatmul.f32.gmra.mxu0 %v11462
    %v11484 = vpop.f32.mrf.mxu0
    %v11485 = vadd.f32 0.0, %v11484
    %11486 = vdwg.mxu0
    %v11487 = vadd.f32 %v11453, %v11485
    %v11488 = vld [vmem:[#allocation14 + $0x1c0] sm:$0xff]
    %v11489 = vld [vmem:[#allocation14 + $0x1c8] sm:$0xff]
    %v11490 = vld [vmem:[#allocation14 + $0x1d0] sm:$0xff]
    %v11491 = vld [vmem:[#allocation14 + $0x1d8] sm:$0xff]
    %v11492 = vld [vmem:[#allocation14 + $0x1e0] sm:$0xff]
    %v11493 = vld [vmem:[#allocation14 + $0x1e8] sm:$0xff]
    %v11494 = vld [vmem:[#allocation14 + $0x1f0] sm:$0x1]
    %v11496 = vsel %vm11231, %v11215, 0
    %v11499 = vsel %vm11109, %v11494, 0
    %11501 = vmatpush.msra.mxu0 0.0
    %11502 = vmatpush.msra.mxu0 0.0
    %11503 = vmatpush.msra.mxu0 0.0
    %11504 = vmatpush.msra.mxu0 0.0
    %11505 = vmatpush.msra.mxu0 0.0
    %11506 = vmatpush.msra.mxu0 0.0
    %11507 = vmatpush.msra.mxu0 0.0
    %11508 = vmatpush.msra.mxu0 0.0
    %11509 = vmatpush.msra.mxu0 0.0
    %11510 = vmatpush.msra.mxu0 %v11499
    %11511 = vmatpush.msra.mxu0 %v11493
    %11512 = vmatpush.msra.mxu0 %v11492
    %11513 = vmatpush.msra.mxu0 %v11491
    %11514 = vmatpush.msra.mxu0 %v11490
    %11515 = vmatpush.msra.mxu0 %v11489
    %11516 = vmatpush.msra.mxu0 %v11488
    %11517 = vmatmul.f32.gmra.mxu0 %v11496
    %v11518 = vpop.f32.mrf.mxu0
    %v11519 = vadd.f32 0.0, %v11518
    %11520 = vdwg.mxu0
    %v11521 = vadd.f32 %v11487, %v11519
    %v11522 = vld [vmem:[#allocation14 + $0x1f8] sm:$0xff]
    %v11523 = vld [vmem:[#allocation14 + $0x200] sm:$0xff]
    %v11524 = vld [vmem:[#allocation14 + $0x208] sm:$0xff]
    %v11525 = vld [vmem:[#allocation14 + $0x210] sm:$0xff]
    %v11526 = vld [vmem:[#allocation14 + $0x218] sm:$0xff]
    %v11527 = vld [vmem:[#allocation14 + $0x220] sm:$0xff]
    %v11528 = vld [vmem:[#allocation14 + $0x228] sm:$0x1]
    %v11530 = vsel %vm11231, %v11216, 0
    %v11533 = vsel %vm11109, %v11528, 0
    %11535 = vmatpush.msra.mxu0 0.0
    %11536 = vmatpush.msra.mxu0 0.0
    %11537 = vmatpush.msra.mxu0 0.0
    %11538 = vmatpush.msra.mxu0 0.0
    %11539 = vmatpush.msra.mxu0 0.0
    %11540 = vmatpush.msra.mxu0 0.0
    %11541 = vmatpush.msra.mxu0 0.0
    %11542 = vmatpush.msra.mxu0 0.0
    %11543 = vmatpush.msra.mxu0 0.0
    %11544 = vmatpush.msra.mxu0 %v11533
    %11545 = vmatpush.msra.mxu0 %v11527
    %11546 = vmatpush.msra.mxu0 %v11526
    %11547 = vmatpush.msra.mxu0 %v11525
    %11548 = vmatpush.msra.mxu0 %v11524
    %11549 = vmatpush.msra.mxu0 %v11523
    %11550 = vmatpush.msra.mxu0 %v11522
    %11551 = vmatmul.f32.gmra.mxu0 %v11530
    %v11552 = vpop.f32.mrf.mxu0
    %v11553 = vadd.f32 0.0, %v11552
    %11554 = vdwg.mxu0
    %v11555 = vadd.f32 %v11521, %v11553
    %v11556 = vld [vmem:[#allocation15] sm:$0x1]
    %v11558 = vperm.slane %v11556, 0
    %v11560 = vadd.f32 %v11555, %v11558
    %v11561 = vld [vmem:[#allocation17] sm:$0xff]
    %v11562 = vld [vmem:[#allocation17 + $0x8] sm:$0xff]
    %v11563 = vld [vmem:[#allocation17 + $0x10] sm:$0xff]
    %v11564 = vld [vmem:[#allocation17 + $0x18] sm:$0xff]
    %v11565 = vld [vmem:[#allocation17 + $0x20] sm:$0xff]
    %v11566 = vld [vmem:[#allocation17 + $0x28] sm:$0xff]
    %v11567 = vld [vmem:[#allocation17 + $0x30] sm:$0x3]
    %v11568 = vld [vmem:[#allocation18] sm:$0x1]
    %v11570 = vperm.slane %v11568, 0
    %vm11572 = vcmask 408576
    %v11574 = vsel %vm11572, %v11560, 0
    %vm11576 = vcmask 1041408
    %v11578 = vsel %vm11576, %v11567, 0
    %11580 = vmatpush.msra.mxu0 0.0
    %11581 = vmatpush.msra.mxu0 0.0
    %11582 = vmatpush.msra.mxu0 0.0
    %11583 = vmatpush.msra.mxu0 0.0
    %11584 = vmatpush.msra.mxu0 0.0
    %11585 = vmatpush.msra.mxu0 0.0
    %11586 = vmatpush.msra.mxu0 0.0
    %11587 = vmatpush.msra.mxu0 0.0
    %11588 = vmatpush.msra.mxu0 0.0
    %11589 = vmatpush.msra.mxu0 %v11578
    %11590 = vmatpush.msra.mxu0 %v11566
    %11591 = vmatpush.msra.mxu0 %v11565
    %11592 = vmatpush.msra.mxu0 %v11564
    %11593 = vmatpush.msra.mxu0 %v11563
    %11594 = vmatpush.msra.mxu0 %v11562
    %11595 = vmatpush.msra.mxu0 %v11561
    %11596 = vmatmul.f32.gmra.mxu0 %v11574
    %v11597 = vpop.f32.mrf.mxu0
    %v11598 = vadd.f32 %v11570, %v11597
    %11599 = vdwg.mxu0
    %vm11600 = vcmask 80896
    %v11601 = vsel %vm11600, %v11598, -inf
    %11602 = vmax.xlane.f32.xlu0 %v11601
    %v11603 = vpop.xlane.xlu0 %11602
    %v11604 = vsub.f32 %v11598, %v11603
    %v11605 = vmul.f32 %v11604, 1.442695
    %v11606 = vpow.pop %v11605
    %v11607 = vsel %vm11600, %v11606, 0.0
    %11608 = vadd.xlane.f32.xlu0 %v11607
    %v11609 = vpop.xlane.xlu0 %11608
    %v11610 = vrcp.pop %v11609
    %v11611 = vmul.f32 %v11606, %v11610
    %v11612 = vld [vmem:[#allocation20] sm:$0xff]
    %v11613 = vld [vmem:[#allocation20 + $0x8] sm:$0xff]
    %v11614 = vld [vmem:[#allocation20 + $0x10] sm:$0xff]
    %v11615 = vld [vmem:[#allocation20 + $0x18] sm:$0xff]
    %v11616 = vld [vmem:[#allocation20 + $0x20] sm:$0xff]
    %v11617 = vld [vmem:[#allocation20 + $0x28] sm:$0xff]
    %v11618 = vld [vmem:[#allocation20 + $0x30] sm:$0x3]
    %v11619 = vld [vmem:[#allocation21] sm:$0x1]
    %v11621 = vperm.slane %v11619, 0
    %v11624 = vsel %vm11576, %v11618, 0
    %11626 = vmatpush.msra.mxu0 0.0
    %11627 = vmatpush.msra.mxu0 0.0
    %11628 = vmatpush.msra.mxu0 0.0
    %11629 = vmatpush.msra.mxu0 0.0
    %11630 = vmatpush.msra.mxu0 0.0
    %11631 = vmatpush.msra.mxu0 0.0
    %11632 = vmatpush.msra.mxu0 0.0
    %11633 = vmatpush.msra.mxu0 0.0
    %11634 = vmatpush.msra.mxu0 0.0
    %11635 = vmatpush.msra.mxu0 %v11624
    %11636 = vmatpush.msra.mxu0 %v11617
    %11637 = vmatpush.msra.mxu0 %v11616
    %11638 = vmatpush.msra.mxu0 %v11615
    %11639 = vmatpush.msra.mxu0 %v11614
    %11640 = vmatpush.msra.mxu0 %v11613
    %11641 = vmatpush.msra.mxu0 %v11612
    %11642 = vmatmul.f32.gmra.mxu0 %v11574
    %v11643 = vpop.f32.mrf.mxu0
    %v11644 = vadd.f32 %v11621, %v11643
    %11645 = vdwg.mxu0
    %vm11646 = vcmask 31744
    %v11647 = vsel %vm11646, %v11644, -inf
    %11648 = vmax.xlane.f32.xlu0 %v11647
    %v11649 = vpop.xlane.xlu0 %11648
    %v11650 = vsub.f32 %v11644, %v11649
    %v11651 = vmul.f32 %v11650, 1.442695
    %v11652 = vpow.pop %v11651
    %v11653 = vsel %vm11646, %v11652, 0.0
    %11654 = vadd.xlane.f32.xlu0 %v11653
    %v11655 = vpop.xlane.xlu0 %11654
    %v11656 = vrcp.pop %v11655
    %v11657 = vmul.f32 %v11652, %v11656
    %v11658 = vld [vmem:[#allocation23] sm:$0xff]
    %v11659 = vld [vmem:[#allocation23 + $0x8] sm:$0xff]
    %v11660 = vld [vmem:[#allocation23 + $0x10] sm:$0xff]
    %v11661 = vld [vmem:[#allocation23 + $0x18] sm:$0xff]
    %v11662 = vld [vmem:[#allocation23 + $0x20] sm:$0xff]
    %v11663 = vld [vmem:[#allocation23 + $0x28] sm:$0xff]
    %v11664 = vld [vmem:[#allocation23 + $0x30] sm:$0x3]
    %v11665 = vld [vmem:[#allocation3] sm:$0x1]
    %v11667 = vperm.slane %v11665, 0
    %v11670 = vsel %vm11576, %v11664, 0
    %11672 = vmatpush.msra.mxu0 0.0
    %11673 = vmatpush.msra.mxu0 0.0
    %11674 = vmatpush.msra.mxu0 0.0
    %11675 = vmatpush.msra.mxu0 0.0
    %11676 = vmatpush.msra.mxu0 0.0
    %11677 = vmatpush.msra.mxu0 0.0
    %11678 = vmatpush.msra.mxu0 0.0
    %11679 = vmatpush.msra.mxu0 0.0
    %11680 = vmatpush.msra.mxu0 0.0
    %11681 = vmatpush.msra.mxu0 %v11670
    %11682 = vmatpush.msra.mxu0 %v11663
    %11683 = vmatpush.msra.mxu0 %v11662
    %11684 = vmatpush.msra.mxu0 %v11661
    %11685 = vmatpush.msra.mxu0 %v11660
    %11686 = vmatpush.msra.mxu0 %v11659
    %11687 = vmatpush.msra.mxu0 %v11658
    %11688 = vmatmul.f32.gmra.mxu0 %v11574
    %v11689 = vpop.f32.mrf.mxu0
    %v11690 = vadd.f32 %v11667, %v11689
    %11691 = vdwg.mxu0
    %11693 = vset.pattern.permute.xlu0 0
    %11694 = vperm.xlu0 %11693, %v11611
    %v11695 = vpop.permute.xlu0 %11694
    %v11697 = vmul.f32 %v11695, %v11657
    %11698 = vset.pattern.permute.xlu0 1
    %11699 = vperm.xlu0 %11698, %v11611
    %v11700 = vpop.permute.xlu0 %11699
    %v11702 = vmul.f32 %v11700, %v11657
    %11703 = vset.pattern.permute.xlu0 2
    %11704 = vperm.xlu0 %11703, %v11611
    %v11705 = vpop.permute.xlu0 %11704
    %v11707 = vmul.f32 %v11705, %v11657
    %11708 = vset.pattern.permute.xlu0 3
    %11709 = vperm.xlu0 %11708, %v11611
    %v11710 = vpop.permute.xlu0 %11709
    %v11712 = vmul.f32 %v11710, %v11657
    %11713 = vset.pattern.permute.xlu0 4
    %11714 = vperm.xlu0 %11713, %v11611
    %v11715 = vpop.permute.xlu0 %11714
    %v11717 = vmul.f32 %v11715, %v11657
    %11718 = vset.pattern.permute.xlu0 5
    %11719 = vperm.xlu0 %11718, %v11611
    %v11720 = vpop.permute.xlu0 %11719
    %v11722 = vmul.f32 %v11720, %v11657
    %11723 = vset.pattern.permute.xlu0 6
    %11724 = vperm.xlu0 %11723, %v11611
    %v11725 = vpop.permute.xlu0 %11724
    %v11727 = vmul.f32 %v11725, %v11657
    %11728 = vset.pattern.permute.xlu0 7
    %11729 = vperm.xlu0 %11728, %v11611
    %v11730 = vpop.permute.xlu0 %11729
    %v11732 = vmul.f32 %v11730, %v11657
    %11733 = vset.pattern.permute.xlu0 8
    %11734 = vperm.xlu0 %11733, %v11611
    %v11735 = vpop.permute.xlu0 %11734
    %v11737 = vmul.f32 %v11735, %v11657
    %11738 = vset.pattern.permute.xlu0 9
    %11739 = vperm.xlu0 %11738, %v11611
    %v11740 = vpop.permute.xlu0 %11739
    %v11742 = vmul.f32 %v11740, %v11657
    %11744 = vrot.lane.b32.xlu0 %v11702, 4
    %v11745 = vpop.permute.xlu0 %11744
    %11748 = vrot.lane.b32.xlu0 %v11707, 8
    %v11749 = vpop.permute.xlu0 %11748
    %11752 = vrot.lane.b32.xlu0 %v11712, 12
    %v11753 = vpop.permute.xlu0 %11752
    %11756 = vrot.lane.b32.xlu0 %v11717, 16
    %v11757 = vpop.permute.xlu0 %11756
    %11760 = vrot.lane.b32.xlu0 %v11722, 20
    %v11761 = vpop.permute.xlu0 %11760
    %11764 = vrot.lane.b32.xlu0 %v11727, 24
    %v11765 = vpop.permute.xlu0 %11764
    %11768 = vrot.lane.b32.xlu0 %v11732, 28
    %v11769 = vpop.permute.xlu0 %11768
    %11772 = vrot.lane.b32.xlu0 %v11737, 32
    %v11773 = vpop.permute.xlu0 %11772
    %11776 = vrot.lane.b32.xlu0 %v11742, 36
    %v11777 = vpop.permute.xlu0 %11776
    %v11779 = vsel %vm11646, %v11697, %v11745
    %vm11780 = vcmask 64512
    %v11781 = vsel %vm11780, %v11779, %v11749
    %vm11782 = vcmask 97280
    %v11783 = vsel %vm11782, %v11781, %v11753
    %vm11784 = vcmask 130048
    %v11785 = vsel %vm11784, %v11783, %v11757
    %vm11786 = vcmask 162816
    %v11787 = vsel %vm11786, %v11785, %v11761
    %vm11788 = vcmask 195584
    %v11789 = vsel %vm11788, %v11787, %v11765
    %v11790 = vsel %vm1266, %v11789, %v11769
    %v11791 = vsel %vm1050, %v11790, %v11773
    %vm11792 = vcmask 293888
    %v11793 = vsel %vm11792, %v11791, %v11777
    %11795 = vrot.lane.b32.xlu0 %v11690, 40
    %v11796 = vpop.permute.xlu0 %11795
    %vm11798 = vcmask 326656
    %v11799 = vsel %vm11798, %v11793, %v11796
    %vm11800 = vcmask 334848
    %v11801 = vsel %vm11800, %v11799, 0.0
    %11802 = vst [vmem:[%s15] sm:$0xff] %v11801
    // Predicated region
    $region114: #{_lambda_.1} parent=1 // pred_check
      _
    $region115: #{_lambda_.1} parent=1 // pred_check_branch
      %11804 = sbr.rel (0) target = $region117
    $region116: #{_lambda_.1} parent=1 // pred_region
      _
    $region117: #{_lambda_.1} parent=1 // pred_fallthru
      _
    // Predicated region
    $region118: #{_lambda_.1} parent=1 // pred_check
      _
    $region119: #{_lambda_.1} parent=1 // pred_check_branch
      %11806 = sbr.rel (0) target = $region121
    $region120: #{_lambda_.1} parent=1 // pred_region
      _
    $region121: #{_lambda_.1} parent=1 // pred_fallthru
      _
    %11807 = vsyncpa [#allocation5], 1
    %11808 = vsyncpa [#allocation7], 1
    %11809 = vsyncpa [#allocation10], 1
    %11810 = vsyncpa [#allocation13], 1
    %11811 = vsyncpa [#allocation16], 1
    %11812 = vsyncpa [#allocation19], 1
    %11813 = vsyncpa [#allocation22], 1

</llo_original>
